<compile_context>
chip_gen: v7x
topology: tpu7x:2x2x1
jax: 0.10.0
libtpu: 0.0.40
codegen_flags: <defaults>
</compile_context>

<pallas_src>
import math

import jax
import jax.numpy as jnp
from jax import lax
from jax.experimental import pallas as pl
from jax.experimental.pallas import tpu as pltpu

PAD = 128  # every feature dimension is zero-padded to this lane-dense width


def _elu(v):
    # ELU(alpha=1): x if x > 0 else exp(x) - 1   (padded zero columns stay zero)
    return jnp.where(v > 0, v, jnp.exp(jnp.minimum(v, 0.0)) - 1.0)


def _sq_pdist(h):
    """Squared pairwise distances (clamped >= 0), Gram via dot_general (no transpose)."""
    sq = jnp.sum(h * h, axis=1, keepdims=True)                              # (N, 1)
    g = lax.dot_general(h, h, dimension_numbers=(((1,), (1,)), ((), ())),
                        preferred_element_type=jnp.float32)                 # h @ h.T
    return jnp.maximum(sq + jnp.transpose(sq) - 2.0 * g, 0.0)


# ----------------------------- Pallas kernels -----------------------------

def _inputnet_pdist_kernel(x_ref, w1_ref, b1_ref, w2_ref, b2_ref, w3_ref, b3_ref,
                           h_ref, dm_ref):
    # datanorm is folded into w1 at init:  (x * d) @ W == x @ (diag(d) W)
    h = _elu(jnp.dot(x_ref[...], w1_ref[...], preferred_element_type=jnp.float32) + b1_ref[...])
    h = _elu(jnp.dot(h, w2_ref[...], preferred_element_type=jnp.float32) + b2_ref[...])
    h = _elu(jnp.dot(h, w3_ref[...], preferred_element_type=jnp.float32) + b3_ref[...])
    h_ref[...] = h
    N = dm_ref.shape[0]
    r = lax.broadcasted_iota(jnp.int32, (N, N), 0)
    c = lax.broadcasted_iota(jnp.int32, (N, N), 1)
    # knn_graph(loop=False): mask the diagonal for the XLA top_k that follows
    dm_ref[...] = jnp.where(r == c, jnp.inf, _sq_pdist(h))


def _masked_pdist_kernel(h_ref, valid_ref, dm_ref):
    h = h_ref[...]
    valid = valid_ref[...]                                                  # (1, N) f32
    N = dm_ref.shape[0]
    r = lax.broadcasted_iota(jnp.int32, (N, N), 0)
    c = lax.broadcasted_iota(jnp.int32, (N, N), 1)
    pair_ok = (valid > 0.5) & (jnp.transpose(valid) > 0.5) & (r != c)
    dm_ref[...] = jnp.where(pair_ok, _sq_pdist(h), jnp.inf)


def _edgeconv_graclus_kernel(h_ref, adj_ref, valid_ref,
                             w1a_ref, w1b_ref, b1_ref, w2_ref, b2_ref,
                             hout_ref, cluster_ref, w_scr):
    N = adj_ref.shape[0]
    h = h_ref[...]
    adj = adj_ref[...]

    # --- EdgeConv (aggr='add'):  out_i = sum_j A[i,j] * MLP([x_i, x_j - x_i]) ---
    p = jnp.dot(h, w1a_ref[...], preferred_element_type=jnp.float32) + b1_ref[...]
    q = jnp.dot(h, w1b_ref[...], preferred_element_type=jnp.float32)       # once, for all nodes
    m = _elu(p[:, None, :] + q[None, :, :] - q[:, None, :])                # (N, N, mid)
    mid = m.shape[-1]
    hp = w2_ref.shape[1]
    msg = _elu(jnp.dot(m.reshape(N * N, mid), w2_ref[...],
                       preferred_element_type=jnp.float32) + b2_ref[...])
    msg = msg.reshape(N, N, hp)                                            # (N, N, H)
    # weighted 'add' aggregation as a batched mat-vec on the MXU
    out = jnp.einsum('bqk,bkd->bqd', adj[:, None, :], msg,
                     preferred_element_type=jnp.float32)[:, 0, :]          # (N, H)
    hout_ref[...] = out

    # --- normalized_cut_2d on the existing edges ---
    d2 = _sq_pdist(out)
    deg = jnp.sum(adj, axis=1, keepdims=True)                              # (N, 1)
    inv = jnp.where(deg > 0.0, 1.0 / deg, 0.0)
    w_scr[...] = jnp.sqrt(d2) * (inv + jnp.transpose(inv))

    # --- graclus greedy matching, fully inside VMEM ---
    # TODO(synk): torch_cluster.graclus visits nodes in an implementation-defined
    # (possibly randomized) order; here we use a deterministic 0..N-1 greedy sweep.
    valid = valid_ref[...]                                                 # (1, N) f32
    lane = lax.broadcasted_iota(jnp.int32, (1, N), 1)

    def body(i, carry):
        matched, cluster = carry                                           # (1,N) f32 / i32
        sel_i = lane == i
        matched_i = jnp.sum(jnp.where(sel_i, matched, 0.0), axis=1, keepdims=True)
        valid_i = jnp.sum(jnp.where(sel_i, valid, 0.0), axis=1, keepdims=True)
        can = (valid_i > 0.0) & (matched_i == 0.0)                         # (1, 1)
        adj_row = adj_ref[pl.ds(i, 1), :]                                  # (1, N)
        w_row = w_scr[pl.ds(i, 1), :]                                      # (1, N)
        cand = (adj_row > 0.0) & (matched == 0.0) & (valid > 0.0)          # (1, N)
        cand_w = jnp.where(cand, w_row, -jnp.inf)
        wmax = jnp.max(cand_w, axis=1, keepdims=True)                      # (1, 1)
        j = jnp.min(jnp.where(cand_w == wmax, lane, N), axis=1, keepdims=True)
        has = can & (jnp.max(cand.astype(jnp.float32), axis=1, keepdims=True) > 0.0)
        sel_j = lane == j
        cluster = jnp.where(sel_i & can, i, cluster)
        cluster = jnp.where(sel_j & has, i, cluster)
        matched = jnp.where(sel_i & can, 1.0, matched)
        matched = jnp.where(sel_j & has, 1.0, matched)
        return matched, cluster

    matched0 = jnp.zeros((1, N), jnp.float32)
    _, cluster = lax.fori_loop(0, N, body, (matched0, lane))
    cluster_ref[...] = cluster


def _outputnet_kernel(h_ref, w1_ref, b1_ref, w2_ref, b2_ref, w3_ref, b3_ref, o_ref):
    h = _elu(jnp.dot(h_ref[...], w1_ref[...], preferred_element_type=jnp.float32) + b1_ref[...])
    h = _elu(jnp.dot(h, w2_ref[...], preferred_element_type=jnp.float32) + b2_ref[...])
    o_ref[...] = jnp.dot(h, w3_ref[...], preferred_element_type=jnp.float32) + b3_ref[...]


# ----------------------------- kernel wrappers -----------------------------

def run_inputnet_pdist(x_pad, p):
    N = x_pad.shape[0]
    return pl.pallas_call(
        _inputnet_pdist_kernel,
        out_shape=(jax.ShapeDtypeStruct((N, PAD), jnp.float32),
                   jax.ShapeDtypeStruct((N, N), jnp.float32)),
    )(x_pad, p["w1"], p["b1"], p["w2"], p["b2"], p["w3"], p["b3"])


def run_masked_pdist(h, valid):
    N = h.shape[0]
    vrow = valid.astype(jnp.float32).reshape(1, N)
    return pl.pallas_call(
        _masked_pdist_kernel,
        out_shape=jax.ShapeDtypeStruct((N, N), jnp.float32),
    )(h, vrow)


def run_edgeconv_graclus(h, adj, valid, conv_params):
    w1a, w1b, b1, w2, b2 = conv_params
    N = h.shape[0]
    vrow = valid.astype(jnp.float32).reshape(1, N)
    hout, cluster = pl.pallas_call(
        _edgeconv_graclus_kernel,
        out_shape=(jax.ShapeDtypeStruct((N, PAD), jnp.float32),
                   jax.ShapeDtypeStruct((1, N), jnp.int32)),
        scratch_shapes=[pltpu.VMEM((N, N), jnp.float32)],
    )(h, adj, vrow, w1a, w1b, b1, w2, b2)
    return hout, cluster.reshape(N)


def run_outputnet(h, p):
    N = h.shape[0]
    return pl.pallas_call(
        _outputnet_kernel,
        out_shape=jax.ShapeDtypeStruct((N, PAD), jnp.float32),
    )(h, p["w1"], p["b1"], p["w2"], p["b2"], p["w3"], p["b3"])


# ------------------------------- JAX glue ---------------------------------

def knn_adjacency(dm, k):
    """knn_graph(loop=False) + to_undirected + coalesce as a dense 0/1 adjacency.
    `dm` is the masked squared-distance matrix (+inf on diagonal / invalid pairs)."""
    N = dm.shape[0]
    vals, idx = lax.top_k(-dm, k)                      # k nearest per node
    keep = (vals > -jnp.inf).astype(jnp.float32)       # drop masked / missing neighbors
    rows = jnp.broadcast_to(jnp.arange(N)[:, None], (N, k))
    a_dir = jnp.zeros((N, N), jnp.float32).at[rows, idx].max(keep)
    return jnp.maximum(a_dir, a_dir.T)                 # symmetrize == to_undirected


def consecutive_pool(cluster, x, valid):
    """consecutive_cluster + scatter-max pooling of node features (padded)."""
    N = x.shape[0]
    rep_hits = jnp.zeros((N,), jnp.int32).at[cluster].max(valid.astype(jnp.int32))
    is_rep = rep_hits > 0
    new_id = jnp.cumsum(is_rep.astype(jnp.int32)) - is_rep.astype(jnp.int32)
    new_cluster = new_id[cluster]
    num_clusters = jnp.sum(is_rep.astype(jnp.int32))
    feat = jnp.where(valid[:, None], x, -jnp.inf)
    pooled = jax.ops.segment_max(feat, new_cluster, num_segments=N)
    valid_new = jnp.arange(N) < num_clusters
    pooled = jnp.where(valid_new[:, None], pooled, 0.0)
    return pooled, valid_new


def forward(x, params, k):
    N, in_dim = x.shape
    x_pad = jnp.zeros((N, PAD), jnp.float32).at[:, :in_dim].set(x)
    valid = jnp.ones((N,), dtype=bool)

    h, dm = run_inputnet_pdist(x_pad, params["inputnet"])          # inputnet MLP + pdist
    adj = knn_adjacency(dm, k)                                     # knn + to_undirected
    h, cluster = run_edgeconv_graclus(h, adj, valid, params["conv1"])   # edgeconv1 + graclus
    h, valid = consecutive_pool(cluster, h, valid)                 # max_pool (edges recomputed next)

    dm = run_masked_pdist(h, valid)
    adj = knn_adjacency(dm, k)
    h, cluster = run_edgeconv_graclus(h, adj, valid, params["conv2"])   # edgeconv2 + graclus
    h, valid = consecutive_pool(cluster, h, valid)                 # max_pool_x

    # batch is None in this configuration -> global_max_pool is skipped (as in the torch code)
    out = run_outputnet(h, params["output"])[:, 0]                 # output MLP + squeeze(-1)
    out = jnp.where(valid, out, 0.0)
    return out, valid, jnp.sum(valid.astype(jnp.int32))


# --------------------------- parameter init --------------------------------

def _linear(key, fan_in, fan_out):
    k1, k2 = jax.random.split(key)
    bound = 1.0 / math.sqrt(fan_in)
    w = jax.random.uniform(k1, (fan_in, fan_out), dtype=jnp.float32,
                           minval=-bound, maxval=bound)
    b = jax.random.uniform(k2, (fan_out,), dtype=jnp.float32,
                           minval=-bound, maxval=bound)
    return w, b


def _pad_w(w):
    assert w.shape[0] <= PAD and w.shape[1] <= PAD
    return jnp.zeros((PAD, PAD), jnp.float32).at[:w.shape[0], :w.shape[1]].set(w)


def _pad_b(b):
    assert b.shape[0] <= PAD
    return jnp.zeros((1, PAD), jnp.float32).at[0, :b.shape[0]].set(b)


def init_params(key, input_dim, hidden_dim, output_dim):
    H = hidden_dim
    mid = 3 * H // 2
    ks = jax.random.split(key, 10)
    w1, b1 = _linear(ks[0], input_dim, H // 2)
    w2, b2 = _linear(ks[1], H // 2, H)
    w3, b3 = _linear(ks[2], H, H)
    c1w1, c1b1 = _linear(ks[3], 2 * H, mid)     # convnn1: Linear(2H, 3H/2), Linear(3H/2, H)
    c1w2, c1b2 = _linear(ks[4], mid, H)
    c2w1, c2b1 = _linear(ks[5], 2 * H, mid)     # convnn2
    c2w2, c2b2 = _linear(ks[6], mid, H)
    o1, ob1 = _linear(ks[7], H, H)
    o2, ob2 = _linear(ks[8], H, H // 2)
    o3, ob3 = _linear(ks[9], H // 2, output_dim)

    datanorm = jnp.array([1.0 / 500.0, 1.0 / 500.0, 1.0 / 54.0, 1.0 / 25.0, 1.0 / 1000.0],
                         dtype=jnp.float32)
    # Fold datanorm into the first inputnet layer: (x * d) @ W == x @ (diag(d) W)
    w1 = w1 * datanorm[:, None]

    return {
        "inputnet": {"w1": _pad_w(w1), "b1": _pad_b(b1),
                     "w2": _pad_w(w2), "b2": _pad_b(b2),
                     "w3": _pad_w(w3), "b3": _pad_b(b3)},
        # EdgeConv message MLP weight split: rows [:H] act on x_i, rows [H:] on (x_j - x_i)
        "conv1": (_pad_w(c1w1[:H]), _pad_w(c1w1[H:]), _pad_b(c1b1),
                  _pad_w(c1w2), _pad_b(c1b2)),
        "conv2": (_pad_w(c2w1[:H]), _pad_w(c2w1[H:]), _pad_b(c2b1),
                  _pad_w(c2w2), _pad_b(c2b2)),
        "output": {"w1": _pad_w(o1), "b1": _pad_b(ob1),
                   "w2": _pad_w(o2), "b2": _pad_b(ob2),
                   "w3": _pad_w(o3), "b3": _pad_b(ob3)},
    }


if __name__ == "__main__":
    N, INPUT_DIM, HIDDEN_DIM, OUTPUT_DIM, K = 32, 5, 64, 1, 8
    params = init_params(jax.random.PRNGKey(42), INPUT_DIM, HIDDEN_DIM, OUTPUT_DIM)
    x = jax.random.uniform(jax.random.PRNGKey(0), (N, INPUT_DIM), dtype=jnp.float32,
                           minval=0.0, maxval=100.0)
    fwd = jax.jit(forward, static_argnums=(2,))
    out, valid_mask, num_clusters = fwd(x, params, K)
    jax.block_until_ready((out, valid_mask, num_clusters))
    print("KERNEL_OK")
</pallas_src>

<mosaic_0001>
module attributes {stable_mosaic.version = 11 : i64} {
  func.func private @main(%arg0: i32) attributes {dimension_semantics = [#tpu.dimension_semantics<core_parallel>], iteration_bounds = array<i64: 2>, tpu.core_type = #tpu.core_type<sc_scalar_subcore>, window_params = []} {
    return
  }
}

module attributes {stable_mosaic.version = 11 : i64} {
  func.func private @main(%arg0: i32) attributes {dimension_semantics = [#tpu.dimension_semantics<core_parallel>], iteration_bounds = array<i64: 2>, tpu.core_type = #tpu.core_type<sc_scalar_subcore>, window_params = []} {
    return
  }
}

module attributes {stable_mosaic.version = 11 : i64} {
  func.func @_inputnet_pdist_kernel(%arg0: memref<32x128xf32, #tpu.memory_space<vmem>>, %arg1: memref<128x128xf32, #tpu.memory_space<vmem>>, %arg2: memref<1x128xf32, #tpu.memory_space<vmem>>, %arg3: memref<128x128xf32, #tpu.memory_space<vmem>>, %arg4: memref<1x128xf32, #tpu.memory_space<vmem>>, %arg5: memref<128x128xf32, #tpu.memory_space<vmem>>, %arg6: memref<1x128xf32, #tpu.memory_space<vmem>>, %arg7: memref<32x128xf32, #tpu.memory_space<vmem>>, %arg8: memref<32x32xf32, #tpu.memory_space<vmem>>) attributes {dimension_semantics = [], scalar_prefetch = 0 : i64, scratch_operands = 0 : i64, tpu.core_type = #tpu.core_type<tc>} {
    %c0 = arith.constant 0 : index
    %c0_0 = arith.constant 0 : index
    %0 = vector.load %arg0[%c0, %c0_0] : memref<32x128xf32, #tpu.memory_space<vmem>>, vector<32x128xf32>
    %c0_1 = arith.constant 0 : index
    %c0_2 = arith.constant 0 : index
    %1 = vector.load %arg1[%c0_1, %c0_2] : memref<128x128xf32, #tpu.memory_space<vmem>>, vector<128x128xf32>
    %cst = arith.constant dense<0.000000e+00> : vector<32x128xf32>
    %2 = tpu.matmul %0, %1, %cst {dimension_numbers = #tpu.dot_dimension_numbers<[1], [0], [0], [1], [0, 0, 1, 1], [], []>} : vector<32x128xf32>, vector<128x128xf32>, vector<32x128xf32> -> vector<32x128xf32>
    %c0_3 = arith.constant 0 : index
    %c0_4 = arith.constant 0 : index
    %3 = vector.load %arg2[%c0_3, %c0_4] : memref<1x128xf32, #tpu.memory_space<vmem>>, vector<1x128xf32>
    %4 = vector.broadcast %3 : vector<1x128xf32> to vector<32x128xf32>
    %5 = arith.addf %2, %4 : vector<32x128xf32>
    %cst_5 = arith.constant 0.000000e+00 : f32
    %6 = vector.broadcast %cst_5 : f32 to vector<32x128xf32>
    %7 = arith.cmpf ogt, %5, %6 : vector<32x128xf32>
    %cst_6 = arith.constant 0.000000e+00 : f32
    %8 = vector.broadcast %cst_6 : f32 to vector<32x128xf32>
    %9 = arith.minimumf %5, %8 : vector<32x128xf32>
    %10 = math.exp %9 : vector<32x128xf32>
    %cst_7 = arith.constant 1.000000e+00 : f32
    %11 = vector.broadcast %cst_7 : f32 to vector<32x128xf32>
    %12 = arith.subf %10, %11 : vector<32x128xf32>
    %13 = arith.select %7, %5, %12 : vector<32x128xi1>, vector<32x128xf32>
    %c0_8 = arith.constant 0 : index
    %c0_9 = arith.constant 0 : index
    %14 = vector.load %arg3[%c0_8, %c0_9] : memref<128x128xf32, #tpu.memory_space<vmem>>, vector<128x128xf32>
    %cst_10 = arith.constant dense<0.000000e+00> : vector<32x128xf32>
    %15 = tpu.matmul %13, %14, %cst_10 {dimension_numbers = #tpu.dot_dimension_numbers<[1], [0], [0], [1], [0, 0, 1, 1], [], []>} : vector<32x128xf32>, vector<128x128xf32>, vector<32x128xf32> -> vector<32x128xf32>
    %c0_11 = arith.constant 0 : index
    %c0_12 = arith.constant 0 : index
    %16 = vector.load %arg4[%c0_11, %c0_12] : memref<1x128xf32, #tpu.memory_space<vmem>>, vector<1x128xf32>
    %17 = vector.broadcast %16 : vector<1x128xf32> to vector<32x128xf32>
    %18 = arith.addf %15, %17 : vector<32x128xf32>
    %cst_13 = arith.constant 0.000000e+00 : f32
    %19 = vector.broadcast %cst_13 : f32 to vector<32x128xf32>
    %20 = arith.cmpf ogt, %18, %19 : vector<32x128xf32>
    %cst_14 = arith.constant 0.000000e+00 : f32
    %21 = vector.broadcast %cst_14 : f32 to vector<32x128xf32>
    %22 = arith.minimumf %18, %21 : vector<32x128xf32>
    %23 = math.exp %22 : vector<32x128xf32>
    %cst_15 = arith.constant 1.000000e+00 : f32
    %24 = vector.broadcast %cst_15 : f32 to vector<32x128xf32>
    %25 = arith.subf %23, %24 : vector<32x128xf32>
    %26 = arith.select %20, %18, %25 : vector<32x128xi1>, vector<32x128xf32>
    %c0_16 = arith.constant 0 : index
    %c0_17 = arith.constant 0 : index
    %27 = vector.load %arg5[%c0_16, %c0_17] : memref<128x128xf32, #tpu.memory_space<vmem>>, vector<128x128xf32>
    %cst_18 = arith.constant dense<0.000000e+00> : vector<32x128xf32>
    %28 = tpu.matmul %26, %27, %cst_18 {dimension_numbers = #tpu.dot_dimension_numbers<[1], [0], [0], [1], [0, 0, 1, 1], [], []>} : vector<32x128xf32>, vector<128x128xf32>, vector<32x128xf32> -> vector<32x128xf32>
    %c0_19 = arith.constant 0 : index
    %c0_20 = arith.constant 0 : index
    %29 = vector.load %arg6[%c0_19, %c0_20] : memref<1x128xf32, #tpu.memory_space<vmem>>, vector<1x128xf32>
    %30 = vector.broadcast %29 : vector<1x128xf32> to vector<32x128xf32>
    %31 = arith.addf %28, %30 : vector<32x128xf32>
    %cst_21 = arith.constant 0.000000e+00 : f32
    %32 = vector.broadcast %cst_21 : f32 to vector<32x128xf32>
    %33 = arith.cmpf ogt, %31, %32 : vector<32x128xf32>
    %cst_22 = arith.constant 0.000000e+00 : f32
    %34 = vector.broadcast %cst_22 : f32 to vector<32x128xf32>
    %35 = arith.minimumf %31, %34 : vector<32x128xf32>
    %36 = math.exp %35 : vector<32x128xf32>
    %cst_23 = arith.constant 1.000000e+00 : f32
    %37 = vector.broadcast %cst_23 : f32 to vector<32x128xf32>
    %38 = arith.subf %36, %37 : vector<32x128xf32>
    %39 = arith.select %33, %31, %38 : vector<32x128xi1>, vector<32x128xf32>
    %c0_24 = arith.constant 0 : index
    %c0_25 = arith.constant 0 : index
    %40 = vector.load %arg7[%c0_24, %c0_25] : memref<32x128xf32, #tpu.memory_space<vmem>>, vector<32x128xf32>
    tpu.vector_store %arg7[%c0_24, %c0_25], %39 {strides = array<i32>} : memref<32x128xf32, #tpu.memory_space<vmem>>, vector<32x128xf32>,
    %41 = tpu.iota {dimensions = array<i32: 0>} : vector<32x32xi32>
    %42 = tpu.iota {dimensions = array<i32: 1>} : vector<32x32xi32>
    %43 = arith.cmpi eq, %41, %42 : vector<32x32xi32>
    %44 = arith.mulf %39, %39 : vector<32x128xf32>
    %cst_26 = arith.constant dense<0.000000e+00> : vector<32xf32>
    %45 = vector.multi_reduction <add>, %44, %cst_26 [1] : vector<32x128xf32> to vector<32xf32>
    %46 = vector.shape_cast %45 : vector<32xf32> to vector<32x1xf32>
    %cst_27 = arith.constant dense<0.000000e+00> : vector<32x32xf32>
    %47 = tpu.matmul %39, %39, %cst_27 {dimension_numbers = #tpu.dot_dimension_numbers<[1], [1], [0], [0], [0, 0, 1, 0], [], []>} : vector<32x128xf32>, vector<32x128xf32>, vector<32x32xf32> -> vector<32x32xf32>
    %48 = tpu.transpose %46, [1, 0] : vector<32x1xf32> -> vector<1x32xf32>
    %49 = vector.broadcast %46 : vector<32x1xf32> to vector<32x32xf32>
    %50 = vector.broadcast %48 : vector<1x32xf32> to vector<32x32xf32>
    %51 = arith.addf %49, %50 : vector<32x32xf32>
    %cst_28 = arith.constant 2.000000e+00 : f32
    %52 = vector.broadcast %cst_28 : f32 to vector<32x32xf32>
    %53 = arith.mulf %52, %47 : vector<32x32xf32>
    %54 = arith.subf %51, %53 : vector<32x32xf32>
    %cst_29 = arith.constant 0.000000e+00 : f32
    %55 = vector.broadcast %cst_29 : f32 to vector<32x32xf32>
    %56 = arith.maximumf %54, %55 : vector<32x32xf32>
    %cst_30 = arith.constant 0x7F800000 : f32
    %57 = vector.broadcast %cst_30 : f32 to vector<32x32xf32>
    %58 = arith.select %43, %57, %56 : vector<32x32xi1>, vector<32x32xf32>
    %c0_31 = arith.constant 0 : index
    %c0_32 = arith.constant 0 : index
    %59 = vector.load %arg8[%c0_31, %c0_32] : memref<32x32xf32, #tpu.memory_space<vmem>>, vector<32x32xf32>
    tpu.vector_store %arg8[%c0_31, %c0_32], %58 {strides = array<i32>} : memref<32x32xf32, #tpu.memory_space<vmem>>, vector<32x32xf32>,
    return
  }
}

module attributes {stable_mosaic.version = 11 : i64} {
  func.func @_edgeconv_graclus_kernel(%arg0: memref<32x128xf32, #tpu.memory_space<vmem>>, %arg1: memref<32x32xf32, #tpu.memory_space<vmem>>, %arg2: memref<1x32xf32, #tpu.memory_space<vmem>>, %arg3: memref<128x128xf32, #tpu.memory_space<vmem>>, %arg4: memref<128x128xf32, #tpu.memory_space<vmem>>, %arg5: memref<1x128xf32, #tpu.memory_space<vmem>>, %arg6: memref<128x128xf32, #tpu.memory_space<vmem>>, %arg7: memref<1x128xf32, #tpu.memory_space<vmem>>, %arg8: memref<32x128xf32, #tpu.memory_space<vmem>>, %arg9: memref<1x32xi32, #tpu.memory_space<vmem>>, %arg10: memref<32x32xf32, #tpu.memory_space<vmem>>) attributes {dimension_semantics = [], scalar_prefetch = 0 : i64, scratch_operands = 1 : i64, tpu.core_type = #tpu.core_type<tc>} {
    %c0 = arith.constant 0 : index
    %c0_0 = arith.constant 0 : index
    %0 = vector.load %arg0[%c0, %c0_0] : memref<32x128xf32, #tpu.memory_space<vmem>>, vector<32x128xf32>
    %c0_1 = arith.constant 0 : index
    %c0_2 = arith.constant 0 : index
    %1 = vector.load %arg1[%c0_1, %c0_2] : memref<32x32xf32, #tpu.memory_space<vmem>>, vector<32x32xf32>
    %c0_3 = arith.constant 0 : index
    %c0_4 = arith.constant 0 : index
    %2 = vector.load %arg3[%c0_3, %c0_4] : memref<128x128xf32, #tpu.memory_space<vmem>>, vector<128x128xf32>
    %cst = arith.constant dense<0.000000e+00> : vector<32x128xf32>
    %3 = tpu.matmul %0, %2, %cst {dimension_numbers = #tpu.dot_dimension_numbers<[1], [0], [0], [1], [0, 0, 1, 1], [], []>} : vector<32x128xf32>, vector<128x128xf32>, vector<32x128xf32> -> vector<32x128xf32>
    %c0_5 = arith.constant 0 : index
    %c0_6 = arith.constant 0 : index
    %4 = vector.load %arg5[%c0_5, %c0_6] : memref<1x128xf32, #tpu.memory_space<vmem>>, vector<1x128xf32>
    %5 = vector.broadcast %4 : vector<1x128xf32> to vector<32x128xf32>
    %6 = arith.addf %3, %5 : vector<32x128xf32>
    %c0_7 = arith.constant 0 : index
    %c0_8 = arith.constant 0 : index
    %7 = vector.load %arg4[%c0_7, %c0_8] : memref<128x128xf32, #tpu.memory_space<vmem>>, vector<128x128xf32>
    %cst_9 = arith.constant dense<0.000000e+00> : vector<32x128xf32>
    %8 = tpu.matmul %0, %7, %cst_9 {dimension_numbers = #tpu.dot_dimension_numbers<[1], [0], [0], [1], [0, 0, 1, 1], [], []>} : vector<32x128xf32>, vector<128x128xf32>, vector<32x128xf32> -> vector<32x128xf32>
    %9 = vector.shape_cast %6 : vector<32x128xf32> to vector<32x1x128xf32>
    %10 = vector.shape_cast %8 : vector<32x128xf32> to vector<1x32x128xf32>
    %11 = vector.broadcast %9 : vector<32x1x128xf32> to vector<32x32x128xf32>
    %12 = vector.broadcast %10 : vector<1x32x128xf32> to vector<32x32x128xf32>
    %13 = arith.addf %11, %12 : vector<32x32x128xf32>
    %14 = vector.shape_cast %8 : vector<32x128xf32> to vector<32x1x128xf32>
    %15 = vector.broadcast %14 : vector<32x1x128xf32> to vector<32x32x128xf32>
    %16 = arith.subf %13, %15 : vector<32x32x128xf32>
    %cst_10 = arith.constant 0.000000e+00 : f32
    %17 = vector.broadcast %cst_10 : f32 to vector<32x32x128xf32>
    %18 = arith.cmpf ogt, %16, %17 : vector<32x32x128xf32>
    %cst_11 = arith.constant 0.000000e+00 : f32
    %19 = vector.broadcast %cst_11 : f32 to vector<32x32x128xf32>
    %20 = arith.minimumf %16, %19 : vector<32x32x128xf32>
    %21 = math.exp %20 : vector<32x32x128xf32>
    %cst_12 = arith.constant 1.000000e+00 : f32
    %22 = vector.broadcast %cst_12 : f32 to vector<32x32x128xf32>
    %23 = arith.subf %21, %22 : vector<32x32x128xf32>
    %24 = arith.select %18, %16, %23 : vector<32x32x128xi1>, vector<32x32x128xf32>
    %25 = vector.shape_cast %24 : vector<32x32x128xf32> to vector<1024x128xf32>
    %c0_13 = arith.constant 0 : index
    %c0_14 = arith.constant 0 : index
    %26 = vector.load %arg6[%c0_13, %c0_14] : memref<128x128xf32, #tpu.memory_space<vmem>>, vector<128x128xf32>
    %cst_15 = arith.constant dense<0.000000e+00> : vector<1024x128xf32>
    %27 = tpu.matmul %25, %26, %cst_15 {dimension_numbers = #tpu.dot_dimension_numbers<[1], [0], [0], [1], [0, 0, 1, 1], [], []>} : vector<1024x128xf32>, vector<128x128xf32>, vector<1024x128xf32> -> vector<1024x128xf32>
    %c0_16 = arith.constant 0 : index
    %c0_17 = arith.constant 0 : index
    %28 = vector.load %arg7[%c0_16, %c0_17] : memref<1x128xf32, #tpu.memory_space<vmem>>, vector<1x128xf32>
    %29 = vector.broadcast %28 : vector<1x128xf32> to vector<1024x128xf32>
    %30 = arith.addf %27, %29 : vector<1024x128xf32>
    %cst_18 = arith.constant 0.000000e+00 : f32
    %31 = vector.broadcast %cst_18 : f32 to vector<1024x128xf32>
    %32 = arith.cmpf ogt, %30, %31 : vector<1024x128xf32>
    %cst_19 = arith.constant 0.000000e+00 : f32
    %33 = vector.broadcast %cst_19 : f32 to vector<1024x128xf32>
    %34 = arith.minimumf %30, %33 : vector<1024x128xf32>
    %35 = math.exp %34 : vector<1024x128xf32>
    %cst_20 = arith.constant 1.000000e+00 : f32
    %36 = vector.broadcast %cst_20 : f32 to vector<1024x128xf32>
    %37 = arith.subf %35, %36 : vector<1024x128xf32>
    %38 = arith.select %32, %30, %37 : vector<1024x128xi1>, vector<1024x128xf32>
    %39 = vector.shape_cast %38 : vector<1024x128xf32> to vector<32x32x128xf32>
    %40 = vector.shape_cast %1 : vector<32x32xf32> to vector<32x1x32xf32>
    "tpu.trace_start"() <{level = 10 : i32, message = "bqk,bkd->bqd"}> : () -> ()
    %cst_21 = arith.constant dense<0.000000e+00> : vector<32x1x128xf32>
    %41 = tpu.matmul %40, %39, %cst_21 {dimension_numbers = #tpu.dot_dimension_numbers<[2], [1], [1], [2], [0, 0, 0, 1, 1, 2], [0], [0]>} : vector<32x1x32xf32>, vector<32x32x128xf32>, vector<32x1x128xf32> -> vector<32x1x128xf32>
    "tpu.trace_stop"() : () -> ()
    %42 = vector.shape_cast %41 : vector<32x1x128xf32> to vector<32x128xf32>
    %c0_22 = arith.constant 0 : index
    %c0_23 = arith.constant 0 : index
    %43 = vector.load %arg8[%c0_22, %c0_23] : memref<32x128xf32, #tpu.memory_space<vmem>>, vector<32x128xf32>
    tpu.vector_store %arg8[%c0_22, %c0_23], %42 {strides = array<i32>} : memref<32x128xf32, #tpu.memory_space<vmem>>, vector<32x128xf32>,
    %44 = arith.mulf %42, %42 : vector<32x128xf32>
    %cst_24 = arith.constant dense<0.000000e+00> : vector<32xf32>
    %45 = vector.multi_reduction <add>, %44, %cst_24 [1] : vector<32x128xf32> to vector<32xf32>
    %46 = vector.shape_cast %45 : vector<32xf32> to vector<32x1xf32>
    %cst_25 = arith.constant dense<0.000000e+00> : vector<32x32xf32>
    %47 = tpu.matmul %42, %42, %cst_25 {dimension_numbers = #tpu.dot_dimension_numbers<[1], [1], [0], [0], [0, 0, 1, 0], [], []>} : vector<32x128xf32>, vector<32x128xf32>, vector<32x32xf32> -> vector<32x32xf32>
    %48 = tpu.transpose %46, [1, 0] : vector<32x1xf32> -> vector<1x32xf32>
    %49 = vector.broadcast %46 : vector<32x1xf32> to vector<32x32xf32>
    %50 = vector.broadcast %48 : vector<1x32xf32> to vector<32x32xf32>
    %51 = arith.addf %49, %50 : vector<32x32xf32>
    %cst_26 = arith.constant 2.000000e+00 : f32
    %52 = vector.broadcast %cst_26 : f32 to vector<32x32xf32>
    %53 = arith.mulf %52, %47 : vector<32x32xf32>
    %54 = arith.subf %51, %53 : vector<32x32xf32>
    %cst_27 = arith.constant 0.000000e+00 : f32
    %55 = vector.broadcast %cst_27 : f32 to vector<32x32xf32>
    %56 = arith.maximumf %54, %55 : vector<32x32xf32>
    %cst_28 = arith.constant dense<0.000000e+00> : vector<32xf32>
    %57 = vector.multi_reduction <add>, %1, %cst_28 [1] : vector<32x32xf32> to vector<32xf32>
    %58 = vector.shape_cast %57 : vector<32xf32> to vector<32x1xf32>
    %cst_29 = arith.constant 0.000000e+00 : f32
    %59 = vector.broadcast %cst_29 : f32 to vector<32x1xf32>
    %60 = arith.cmpf ogt, %58, %59 : vector<32x1xf32>
    %cst_30 = arith.constant 1.000000e+00 : f32
    %61 = vector.broadcast %cst_30 : f32 to vector<32x1xf32>
    %62 = arith.divf %61, %58 : vector<32x1xf32>
    %cst_31 = arith.constant 0.000000e+00 : f32
    %63 = vector.broadcast %cst_31 : f32 to vector<32x1xf32>
    %64 = arith.select %60, %62, %63 : vector<32x1xi1>, vector<32x1xf32>
    %65 = math.sqrt %56 : vector<32x32xf32>
    %66 = tpu.transpose %64, [1, 0] : vector<32x1xf32> -> vector<1x32xf32>
    %67 = vector.broadcast %64 : vector<32x1xf32> to vector<32x32xf32>
    %68 = vector.broadcast %66 : vector<1x32xf32> to vector<32x32xf32>
    %69 = arith.addf %67, %68 : vector<32x32xf32>
    %70 = arith.mulf %65, %69 : vector<32x32xf32>
    %c0_32 = arith.constant 0 : index
    %c0_33 = arith.constant 0 : index
    %71 = vector.load %arg10[%c0_32, %c0_33] : memref<32x32xf32, #tpu.memory_space<vmem>>, vector<32x32xf32>
    tpu.vector_store %arg10[%c0_32, %c0_33], %70 {strides = array<i32>} : memref<32x32xf32, #tpu.memory_space<vmem>>, vector<32x32xf32>,
    %c0_34 = arith.constant 0 : index
    %c0_35 = arith.constant 0 : index
    %72 = vector.load %arg2[%c0_34, %c0_35] : memref<1x32xf32, #tpu.memory_space<vmem>>, vector<1x32xf32>
    %73 = tpu.iota {dimensions = array<i32: 1>} : vector<1x32xi32>
    %cst_36 = arith.constant 0.000000e+00 : f32
    %74 = vector.broadcast %cst_36 : f32 to vector<1x32xf32>
    %c0_i32 = arith.constant 0 : i32
    %c32_i32 = arith.constant 32 : i32
    %75 = arith.addi %c0_i32, %c32_i32 : i32
    %c1_i32 = arith.constant 1 : i32
    %76:2 = scf.for %arg11 = %c0_i32 to %75 step %c1_i32 iter_args(%arg12 = %74, %arg13 = %73) -> (vector<1x32xf32>, vector<1x32xi32>)  : i32 {
      %78 = vector.broadcast %arg11 : i32 to vector<1x32xi32>
      %79 = arith.cmpi eq, %73, %78 : vector<1x32xi32>
      %cst_40 = arith.constant 0.000000e+00 : f32
      %80 = vector.broadcast %cst_40 : f32 to vector<1x32xf32>
      %81 = arith.select %79, %arg12, %80 : vector<1x32xi1>, vector<1x32xf32>
      %cst_41 = arith.constant dense<0.000000e+00> : vector<1xf32>
      %82 = vector.multi_reduction <add>, %81, %cst_41 [1] : vector<1x32xf32> to vector<1xf32>
      %83 = vector.shape_cast %82 : vector<1xf32> to vector<1x1xf32>
      %cst_42 = arith.constant 0.000000e+00 : f32
      %84 = vector.broadcast %cst_42 : f32 to vector<1x32xf32>
      %85 = arith.select %79, %72, %84 : vector<1x32xi1>, vector<1x32xf32>
      %cst_43 = arith.constant dense<0.000000e+00> : vector<1xf32>
      %86 = vector.multi_reduction <add>, %85, %cst_43 [1] : vector<1x32xf32> to vector<1xf32>
      %87 = vector.shape_cast %86 : vector<1xf32> to vector<1x1xf32>
      %cst_44 = arith.constant 0.000000e+00 : f32
      %88 = vector.broadcast %cst_44 : f32 to vector<1x1xf32>
      %89 = arith.cmpf ogt, %87, %88 : vector<1x1xf32>
      %cst_45 = arith.constant 0.000000e+00 : f32
      %90 = vector.broadcast %cst_45 : f32 to vector<1x1xf32>
      %91 = arith.cmpf oeq, %83, %90 : vector<1x1xf32>
      %92 = arith.andi %89, %91 : vector<1x1xi1>
      %93 = arith.index_cast %arg11 : i32 to index
      %c0_46 = arith.constant 0 : index
      %94 = vector.load %arg1[%93, %c0_46] : memref<32x32xf32, #tpu.memory_space<vmem>>, vector<1x32xf32>
      %95 = arith.index_cast %arg11 : i32 to index
      %c0_47 = arith.constant 0 : index
      %96 = vector.load %arg10[%95, %c0_47] : memref<32x32xf32, #tpu.memory_space<vmem>>, vector<1x32xf32>
      %cst_48 = arith.constant 0.000000e+00 : f32
      %97 = vector.broadcast %cst_48 : f32 to vector<1x32xf32>
      %98 = arith.cmpf ogt, %94, %97 : vector<1x32xf32>
      %cst_49 = arith.constant 0.000000e+00 : f32
      %99 = vector.broadcast %cst_49 : f32 to vector<1x32xf32>
      %100 = arith.cmpf oeq, %arg12, %99 : vector<1x32xf32>
      %101 = arith.andi %98, %100 : vector<1x32xi1>
      %cst_50 = arith.constant 0.000000e+00 : f32
      %102 = vector.broadcast %cst_50 : f32 to vector<1x32xf32>
      %103 = arith.cmpf ogt, %72, %102 : vector<1x32xf32>
      %104 = arith.andi %101, %103 : vector<1x32xi1>
      %cst_51 = arith.constant 0xFF800000 : f32
      %105 = vector.broadcast %cst_51 : f32 to vector<1x32xf32>
      %106 = arith.select %104, %96, %105 : vector<1x32xi1>, vector<1x32xf32>
      %cst_52 = arith.constant dense<0xFF800000> : vector<1xf32>
      %107 = vector.multi_reduction <maximumf>, %106, %cst_52 [1] : vector<1x32xf32> to vector<1xf32>
      %108 = vector.shape_cast %107 : vector<1xf32> to vector<1x1xf32>
      %109 = vector.broadcast %108 : vector<1x1xf32> to vector<1x32xf32>
      %110 = arith.cmpf oeq, %106, %109 : vector<1x32xf32>
      %c32_i32_53 = arith.constant 32 : i32
      %111 = vector.broadcast %c32_i32_53 : i32 to vector<1x32xi32>
      %112 = arith.select %110, %73, %111 : vector<1x32xi1>, vector<1x32xi32>
      %cst_54 = arith.constant dense<2147483647> : vector<1xi32>
      %113 = vector.multi_reduction <minsi>, %112, %cst_54 [1] : vector<1x32xi32> to vector<1xi32>
      %114 = vector.shape_cast %113 : vector<1xi32> to vector<1x1xi32>
      %115 = arith.extui %104 : vector<1x32xi1> to vector<1x32xi32>
      %116 = arith.sitofp %115 : vector<1x32xi32> to vector<1x32xf32>
      %cst_55 = arith.constant dense<0xFF800000> : vector<1xf32>
      %117 = vector.multi_reduction <maximumf>, %116, %cst_55 [1] : vector<1x32xf32> to vector<1xf32>
      %118 = vector.shape_cast %117 : vector<1xf32> to vector<1x1xf32>
      %cst_56 = arith.constant 0.000000e+00 : f32
      %119 = vector.broadcast %cst_56 : f32 to vector<1x1xf32>
      %120 = arith.cmpf ogt, %118, %119 : vector<1x1xf32>
      %121 = arith.andi %92, %120 : vector<1x1xi1>
      %122 = vector.broadcast %114 : vector<1x1xi32> to vector<1x32xi32>
      %123 = arith.cmpi eq, %73, %122 : vector<1x32xi32>
      %124 = vector.broadcast %92 : vector<1x1xi1> to vector<1x32xi1>
      %125 = arith.andi %79, %124 : vector<1x32xi1>
      %126 = vector.broadcast %arg11 : i32 to vector<1x32xi32>
      %127 = arith.select %125, %126, %arg13 : vector<1x32xi1>, vector<1x32xi32>
      %128 = vector.broadcast %121 : vector<1x1xi1> to vector<1x32xi1>
      %129 = arith.andi %123, %128 : vector<1x32xi1>
      %130 = vector.broadcast %arg11 : i32 to vector<1x32xi32>
      %131 = arith.select %129, %130, %127 : vector<1x32xi1>, vector<1x32xi32>
      %132 = vector.broadcast %92 : vector<1x1xi1> to vector<1x32xi1>
      %133 = arith.andi %79, %132 : vector<1x32xi1>
      %cst_57 = arith.constant 1.000000e+00 : f32
      %134 = vector.broadcast %cst_57 : f32 to vector<1x32xf32>
      %135 = arith.select %133, %134, %arg12 : vector<1x32xi1>, vector<1x32xf32>
      %136 = vector.broadcast %121 : vector<1x1xi1> to vector<1x32xi1>
      %137 = arith.andi %123, %136 : vector<1x32xi1>
      %cst_58 = arith.constant 1.000000e+00 : f32
      %138 = vector.broadcast %cst_58 : f32 to vector<1x32xf32>
      %139 = arith.select %137, %138, %135 : vector<1x32xi1>, vector<1x32xf32>
      scf.yield %139, %131 : vector<1x32xf32>, vector<1x32xi32>
    }
    %c32_i32_37 = arith.constant 32 : i32
    %c0_38 = arith.constant 0 : index
    %c0_39 = arith.constant 0 : index
    %77 = vector.load %arg9[%c0_38, %c0_39] : memref<1x32xi32, #tpu.memory_space<vmem>>, vector<1x32xi32>
    tpu.vector_store %arg9[%c0_38, %c0_39], %76#1 {strides = array<i32>} : memref<1x32xi32, #tpu.memory_space<vmem>>, vector<1x32xi32>,
    return
  }
}

module attributes {stable_mosaic.version = 11 : i64} {
  func.func @_masked_pdist_kernel(%arg0: memref<32x128xf32, #tpu.memory_space<vmem>>, %arg1: memref<1x32xf32, #tpu.memory_space<vmem>>, %arg2: memref<32x32xf32, #tpu.memory_space<vmem>>) attributes {dimension_semantics = [], scalar_prefetch = 0 : i64, scratch_operands = 0 : i64, tpu.core_type = #tpu.core_type<tc>} {
    %c0 = arith.constant 0 : index
    %c0_0 = arith.constant 0 : index
    %0 = vector.load %arg0[%c0, %c0_0] : memref<32x128xf32, #tpu.memory_space<vmem>>, vector<32x128xf32>
    %c0_1 = arith.constant 0 : index
    %c0_2 = arith.constant 0 : index
    %1 = vector.load %arg1[%c0_1, %c0_2] : memref<1x32xf32, #tpu.memory_space<vmem>>, vector<1x32xf32>
    %2 = tpu.iota {dimensions = array<i32: 0>} : vector<32x32xi32>
    %3 = tpu.iota {dimensions = array<i32: 1>} : vector<32x32xi32>
    %cst = arith.constant 5.000000e-01 : f32
    %4 = vector.broadcast %cst : f32 to vector<1x32xf32>
    %5 = arith.cmpf ogt, %1, %4 : vector<1x32xf32>
    %6 = tpu.transpose %1, [1, 0] : vector<1x32xf32> -> vector<32x1xf32>
    %cst_3 = arith.constant 5.000000e-01 : f32
    %7 = vector.broadcast %cst_3 : f32 to vector<32x1xf32>
    %8 = arith.cmpf ogt, %6, %7 : vector<32x1xf32>
    %9 = vector.broadcast %5 : vector<1x32xi1> to vector<32x32xi1>
    %10 = vector.broadcast %8 : vector<32x1xi1> to vector<32x32xi1>
    %11 = arith.andi %9, %10 : vector<32x32xi1>
    %12 = arith.cmpi ne, %2, %3 : vector<32x32xi32>
    %13 = arith.andi %11, %12 : vector<32x32xi1>
    %14 = arith.mulf %0, %0 : vector<32x128xf32>
    %cst_4 = arith.constant dense<0.000000e+00> : vector<32xf32>
    %15 = vector.multi_reduction <add>, %14, %cst_4 [1] : vector<32x128xf32> to vector<32xf32>
    %16 = vector.shape_cast %15 : vector<32xf32> to vector<32x1xf32>
    %cst_5 = arith.constant dense<0.000000e+00> : vector<32x32xf32>
    %17 = tpu.matmul %0, %0, %cst_5 {dimension_numbers = #tpu.dot_dimension_numbers<[1], [1], [0], [0], [0, 0, 1, 0], [], []>} : vector<32x128xf32>, vector<32x128xf32>, vector<32x32xf32> -> vector<32x32xf32>
    %18 = tpu.transpose %16, [1, 0] : vector<32x1xf32> -> vector<1x32xf32>
    %19 = vector.broadcast %16 : vector<32x1xf32> to vector<32x32xf32>
    %20 = vector.broadcast %18 : vector<1x32xf32> to vector<32x32xf32>
    %21 = arith.addf %19, %20 : vector<32x32xf32>
    %cst_6 = arith.constant 2.000000e+00 : f32
    %22 = vector.broadcast %cst_6 : f32 to vector<32x32xf32>
    %23 = arith.mulf %22, %17 : vector<32x32xf32>
    %24 = arith.subf %21, %23 : vector<32x32xf32>
    %cst_7 = arith.constant 0.000000e+00 : f32
    %25 = vector.broadcast %cst_7 : f32 to vector<32x32xf32>
    %26 = arith.maximumf %24, %25 : vector<32x32xf32>
    %cst_8 = arith.constant 0x7F800000 : f32
    %27 = vector.broadcast %cst_8 : f32 to vector<32x32xf32>
    %28 = arith.select %13, %26, %27 : vector<32x32xi1>, vector<32x32xf32>
    %c0_9 = arith.constant 0 : index
    %c0_10 = arith.constant 0 : index
    %29 = vector.load %arg2[%c0_9, %c0_10] : memref<32x32xf32, #tpu.memory_space<vmem>>, vector<32x32xf32>
    tpu.vector_store %arg2[%c0_9, %c0_10], %28 {strides = array<i32>} : memref<32x32xf32, #tpu.memory_space<vmem>>, vector<32x32xf32>,
    return
  }
}

module attributes {stable_mosaic.version = 11 : i64} {
  func.func @_outputnet_kernel(%arg0: memref<32x128xf32, #tpu.memory_space<vmem>>, %arg1: memref<128x128xf32, #tpu.memory_space<vmem>>, %arg2: memref<1x128xf32, #tpu.memory_space<vmem>>, %arg3: memref<128x128xf32, #tpu.memory_space<vmem>>, %arg4: memref<1x128xf32, #tpu.memory_space<vmem>>, %arg5: memref<128x128xf32, #tpu.memory_space<vmem>>, %arg6: memref<1x128xf32, #tpu.memory_space<vmem>>, %arg7: memref<32x128xf32, #tpu.memory_space<vmem>>) attributes {dimension_semantics = [], scalar_prefetch = 0 : i64, scratch_operands = 0 : i64, tpu.core_type = #tpu.core_type<tc>} {
    %c0 = arith.constant 0 : index
    %c0_0 = arith.constant 0 : index
    %0 = vector.load %arg0[%c0, %c0_0] : memref<32x128xf32, #tpu.memory_space<vmem>>, vector<32x128xf32>
    %c0_1 = arith.constant 0 : index
    %c0_2 = arith.constant 0 : index
    %1 = vector.load %arg1[%c0_1, %c0_2] : memref<128x128xf32, #tpu.memory_space<vmem>>, vector<128x128xf32>
    %cst = arith.constant dense<0.000000e+00> : vector<32x128xf32>
    %2 = tpu.matmul %0, %1, %cst {dimension_numbers = #tpu.dot_dimension_numbers<[1], [0], [0], [1], [0, 0, 1, 1], [], []>} : vector<32x128xf32>, vector<128x128xf32>, vector<32x128xf32> -> vector<32x128xf32>
    %c0_3 = arith.constant 0 : index
    %c0_4 = arith.constant 0 : index
    %3 = vector.load %arg2[%c0_3, %c0_4] : memref<1x128xf32, #tpu.memory_space<vmem>>, vector<1x128xf32>
    %4 = vector.broadcast %3 : vector<1x128xf32> to vector<32x128xf32>
    %5 = arith.addf %2, %4 : vector<32x128xf32>
    %cst_5 = arith.constant 0.000000e+00 : f32
    %6 = vector.broadcast %cst_5 : f32 to vector<32x128xf32>
    %7 = arith.cmpf ogt, %5, %6 : vector<32x128xf32>
    %cst_6 = arith.constant 0.000000e+00 : f32
    %8 = vector.broadcast %cst_6 : f32 to vector<32x128xf32>
    %9 = arith.minimumf %5, %8 : vector<32x128xf32>
    %10 = math.exp %9 : vector<32x128xf32>
    %cst_7 = arith.constant 1.000000e+00 : f32
    %11 = vector.broadcast %cst_7 : f32 to vector<32x128xf32>
    %12 = arith.subf %10, %11 : vector<32x128xf32>
    %13 = arith.select %7, %5, %12 : vector<32x128xi1>, vector<32x128xf32>
    %c0_8 = arith.constant 0 : index
    %c0_9 = arith.constant 0 : index
    %14 = vector.load %arg3[%c0_8, %c0_9] : memref<128x128xf32, #tpu.memory_space<vmem>>, vector<128x128xf32>
    %cst_10 = arith.constant dense<0.000000e+00> : vector<32x128xf32>
    %15 = tpu.matmul %13, %14, %cst_10 {dimension_numbers = #tpu.dot_dimension_numbers<[1], [0], [0], [1], [0, 0, 1, 1], [], []>} : vector<32x128xf32>, vector<128x128xf32>, vector<32x128xf32> -> vector<32x128xf32>
    %c0_11 = arith.constant 0 : index
    %c0_12 = arith.constant 0 : index
    %16 = vector.load %arg4[%c0_11, %c0_12] : memref<1x128xf32, #tpu.memory_space<vmem>>, vector<1x128xf32>
    %17 = vector.broadcast %16 : vector<1x128xf32> to vector<32x128xf32>
    %18 = arith.addf %15, %17 : vector<32x128xf32>
    %cst_13 = arith.constant 0.000000e+00 : f32
    %19 = vector.broadcast %cst_13 : f32 to vector<32x128xf32>
    %20 = arith.cmpf ogt, %18, %19 : vector<32x128xf32>
    %cst_14 = arith.constant 0.000000e+00 : f32
    %21 = vector.broadcast %cst_14 : f32 to vector<32x128xf32>
    %22 = arith.minimumf %18, %21 : vector<32x128xf32>
    %23 = math.exp %22 : vector<32x128xf32>
    %cst_15 = arith.constant 1.000000e+00 : f32
    %24 = vector.broadcast %cst_15 : f32 to vector<32x128xf32>
    %25 = arith.subf %23, %24 : vector<32x128xf32>
    %26 = arith.select %20, %18, %25 : vector<32x128xi1>, vector<32x128xf32>
    %c0_16 = arith.constant 0 : index
    %c0_17 = arith.constant 0 : index
    %27 = vector.load %arg5[%c0_16, %c0_17] : memref<128x128xf32, #tpu.memory_space<vmem>>, vector<128x128xf32>
    %cst_18 = arith.constant dense<0.000000e+00> : vector<32x128xf32>
    %28 = tpu.matmul %26, %27, %cst_18 {dimension_numbers = #tpu.dot_dimension_numbers<[1], [0], [0], [1], [0, 0, 1, 1], [], []>} : vector<32x128xf32>, vector<128x128xf32>, vector<32x128xf32> -> vector<32x128xf32>
    %c0_19 = arith.constant 0 : index
    %c0_20 = arith.constant 0 : index
    %29 = vector.load %arg6[%c0_19, %c0_20] : memref<1x128xf32, #tpu.memory_space<vmem>>, vector<1x128xf32>
    %30 = vector.broadcast %29 : vector<1x128xf32> to vector<32x128xf32>
    %31 = arith.addf %28, %30 : vector<32x128xf32>
    %c0_21 = arith.constant 0 : index
    %c0_22 = arith.constant 0 : index
    %32 = vector.load %arg7[%c0_21, %c0_22] : memref<32x128xf32, #tpu.memory_space<vmem>>, vector<32x128xf32>
    tpu.vector_store %arg7[%c0_21, %c0_22], %31 {strides = array<i32>} : memref<32x128xf32, #tpu.memory_space<vmem>>, vector<32x128xf32>,
    return
  }
}

</mosaic_0001>

<llo_original>
// kernel: neg.2
$region0: #{neg.2}
  #allocation0 [shape = 's32[1]{0}', space=sflag, size = 0x4, scoped, tag = 'scoped memory for neg.2']
  %s0 = inlined_call_operand.vmem [shape: f32[32,32], index: 0, kind: input, shape index: {}]
  %s1 = inlined_call_operand.vmem [shape: f32[32,32], index: 1, kind: output, shape index: {}]
  %v2 = vld [vmem:[%s0] sm:$0xff]
  %3 = xla_tuple %v2
  %4 = xla_tuple %3
  %v5 = vxor.u32 %v2, 2147483648
  %6 = xla_tuple %v5
  %7 = vst [vmem:[%s1] sm:$0xff] %v5
  %s8 = scalar_lea.vmem %s0, 8
  %v9 = vld [vmem:[%s8] sm:$0xff]
  %10 = xla_tuple %v9
  %11 = xla_tuple %10
  %v12 = vxor.u32 %v9, 2147483648
  %13 = xla_tuple %v12
  %s14 = scalar_lea.vmem %s1, 8
  %15 = vst [vmem:[%s14] sm:$0xff] %v12
  %s16 = scalar_lea.vmem %s0, 16
  %v17 = vld [vmem:[%s16] sm:$0xff]
  %18 = xla_tuple %v17
  %19 = xla_tuple %18
  %v20 = vxor.u32 %v17, 2147483648
  %21 = xla_tuple %v20
  %s22 = scalar_lea.vmem %s1, 16
  %23 = vst [vmem:[%s22] sm:$0xff] %v20
  %s24 = scalar_lea.vmem %s0, 24
  %v25 = vld [vmem:[%s24] sm:$0xff]
  %26 = xla_tuple %v25
  %27 = xla_tuple %26
  %v28 = vxor.u32 %v25, 2147483648
  %29 = xla_tuple %v28
  %s30 = scalar_lea.vmem %s1, 24
  %31 = vst [vmem:[%s30] sm:$0xff] %v28

// kernel: forward.5
$region0: #{forward.5}
  #allocation0 [shape = 'u32[]', space=smem, size = 0x4, offset = 0x4, fixed_abs, tag = 'smem constant byte address 0x4 - core index']
  #allocation1 [shape = 'u32[144,128]{1,0:T(1,128)}', space=vmem, size = 0x12000, scoped, tag = 'internal scratch']
  %s0 = inlined_call_operand.vmem [shape: f32[32,128], index: 0, kind: input, shape index: {}]
  %s1 = inlined_call_operand.vmem [shape: f32[128,128], index: 1, kind: input, shape index: {}]
  %s2 = inlined_call_operand.vmem [shape: f32[1,128], index: 2, kind: input, shape index: {}]
  %s3 = inlined_call_operand.hbm [shape: f32[128,128], index: 3, kind: input, shape index: {}]
  %s4 = inlined_call_operand.vmem [shape: f32[1,128], index: 4, kind: input, shape index: {}]
  %s5 = inlined_call_operand.hbm [shape: f32[128,128], index: 5, kind: input, shape index: {}]
  %s6 = inlined_call_operand.vmem [shape: f32[1,128], index: 6, kind: input, shape index: {}]
  %s7 = inlined_call_operand.vmem [shape: f32[32,128], index: 7, kind: output, shape index: {0}]
  %s8 = inlined_call_operand.vmem [shape: f32[32,32], index: 8, kind: output, shape index: {1}]
  %9 = xla_tuple %s7, %s8
  %s10 = sld [smem:[#allocation0]]
  $region54: #{forward.5} parent=0
    _
  %s12 = ssub.s32 1, %s10
  %s13 = scalar_select 0, %s12, %s10
  $region1: #{forward.5} parent=0
    #allocation2 [shape = 'u8[65536]{0}', space=vmem, size = 0x10000, scoped, tag = 'input window, operand 3, single buffered']
    #allocation3 [shape = 's32[1]{0}', space=sflag, size = 0x4, scoped, tag = 'scoped memory for forward.5']
    #allocation4 [shape = 'u8[65536]{0}', space=vmem, size = 0x10000, scoped, tag = 'input window, operand 5, single buffered']
    #allocation5 [shape = 's32[1]{0}', space=sflag, size = 0x4, scoped, tag = 'scoped memory for forward.5']
    %14 = vsyncpa [#allocation3], 0
    %15 = vsyncpa [#allocation5], 0
    // Predicated region
    $region2: #{forward.5} parent=1 // pred_check
      _
    $region3: #{forward.5} parent=1 // pred_check_branch
      %17 = sbr.rel (0) target = $region5
    $region4: #{forward.5} parent=1 // pred_region
      _
    $region5: #{forward.5} parent=1 // pred_fallthru
      _
    // Predicated region
    $region6: #{forward.5} parent=1 // pred_check
      _
    $region7: #{forward.5} parent=1 // pred_check_branch
      %19 = sbr.rel (0) target = $region9
    $region8: #{forward.5} parent=1 // pred_region
      _
    $region9: #{forward.5} parent=1 // pred_fallthru
      _
    // Predicated region
    $region10: #{forward.5} parent=1 // pred_check
      _
    $region11: #{forward.5} parent=1 // pred_check_branch
      %21 = sbr.rel (0) target = $region13
    $region12: #{forward.5} parent=1 // pred_region
      _
    $region13: #{forward.5} parent=1 // pred_fallthru
      _
    // Predicated region
    $region14: #{forward.5} parent=1 // pred_check
      _
    $region15: #{forward.5} parent=1 // pred_check_branch
      %23 = sbr.rel (0) target = $region17
    $region16: #{forward.5} parent=1 // pred_region
      %s25 = ssub.s32 2048, 2048
      %26 = vsyncadd [#allocation3], %s25
      %s27 = sshll.u32 [#allocation2], 4
      %s28 = int_to_ptr.vmem [resolvable:$true] %s27
      %33 = dma.hbm_to_vmem [thread:$0]  %s3, 2048, %s28, [#allocation3], 128, 128, 8
    $region17: #{forward.5} parent=1 // pred_fallthru
      _
    // Predicated region
    $region18: #{forward.5} parent=1 // pred_check
      _
    $region19: #{forward.5} parent=1 // pred_check_branch
      %35 = sbr.rel (0) target = $region21
    $region20: #{forward.5} parent=1 // pred_region
      _
    $region21: #{forward.5} parent=1 // pred_fallthru
      _
    // Predicated region
    $region22: #{forward.5} parent=1 // pred_check
      _
    $region23: #{forward.5} parent=1 // pred_check_branch
      %37 = sbr.rel (0) target = $region25
    $region24: #{forward.5} parent=1 // pred_region
      %s39 = ssub.s32 2048, 2048
      %40 = vsyncadd [#allocation5], %s39
      %s41 = sshll.u32 [#allocation4], 4
      %s42 = int_to_ptr.vmem [resolvable:$true] %s41
      %47 = dma.hbm_to_vmem [thread:$0]  %s5, 2048, %s42, [#allocation5], 128, 128, 8
    $region25: #{forward.5} parent=1 // pred_fallthru
      _
    // Predicated region
    $region26: #{forward.5} parent=1 // pred_check
      _
    $region27: #{forward.5} parent=1 // pred_check_branch
      %49 = sbr.rel (0) target = $region29
    $region28: #{forward.5} parent=1 // pred_region
      _
    $region29: #{forward.5} parent=1 // pred_fallthru
      _
    // Predicated region
    $region30: #{forward.5} parent=1 // pred_check
      _
    $region31: #{forward.5} parent=1 // pred_check_branch
      %51 = sbr.rel (0) target = $region33
    $region32: #{forward.5} parent=1 // pred_region
      %52 = dma.done [#allocation3], 2048
    $region33: #{forward.5} parent=1 // pred_fallthru
      _
    // Predicated region
    $region34: #{forward.5} parent=1 // pred_check
      _
    $region35: #{forward.5} parent=1 // pred_check_branch
      %54 = sbr.rel (0) target = $region37
    $region36: #{forward.5} parent=1 // pred_region
      %55 = dma.done [#allocation5], 2048
    $region37: #{forward.5} parent=1 // pred_fallthru
      _
    %v56 = vld [vmem:[%s0] sm:$0xff]
    %v57 = vld [vmem:[%s0 + $0x8] sm:$0xff]
    %v58 = vld [vmem:[%s0 + $0x10] sm:$0xff]
    %v59 = vld [vmem:[%s0 + $0x18] sm:$0xff]
    %v60 = vld [vmem:[%s1] sm:$0xff]
    %v61 = vld [vmem:[%s1 + $0x8] sm:$0xff]
    %v62 = vld [vmem:[%s1 + $0x10] sm:$0xff]
    %v63 = vld [vmem:[%s1 + $0x18] sm:$0xff]
    %v64 = vld [vmem:[%s1 + $0x20] sm:$0xff]
    %v65 = vld [vmem:[%s1 + $0x28] sm:$0xff]
    %v66 = vld [vmem:[%s1 + $0x30] sm:$0xff]
    %v67 = vld [vmem:[%s1 + $0x38] sm:$0xff]
    %v68 = vld [vmem:[%s1 + $0x40] sm:$0xff]
    %v69 = vld [vmem:[%s1 + $0x48] sm:$0xff]
    %v70 = vld [vmem:[%s1 + $0x50] sm:$0xff]
    %v71 = vld [vmem:[%s1 + $0x58] sm:$0xff]
    %v72 = vld [vmem:[%s1 + $0x60] sm:$0xff]
    %v73 = vld [vmem:[%s1 + $0x68] sm:$0xff]
    %v74 = vld [vmem:[%s1 + $0x70] sm:$0xff]
    %v75 = vld [vmem:[%s1 + $0x78] sm:$0xff]
    %v76 = vld [vmem:[%s2] sm:$0x1]
    %v78 = vlaneseq
    %v79 = vshrl.u32 %v78, 7
    %v80 = vsub.s32 0, %v79
    %v81 = vrot.slane %v76, %v80
    %83 = vmatprep.subr.mxu0 0.0
    %84 = vmatpush1.msra.mxu0 %v60
    %85 = vmatprep.subr.mxu0 0.0
    %86 = vmatpush1.msra.mxu0 %v61
    %87 = vmatprep.subr.mxu0 0.0
    %88 = vmatpush1.msra.mxu0 %v62
    %89 = vmatprep.subr.mxu0 0.0
    %90 = vmatpush1.msra.mxu0 %v63
    %91 = vmatprep.subr.mxu0 0.0
    %92 = vmatpush1.msra.mxu0 %v64
    %93 = vmatprep.subr.mxu0 0.0
    %94 = vmatpush1.msra.mxu0 %v65
    %95 = vmatprep.subr.mxu0 0.0
    %96 = vmatpush1.msra.mxu0 %v66
    %97 = vmatprep.subr.mxu0 0.0
    %98 = vmatpush1.msra.mxu0 %v67
    %99 = vmatprep.subr.mxu0 0.0
    %100 = vmatpush1.msra.mxu0 %v68
    %101 = vmatprep.subr.mxu0 0.0
    %102 = vmatpush1.msra.mxu0 %v69
    %103 = vmatprep.subr.mxu0 0.0
    %104 = vmatpush1.msra.mxu0 %v70
    %105 = vmatprep.subr.mxu0 0.0
    %106 = vmatpush1.msra.mxu0 %v71
    %107 = vmatprep.subr.mxu0 0.0
    %108 = vmatpush1.msra.mxu0 %v72
    %109 = vmatprep.subr.mxu0 0.0
    %110 = vmatpush1.msra.mxu0 %v73
    %111 = vmatprep.subr.mxu0 0.0
    %112 = vmatpush1.msra.mxu0 %v74
    %113 = vmatprep.subr.mxu0 0.0
    %114 = vmatpush1.msra.mxu0 %v75
    %115 = vmatprep.subr.mxu0 0.0
    %116 = vmatpush1.msra.mxu0 0.0
    %117 = vmatprep.subr.mxu0 0.0
    %118 = vmatpush1.msra.mxu0 0.0
    %119 = vmatprep.subr.mxu0 0.0
    %120 = vmatpush1.msra.mxu0 0.0
    %121 = vmatprep.subr.mxu0 0.0
    %122 = vmatpush1.msra.mxu0 0.0
    %123 = vmatprep.subr.mxu0 0.0
    %124 = vmatpush1.msra.mxu0 0.0
    %125 = vmatprep.subr.mxu0 0.0
    %126 = vmatpush1.msra.mxu0 0.0
    %127 = vmatprep.subr.mxu0 0.0
    %128 = vmatpush1.msra.mxu0 0.0
    %129 = vmatprep.subr.mxu0 0.0
    %130 = vmatpush1.msra.mxu0 0.0
    %131 = vmatprep.subr.mxu0 0.0
    %132 = vmatpush1.msra.mxu0 0.0
    %133 = vmatprep.subr.mxu0 0.0
    %134 = vmatpush1.msra.mxu0 0.0
    %135 = vmatprep.subr.mxu0 0.0
    %136 = vmatpush1.msra.mxu0 0.0
    %137 = vmatprep.subr.mxu0 0.0
    %138 = vmatpush1.msra.mxu0 0.0
    %139 = vmatprep.subr.mxu0 0.0
    %140 = vmatpush1.msra.mxu0 0.0
    %141 = vmatprep.subr.mxu0 0.0
    %142 = vmatpush1.msra.mxu0 0.0
    %143 = vmatprep.subr.mxu0 0.0
    %144 = vmatpush1.msra.mxu0 0.0
    %145 = vmatprep.subr.mxu0 0.0
    %146 = vmatpush1.msra.mxu0 0.0
    %147 = vmatprep.mubr.f32.mxu0 0.0
    %148 = vmatmul.mubr.f32.gmra.mrb[0].mxu0 %v56
    %v149 = vpop.f32.mrb[0].mxu0
    %v150 = vadd.f32 %v81, %v149
    %v151 = vpop.f32.mrb[0].mxu0
    %152 = vmatprep.mubr.f32.mxu0 0.0
    %153 = vmatmul.mubr.f32.gmra.mrb[0].mxu0 %v57
    %v154 = vpop.f32.mrb[0].mxu0
    %v155 = vadd.f32 %v81, %v154
    %v156 = vpop.f32.mrb[0].mxu0
    %157 = vmatprep.mubr.f32.mxu0 0.0
    %158 = vmatmul.mubr.f32.gmra.mrb[0].mxu0 %v58
    %v159 = vpop.f32.mrb[0].mxu0
    %v160 = vadd.f32 %v81, %v159
    %v161 = vpop.f32.mrb[0].mxu0
    %162 = vmatprep.mubr.f32.mxu0 0.0
    %163 = vmatmul.mubr.f32.gmra.mrb[0].mxu0 %v59
    %v164 = vpop.f32.mrb[0].mxu0
    %v165 = vadd.f32 %v81, %v164
    %v166 = vpop.f32.mrb[0].mxu0
    %167 = vdwg.mxu0
    %vm168 = vcmp.gt.f32.partialorder %v150, 0.0
    %vm169 = vcmp.gt.f32.partialorder %v155, 0.0
    %vm170 = vcmp.gt.f32.partialorder %v160, 0.0
    %vm171 = vcmp.gt.f32.partialorder %v165, 0.0
    %v172 = vmin.f32 %v150, 0.0
    %v173 = vmin.f32 %v155, 0.0
    %v174 = vmin.f32 %v160, 0.0
    %v175 = vmin.f32 %v165, 0.0
    %v176 = vmul.f32 %v172, 1.442695
    %v177 = vpow.pop %v176
    %v178 = vmul.f32 %v173, 1.442695
    %v179 = vpow.pop %v178
    %v180 = vmul.f32 %v174, 1.442695
    %v181 = vpow.pop %v180
    %v182 = vmul.f32 %v175, 1.442695
    %v183 = vpow.pop %v182
    %v184 = vsub.f32 %v177, 1.0
    %v185 = vsub.f32 %v179, 1.0
    %v186 = vsub.f32 %v181, 1.0
    %v187 = vsub.f32 %v183, 1.0
    %v188 = vsel %vm168, %v150, %v184
    %v189 = vsel %vm169, %v155, %v185
    %v190 = vsel %vm170, %v160, %v186
    %v191 = vsel %vm171, %v165, %v187
    %v192 = vld [vmem:[#allocation2] sm:$0xff]
    %v193 = vld [vmem:[#allocation2 + $0x8] sm:$0xff]
    %v194 = vld [vmem:[#allocation2 + $0x10] sm:$0xff]
    %v195 = vld [vmem:[#allocation2 + $0x18] sm:$0xff]
    %v196 = vld [vmem:[#allocation2 + $0x20] sm:$0xff]
    %v197 = vld [vmem:[#allocation2 + $0x28] sm:$0xff]
    %v198 = vld [vmem:[#allocation2 + $0x30] sm:$0xff]
    %v199 = vld [vmem:[#allocation2 + $0x38] sm:$0xff]
    %v200 = vld [vmem:[#allocation2 + $0x40] sm:$0xff]
    %v201 = vld [vmem:[#allocation2 + $0x48] sm:$0xff]
    %v202 = vld [vmem:[#allocation2 + $0x50] sm:$0xff]
    %v203 = vld [vmem:[#allocation2 + $0x58] sm:$0xff]
    %v204 = vld [vmem:[#allocation2 + $0x60] sm:$0xff]
    %v205 = vld [vmem:[#allocation2 + $0x68] sm:$0xff]
    %v206 = vld [vmem:[#allocation2 + $0x70] sm:$0xff]
    %v207 = vld [vmem:[#allocation2 + $0x78] sm:$0xff]
    %v208 = vld [vmem:[%s4] sm:$0x1]
    %v210 = vlaneseq
    %v211 = vshrl.u32 %v210, 7
    %v212 = vsub.s32 0, %v211
    %v213 = vrot.slane %v208, %v212
    %215 = vmatprep.subr.mxu0 0.0
    %216 = vmatpush1.msra.mxu0 %v192
    %217 = vmatprep.subr.mxu0 0.0
    %218 = vmatpush1.msra.mxu0 %v193
    %219 = vmatprep.subr.mxu0 0.0
    %220 = vmatpush1.msra.mxu0 %v194
    %221 = vmatprep.subr.mxu0 0.0
    %222 = vmatpush1.msra.mxu0 %v195
    %223 = vmatprep.subr.mxu0 0.0
    %224 = vmatpush1.msra.mxu0 %v196
    %225 = vmatprep.subr.mxu0 0.0
    %226 = vmatpush1.msra.mxu0 %v197
    %227 = vmatprep.subr.mxu0 0.0
    %228 = vmatpush1.msra.mxu0 %v198
    %229 = vmatprep.subr.mxu0 0.0
    %230 = vmatpush1.msra.mxu0 %v199
    %231 = vmatprep.subr.mxu0 0.0
    %232 = vmatpush1.msra.mxu0 %v200
    %233 = vmatprep.subr.mxu0 0.0
    %234 = vmatpush1.msra.mxu0 %v201
    %235 = vmatprep.subr.mxu0 0.0
    %236 = vmatpush1.msra.mxu0 %v202
    %237 = vmatprep.subr.mxu0 0.0
    %238 = vmatpush1.msra.mxu0 %v203
    %239 = vmatprep.subr.mxu0 0.0
    %240 = vmatpush1.msra.mxu0 %v204
    %241 = vmatprep.subr.mxu0 0.0
    %242 = vmatpush1.msra.mxu0 %v205
    %243 = vmatprep.subr.mxu0 0.0
    %244 = vmatpush1.msra.mxu0 %v206
    %245 = vmatprep.subr.mxu0 0.0
    %246 = vmatpush1.msra.mxu0 %v207
    %247 = vmatprep.subr.mxu0 0.0
    %248 = vmatpush1.msra.mxu0 0.0
    %249 = vmatprep.subr.mxu0 0.0
    %250 = vmatpush1.msra.mxu0 0.0
    %251 = vmatprep.subr.mxu0 0.0
    %252 = vmatpush1.msra.mxu0 0.0
    %253 = vmatprep.subr.mxu0 0.0
    %254 = vmatpush1.msra.mxu0 0.0
    %255 = vmatprep.subr.mxu0 0.0
    %256 = vmatpush1.msra.mxu0 0.0
    %257 = vmatprep.subr.mxu0 0.0
    %258 = vmatpush1.msra.mxu0 0.0
    %259 = vmatprep.subr.mxu0 0.0
    %260 = vmatpush1.msra.mxu0 0.0
    %261 = vmatprep.subr.mxu0 0.0
    %262 = vmatpush1.msra.mxu0 0.0
    %263 = vmatprep.subr.mxu0 0.0
    %264 = vmatpush1.msra.mxu0 0.0
    %265 = vmatprep.subr.mxu0 0.0
    %266 = vmatpush1.msra.mxu0 0.0
    %267 = vmatprep.subr.mxu0 0.0
    %268 = vmatpush1.msra.mxu0 0.0
    %269 = vmatprep.subr.mxu0 0.0
    %270 = vmatpush1.msra.mxu0 0.0
    %271 = vmatprep.subr.mxu0 0.0
    %272 = vmatpush1.msra.mxu0 0.0
    %273 = vmatprep.subr.mxu0 0.0
    %274 = vmatpush1.msra.mxu0 0.0
    %275 = vmatprep.subr.mxu0 0.0
    %276 = vmatpush1.msra.mxu0 0.0
    %277 = vmatprep.subr.mxu0 0.0
    %278 = vmatpush1.msra.mxu0 0.0
    %279 = vmatprep.mubr.f32.mxu0 0.0
    %280 = vmatmul.mubr.f32.gmra.mrb[0].mxu0 %v188
    %v281 = vpop.f32.mrb[0].mxu0
    %v282 = vadd.f32 %v213, %v281
    %v283 = vpop.f32.mrb[0].mxu0
    %284 = vmatprep.mubr.f32.mxu0 0.0
    %285 = vmatmul.mubr.f32.gmra.mrb[0].mxu0 %v189
    %v286 = vpop.f32.mrb[0].mxu0
    %v287 = vadd.f32 %v213, %v286
    %v288 = vpop.f32.mrb[0].mxu0
    %289 = vmatprep.mubr.f32.mxu0 0.0
    %290 = vmatmul.mubr.f32.gmra.mrb[0].mxu0 %v190
    %v291 = vpop.f32.mrb[0].mxu0
    %v292 = vadd.f32 %v213, %v291
    %v293 = vpop.f32.mrb[0].mxu0
    %294 = vmatprep.mubr.f32.mxu0 0.0
    %295 = vmatmul.mubr.f32.gmra.mrb[0].mxu0 %v191
    %v296 = vpop.f32.mrb[0].mxu0
    %v297 = vadd.f32 %v213, %v296
    %v298 = vpop.f32.mrb[0].mxu0
    %299 = vdwg.mxu0
    %vm300 = vcmp.gt.f32.partialorder %v282, 0.0
    %vm301 = vcmp.gt.f32.partialorder %v287, 0.0
    %vm302 = vcmp.gt.f32.partialorder %v292, 0.0
    %vm303 = vcmp.gt.f32.partialorder %v297, 0.0
    %v304 = vmin.f32 %v282, 0.0
    %v305 = vmin.f32 %v287, 0.0
    %v306 = vmin.f32 %v292, 0.0
    %v307 = vmin.f32 %v297, 0.0
    %v308 = vmul.f32 %v304, 1.442695
    %v309 = vpow.pop %v308
    %v310 = vmul.f32 %v305, 1.442695
    %v311 = vpow.pop %v310
    %v312 = vmul.f32 %v306, 1.442695
    %v313 = vpow.pop %v312
    %v314 = vmul.f32 %v307, 1.442695
    %v315 = vpow.pop %v314
    %v316 = vsub.f32 %v309, 1.0
    %v317 = vsub.f32 %v311, 1.0
    %v318 = vsub.f32 %v313, 1.0
    %v319 = vsub.f32 %v315, 1.0
    %v320 = vsel %vm300, %v282, %v316
    %v321 = vsel %vm301, %v287, %v317
    %v322 = vsel %vm302, %v292, %v318
    %v323 = vsel %vm303, %v297, %v319
    %v324 = vld [vmem:[#allocation4] sm:$0xff]
    %v325 = vld [vmem:[#allocation4 + $0x8] sm:$0xff]
    %v326 = vld [vmem:[#allocation4 + $0x10] sm:$0xff]
    %v327 = vld [vmem:[#allocation4 + $0x18] sm:$0xff]
    %v328 = vld [vmem:[#allocation4 + $0x20] sm:$0xff]
    %v329 = vld [vmem:[#allocation4 + $0x28] sm:$0xff]
    %v330 = vld [vmem:[#allocation4 + $0x30] sm:$0xff]
    %v331 = vld [vmem:[#allocation4 + $0x38] sm:$0xff]
    %v332 = vld [vmem:[#allocation4 + $0x40] sm:$0xff]
    %v333 = vld [vmem:[#allocation4 + $0x48] sm:$0xff]
    %v334 = vld [vmem:[#allocation4 + $0x50] sm:$0xff]
    %v335 = vld [vmem:[#allocation4 + $0x58] sm:$0xff]
    %v336 = vld [vmem:[#allocation4 + $0x60] sm:$0xff]
    %v337 = vld [vmem:[#allocation4 + $0x68] sm:$0xff]
    %v338 = vld [vmem:[#allocation4 + $0x70] sm:$0xff]
    %v339 = vld [vmem:[#allocation4 + $0x78] sm:$0xff]
    %v340 = vld [vmem:[%s6] sm:$0x1]
    %v342 = vlaneseq
    %v343 = vshrl.u32 %v342, 7
    %v344 = vsub.s32 0, %v343
    %v345 = vrot.slane %v340, %v344
    %347 = vmatprep.subr.mxu0 0.0
    %348 = vmatpush1.msra.mxu0 %v324
    %349 = vmatprep.subr.mxu0 0.0
    %350 = vmatpush1.msra.mxu0 %v325
    %351 = vmatprep.subr.mxu0 0.0
    %352 = vmatpush1.msra.mxu0 %v326
    %353 = vmatprep.subr.mxu0 0.0
    %354 = vmatpush1.msra.mxu0 %v327
    %355 = vmatprep.subr.mxu0 0.0
    %356 = vmatpush1.msra.mxu0 %v328
    %357 = vmatprep.subr.mxu0 0.0
    %358 = vmatpush1.msra.mxu0 %v329
    %359 = vmatprep.subr.mxu0 0.0
    %360 = vmatpush1.msra.mxu0 %v330
    %361 = vmatprep.subr.mxu0 0.0
    %362 = vmatpush1.msra.mxu0 %v331
    %363 = vmatprep.subr.mxu0 0.0
    %364 = vmatpush1.msra.mxu0 %v332
    %365 = vmatprep.subr.mxu0 0.0
    %366 = vmatpush1.msra.mxu0 %v333
    %367 = vmatprep.subr.mxu0 0.0
    %368 = vmatpush1.msra.mxu0 %v334
    %369 = vmatprep.subr.mxu0 0.0
    %370 = vmatpush1.msra.mxu0 %v335
    %371 = vmatprep.subr.mxu0 0.0
    %372 = vmatpush1.msra.mxu0 %v336
    %373 = vmatprep.subr.mxu0 0.0
    %374 = vmatpush1.msra.mxu0 %v337
    %375 = vmatprep.subr.mxu0 0.0
    %376 = vmatpush1.msra.mxu0 %v338
    %377 = vmatprep.subr.mxu0 0.0
    %378 = vmatpush1.msra.mxu0 %v339
    %379 = vmatprep.subr.mxu0 0.0
    %380 = vmatpush1.msra.mxu0 0.0
    %381 = vmatprep.subr.mxu0 0.0
    %382 = vmatpush1.msra.mxu0 0.0
    %383 = vmatprep.subr.mxu0 0.0
    %384 = vmatpush1.msra.mxu0 0.0
    %385 = vmatprep.subr.mxu0 0.0
    %386 = vmatpush1.msra.mxu0 0.0
    %387 = vmatprep.subr.mxu0 0.0
    %388 = vmatpush1.msra.mxu0 0.0
    %389 = vmatprep.subr.mxu0 0.0
    %390 = vmatpush1.msra.mxu0 0.0
    %391 = vmatprep.subr.mxu0 0.0
    %392 = vmatpush1.msra.mxu0 0.0
    %393 = vmatprep.subr.mxu0 0.0
    %394 = vmatpush1.msra.mxu0 0.0
    %395 = vmatprep.subr.mxu0 0.0
    %396 = vmatpush1.msra.mxu0 0.0
    %397 = vmatprep.subr.mxu0 0.0
    %398 = vmatpush1.msra.mxu0 0.0
    %399 = vmatprep.subr.mxu0 0.0
    %400 = vmatpush1.msra.mxu0 0.0
    %401 = vmatprep.subr.mxu0 0.0
    %402 = vmatpush1.msra.mxu0 0.0
    %403 = vmatprep.subr.mxu0 0.0
    %404 = vmatpush1.msra.mxu0 0.0
    %405 = vmatprep.subr.mxu0 0.0
    %406 = vmatpush1.msra.mxu0 0.0
    %407 = vmatprep.subr.mxu0 0.0
    %408 = vmatpush1.msra.mxu0 0.0
    %409 = vmatprep.subr.mxu0 0.0
    %410 = vmatpush1.msra.mxu0 0.0
    %411 = vmatprep.mubr.f32.mxu0 0.0
    %412 = vmatmul.mubr.f32.gmra.mrb[0].mxu0 %v320
    %v413 = vpop.f32.mrb[0].mxu0
    %v414 = vadd.f32 %v345, %v413
    %v415 = vpop.f32.mrb[0].mxu0
    %416 = vmatprep.mubr.f32.mxu0 0.0
    %417 = vmatmul.mubr.f32.gmra.mrb[0].mxu0 %v321
    %v418 = vpop.f32.mrb[0].mxu0
    %v419 = vadd.f32 %v345, %v418
    %v420 = vpop.f32.mrb[0].mxu0
    %421 = vmatprep.mubr.f32.mxu0 0.0
    %422 = vmatmul.mubr.f32.gmra.mrb[0].mxu0 %v322
    %v423 = vpop.f32.mrb[0].mxu0
    %v424 = vadd.f32 %v345, %v423
    %v425 = vpop.f32.mrb[0].mxu0
    %426 = vmatprep.mubr.f32.mxu0 0.0
    %427 = vmatmul.mubr.f32.gmra.mrb[0].mxu0 %v323
    %v428 = vpop.f32.mrb[0].mxu0
    %v429 = vadd.f32 %v345, %v428
    %v430 = vpop.f32.mrb[0].mxu0
    %431 = vdwg.mxu0
    %vm432 = vcmp.gt.f32.partialorder %v414, 0.0
    %vm433 = vcmp.gt.f32.partialorder %v419, 0.0
    %vm434 = vcmp.gt.f32.partialorder %v424, 0.0
    %vm435 = vcmp.gt.f32.partialorder %v429, 0.0
    %v436 = vmin.f32 %v414, 0.0
    %v437 = vmin.f32 %v419, 0.0
    %v438 = vmin.f32 %v424, 0.0
    %v439 = vmin.f32 %v429, 0.0
    %v440 = vmul.f32 %v436, 1.442695
    %v441 = vpow.pop %v440
    %v442 = vmul.f32 %v437, 1.442695
    %v443 = vpow.pop %v442
    %v444 = vmul.f32 %v438, 1.442695
    %v445 = vpow.pop %v444
    %v446 = vmul.f32 %v439, 1.442695
    %v447 = vpow.pop %v446
    %v448 = vsub.f32 %v441, 1.0
    %v449 = vsub.f32 %v443, 1.0
    %v450 = vsub.f32 %v445, 1.0
    %v451 = vsub.f32 %v447, 1.0
    %v452 = vsel %vm432, %v414, %v448
    %v453 = vsel %vm433, %v419, %v449
    %v454 = vsel %vm434, %v424, %v450
    %v455 = vsel %vm435, %v429, %v451
    %456 = vst [vmem:[%s7] sm:$0xff] %v452
    %457 = vst [vmem:[%s7 + $0x8] sm:$0xff] %v453
    %458 = vst [vmem:[%s7 + $0x10] sm:$0xff] %v454
    %459 = vst [vmem:[%s7 + $0x18] sm:$0xff] %v455
    %v460 = vlaneseq
    %v461 = vshrl.u32 %v460, 7
    %v462 = vadd.s32 %v461, 8
    %v463 = vadd.s32 %v461, 16
    %v464 = vadd.s32 %v461, 24
    %v465 = vlaneseq
    %v466 = vand.u32 %v465, 127
    %vm467 = vcmp.eq.s32.totalorder %v461, %v466
    %vm468 = vcmp.eq.s32.totalorder %v462, %v466
    %vm469 = vcmp.eq.s32.totalorder %v463, %v466
    %vm470 = vcmp.eq.s32.totalorder %v464, %v466
    %v471 = vmul.f32 %v452, %v452
    %v472 = vmul.f32 %v453, %v453
    %v473 = vmul.f32 %v454, %v454
    %v474 = vmul.f32 %v455, %v455
    %475 = vadd.xlane.f32.xlu0 %v471
    %v476 = vpop.xlane.xlu0 %475
    %477 = vadd.xlane.f32.xlu0 %v472
    %v478 = vpop.xlane.xlu0 %477
    %479 = vadd.xlane.f32.xlu0 %v473
    %v480 = vpop.xlane.xlu0 %479
    %481 = vadd.xlane.f32.xlu0 %v474
    %v482 = vpop.xlane.xlu0 %481
    %483 = vmatprep.subr.mxu0 0.0
    %484 = vmatpush1.xpose.msra.mxu0 %v452
    %485 = vmatprep.subr.mxu0 0.0
    %486 = vmatpush1.xpose.msra.mxu0 %v453
    %487 = vmatprep.subr.mxu0 0.0
    %488 = vmatpush1.xpose.msra.mxu0 %v454
    %489 = vmatprep.subr.mxu0 0.0
    %490 = vmatpush1.xpose.msra.mxu0 %v455
    %491 = vmatprep.subr.mxu0 0.0
    %492 = vmatpush1.xpose.msra.mxu0 0.0
    %493 = vmatprep.subr.mxu0 0.0
    %494 = vmatpush1.xpose.msra.mxu0 0.0
    %495 = vmatprep.subr.mxu0 0.0
    %496 = vmatpush1.xpose.msra.mxu0 0.0
    %497 = vmatprep.subr.mxu0 0.0
    %498 = vmatpush1.xpose.msra.mxu0 0.0
    %499 = vmatprep.subr.mxu0 0.0
    %500 = vmatpush1.xpose.msra.mxu0 0.0
    %501 = vmatprep.subr.mxu0 0.0
    %502 = vmatpush1.xpose.msra.mxu0 0.0
    %503 = vmatprep.subr.mxu0 0.0
    %504 = vmatpush1.xpose.msra.mxu0 0.0
    %505 = vmatprep.subr.mxu0 0.0
    %506 = vmatpush1.xpose.msra.mxu0 0.0
    %507 = vmatprep.subr.mxu0 0.0
    %508 = vmatpush1.xpose.msra.mxu0 0.0
    %509 = vmatprep.subr.mxu0 0.0
    %510 = vmatpush1.xpose.msra.mxu0 0.0
    %511 = vmatprep.subr.mxu0 0.0
    %512 = vmatpush1.xpose.msra.mxu0 0.0
    %513 = vmatprep.subr.mxu0 0.0
    %514 = vmatpush1.xpose.msra.mxu0 0.0
    %515 = vmatprep.subr.mxu0 0.0
    %516 = vmatpush1.xpose.msra.mxu0 0.0
    %517 = vmatprep.subr.mxu0 0.0
    %518 = vmatpush1.xpose.msra.mxu0 0.0
    %519 = vmatprep.subr.mxu0 0.0
    %520 = vmatpush1.xpose.msra.mxu0 0.0
    %521 = vmatprep.subr.mxu0 0.0
    %522 = vmatpush1.xpose.msra.mxu0 0.0
    %523 = vmatprep.subr.mxu0 0.0
    %524 = vmatpush1.xpose.msra.mxu0 0.0
    %525 = vmatprep.subr.mxu0 0.0
    %526 = vmatpush1.xpose.msra.mxu0 0.0
    %527 = vmatprep.subr.mxu0 0.0
    %528 = vmatpush1.xpose.msra.mxu0 0.0
    %529 = vmatprep.subr.mxu0 0.0
    %530 = vmatpush1.xpose.msra.mxu0 0.0
    %531 = vmatprep.subr.mxu0 0.0
    %532 = vmatpush1.xpose.msra.mxu0 0.0
    %533 = vmatprep.subr.mxu0 0.0
    %534 = vmatpush1.xpose.msra.mxu0 0.0
    %535 = vmatprep.subr.mxu0 0.0
    %536 = vmatpush1.xpose.msra.mxu0 0.0
    %537 = vmatprep.subr.mxu0 0.0
    %538 = vmatpush1.xpose.msra.mxu0 0.0
    %539 = vmatprep.subr.mxu0 0.0
    %540 = vmatpush1.xpose.msra.mxu0 0.0
    %541 = vmatprep.subr.mxu0 0.0
    %542 = vmatpush1.xpose.msra.mxu0 0.0
    %543 = vmatprep.subr.mxu0 0.0
    %544 = vmatpush1.xpose.msra.mxu0 0.0
    %545 = vmatprep.subr.mxu0 0.0
    %546 = vmatpush1.xpose.msra.mxu0 0.0
    %547 = vmatprep.mubr.f32.mxu0 0.0
    %548 = vmatmul.mubr.f32.gmra.mrb[0].mxu0 %v452
    %v549 = vpop.f32.mrb[0].mxu0
    %v550 = vadd.f32 0.0, %v549
    %v551 = vpop.f32.mrb[0].mxu0
    %552 = vmatprep.mubr.f32.mxu0 0.0
    %553 = vmatmul.mubr.f32.gmra.mrb[0].mxu0 %v453
    %v554 = vpop.f32.mrb[0].mxu0
    %v555 = vadd.f32 0.0, %v554
    %v556 = vpop.f32.mrb[0].mxu0
    %557 = vmatprep.mubr.f32.mxu0 0.0
    %558 = vmatmul.mubr.f32.gmra.mrb[0].mxu0 %v454
    %v559 = vpop.f32.mrb[0].mxu0
    %v560 = vadd.f32 0.0, %v559
    %v561 = vpop.f32.mrb[0].mxu0
    %562 = vmatprep.mubr.f32.mxu0 0.0
    %563 = vmatmul.mubr.f32.gmra.mrb[0].mxu0 %v455
    %v564 = vpop.f32.mrb[0].mxu0
    %v565 = vadd.f32 0.0, %v564
    %v566 = vpop.f32.mrb[0].mxu0
    %567 = vdwg.mxu0
    %568 = vxpose.xlu0.b32.start [1/16] %v476, 128
    %569 = vxpose.xlu0.b32.cont [2/16] %v478, 128
    %570 = vxpose.xlu0.b32.cont [3/16] %v480, 128
    %571 = vxpose.xlu0.b32.cont [4/16] %v482, 128
    %572 = vxpose.xlu0.b32.cont [5/16] 0.0, 128
    %573 = vxpose.xlu0.b32.cont [6/16] 0.0, 128
    %574 = vxpose.xlu0.b32.cont [7/16] 0.0, 128
    %575 = vxpose.xlu0.b32.cont [8/16] 0.0, 128
    %576 = vxpose.xlu0.b32.cont [9/16] 0.0, 128
    %577 = vxpose.xlu0.b32.cont [10/16] 0.0, 128
    %578 = vxpose.xlu0.b32.cont [11/16] 0.0, 128
    %579 = vxpose.xlu0.b32.cont [12/16] 0.0, 128
    %580 = vxpose.xlu0.b32.cont [13/16] 0.0, 128
    %581 = vxpose.xlu0.b32.cont [14/16] 0.0, 128
    %582 = vxpose.xlu0.b32.cont [15/16] 0.0, 128
    %583 = vxpose.xlu0.b32.end [16/16] 0.0, 128
    %v584 = vpop.trf.xlu0
    %v585 = vpop.trf.xlu0
    %v586 = vpop.trf.xlu0
    %v587 = vpop.trf.xlu0
    %v588 = vpop.trf.xlu0
    %v589 = vpop.trf.xlu0
    %v590 = vpop.trf.xlu0
    %v591 = vpop.trf.xlu0
    %v592 = vpop.trf.xlu0
    %v593 = vpop.trf.xlu0
    %v594 = vpop.trf.xlu0
    %v595 = vpop.trf.xlu0
    %v596 = vpop.trf.xlu0
    %v597 = vpop.trf.xlu0
    %v598 = vpop.trf.xlu0
    %v599 = vpop.trf.xlu0
    %v600 = vlaneseq
    %v601 = vshrl.u32 %v600, 7
    %v602 = vsub.s32 0, %v601
    %v603 = vrot.slane %v584, %v602
    %v604 = vadd.f32 %v476, %v603
    %v605 = vadd.f32 %v478, %v603
    %v606 = vadd.f32 %v480, %v603
    %v607 = vadd.f32 %v482, %v603
    %v608 = vmul.f32 %v550, 2.0
    %v609 = vmul.f32 %v555, 2.0
    %v610 = vmul.f32 %v560, 2.0
    %v611 = vmul.f32 %v565, 2.0
    %v612 = vsub.f32 %v604, %v608
    %v613 = vsub.f32 %v605, %v609
    %v614 = vsub.f32 %v606, %v610
    %v615 = vsub.f32 %v607, %v611
    %v616 = vmax.f32 %v612, 0.0
    %v617 = vmax.f32 %v613, 0.0
    %v618 = vmax.f32 %v614, 0.0
    %v619 = vmax.f32 %v615, 0.0
    %v620 = vsel %vm467, inf, %v616
    %v621 = vsel %vm468, inf, %v617
    %v622 = vsel %vm469, inf, %v618
    %v623 = vsel %vm470, inf, %v619
    %vm624 = vcmask 261120
    %625 = vst.msk [vmem:[%s8] sm:$0xff] %vm624, %v620
    %626 = vst.msk [vmem:[%s8 + $0x8] sm:$0xff] %vm624, %v621
    %627 = vst.msk [vmem:[%s8 + $0x10] sm:$0xff] %vm624, %v622
    %628 = vst.msk [vmem:[%s8 + $0x18] sm:$0xff] %vm624, %v623
    // Predicated region
    $region38: #{forward.5} parent=1 // pred_check
      _
    $region39: #{forward.5} parent=1 // pred_check_branch
      %630 = sbr.rel (0) target = $region41
    $region40: #{forward.5} parent=1 // pred_region
      _
    $region41: #{forward.5} parent=1 // pred_fallthru
      _
    // Predicated region
    $region42: #{forward.5} parent=1 // pred_check
      _
    $region43: #{forward.5} parent=1 // pred_check_branch
      %632 = sbr.rel (0) target = $region45
    $region44: #{forward.5} parent=1 // pred_region
      _
    $region45: #{forward.5} parent=1 // pred_fallthru
      _
    // Predicated region
    $region46: #{forward.5} parent=1 // pred_check
      _
    $region47: #{forward.5} parent=1 // pred_check_branch
      %634 = sbr.rel (0) target = $region49
    $region48: #{forward.5} parent=1 // pred_region
      _
    $region49: #{forward.5} parent=1 // pred_fallthru
      _
    // Predicated region
    $region50: #{forward.5} parent=1 // pred_check
      _
    $region51: #{forward.5} parent=1 // pred_check_branch
      %636 = sbr.rel (0) target = $region53
    $region52: #{forward.5} parent=1 // pred_region
      _
    $region53: #{forward.5} parent=1 // pred_fallthru
      _
    %637 = vsyncpa [#allocation3], 1
    %638 = vsyncpa [#allocation5], 1

// kernel: forward.7
$region0: #{forward.7}
  #allocation0 [shape = 'u32[]', space=smem, size = 0x4, offset = 0x4, fixed_abs, tag = 'smem constant byte address 0x4 - core index']
  #allocation1 [shape = 'u32[144,128]{1,0:T(1,128)}', space=vmem, size = 0x12000, scoped, tag = 'internal scratch']
  %s0 = inlined_call_operand.vmem [shape: f32[32,128], index: 0, kind: input, shape index: {}]
  %s1 = inlined_call_operand.vmem [shape: f32[1,32], index: 1, kind: input, shape index: {}]
  %s2 = inlined_call_operand.vmem [shape: f32[32,32], index: 2, kind: output, shape index: {}]
  %s3 = sld [smem:[#allocation0]]
  $region18: #{forward.7} parent=0
    _
  %s5 = ssub.s32 1, %s3
  %s6 = scalar_select 0, %s5, %s3
  // Predicated region
  $region2: #{forward.7} parent=0 // pred_check
    _
  $region3: #{forward.7} parent=0 // pred_check_branch
    %8 = sbr.rel (0) target = $region5
  $region4: #{forward.7} parent=0 // pred_region
    _
  $region5: #{forward.7} parent=0 // pred_fallthru
    _
  // Predicated region
  $region6: #{forward.7} parent=0 // pred_check
    _
  $region7: #{forward.7} parent=0 // pred_check_branch
    %10 = sbr.rel (0) target = $region9
  $region8: #{forward.7} parent=0 // pred_region
    _
  $region9: #{forward.7} parent=0 // pred_fallthru
    _
  %v11 = vld [vmem:[%s0] sm:$0xff]
  %v12 = vld [vmem:[%s0 + $0x8] sm:$0xff]
  %v13 = vld [vmem:[%s0 + $0x10] sm:$0xff]
  %v14 = vld [vmem:[%s0 + $0x18] sm:$0xff]
  %v15 = vld [vmem:[%s1] sm:$0x1]
  %v16 = vlaneseq
  %v17 = vshrl.u32 %v16, 7
  %v18 = vadd.s32 %v17, 8
  %v19 = vadd.s32 %v17, 16
  %v20 = vadd.s32 %v17, 24
  %v21 = vlaneseq
  %v22 = vand.u32 %v21, 127
  %vm23 = vcmp.gt.f32.partialorder %v15, 0.5
  %24 = vxpose.xlu0.b32.start [1/16] %v15, 128
  %25 = vxpose.xlu0.b32.cont [2/16] 0.0, 128
  %26 = vxpose.xlu0.b32.cont [3/16] 0.0, 128
  %27 = vxpose.xlu0.b32.cont [4/16] 0.0, 128
  %28 = vxpose.xlu0.b32.cont [5/16] 0.0, 128
  %29 = vxpose.xlu0.b32.cont [6/16] 0.0, 128
  %30 = vxpose.xlu0.b32.cont [7/16] 0.0, 128
  %31 = vxpose.xlu0.b32.cont [8/16] 0.0, 128
  %32 = vxpose.xlu0.b32.cont [9/16] 0.0, 128
  %33 = vxpose.xlu0.b32.cont [10/16] 0.0, 128
  %34 = vxpose.xlu0.b32.cont [11/16] 0.0, 128
  %35 = vxpose.xlu0.b32.cont [12/16] 0.0, 128
  %36 = vxpose.xlu0.b32.cont [13/16] 0.0, 128
  %37 = vxpose.xlu0.b32.cont [14/16] 0.0, 128
  %38 = vxpose.xlu0.b32.cont [15/16] 0.0, 128
  %39 = vxpose.xlu0.b32.end [16/16] 0.0, 128
  %v40 = vpop.trf.xlu0
  %v41 = vpop.trf.xlu0
  %v42 = vpop.trf.xlu0
  %v43 = vpop.trf.xlu0
  %v44 = vpop.trf.xlu0
  %v45 = vpop.trf.xlu0
  %v46 = vpop.trf.xlu0
  %v47 = vpop.trf.xlu0
  %v48 = vpop.trf.xlu0
  %v49 = vpop.trf.xlu0
  %v50 = vpop.trf.xlu0
  %v51 = vpop.trf.xlu0
  %v52 = vpop.trf.xlu0
  %v53 = vpop.trf.xlu0
  %v54 = vpop.trf.xlu0
  %v55 = vpop.trf.xlu0
  %vm56 = vcmp.gt.f32.partialorder %v40, 0.5
  %vm57 = vcmp.gt.f32.partialorder %v41, 0.5
  %vm58 = vcmp.gt.f32.partialorder %v42, 0.5
  %vm59 = vcmp.gt.f32.partialorder %v43, 0.5
  %v60 = vsel %vm23, 1, 0
  %v61 = vlaneseq
  %v62 = vshrl.u32 %v61, 7
  %v63 = vsub.s32 0, %v62
  %v64 = vrot.slane %v60, %v63
  %vm65 = vcmp.eq.s32.totalorder %v64, 1
  %v66 = vsel %vm56, 1, 0
  %v67 = vsel %vm57, 1, 0
  %v68 = vsel %vm58, 1, 0
  %v69 = vsel %vm59, 1, 0
  %70 = vset.pattern.permute.xlu0 0
  %71 = vperm.xlu0 %70, %v66
  %v72 = vpop.permute.xlu0 %71
  %73 = vset.pattern.permute.xlu0 0
  %74 = vperm.xlu0 %73, %v67
  %v75 = vpop.permute.xlu0 %74
  %76 = vset.pattern.permute.xlu0 0
  %77 = vperm.xlu0 %76, %v68
  %v78 = vpop.permute.xlu0 %77
  %79 = vset.pattern.permute.xlu0 0
  %80 = vperm.xlu0 %79, %v69
  %v81 = vpop.permute.xlu0 %80
  %vm82 = vcmp.eq.s32.totalorder %v72, 1
  %vm83 = vcmp.eq.s32.totalorder %v75, 1
  %vm84 = vcmp.eq.s32.totalorder %v78, 1
  %vm85 = vcmp.eq.s32.totalorder %v81, 1
  %vm86 = vmand %vm65, %vm82
  %vm87 = vmand %vm65, %vm83
  %vm88 = vmand %vm65, %vm84
  %vm89 = vmand %vm65, %vm85
  %vm90 = vcmp.ne.s32.totalorder %v17, %v22
  %vm91 = vcmp.ne.s32.totalorder %v18, %v22
  %vm92 = vcmp.ne.s32.totalorder %v19, %v22
  %vm93 = vcmp.ne.s32.totalorder %v20, %v22
  %vm94 = vmand %vm86, %vm90
  %vm95 = vmand %vm87, %vm91
  %vm96 = vmand %vm88, %vm92
  %vm97 = vmand %vm89, %vm93
  %v98 = vmul.f32 %v11, %v11
  %v99 = vmul.f32 %v12, %v12
  %v100 = vmul.f32 %v13, %v13
  %v101 = vmul.f32 %v14, %v14
  %102 = vadd.xlane.f32.xlu0 %v98
  %v103 = vpop.xlane.xlu0 %102
  %104 = vadd.xlane.f32.xlu0 %v99
  %v105 = vpop.xlane.xlu0 %104
  %106 = vadd.xlane.f32.xlu0 %v100
  %v107 = vpop.xlane.xlu0 %106
  %108 = vadd.xlane.f32.xlu0 %v101
  %v109 = vpop.xlane.xlu0 %108
  %110 = vmatprep.subr.mxu0 0.0
  %111 = vmatpush1.xpose.msra.mxu0 %v11
  %112 = vmatprep.subr.mxu0 0.0
  %113 = vmatpush1.xpose.msra.mxu0 %v12
  %114 = vmatprep.subr.mxu0 0.0
  %115 = vmatpush1.xpose.msra.mxu0 %v13
  %116 = vmatprep.subr.mxu0 0.0
  %117 = vmatpush1.xpose.msra.mxu0 %v14
  %118 = vmatprep.subr.mxu0 0.0
  %119 = vmatpush1.xpose.msra.mxu0 0.0
  %120 = vmatprep.subr.mxu0 0.0
  %121 = vmatpush1.xpose.msra.mxu0 0.0
  %122 = vmatprep.subr.mxu0 0.0
  %123 = vmatpush1.xpose.msra.mxu0 0.0
  %124 = vmatprep.subr.mxu0 0.0
  %125 = vmatpush1.xpose.msra.mxu0 0.0
  %126 = vmatprep.subr.mxu0 0.0
  %127 = vmatpush1.xpose.msra.mxu0 0.0
  %128 = vmatprep.subr.mxu0 0.0
  %129 = vmatpush1.xpose.msra.mxu0 0.0
  %130 = vmatprep.subr.mxu0 0.0
  %131 = vmatpush1.xpose.msra.mxu0 0.0
  %132 = vmatprep.subr.mxu0 0.0
  %133 = vmatpush1.xpose.msra.mxu0 0.0
  %134 = vmatprep.subr.mxu0 0.0
  %135 = vmatpush1.xpose.msra.mxu0 0.0
  %136 = vmatprep.subr.mxu0 0.0
  %137 = vmatpush1.xpose.msra.mxu0 0.0
  %138 = vmatprep.subr.mxu0 0.0
  %139 = vmatpush1.xpose.msra.mxu0 0.0
  %140 = vmatprep.subr.mxu0 0.0
  %141 = vmatpush1.xpose.msra.mxu0 0.0
  %142 = vmatprep.subr.mxu0 0.0
  %143 = vmatpush1.xpose.msra.mxu0 0.0
  %144 = vmatprep.subr.mxu0 0.0
  %145 = vmatpush1.xpose.msra.mxu0 0.0
  %146 = vmatprep.subr.mxu0 0.0
  %147 = vmatpush1.xpose.msra.mxu0 0.0
  %148 = vmatprep.subr.mxu0 0.0
  %149 = vmatpush1.xpose.msra.mxu0 0.0
  %150 = vmatprep.subr.mxu0 0.0
  %151 = vmatpush1.xpose.msra.mxu0 0.0
  %152 = vmatprep.subr.mxu0 0.0
  %153 = vmatpush1.xpose.msra.mxu0 0.0
  %154 = vmatprep.subr.mxu0 0.0
  %155 = vmatpush1.xpose.msra.mxu0 0.0
  %156 = vmatprep.subr.mxu0 0.0
  %157 = vmatpush1.xpose.msra.mxu0 0.0
  %158 = vmatprep.subr.mxu0 0.0
  %159 = vmatpush1.xpose.msra.mxu0 0.0
  %160 = vmatprep.subr.mxu0 0.0
  %161 = vmatpush1.xpose.msra.mxu0 0.0
  %162 = vmatprep.subr.mxu0 0.0
  %163 = vmatpush1.xpose.msra.mxu0 0.0
  %164 = vmatprep.subr.mxu0 0.0
  %165 = vmatpush1.xpose.msra.mxu0 0.0
  %166 = vmatprep.subr.mxu0 0.0
  %167 = vmatpush1.xpose.msra.mxu0 0.0
  %168 = vmatprep.subr.mxu0 0.0
  %169 = vmatpush1.xpose.msra.mxu0 0.0
  %170 = vmatprep.subr.mxu0 0.0
  %171 = vmatpush1.xpose.msra.mxu0 0.0
  %172 = vmatprep.subr.mxu0 0.0
  %173 = vmatpush1.xpose.msra.mxu0 0.0
  %174 = vmatprep.mubr.f32.mxu0 0.0
  %175 = vmatmul.mubr.f32.gmra.mrb[0].mxu0 %v11
  %v176 = vpop.f32.mrb[0].mxu0
  %v177 = vadd.f32 0.0, %v176
  %v178 = vpop.f32.mrb[0].mxu0
  %179 = vmatprep.mubr.f32.mxu0 0.0
  %180 = vmatmul.mubr.f32.gmra.mrb[0].mxu0 %v12
  %v181 = vpop.f32.mrb[0].mxu0
  %v182 = vadd.f32 0.0, %v181
  %v183 = vpop.f32.mrb[0].mxu0
  %184 = vmatprep.mubr.f32.mxu0 0.0
  %185 = vmatmul.mubr.f32.gmra.mrb[0].mxu0 %v13
  %v186 = vpop.f32.mrb[0].mxu0
  %v187 = vadd.f32 0.0, %v186
  %v188 = vpop.f32.mrb[0].mxu0
  %189 = vmatprep.mubr.f32.mxu0 0.0
  %190 = vmatmul.mubr.f32.gmra.mrb[0].mxu0 %v14
  %v191 = vpop.f32.mrb[0].mxu0
  %v192 = vadd.f32 0.0, %v191
  %v193 = vpop.f32.mrb[0].mxu0
  %194 = vdwg.mxu0
  %195 = vxpose.xlu0.b32.start [1/16] %v103, 128
  %196 = vxpose.xlu0.b32.cont [2/16] %v105, 128
  %197 = vxpose.xlu0.b32.cont [3/16] %v107, 128
  %198 = vxpose.xlu0.b32.cont [4/16] %v109, 128
  %199 = vxpose.xlu0.b32.cont [5/16] 0.0, 128
  %200 = vxpose.xlu0.b32.cont [6/16] 0.0, 128
  %201 = vxpose.xlu0.b32.cont [7/16] 0.0, 128
  %202 = vxpose.xlu0.b32.cont [8/16] 0.0, 128
  %203 = vxpose.xlu0.b32.cont [9/16] 0.0, 128
  %204 = vxpose.xlu0.b32.cont [10/16] 0.0, 128
  %205 = vxpose.xlu0.b32.cont [11/16] 0.0, 128
  %206 = vxpose.xlu0.b32.cont [12/16] 0.0, 128
  %207 = vxpose.xlu0.b32.cont [13/16] 0.0, 128
  %208 = vxpose.xlu0.b32.cont [14/16] 0.0, 128
  %209 = vxpose.xlu0.b32.cont [15/16] 0.0, 128
  %210 = vxpose.xlu0.b32.end [16/16] 0.0, 128
  %v211 = vpop.trf.xlu0
  %v212 = vpop.trf.xlu0
  %v213 = vpop.trf.xlu0
  %v214 = vpop.trf.xlu0
  %v215 = vpop.trf.xlu0
  %v216 = vpop.trf.xlu0
  %v217 = vpop.trf.xlu0
  %v218 = vpop.trf.xlu0
  %v219 = vpop.trf.xlu0
  %v220 = vpop.trf.xlu0
  %v221 = vpop.trf.xlu0
  %v222 = vpop.trf.xlu0
  %v223 = vpop.trf.xlu0
  %v224 = vpop.trf.xlu0
  %v225 = vpop.trf.xlu0
  %v226 = vpop.trf.xlu0
  %v227 = vlaneseq
  %v228 = vshrl.u32 %v227, 7
  %v229 = vsub.s32 0, %v228
  %v230 = vrot.slane %v211, %v229
  %v231 = vadd.f32 %v103, %v230
  %v232 = vadd.f32 %v105, %v230
  %v233 = vadd.f32 %v107, %v230
  %v234 = vadd.f32 %v109, %v230
  %v235 = vmul.f32 %v177, 2.0
  %v236 = vmul.f32 %v182, 2.0
  %v237 = vmul.f32 %v187, 2.0
  %v238 = vmul.f32 %v192, 2.0
  %v239 = vsub.f32 %v231, %v235
  %v240 = vsub.f32 %v232, %v236
  %v241 = vsub.f32 %v233, %v237
  %v242 = vsub.f32 %v234, %v238
  %v243 = vmax.f32 %v239, 0.0
  %v244 = vmax.f32 %v240, 0.0
  %v245 = vmax.f32 %v241, 0.0
  %v246 = vmax.f32 %v242, 0.0
  %v247 = vsel %vm94, %v243, inf
  %v248 = vsel %vm95, %v244, inf
  %v249 = vsel %vm96, %v245, inf
  %v250 = vsel %vm97, %v246, inf
  %vm251 = vcmask 261120
  %252 = vst.msk [vmem:[%s2] sm:$0xff] %vm251, %v247
  %253 = vst.msk [vmem:[%s2 + $0x8] sm:$0xff] %vm251, %v248
  %254 = vst.msk [vmem:[%s2 + $0x10] sm:$0xff] %vm251, %v249
  %255 = vst.msk [vmem:[%s2 + $0x18] sm:$0xff] %vm251, %v250
  // Predicated region
  $region10: #{forward.7} parent=0 // pred_check
    _
  $region11: #{forward.7} parent=0 // pred_check_branch
    %257 = sbr.rel (0) target = $region13
  $region12: #{forward.7} parent=0 // pred_region
    _
  $region13: #{forward.7} parent=0 // pred_fallthru
    _
  // Predicated region
  $region14: #{forward.7} parent=0 // pred_check
    _
  $region15: #{forward.7} parent=0 // pred_check_branch
    %259 = sbr.rel (0) target = $region17
  $region16: #{forward.7} parent=0 // pred_region
    _
  $region17: #{forward.7} parent=0 // pred_fallthru
    _

// kernel: forward.9
$region0: #{forward.9}
  #allocation0 [shape = 'u32[]', space=smem, size = 0x4, offset = 0x4, fixed_abs, tag = 'smem constant byte address 0x4 - core index']
  #allocation1 [shape = 'u32[144,128]{1,0:T(1,128)}', space=vmem, size = 0x12000, scoped, tag = 'internal scratch']
  %s0 = inlined_call_operand.vmem [shape: f32[32,128], index: 0, kind: input, shape index: {}]
  %s1 = inlined_call_operand.vmem [shape: f32[128,128], index: 1, kind: input, shape index: {}]
  %s2 = inlined_call_operand.vmem [shape: f32[1,128], index: 2, kind: input, shape index: {}]
  %s3 = inlined_call_operand.vmem [shape: f32[128,128], index: 3, kind: input, shape index: {}]
  %s4 = inlined_call_operand.vmem [shape: f32[1,128], index: 4, kind: input, shape index: {}]
  %s5 = inlined_call_operand.vmem [shape: f32[128,128], index: 5, kind: input, shape index: {}]
  %s6 = inlined_call_operand.vmem [shape: f32[1,128], index: 6, kind: input, shape index: {}]
  %s7 = inlined_call_operand.vmem [shape: f32[32,128], index: 7, kind: output, shape index: {}]
  %s8 = sld [smem:[#allocation0]]
  $region38: #{forward.9} parent=0
    _
  %s10 = ssub.s32 1, %s8
  %s11 = scalar_select 0, %s10, %s8
  // Predicated region
  $region2: #{forward.9} parent=0 // pred_check
    _
  $region3: #{forward.9} parent=0 // pred_check_branch
    %13 = sbr.rel (0) target = $region5
  $region4: #{forward.9} parent=0 // pred_region
    _
  $region5: #{forward.9} parent=0 // pred_fallthru
    _
  // Predicated region
  $region6: #{forward.9} parent=0 // pred_check
    _
  $region7: #{forward.9} parent=0 // pred_check_branch
    %15 = sbr.rel (0) target = $region9
  $region8: #{forward.9} parent=0 // pred_region
    _
  $region9: #{forward.9} parent=0 // pred_fallthru
    _
  // Predicated region
  $region10: #{forward.9} parent=0 // pred_check
    _
  $region11: #{forward.9} parent=0 // pred_check_branch
    %17 = sbr.rel (0) target = $region13
  $region12: #{forward.9} parent=0 // pred_region
    _
  $region13: #{forward.9} parent=0 // pred_fallthru
    _
  // Predicated region
  $region14: #{forward.9} parent=0 // pred_check
    _
  $region15: #{forward.9} parent=0 // pred_check_branch
    %19 = sbr.rel (0) target = $region17
  $region16: #{forward.9} parent=0 // pred_region
    _
  $region17: #{forward.9} parent=0 // pred_fallthru
    _
  // Predicated region
  $region18: #{forward.9} parent=0 // pred_check
    _
  $region19: #{forward.9} parent=0 // pred_check_branch
    %21 = sbr.rel (0) target = $region21
  $region20: #{forward.9} parent=0 // pred_region
    _
  $region21: #{forward.9} parent=0 // pred_fallthru
    _
  // Predicated region
  $region22: #{forward.9} parent=0 // pred_check
    _
  $region23: #{forward.9} parent=0 // pred_check_branch
    %23 = sbr.rel (0) target = $region25
  $region24: #{forward.9} parent=0 // pred_region
    _
  $region25: #{forward.9} parent=0 // pred_fallthru
    _
  // Predicated region
  $region26: #{forward.9} parent=0 // pred_check
    _
  $region27: #{forward.9} parent=0 // pred_check_branch
    %25 = sbr.rel (0) target = $region29
  $region28: #{forward.9} parent=0 // pred_region
    _
  $region29: #{forward.9} parent=0 // pred_fallthru
    _
  %v26 = vld [vmem:[%s0] sm:$0xff]
  %v27 = vld [vmem:[%s0 + $0x8] sm:$0xff]
  %v28 = vld [vmem:[%s0 + $0x10] sm:$0xff]
  %v29 = vld [vmem:[%s0 + $0x18] sm:$0xff]
  %v30 = vld [vmem:[%s1] sm:$0xff]
  %v31 = vld [vmem:[%s1 + $0x8] sm:$0xff]
  %v32 = vld [vmem:[%s1 + $0x10] sm:$0xff]
  %v33 = vld [vmem:[%s1 + $0x18] sm:$0xff]
  %v34 = vld [vmem:[%s1 + $0x20] sm:$0xff]
  %v35 = vld [vmem:[%s1 + $0x28] sm:$0xff]
  %v36 = vld [vmem:[%s1 + $0x30] sm:$0xff]
  %v37 = vld [vmem:[%s1 + $0x38] sm:$0xff]
  %v38 = vld [vmem:[%s1 + $0x40] sm:$0xff]
  %v39 = vld [vmem:[%s1 + $0x48] sm:$0xff]
  %v40 = vld [vmem:[%s1 + $0x50] sm:$0xff]
  %v41 = vld [vmem:[%s1 + $0x58] sm:$0xff]
  %v42 = vld [vmem:[%s1 + $0x60] sm:$0xff]
  %v43 = vld [vmem:[%s1 + $0x68] sm:$0xff]
  %v44 = vld [vmem:[%s1 + $0x70] sm:$0xff]
  %v45 = vld [vmem:[%s1 + $0x78] sm:$0xff]
  %v46 = vld [vmem:[%s2] sm:$0x1]
  %v48 = vlaneseq
  %v49 = vshrl.u32 %v48, 7
  %v50 = vsub.s32 0, %v49
  %v51 = vrot.slane %v46, %v50
  %53 = vmatprep.subr.mxu0 0.0
  %54 = vmatpush1.msra.mxu0 %v30
  %55 = vmatprep.subr.mxu0 0.0
  %56 = vmatpush1.msra.mxu0 %v31
  %57 = vmatprep.subr.mxu0 0.0
  %58 = vmatpush1.msra.mxu0 %v32
  %59 = vmatprep.subr.mxu0 0.0
  %60 = vmatpush1.msra.mxu0 %v33
  %61 = vmatprep.subr.mxu0 0.0
  %62 = vmatpush1.msra.mxu0 %v34
  %63 = vmatprep.subr.mxu0 0.0
  %64 = vmatpush1.msra.mxu0 %v35
  %65 = vmatprep.subr.mxu0 0.0
  %66 = vmatpush1.msra.mxu0 %v36
  %67 = vmatprep.subr.mxu0 0.0
  %68 = vmatpush1.msra.mxu0 %v37
  %69 = vmatprep.subr.mxu0 0.0
  %70 = vmatpush1.msra.mxu0 %v38
  %71 = vmatprep.subr.mxu0 0.0
  %72 = vmatpush1.msra.mxu0 %v39
  %73 = vmatprep.subr.mxu0 0.0
  %74 = vmatpush1.msra.mxu0 %v40
  %75 = vmatprep.subr.mxu0 0.0
  %76 = vmatpush1.msra.mxu0 %v41
  %77 = vmatprep.subr.mxu0 0.0
  %78 = vmatpush1.msra.mxu0 %v42
  %79 = vmatprep.subr.mxu0 0.0
  %80 = vmatpush1.msra.mxu0 %v43
  %81 = vmatprep.subr.mxu0 0.0
  %82 = vmatpush1.msra.mxu0 %v44
  %83 = vmatprep.subr.mxu0 0.0
  %84 = vmatpush1.msra.mxu0 %v45
  %85 = vmatprep.subr.mxu0 0.0
  %86 = vmatpush1.msra.mxu0 0.0
  %87 = vmatprep.subr.mxu0 0.0
  %88 = vmatpush1.msra.mxu0 0.0
  %89 = vmatprep.subr.mxu0 0.0
  %90 = vmatpush1.msra.mxu0 0.0
  %91 = vmatprep.subr.mxu0 0.0
  %92 = vmatpush1.msra.mxu0 0.0
  %93 = vmatprep.subr.mxu0 0.0
  %94 = vmatpush1.msra.mxu0 0.0
  %95 = vmatprep.subr.mxu0 0.0
  %96 = vmatpush1.msra.mxu0 0.0
  %97 = vmatprep.subr.mxu0 0.0
  %98 = vmatpush1.msra.mxu0 0.0
  %99 = vmatprep.subr.mxu0 0.0
  %100 = vmatpush1.msra.mxu0 0.0
  %101 = vmatprep.subr.mxu0 0.0
  %102 = vmatpush1.msra.mxu0 0.0
  %103 = vmatprep.subr.mxu0 0.0
  %104 = vmatpush1.msra.mxu0 0.0
  %105 = vmatprep.subr.mxu0 0.0
  %106 = vmatpush1.msra.mxu0 0.0
  %107 = vmatprep.subr.mxu0 0.0
  %108 = vmatpush1.msra.mxu0 0.0
  %109 = vmatprep.subr.mxu0 0.0
  %110 = vmatpush1.msra.mxu0 0.0
  %111 = vmatprep.subr.mxu0 0.0
  %112 = vmatpush1.msra.mxu0 0.0
  %113 = vmatprep.subr.mxu0 0.0
  %114 = vmatpush1.msra.mxu0 0.0
  %115 = vmatprep.subr.mxu0 0.0
  %116 = vmatpush1.msra.mxu0 0.0
  %117 = vmatprep.mubr.f32.mxu0 0.0
  %118 = vmatmul.mubr.f32.gmra.mrb[0].mxu0 %v26
  %v119 = vpop.f32.mrb[0].mxu0
  %v120 = vadd.f32 %v51, %v119
  %v121 = vpop.f32.mrb[0].mxu0
  %122 = vmatprep.mubr.f32.mxu0 0.0
  %123 = vmatmul.mubr.f32.gmra.mrb[0].mxu0 %v27
  %v124 = vpop.f32.mrb[0].mxu0
  %v125 = vadd.f32 %v51, %v124
  %v126 = vpop.f32.mrb[0].mxu0
  %127 = vmatprep.mubr.f32.mxu0 0.0
  %128 = vmatmul.mubr.f32.gmra.mrb[0].mxu0 %v28
  %v129 = vpop.f32.mrb[0].mxu0
  %v130 = vadd.f32 %v51, %v129
  %v131 = vpop.f32.mrb[0].mxu0
  %132 = vmatprep.mubr.f32.mxu0 0.0
  %133 = vmatmul.mubr.f32.gmra.mrb[0].mxu0 %v29
  %v134 = vpop.f32.mrb[0].mxu0
  %v135 = vadd.f32 %v51, %v134
  %v136 = vpop.f32.mrb[0].mxu0
  %137 = vdwg.mxu0
  %vm138 = vcmp.gt.f32.partialorder %v120, 0.0
  %vm139 = vcmp.gt.f32.partialorder %v125, 0.0
  %vm140 = vcmp.gt.f32.partialorder %v130, 0.0
  %vm141 = vcmp.gt.f32.partialorder %v135, 0.0
  %v142 = vmin.f32 %v120, 0.0
  %v143 = vmin.f32 %v125, 0.0
  %v144 = vmin.f32 %v130, 0.0
  %v145 = vmin.f32 %v135, 0.0
  %v146 = vmul.f32 %v142, 1.442695
  %v147 = vpow.pop %v146
  %v148 = vmul.f32 %v143, 1.442695
  %v149 = vpow.pop %v148
  %v150 = vmul.f32 %v144, 1.442695
  %v151 = vpow.pop %v150
  %v152 = vmul.f32 %v145, 1.442695
  %v153 = vpow.pop %v152
  %v154 = vsub.f32 %v147, 1.0
  %v155 = vsub.f32 %v149, 1.0
  %v156 = vsub.f32 %v151, 1.0
  %v157 = vsub.f32 %v153, 1.0
  %v158 = vsel %vm138, %v120, %v154
  %v159 = vsel %vm139, %v125, %v155
  %v160 = vsel %vm140, %v130, %v156
  %v161 = vsel %vm141, %v135, %v157
  %v162 = vld [vmem:[%s3] sm:$0xff]
  %v163 = vld [vmem:[%s3 + $0x8] sm:$0xff]
  %v164 = vld [vmem:[%s3 + $0x10] sm:$0xff]
  %v165 = vld [vmem:[%s3 + $0x18] sm:$0xff]
  %v166 = vld [vmem:[%s3 + $0x20] sm:$0xff]
  %v167 = vld [vmem:[%s3 + $0x28] sm:$0xff]
  %v168 = vld [vmem:[%s3 + $0x30] sm:$0xff]
  %v169 = vld [vmem:[%s3 + $0x38] sm:$0xff]
  %v170 = vld [vmem:[%s3 + $0x40] sm:$0xff]
  %v171 = vld [vmem:[%s3 + $0x48] sm:$0xff]
  %v172 = vld [vmem:[%s3 + $0x50] sm:$0xff]
  %v173 = vld [vmem:[%s3 + $0x58] sm:$0xff]
  %v174 = vld [vmem:[%s3 + $0x60] sm:$0xff]
  %v175 = vld [vmem:[%s3 + $0x68] sm:$0xff]
  %v176 = vld [vmem:[%s3 + $0x70] sm:$0xff]
  %v177 = vld [vmem:[%s3 + $0x78] sm:$0xff]
  %v178 = vld [vmem:[%s4] sm:$0x1]
  %v180 = vlaneseq
  %v181 = vshrl.u32 %v180, 7
  %v182 = vsub.s32 0, %v181
  %v183 = vrot.slane %v178, %v182
  %185 = vmatprep.subr.mxu0 0.0
  %186 = vmatpush1.msra.mxu0 %v162
  %187 = vmatprep.subr.mxu0 0.0
  %188 = vmatpush1.msra.mxu0 %v163
  %189 = vmatprep.subr.mxu0 0.0
  %190 = vmatpush1.msra.mxu0 %v164
  %191 = vmatprep.subr.mxu0 0.0
  %192 = vmatpush1.msra.mxu0 %v165
  %193 = vmatprep.subr.mxu0 0.0
  %194 = vmatpush1.msra.mxu0 %v166
  %195 = vmatprep.subr.mxu0 0.0
  %196 = vmatpush1.msra.mxu0 %v167
  %197 = vmatprep.subr.mxu0 0.0
  %198 = vmatpush1.msra.mxu0 %v168
  %199 = vmatprep.subr.mxu0 0.0
  %200 = vmatpush1.msra.mxu0 %v169
  %201 = vmatprep.subr.mxu0 0.0
  %202 = vmatpush1.msra.mxu0 %v170
  %203 = vmatprep.subr.mxu0 0.0
  %204 = vmatpush1.msra.mxu0 %v171
  %205 = vmatprep.subr.mxu0 0.0
  %206 = vmatpush1.msra.mxu0 %v172
  %207 = vmatprep.subr.mxu0 0.0
  %208 = vmatpush1.msra.mxu0 %v173
  %209 = vmatprep.subr.mxu0 0.0
  %210 = vmatpush1.msra.mxu0 %v174
  %211 = vmatprep.subr.mxu0 0.0
  %212 = vmatpush1.msra.mxu0 %v175
  %213 = vmatprep.subr.mxu0 0.0
  %214 = vmatpush1.msra.mxu0 %v176
  %215 = vmatprep.subr.mxu0 0.0
  %216 = vmatpush1.msra.mxu0 %v177
  %217 = vmatprep.subr.mxu0 0.0
  %218 = vmatpush1.msra.mxu0 0.0
  %219 = vmatprep.subr.mxu0 0.0
  %220 = vmatpush1.msra.mxu0 0.0
  %221 = vmatprep.subr.mxu0 0.0
  %222 = vmatpush1.msra.mxu0 0.0
  %223 = vmatprep.subr.mxu0 0.0
  %224 = vmatpush1.msra.mxu0 0.0
  %225 = vmatprep.subr.mxu0 0.0
  %226 = vmatpush1.msra.mxu0 0.0
  %227 = vmatprep.subr.mxu0 0.0
  %228 = vmatpush1.msra.mxu0 0.0
  %229 = vmatprep.subr.mxu0 0.0
  %230 = vmatpush1.msra.mxu0 0.0
  %231 = vmatprep.subr.mxu0 0.0
  %232 = vmatpush1.msra.mxu0 0.0
  %233 = vmatprep.subr.mxu0 0.0
  %234 = vmatpush1.msra.mxu0 0.0
  %235 = vmatprep.subr.mxu0 0.0
  %236 = vmatpush1.msra.mxu0 0.0
  %237 = vmatprep.subr.mxu0 0.0
  %238 = vmatpush1.msra.mxu0 0.0
  %239 = vmatprep.subr.mxu0 0.0
  %240 = vmatpush1.msra.mxu0 0.0
  %241 = vmatprep.subr.mxu0 0.0
  %242 = vmatpush1.msra.mxu0 0.0
  %243 = vmatprep.subr.mxu0 0.0
  %244 = vmatpush1.msra.mxu0 0.0
  %245 = vmatprep.subr.mxu0 0.0
  %246 = vmatpush1.msra.mxu0 0.0
  %247 = vmatprep.subr.mxu0 0.0
  %248 = vmatpush1.msra.mxu0 0.0
  %249 = vmatprep.mubr.f32.mxu0 0.0
  %250 = vmatmul.mubr.f32.gmra.mrb[0].mxu0 %v158
  %v251 = vpop.f32.mrb[0].mxu0
  %v252 = vadd.f32 %v183, %v251
  %v253 = vpop.f32.mrb[0].mxu0
  %254 = vmatprep.mubr.f32.mxu0 0.0
  %255 = vmatmul.mubr.f32.gmra.mrb[0].mxu0 %v159
  %v256 = vpop.f32.mrb[0].mxu0
  %v257 = vadd.f32 %v183, %v256
  %v258 = vpop.f32.mrb[0].mxu0
  %259 = vmatprep.mubr.f32.mxu0 0.0
  %260 = vmatmul.mubr.f32.gmra.mrb[0].mxu0 %v160
  %v261 = vpop.f32.mrb[0].mxu0
  %v262 = vadd.f32 %v183, %v261
  %v263 = vpop.f32.mrb[0].mxu0
  %264 = vmatprep.mubr.f32.mxu0 0.0
  %265 = vmatmul.mubr.f32.gmra.mrb[0].mxu0 %v161
  %v266 = vpop.f32.mrb[0].mxu0
  %v267 = vadd.f32 %v183, %v266
  %v268 = vpop.f32.mrb[0].mxu0
  %269 = vdwg.mxu0
  %vm270 = vcmp.gt.f32.partialorder %v252, 0.0
  %vm271 = vcmp.gt.f32.partialorder %v257, 0.0
  %vm272 = vcmp.gt.f32.partialorder %v262, 0.0
  %vm273 = vcmp.gt.f32.partialorder %v267, 0.0
  %v274 = vmin.f32 %v252, 0.0
  %v275 = vmin.f32 %v257, 0.0
  %v276 = vmin.f32 %v262, 0.0
  %v277 = vmin.f32 %v267, 0.0
  %v278 = vmul.f32 %v274, 1.442695
  %v279 = vpow.pop %v278
  %v280 = vmul.f32 %v275, 1.442695
  %v281 = vpow.pop %v280
  %v282 = vmul.f32 %v276, 1.442695
  %v283 = vpow.pop %v282
  %v284 = vmul.f32 %v277, 1.442695
  %v285 = vpow.pop %v284
  %v286 = vsub.f32 %v279, 1.0
  %v287 = vsub.f32 %v281, 1.0
  %v288 = vsub.f32 %v283, 1.0
  %v289 = vsub.f32 %v285, 1.0
  %v290 = vsel %vm270, %v252, %v286
  %v291 = vsel %vm271, %v257, %v287
  %v292 = vsel %vm272, %v262, %v288
  %v293 = vsel %vm273, %v267, %v289
  %v294 = vld [vmem:[%s5] sm:$0xff]
  %v295 = vld [vmem:[%s5 + $0x8] sm:$0xff]
  %v296 = vld [vmem:[%s5 + $0x10] sm:$0xff]
  %v297 = vld [vmem:[%s5 + $0x18] sm:$0xff]
  %v298 = vld [vmem:[%s5 + $0x20] sm:$0xff]
  %v299 = vld [vmem:[%s5 + $0x28] sm:$0xff]
  %v300 = vld [vmem:[%s5 + $0x30] sm:$0xff]
  %v301 = vld [vmem:[%s5 + $0x38] sm:$0xff]
  %v302 = vld [vmem:[%s5 + $0x40] sm:$0xff]
  %v303 = vld [vmem:[%s5 + $0x48] sm:$0xff]
  %v304 = vld [vmem:[%s5 + $0x50] sm:$0xff]
  %v305 = vld [vmem:[%s5 + $0x58] sm:$0xff]
  %v306 = vld [vmem:[%s5 + $0x60] sm:$0xff]
  %v307 = vld [vmem:[%s5 + $0x68] sm:$0xff]
  %v308 = vld [vmem:[%s5 + $0x70] sm:$0xff]
  %v309 = vld [vmem:[%s5 + $0x78] sm:$0xff]
  %v310 = vld [vmem:[%s6] sm:$0x1]
  %v312 = vlaneseq
  %v313 = vshrl.u32 %v312, 7
  %v314 = vsub.s32 0, %v313
  %v315 = vrot.slane %v310, %v314
  %317 = vmatprep.subr.mxu0 0.0
  %318 = vmatpush1.msra.mxu0 %v294
  %319 = vmatprep.subr.mxu0 0.0
  %320 = vmatpush1.msra.mxu0 %v295
  %321 = vmatprep.subr.mxu0 0.0
  %322 = vmatpush1.msra.mxu0 %v296
  %323 = vmatprep.subr.mxu0 0.0
  %324 = vmatpush1.msra.mxu0 %v297
  %325 = vmatprep.subr.mxu0 0.0
  %326 = vmatpush1.msra.mxu0 %v298
  %327 = vmatprep.subr.mxu0 0.0
  %328 = vmatpush1.msra.mxu0 %v299
  %329 = vmatprep.subr.mxu0 0.0
  %330 = vmatpush1.msra.mxu0 %v300
  %331 = vmatprep.subr.mxu0 0.0
  %332 = vmatpush1.msra.mxu0 %v301
  %333 = vmatprep.subr.mxu0 0.0
  %334 = vmatpush1.msra.mxu0 %v302
  %335 = vmatprep.subr.mxu0 0.0
  %336 = vmatpush1.msra.mxu0 %v303
  %337 = vmatprep.subr.mxu0 0.0
  %338 = vmatpush1.msra.mxu0 %v304
  %339 = vmatprep.subr.mxu0 0.0
  %340 = vmatpush1.msra.mxu0 %v305
  %341 = vmatprep.subr.mxu0 0.0
  %342 = vmatpush1.msra.mxu0 %v306
  %343 = vmatprep.subr.mxu0 0.0
  %344 = vmatpush1.msra.mxu0 %v307
  %345 = vmatprep.subr.mxu0 0.0
  %346 = vmatpush1.msra.mxu0 %v308
  %347 = vmatprep.subr.mxu0 0.0
  %348 = vmatpush1.msra.mxu0 %v309
  %349 = vmatprep.subr.mxu0 0.0
  %350 = vmatpush1.msra.mxu0 0.0
  %351 = vmatprep.subr.mxu0 0.0
  %352 = vmatpush1.msra.mxu0 0.0
  %353 = vmatprep.subr.mxu0 0.0
  %354 = vmatpush1.msra.mxu0 0.0
  %355 = vmatprep.subr.mxu0 0.0
  %356 = vmatpush1.msra.mxu0 0.0
  %357 = vmatprep.subr.mxu0 0.0
  %358 = vmatpush1.msra.mxu0 0.0
  %359 = vmatprep.subr.mxu0 0.0
  %360 = vmatpush1.msra.mxu0 0.0
  %361 = vmatprep.subr.mxu0 0.0
  %362 = vmatpush1.msra.mxu0 0.0
  %363 = vmatprep.subr.mxu0 0.0
  %364 = vmatpush1.msra.mxu0 0.0
  %365 = vmatprep.subr.mxu0 0.0
  %366 = vmatpush1.msra.mxu0 0.0
  %367 = vmatprep.subr.mxu0 0.0
  %368 = vmatpush1.msra.mxu0 0.0
  %369 = vmatprep.subr.mxu0 0.0
  %370 = vmatpush1.msra.mxu0 0.0
  %371 = vmatprep.subr.mxu0 0.0
  %372 = vmatpush1.msra.mxu0 0.0
  %373 = vmatprep.subr.mxu0 0.0
  %374 = vmatpush1.msra.mxu0 0.0
  %375 = vmatprep.subr.mxu0 0.0
  %376 = vmatpush1.msra.mxu0 0.0
  %377 = vmatprep.subr.mxu0 0.0
  %378 = vmatpush1.msra.mxu0 0.0
  %379 = vmatprep.subr.mxu0 0.0
  %380 = vmatpush1.msra.mxu0 0.0
  %381 = vmatprep.mubr.f32.mxu0 0.0
  %382 = vmatmul.mubr.f32.gmra.mrb[0].mxu0 %v290
  %v383 = vpop.f32.mrb[0].mxu0
  %v384 = vadd.f32 %v315, %v383
  %v385 = vpop.f32.mrb[0].mxu0
  %386 = vmatprep.mubr.f32.mxu0 0.0
  %387 = vmatmul.mubr.f32.gmra.mrb[0].mxu0 %v291
  %v388 = vpop.f32.mrb[0].mxu0
  %v389 = vadd.f32 %v315, %v388
  %v390 = vpop.f32.mrb[0].mxu0
  %391 = vmatprep.mubr.f32.mxu0 0.0
  %392 = vmatmul.mubr.f32.gmra.mrb[0].mxu0 %v292
  %v393 = vpop.f32.mrb[0].mxu0
  %v394 = vadd.f32 %v315, %v393
  %v395 = vpop.f32.mrb[0].mxu0
  %396 = vmatprep.mubr.f32.mxu0 0.0
  %397 = vmatmul.mubr.f32.gmra.mrb[0].mxu0 %v293
  %v398 = vpop.f32.mrb[0].mxu0
  %v399 = vadd.f32 %v315, %v398
  %v400 = vpop.f32.mrb[0].mxu0
  %401 = vdwg.mxu0
  %402 = vst [vmem:[%s7] sm:$0xff] %v384
  %403 = vst [vmem:[%s7 + $0x8] sm:$0xff] %v389
  %404 = vst [vmem:[%s7 + $0x10] sm:$0xff] %v394
  %405 = vst [vmem:[%s7 + $0x18] sm:$0xff] %v399
  // Predicated region
  $region30: #{forward.9} parent=0 // pred_check
    _
  $region31: #{forward.9} parent=0 // pred_check_branch
    %407 = sbr.rel (0) target = $region33
  $region32: #{forward.9} parent=0 // pred_region
    _
  $region33: #{forward.9} parent=0 // pred_fallthru
    _
  // Predicated region
  $region34: #{forward.9} parent=0 // pred_check
    _
  $region35: #{forward.9} parent=0 // pred_check_branch
    %409 = sbr.rel (0) target = $region37
  $region36: #{forward.9} parent=0 // pred_region
    _
  $region37: #{forward.9} parent=0 // pred_fallthru
    _

// kernel: forward.6
$region0: #{forward.6}
  #allocation0 [shape = 'u32[]', space=smem, size = 0x4, offset = 0x4, fixed_abs, tag = 'smem constant byte address 0x4 - core index']
  #allocation1 [shape = 'u32[144,128]{1,0:T(1,128)}', space=vmem, size = 0x12000, scoped, tag = 'internal scratch']
  #allocation2 [shape = 'f32[32,32]{1,0:T(8,128)}', space=vmem, size = 0x4000, scoped, tag = 'scratch operand']
  %s0 = inlined_call_operand.vmem [shape: f32[32,128], index: 0, kind: input, shape index: {}]
  %s1 = inlined_call_operand.vmem [shape: f32[32,32], index: 1, kind: input, shape index: {}]
  %s2 = inlined_call_operand.vmem [shape: f32[1,32], index: 2, kind: input, shape index: {}]
  %s3 = inlined_call_operand.vmem [shape: f32[128,128], index: 3, kind: input, shape index: {}]
  %s4 = inlined_call_operand.vmem [shape: f32[128,128], index: 4, kind: input, shape index: {}]
  %s5 = inlined_call_operand.vmem [shape: f32[1,128], index: 5, kind: input, shape index: {}]
  %s6 = inlined_call_operand.vmem [shape: f32[128,128], index: 6, kind: input, shape index: {}]
  %s7 = inlined_call_operand.vmem [shape: f32[1,128], index: 7, kind: input, shape index: {}]
  %s8 = inlined_call_operand.vmem [shape: f32[32,128], index: 8, kind: output, shape index: {0}]
  %s9 = inlined_call_operand.vmem [shape: s32[1,32], index: 9, kind: output, shape index: {1}]
  %10 = xla_tuple %s8, %s9
  %s11 = sld [smem:[#allocation0]]
  $region57: #{forward.6} parent=0
    _
  %s13 = ssub.s32 1, %s11
  %s14 = scalar_select 0, %s13, %s11
  // Predicated region
  $region2: #{forward.6} parent=0 // pred_check
    _
  $region3: #{forward.6} parent=0 // pred_check_branch
    %16 = sbr.rel (0) target = $region5
  $region4: #{forward.6} parent=0 // pred_region
    _
  $region5: #{forward.6} parent=0 // pred_fallthru
    _
  // Predicated region
  $region6: #{forward.6} parent=0 // pred_check
    _
  $region7: #{forward.6} parent=0 // pred_check_branch
    %18 = sbr.rel (0) target = $region9
  $region8: #{forward.6} parent=0 // pred_region
    _
  $region9: #{forward.6} parent=0 // pred_fallthru
    _
  // Predicated region
  $region10: #{forward.6} parent=0 // pred_check
    _
  $region11: #{forward.6} parent=0 // pred_check_branch
    %20 = sbr.rel (0) target = $region13
  $region12: #{forward.6} parent=0 // pred_region
    _
  $region13: #{forward.6} parent=0 // pred_fallthru
    _
  // Predicated region
  $region14: #{forward.6} parent=0 // pred_check
    _
  $region15: #{forward.6} parent=0 // pred_check_branch
    %22 = sbr.rel (0) target = $region17
  $region16: #{forward.6} parent=0 // pred_region
    _
  $region17: #{forward.6} parent=0 // pred_fallthru
    _
  // Predicated region
  $region18: #{forward.6} parent=0 // pred_check
    _
  $region19: #{forward.6} parent=0 // pred_check_branch
    %24 = sbr.rel (0) target = $region21
  $region20: #{forward.6} parent=0 // pred_region
    _
  $region21: #{forward.6} parent=0 // pred_fallthru
    _
  // Predicated region
  $region22: #{forward.6} parent=0 // pred_check
    _
  $region23: #{forward.6} parent=0 // pred_check_branch
    %26 = sbr.rel (0) target = $region25
  $region24: #{forward.6} parent=0 // pred_region
    _
  $region25: #{forward.6} parent=0 // pred_fallthru
    _
  // Predicated region
  $region26: #{forward.6} parent=0 // pred_check
    _
  $region27: #{forward.6} parent=0 // pred_check_branch
    %28 = sbr.rel (0) target = $region29
  $region28: #{forward.6} parent=0 // pred_region
    _
  $region29: #{forward.6} parent=0 // pred_fallthru
    _
  // Predicated region
  $region30: #{forward.6} parent=0 // pred_check
    _
  $region31: #{forward.6} parent=0 // pred_check_branch
    %30 = sbr.rel (0) target = $region33
  $region32: #{forward.6} parent=0 // pred_region
    _
  $region33: #{forward.6} parent=0 // pred_fallthru
    _
  %v31 = vld [vmem:[%s0] sm:$0xff]
  %v32 = vld [vmem:[%s0 + $0x8] sm:$0xff]
  %v33 = vld [vmem:[%s0 + $0x10] sm:$0xff]
  %v34 = vld [vmem:[%s0 + $0x18] sm:$0xff]
  %v35 = vld [vmem:[%s1] sm:$0xff]
  %v36 = vld [vmem:[%s1 + $0x8] sm:$0xff]
  %v37 = vld [vmem:[%s1 + $0x10] sm:$0xff]
  %v38 = vld [vmem:[%s1 + $0x18] sm:$0xff]
  %v39 = vld [vmem:[%s3] sm:$0xff]
  %v40 = vld [vmem:[%s3 + $0x8] sm:$0xff]
  %v41 = vld [vmem:[%s3 + $0x10] sm:$0xff]
  %v42 = vld [vmem:[%s3 + $0x18] sm:$0xff]
  %v43 = vld [vmem:[%s3 + $0x20] sm:$0xff]
  %v44 = vld [vmem:[%s3 + $0x28] sm:$0xff]
  %v45 = vld [vmem:[%s3 + $0x30] sm:$0xff]
  %v46 = vld [vmem:[%s3 + $0x38] sm:$0xff]
  %v47 = vld [vmem:[%s3 + $0x40] sm:$0xff]
  %v48 = vld [vmem:[%s3 + $0x48] sm:$0xff]
  %v49 = vld [vmem:[%s3 + $0x50] sm:$0xff]
  %v50 = vld [vmem:[%s3 + $0x58] sm:$0xff]
  %v51 = vld [vmem:[%s3 + $0x60] sm:$0xff]
  %v52 = vld [vmem:[%s3 + $0x68] sm:$0xff]
  %v53 = vld [vmem:[%s3 + $0x70] sm:$0xff]
  %v54 = vld [vmem:[%s3 + $0x78] sm:$0xff]
  %v55 = vld [vmem:[%s5] sm:$0x1]
  %v57 = vlaneseq
  %v58 = vshrl.u32 %v57, 7
  %v59 = vsub.s32 0, %v58
  %v60 = vrot.slane %v55, %v59
  %62 = vmatprep.subr.mxu0 0.0
  %63 = vmatpush1.msra.mxu0 %v39
  %64 = vmatprep.subr.mxu0 0.0
  %65 = vmatpush1.msra.mxu0 %v40
  %66 = vmatprep.subr.mxu0 0.0
  %67 = vmatpush1.msra.mxu0 %v41
  %68 = vmatprep.subr.mxu0 0.0
  %69 = vmatpush1.msra.mxu0 %v42
  %70 = vmatprep.subr.mxu0 0.0
  %71 = vmatpush1.msra.mxu0 %v43
  %72 = vmatprep.subr.mxu0 0.0
  %73 = vmatpush1.msra.mxu0 %v44
  %74 = vmatprep.subr.mxu0 0.0
  %75 = vmatpush1.msra.mxu0 %v45
  %76 = vmatprep.subr.mxu0 0.0
  %77 = vmatpush1.msra.mxu0 %v46
  %78 = vmatprep.subr.mxu0 0.0
  %79 = vmatpush1.msra.mxu0 %v47
  %80 = vmatprep.subr.mxu0 0.0
  %81 = vmatpush1.msra.mxu0 %v48
  %82 = vmatprep.subr.mxu0 0.0
  %83 = vmatpush1.msra.mxu0 %v49
  %84 = vmatprep.subr.mxu0 0.0
  %85 = vmatpush1.msra.mxu0 %v50
  %86 = vmatprep.subr.mxu0 0.0
  %87 = vmatpush1.msra.mxu0 %v51
  %88 = vmatprep.subr.mxu0 0.0
  %89 = vmatpush1.msra.mxu0 %v52
  %90 = vmatprep.subr.mxu0 0.0
  %91 = vmatpush1.msra.mxu0 %v53
  %92 = vmatprep.subr.mxu0 0.0
  %93 = vmatpush1.msra.mxu0 %v54
  %94 = vmatprep.subr.mxu0 0.0
  %95 = vmatpush1.msra.mxu0 0.0
  %96 = vmatprep.subr.mxu0 0.0
  %97 = vmatpush1.msra.mxu0 0.0
  %98 = vmatprep.subr.mxu0 0.0
  %99 = vmatpush1.msra.mxu0 0.0
  %100 = vmatprep.subr.mxu0 0.0
  %101 = vmatpush1.msra.mxu0 0.0
  %102 = vmatprep.subr.mxu0 0.0
  %103 = vmatpush1.msra.mxu0 0.0
  %104 = vmatprep.subr.mxu0 0.0
  %105 = vmatpush1.msra.mxu0 0.0
  %106 = vmatprep.subr.mxu0 0.0
  %107 = vmatpush1.msra.mxu0 0.0
  %108 = vmatprep.subr.mxu0 0.0
  %109 = vmatpush1.msra.mxu0 0.0
  %110 = vmatprep.subr.mxu0 0.0
  %111 = vmatpush1.msra.mxu0 0.0
  %112 = vmatprep.subr.mxu0 0.0
  %113 = vmatpush1.msra.mxu0 0.0
  %114 = vmatprep.subr.mxu0 0.0
  %115 = vmatpush1.msra.mxu0 0.0
  %116 = vmatprep.subr.mxu0 0.0
  %117 = vmatpush1.msra.mxu0 0.0
  %118 = vmatprep.subr.mxu0 0.0
  %119 = vmatpush1.msra.mxu0 0.0
  %120 = vmatprep.subr.mxu0 0.0
  %121 = vmatpush1.msra.mxu0 0.0
  %122 = vmatprep.subr.mxu0 0.0
  %123 = vmatpush1.msra.mxu0 0.0
  %124 = vmatprep.subr.mxu0 0.0
  %125 = vmatpush1.msra.mxu0 0.0
  %126 = vmatprep.mubr.f32.mxu0 0.0
  %127 = vmatmul.mubr.f32.gmra.mrb[0].mxu0 %v31
  %v128 = vpop.f32.mrb[0].mxu0
  %v129 = vadd.f32 %v60, %v128
  %v130 = vpop.f32.mrb[0].mxu0
  %131 = vmatprep.mubr.f32.mxu0 0.0
  %132 = vmatmul.mubr.f32.gmra.mrb[0].mxu0 %v32
  %v133 = vpop.f32.mrb[0].mxu0
  %v134 = vadd.f32 %v60, %v133
  %v135 = vpop.f32.mrb[0].mxu0
  %136 = vmatprep.mubr.f32.mxu0 0.0
  %137 = vmatmul.mubr.f32.gmra.mrb[0].mxu0 %v33
  %v138 = vpop.f32.mrb[0].mxu0
  %v139 = vadd.f32 %v60, %v138
  %v140 = vpop.f32.mrb[0].mxu0
  %141 = vmatprep.mubr.f32.mxu0 0.0
  %142 = vmatmul.mubr.f32.gmra.mrb[0].mxu0 %v34
  %v143 = vpop.f32.mrb[0].mxu0
  %v144 = vadd.f32 %v60, %v143
  %v145 = vpop.f32.mrb[0].mxu0
  %146 = vdwg.mxu0
  %v147 = vld [vmem:[%s4] sm:$0xff]
  %v148 = vld [vmem:[%s4 + $0x8] sm:$0xff]
  %v149 = vld [vmem:[%s4 + $0x10] sm:$0xff]
  %v150 = vld [vmem:[%s4 + $0x18] sm:$0xff]
  %v151 = vld [vmem:[%s4 + $0x20] sm:$0xff]
  %v152 = vld [vmem:[%s4 + $0x28] sm:$0xff]
  %v153 = vld [vmem:[%s4 + $0x30] sm:$0xff]
  %v154 = vld [vmem:[%s4 + $0x38] sm:$0xff]
  %v155 = vld [vmem:[%s4 + $0x40] sm:$0xff]
  %v156 = vld [vmem:[%s4 + $0x48] sm:$0xff]
  %v157 = vld [vmem:[%s4 + $0x50] sm:$0xff]
  %v158 = vld [vmem:[%s4 + $0x58] sm:$0xff]
  %v159 = vld [vmem:[%s4 + $0x60] sm:$0xff]
  %v160 = vld [vmem:[%s4 + $0x68] sm:$0xff]
  %v161 = vld [vmem:[%s4 + $0x70] sm:$0xff]
  %v162 = vld [vmem:[%s4 + $0x78] sm:$0xff]
  %163 = vmatprep.subr.mxu0 0.0
  %164 = vmatpush1.msra.mxu0 %v147
  %165 = vmatprep.subr.mxu0 0.0
  %166 = vmatpush1.msra.mxu0 %v148
  %167 = vmatprep.subr.mxu0 0.0
  %168 = vmatpush1.msra.mxu0 %v149
  %169 = vmatprep.subr.mxu0 0.0
  %170 = vmatpush1.msra.mxu0 %v150
  %171 = vmatprep.subr.mxu0 0.0
  %172 = vmatpush1.msra.mxu0 %v151
  %173 = vmatprep.subr.mxu0 0.0
  %174 = vmatpush1.msra.mxu0 %v152
  %175 = vmatprep.subr.mxu0 0.0
  %176 = vmatpush1.msra.mxu0 %v153
  %177 = vmatprep.subr.mxu0 0.0
  %178 = vmatpush1.msra.mxu0 %v154
  %179 = vmatprep.subr.mxu0 0.0
  %180 = vmatpush1.msra.mxu0 %v155
  %181 = vmatprep.subr.mxu0 0.0
  %182 = vmatpush1.msra.mxu0 %v156
  %183 = vmatprep.subr.mxu0 0.0
  %184 = vmatpush1.msra.mxu0 %v157
  %185 = vmatprep.subr.mxu0 0.0
  %186 = vmatpush1.msra.mxu0 %v158
  %187 = vmatprep.subr.mxu0 0.0
  %188 = vmatpush1.msra.mxu0 %v159
  %189 = vmatprep.subr.mxu0 0.0
  %190 = vmatpush1.msra.mxu0 %v160
  %191 = vmatprep.subr.mxu0 0.0
  %192 = vmatpush1.msra.mxu0 %v161
  %193 = vmatprep.subr.mxu0 0.0
  %194 = vmatpush1.msra.mxu0 %v162
  %195 = vmatprep.subr.mxu0 0.0
  %196 = vmatpush1.msra.mxu0 0.0
  %197 = vmatprep.subr.mxu0 0.0
  %198 = vmatpush1.msra.mxu0 0.0
  %199 = vmatprep.subr.mxu0 0.0
  %200 = vmatpush1.msra.mxu0 0.0
  %201 = vmatprep.subr.mxu0 0.0
  %202 = vmatpush1.msra.mxu0 0.0
  %203 = vmatprep.subr.mxu0 0.0
  %204 = vmatpush1.msra.mxu0 0.0
  %205 = vmatprep.subr.mxu0 0.0
  %206 = vmatpush1.msra.mxu0 0.0
  %207 = vmatprep.subr.mxu0 0.0
  %208 = vmatpush1.msra.mxu0 0.0
  %209 = vmatprep.subr.mxu0 0.0
  %210 = vmatpush1.msra.mxu0 0.0
  %211 = vmatprep.subr.mxu0 0.0
  %212 = vmatpush1.msra.mxu0 0.0
  %213 = vmatprep.subr.mxu0 0.0
  %214 = vmatpush1.msra.mxu0 0.0
  %215 = vmatprep.subr.mxu0 0.0
  %216 = vmatpush1.msra.mxu0 0.0
  %217 = vmatprep.subr.mxu0 0.0
  %218 = vmatpush1.msra.mxu0 0.0
  %219 = vmatprep.subr.mxu0 0.0
  %220 = vmatpush1.msra.mxu0 0.0
  %221 = vmatprep.subr.mxu0 0.0
  %222 = vmatpush1.msra.mxu0 0.0
  %223 = vmatprep.subr.mxu0 0.0
  %224 = vmatpush1.msra.mxu0 0.0
  %225 = vmatprep.subr.mxu0 0.0
  %226 = vmatpush1.msra.mxu0 0.0
  %227 = vmatprep.mubr.f32.mxu0 0.0
  %228 = vmatmul.mubr.f32.gmra.mrb[0].mxu0 %v31
  %v229 = vpop.f32.mrb[0].mxu0
  %v230 = vadd.f32 0.0, %v229
  %v231 = vpop.f32.mrb[0].mxu0
  %232 = vmatprep.mubr.f32.mxu0 0.0
  %233 = vmatmul.mubr.f32.gmra.mrb[0].mxu0 %v32
  %v234 = vpop.f32.mrb[0].mxu0
  %v235 = vadd.f32 0.0, %v234
  %v236 = vpop.f32.mrb[0].mxu0
  %237 = vmatprep.mubr.f32.mxu0 0.0
  %238 = vmatmul.mubr.f32.gmra.mrb[0].mxu0 %v33
  %v239 = vpop.f32.mrb[0].mxu0
  %v240 = vadd.f32 0.0, %v239
  %v241 = vpop.f32.mrb[0].mxu0
  %242 = vmatprep.mubr.f32.mxu0 0.0
  %243 = vmatmul.mubr.f32.gmra.mrb[0].mxu0 %v34
  %v244 = vpop.f32.mrb[0].mxu0
  %v245 = vadd.f32 0.0, %v244
  %v246 = vpop.f32.mrb[0].mxu0
  %247 = vdwg.mxu0
  %v252 = vcombine.high %v129, %v129
  %v254 = vunpack.c.l.s4 1966171168
  %v255 = vunpack.c.0.s8 %v254
  %v256 = vlaneseq
  %v257 = vshrl.u32 %v256, 7
  %v258 = vsub.s32 %v255, %v257
  %v259 = vrot.slane %v129, %v258
  %v261 = vunpack.c.l.s4 1966171168
  %v262 = vunpack.c.0.s8 %v261
  %v263 = vlaneseq
  %v264 = vshrl.u32 %v263, 7
  %v265 = vsub.s32 %v262, %v264
  %v266 = vrot.slane %v252, %v265
  %v267 = vcombine.high %v259, %v259
  %v268 = vcombine.high %v266, %v266
  %v270 = vunpack.c.l.s4 1966171168
  %v271 = vunpack.c.0.s8 %v270
  %v272 = vlaneseq
  %v273 = vshrl.u32 %v272, 7
  %v274 = vsub.s32 %v271, %v273
  %v275 = vrot.slane %v259, %v274
  %v277 = vunpack.c.l.s4 1966171168
  %v278 = vunpack.c.0.s8 %v277
  %v279 = vlaneseq
  %v280 = vshrl.u32 %v279, 7
  %v281 = vsub.s32 %v278, %v280
  %v282 = vrot.slane %v266, %v281
  %v284 = vunpack.c.l.s4 1966171168
  %v285 = vunpack.c.0.s8 %v284
  %v286 = vlaneseq
  %v287 = vshrl.u32 %v286, 7
  %v288 = vsub.s32 %v285, %v287
  %v289 = vrot.slane %v267, %v288
  %v291 = vunpack.c.l.s4 1966171168
  %v292 = vunpack.c.0.s8 %v291
  %v293 = vlaneseq
  %v294 = vshrl.u32 %v293, 7
  %v295 = vsub.s32 %v292, %v294
  %v296 = vrot.slane %v268, %v295
  %v297 = vcombine.high %v275, %v275
  %v298 = vcombine.high %v282, %v282
  %v299 = vcombine.high %v289, %v289
  %v300 = vcombine.high %v296, %v296
  %v301 = vcombine.high %v134, %v134
  %v303 = vunpack.c.l.s4 1966171168
  %v304 = vunpack.c.0.s8 %v303
  %v305 = vlaneseq
  %v306 = vshrl.u32 %v305, 7
  %v307 = vsub.s32 %v304, %v306
  %v308 = vrot.slane %v134, %v307
  %v310 = vunpack.c.l.s4 1966171168
  %v311 = vunpack.c.0.s8 %v310
  %v312 = vlaneseq
  %v313 = vshrl.u32 %v312, 7
  %v314 = vsub.s32 %v311, %v313
  %v315 = vrot.slane %v301, %v314
  %v316 = vcombine.high %v308, %v308
  %v317 = vcombine.high %v315, %v315
  %v319 = vunpack.c.l.s4 1966171168
  %v320 = vunpack.c.0.s8 %v319
  %v321 = vlaneseq
  %v322 = vshrl.u32 %v321, 7
  %v323 = vsub.s32 %v320, %v322
  %v324 = vrot.slane %v308, %v323
  %v326 = vunpack.c.l.s4 1966171168
  %v327 = vunpack.c.0.s8 %v326
  %v328 = vlaneseq
  %v329 = vshrl.u32 %v328, 7
  %v330 = vsub.s32 %v327, %v329
  %v331 = vrot.slane %v315, %v330
  %v333 = vunpack.c.l.s4 1966171168
  %v334 = vunpack.c.0.s8 %v333
  %v335 = vlaneseq
  %v336 = vshrl.u32 %v335, 7
  %v337 = vsub.s32 %v334, %v336
  %v338 = vrot.slane %v316, %v337
  %v340 = vunpack.c.l.s4 1966171168
  %v341 = vunpack.c.0.s8 %v340
  %v342 = vlaneseq
  %v343 = vshrl.u32 %v342, 7
  %v344 = vsub.s32 %v341, %v343
  %v345 = vrot.slane %v317, %v344
  %v346 = vcombine.high %v324, %v324
  %v347 = vcombine.high %v331, %v331
  %v348 = vcombine.high %v338, %v338
  %v349 = vcombine.high %v345, %v345
  %v350 = vcombine.high %v139, %v139
  %v352 = vunpack.c.l.s4 1966171168
  %v353 = vunpack.c.0.s8 %v352
  %v354 = vlaneseq
  %v355 = vshrl.u32 %v354, 7
  %v356 = vsub.s32 %v353, %v355
  %v357 = vrot.slane %v139, %v356
  %v359 = vunpack.c.l.s4 1966171168
  %v360 = vunpack.c.0.s8 %v359
  %v361 = vlaneseq
  %v362 = vshrl.u32 %v361, 7
  %v363 = vsub.s32 %v360, %v362
  %v364 = vrot.slane %v350, %v363
  %v365 = vcombine.high %v357, %v357
  %v366 = vcombine.high %v364, %v364
  %v368 = vunpack.c.l.s4 1966171168
  %v369 = vunpack.c.0.s8 %v368
  %v370 = vlaneseq
  %v371 = vshrl.u32 %v370, 7
  %v372 = vsub.s32 %v369, %v371
  %v373 = vrot.slane %v357, %v372
  %v375 = vunpack.c.l.s4 1966171168
  %v376 = vunpack.c.0.s8 %v375
  %v377 = vlaneseq
  %v378 = vshrl.u32 %v377, 7
  %v379 = vsub.s32 %v376, %v378
  %v380 = vrot.slane %v364, %v379
  %v382 = vunpack.c.l.s4 1966171168
  %v383 = vunpack.c.0.s8 %v382
  %v384 = vlaneseq
  %v385 = vshrl.u32 %v384, 7
  %v386 = vsub.s32 %v383, %v385
  %v387 = vrot.slane %v365, %v386
  %v389 = vunpack.c.l.s4 1966171168
  %v390 = vunpack.c.0.s8 %v389
  %v391 = vlaneseq
  %v392 = vshrl.u32 %v391, 7
  %v393 = vsub.s32 %v390, %v392
  %v394 = vrot.slane %v366, %v393
  %v395 = vcombine.high %v373, %v373
  %v396 = vcombine.high %v380, %v380
  %v397 = vcombine.high %v387, %v387
  %v398 = vcombine.high %v394, %v394
  %v399 = vcombine.high %v144, %v144
  %v401 = vunpack.c.l.s4 1966171168
  %v402 = vunpack.c.0.s8 %v401
  %v403 = vlaneseq
  %v404 = vshrl.u32 %v403, 7
  %v405 = vsub.s32 %v402, %v404
  %v406 = vrot.slane %v144, %v405
  %v408 = vunpack.c.l.s4 1966171168
  %v409 = vunpack.c.0.s8 %v408
  %v410 = vlaneseq
  %v411 = vshrl.u32 %v410, 7
  %v412 = vsub.s32 %v409, %v411
  %v413 = vrot.slane %v399, %v412
  %v414 = vcombine.high %v406, %v406
  %v415 = vcombine.high %v413, %v413
  %v417 = vunpack.c.l.s4 1966171168
  %v418 = vunpack.c.0.s8 %v417
  %v419 = vlaneseq
  %v420 = vshrl.u32 %v419, 7
  %v421 = vsub.s32 %v418, %v420
  %v422 = vrot.slane %v406, %v421
  %v424 = vunpack.c.l.s4 1966171168
  %v425 = vunpack.c.0.s8 %v424
  %v426 = vlaneseq
  %v427 = vshrl.u32 %v426, 7
  %v428 = vsub.s32 %v425, %v427
  %v429 = vrot.slane %v413, %v428
  %v431 = vunpack.c.l.s4 1966171168
  %v432 = vunpack.c.0.s8 %v431
  %v433 = vlaneseq
  %v434 = vshrl.u32 %v433, 7
  %v435 = vsub.s32 %v432, %v434
  %v436 = vrot.slane %v414, %v435
  %v438 = vunpack.c.l.s4 1966171168
  %v439 = vunpack.c.0.s8 %v438
  %v440 = vlaneseq
  %v441 = vshrl.u32 %v440, 7
  %v442 = vsub.s32 %v439, %v441
  %v443 = vrot.slane %v415, %v442
  %v444 = vcombine.high %v422, %v422
  %v445 = vcombine.high %v429, %v429
  %v446 = vcombine.high %v436, %v436
  %v447 = vcombine.high %v443, %v443
  %v448 = vlaneseq
  %v449 = vshrl.u32 %v448, 7
  %v450 = vsub.s32 0, %v449
  %v451 = vrot.slane %v275, %v450
  %v452 = vlaneseq
  %v453 = vshrl.u32 %v452, 7
  %v454 = vsub.s32 0, %v453
  %v455 = vrot.slane %v289, %v454
  %v456 = vlaneseq
  %v457 = vshrl.u32 %v456, 7
  %v458 = vsub.s32 0, %v457
  %v459 = vrot.slane %v297, %v458
  %v460 = vlaneseq
  %v461 = vshrl.u32 %v460, 7
  %v462 = vsub.s32 0, %v461
  %v463 = vrot.slane %v299, %v462
  %v464 = vlaneseq
  %v465 = vshrl.u32 %v464, 7
  %v466 = vsub.s32 0, %v465
  %v467 = vrot.slane %v282, %v466
  %v468 = vlaneseq
  %v469 = vshrl.u32 %v468, 7
  %v470 = vsub.s32 0, %v469
  %v471 = vrot.slane %v296, %v470
  %v472 = vlaneseq
  %v473 = vshrl.u32 %v472, 7
  %v474 = vsub.s32 0, %v473
  %v475 = vrot.slane %v298, %v474
  %v476 = vlaneseq
  %v477 = vshrl.u32 %v476, 7
  %v478 = vsub.s32 0, %v477
  %v479 = vrot.slane %v300, %v478
  %v480 = vlaneseq
  %v481 = vshrl.u32 %v480, 7
  %v482 = vsub.s32 0, %v481
  %v483 = vrot.slane %v324, %v482
  %v484 = vlaneseq
  %v485 = vshrl.u32 %v484, 7
  %v486 = vsub.s32 0, %v485
  %v487 = vrot.slane %v338, %v486
  %v488 = vlaneseq
  %v489 = vshrl.u32 %v488, 7
  %v490 = vsub.s32 0, %v489
  %v491 = vrot.slane %v346, %v490
  %v492 = vlaneseq
  %v493 = vshrl.u32 %v492, 7
  %v494 = vsub.s32 0, %v493
  %v495 = vrot.slane %v348, %v494
  %v496 = vlaneseq
  %v497 = vshrl.u32 %v496, 7
  %v498 = vsub.s32 0, %v497
  %v499 = vrot.slane %v331, %v498
  %v500 = vlaneseq
  %v501 = vshrl.u32 %v500, 7
  %v502 = vsub.s32 0, %v501
  %v503 = vrot.slane %v345, %v502
  %v504 = vlaneseq
  %v505 = vshrl.u32 %v504, 7
  %v506 = vsub.s32 0, %v505
  %v507 = vrot.slane %v347, %v506
  %v508 = vlaneseq
  %v509 = vshrl.u32 %v508, 7
  %v510 = vsub.s32 0, %v509
  %v511 = vrot.slane %v349, %v510
  %v512 = vlaneseq
  %v513 = vshrl.u32 %v512, 7
  %v514 = vsub.s32 0, %v513
  %v515 = vrot.slane %v373, %v514
  %v516 = vlaneseq
  %v517 = vshrl.u32 %v516, 7
  %v518 = vsub.s32 0, %v517
  %v519 = vrot.slane %v387, %v518
  %v520 = vlaneseq
  %v521 = vshrl.u32 %v520, 7
  %v522 = vsub.s32 0, %v521
  %v523 = vrot.slane %v395, %v522
  %v524 = vlaneseq
  %v525 = vshrl.u32 %v524, 7
  %v526 = vsub.s32 0, %v525
  %v527 = vrot.slane %v397, %v526
  %v528 = vlaneseq
  %v529 = vshrl.u32 %v528, 7
  %v530 = vsub.s32 0, %v529
  %v531 = vrot.slane %v380, %v530
  %v532 = vlaneseq
  %v533 = vshrl.u32 %v532, 7
  %v534 = vsub.s32 0, %v533
  %v535 = vrot.slane %v394, %v534
  %v536 = vlaneseq
  %v537 = vshrl.u32 %v536, 7
  %v538 = vsub.s32 0, %v537
  %v539 = vrot.slane %v396, %v538
  %v540 = vlaneseq
  %v541 = vshrl.u32 %v540, 7
  %v542 = vsub.s32 0, %v541
  %v543 = vrot.slane %v398, %v542
  %v544 = vlaneseq
  %v545 = vshrl.u32 %v544, 7
  %v546 = vsub.s32 0, %v545
  %v547 = vrot.slane %v422, %v546
  %v548 = vlaneseq
  %v549 = vshrl.u32 %v548, 7
  %v550 = vsub.s32 0, %v549
  %v551 = vrot.slane %v436, %v550
  %v552 = vlaneseq
  %v553 = vshrl.u32 %v552, 7
  %v554 = vsub.s32 0, %v553
  %v555 = vrot.slane %v444, %v554
  %v556 = vlaneseq
  %v557 = vshrl.u32 %v556, 7
  %v558 = vsub.s32 0, %v557
  %v559 = vrot.slane %v446, %v558
  %v560 = vlaneseq
  %v561 = vshrl.u32 %v560, 7
  %v562 = vsub.s32 0, %v561
  %v563 = vrot.slane %v429, %v562
  %v564 = vlaneseq
  %v565 = vshrl.u32 %v564, 7
  %v566 = vsub.s32 0, %v565
  %v567 = vrot.slane %v443, %v566
  %v568 = vlaneseq
  %v569 = vshrl.u32 %v568, 7
  %v570 = vsub.s32 0, %v569
  %v571 = vrot.slane %v445, %v570
  %v572 = vlaneseq
  %v573 = vshrl.u32 %v572, 7
  %v574 = vsub.s32 0, %v573
  %v575 = vrot.slane %v447, %v574
  %v608 = vadd.f32 %v451, %v230
  %v609 = vadd.f32 %v451, %v235
  %v610 = vadd.f32 %v451, %v240
  %v611 = vadd.f32 %v451, %v245
  %v612 = vadd.f32 %v455, %v230
  %v613 = vadd.f32 %v455, %v235
  %v614 = vadd.f32 %v455, %v240
  %v615 = vadd.f32 %v455, %v245
  %v616 = vadd.f32 %v459, %v230
  %v617 = vadd.f32 %v459, %v235
  %v618 = vadd.f32 %v459, %v240
  %v619 = vadd.f32 %v459, %v245
  %v620 = vadd.f32 %v463, %v230
  %v621 = vadd.f32 %v463, %v235
  %v622 = vadd.f32 %v463, %v240
  %v623 = vadd.f32 %v463, %v245
  %v624 = vadd.f32 %v467, %v230
  %v625 = vadd.f32 %v467, %v235
  %v626 = vadd.f32 %v467, %v240
  %v627 = vadd.f32 %v467, %v245
  %v628 = vadd.f32 %v471, %v230
  %v629 = vadd.f32 %v471, %v235
  %v630 = vadd.f32 %v471, %v240
  %v631 = vadd.f32 %v471, %v245
  %v632 = vadd.f32 %v475, %v230
  %v633 = vadd.f32 %v475, %v235
  %v634 = vadd.f32 %v475, %v240
  %v635 = vadd.f32 %v475, %v245
  %v636 = vadd.f32 %v479, %v230
  %v637 = vadd.f32 %v479, %v235
  %v638 = vadd.f32 %v479, %v240
  %v639 = vadd.f32 %v479, %v245
  %v640 = vadd.f32 %v483, %v230
  %v641 = vadd.f32 %v483, %v235
  %v642 = vadd.f32 %v483, %v240
  %v643 = vadd.f32 %v483, %v245
  %v644 = vadd.f32 %v487, %v230
  %v645 = vadd.f32 %v487, %v235
  %v646 = vadd.f32 %v487, %v240
  %v647 = vadd.f32 %v487, %v245
  %v648 = vadd.f32 %v491, %v230
  %v649 = vadd.f32 %v491, %v235
  %v650 = vadd.f32 %v491, %v240
  %v651 = vadd.f32 %v491, %v245
  %v652 = vadd.f32 %v495, %v230
  %v653 = vadd.f32 %v495, %v235
  %v654 = vadd.f32 %v495, %v240
  %v655 = vadd.f32 %v495, %v245
  %v656 = vadd.f32 %v499, %v230
  %v657 = vadd.f32 %v499, %v235
  %v658 = vadd.f32 %v499, %v240
  %v659 = vadd.f32 %v499, %v245
  %v660 = vadd.f32 %v503, %v230
  %v661 = vadd.f32 %v503, %v235
  %v662 = vadd.f32 %v503, %v240
  %v663 = vadd.f32 %v503, %v245
  %v664 = vadd.f32 %v507, %v230
  %v665 = vadd.f32 %v507, %v235
  %v666 = vadd.f32 %v507, %v240
  %v667 = vadd.f32 %v507, %v245
  %v668 = vadd.f32 %v511, %v230
  %v669 = vadd.f32 %v511, %v235
  %v670 = vadd.f32 %v511, %v240
  %v671 = vadd.f32 %v511, %v245
  %v672 = vadd.f32 %v515, %v230
  %v673 = vadd.f32 %v515, %v235
  %v674 = vadd.f32 %v515, %v240
  %v675 = vadd.f32 %v515, %v245
  %v676 = vadd.f32 %v519, %v230
  %v677 = vadd.f32 %v519, %v235
  %v678 = vadd.f32 %v519, %v240
  %v679 = vadd.f32 %v519, %v245
  %v680 = vadd.f32 %v523, %v230
  %v681 = vadd.f32 %v523, %v235
  %v682 = vadd.f32 %v523, %v240
  %v683 = vadd.f32 %v523, %v245
  %v684 = vadd.f32 %v527, %v230
  %v685 = vadd.f32 %v527, %v235
  %v686 = vadd.f32 %v527, %v240
  %v687 = vadd.f32 %v527, %v245
  %v688 = vadd.f32 %v531, %v230
  %v689 = vadd.f32 %v531, %v235
  %v690 = vadd.f32 %v531, %v240
  %v691 = vadd.f32 %v531, %v245
  %v692 = vadd.f32 %v535, %v230
  %v693 = vadd.f32 %v535, %v235
  %v694 = vadd.f32 %v535, %v240
  %v695 = vadd.f32 %v535, %v245
  %v696 = vadd.f32 %v539, %v230
  %v697 = vadd.f32 %v539, %v235
  %v698 = vadd.f32 %v539, %v240
  %v699 = vadd.f32 %v539, %v245
  %v700 = vadd.f32 %v543, %v230
  %v701 = vadd.f32 %v543, %v235
  %v702 = vadd.f32 %v543, %v240
  %v703 = vadd.f32 %v543, %v245
  %v704 = vadd.f32 %v547, %v230
  %v705 = vadd.f32 %v547, %v235
  %v706 = vadd.f32 %v547, %v240
  %v707 = vadd.f32 %v547, %v245
  %v708 = vadd.f32 %v551, %v230
  %v709 = vadd.f32 %v551, %v235
  %v710 = vadd.f32 %v551, %v240
  %v711 = vadd.f32 %v551, %v245
  %v712 = vadd.f32 %v555, %v230
  %v713 = vadd.f32 %v555, %v235
  %v714 = vadd.f32 %v555, %v240
  %v715 = vadd.f32 %v555, %v245
  %v716 = vadd.f32 %v559, %v230
  %v717 = vadd.f32 %v559, %v235
  %v718 = vadd.f32 %v559, %v240
  %v719 = vadd.f32 %v559, %v245
  %v720 = vadd.f32 %v563, %v230
  %v721 = vadd.f32 %v563, %v235
  %v722 = vadd.f32 %v563, %v240
  %v723 = vadd.f32 %v563, %v245
  %v724 = vadd.f32 %v567, %v230
  %v725 = vadd.f32 %v567, %v235
  %v726 = vadd.f32 %v567, %v240
  %v727 = vadd.f32 %v567, %v245
  %v728 = vadd.f32 %v571, %v230
  %v729 = vadd.f32 %v571, %v235
  %v730 = vadd.f32 %v571, %v240
  %v731 = vadd.f32 %v571, %v245
  %v732 = vadd.f32 %v575, %v230
  %v733 = vadd.f32 %v575, %v235
  %v734 = vadd.f32 %v575, %v240
  %v735 = vadd.f32 %v575, %v245
  %v740 = vcombine.high %v230, %v230
  %v742 = vunpack.c.l.s4 1966171168
  %v743 = vunpack.c.0.s8 %v742
  %v744 = vlaneseq
  %v745 = vshrl.u32 %v744, 7
  %v746 = vsub.s32 %v743, %v745
  %v747 = vrot.slane %v230, %v746
  %v749 = vunpack.c.l.s4 1966171168
  %v750 = vunpack.c.0.s8 %v749
  %v751 = vlaneseq
  %v752 = vshrl.u32 %v751, 7
  %v753 = vsub.s32 %v750, %v752
  %v754 = vrot.slane %v740, %v753
  %v755 = vcombine.high %v747, %v747
  %v756 = vcombine.high %v754, %v754
  %v758 = vunpack.c.l.s4 1966171168
  %v759 = vunpack.c.0.s8 %v758
  %v760 = vlaneseq
  %v761 = vshrl.u32 %v760, 7
  %v762 = vsub.s32 %v759, %v761
  %v763 = vrot.slane %v747, %v762
  %v765 = vunpack.c.l.s4 1966171168
  %v766 = vunpack.c.0.s8 %v765
  %v767 = vlaneseq
  %v768 = vshrl.u32 %v767, 7
  %v769 = vsub.s32 %v766, %v768
  %v770 = vrot.slane %v754, %v769
  %v772 = vunpack.c.l.s4 1966171168
  %v773 = vunpack.c.0.s8 %v772
  %v774 = vlaneseq
  %v775 = vshrl.u32 %v774, 7
  %v776 = vsub.s32 %v773, %v775
  %v777 = vrot.slane %v755, %v776
  %v779 = vunpack.c.l.s4 1966171168
  %v780 = vunpack.c.0.s8 %v779
  %v781 = vlaneseq
  %v782 = vshrl.u32 %v781, 7
  %v783 = vsub.s32 %v780, %v782
  %v784 = vrot.slane %v756, %v783
  %v785 = vcombine.high %v763, %v763
  %v786 = vcombine.high %v770, %v770
  %v787 = vcombine.high %v777, %v777
  %v788 = vcombine.high %v784, %v784
  %v789 = vcombine.high %v235, %v235
  %v791 = vunpack.c.l.s4 1966171168
  %v792 = vunpack.c.0.s8 %v791
  %v793 = vlaneseq
  %v794 = vshrl.u32 %v793, 7
  %v795 = vsub.s32 %v792, %v794
  %v796 = vrot.slane %v235, %v795
  %v798 = vunpack.c.l.s4 1966171168
  %v799 = vunpack.c.0.s8 %v798
  %v800 = vlaneseq
  %v801 = vshrl.u32 %v800, 7
  %v802 = vsub.s32 %v799, %v801
  %v803 = vrot.slane %v789, %v802
  %v804 = vcombine.high %v796, %v796
  %v805 = vcombine.high %v803, %v803
  %v807 = vunpack.c.l.s4 1966171168
  %v808 = vunpack.c.0.s8 %v807
  %v809 = vlaneseq
  %v810 = vshrl.u32 %v809, 7
  %v811 = vsub.s32 %v808, %v810
  %v812 = vrot.slane %v796, %v811
  %v814 = vunpack.c.l.s4 1966171168
  %v815 = vunpack.c.0.s8 %v814
  %v816 = vlaneseq
  %v817 = vshrl.u32 %v816, 7
  %v818 = vsub.s32 %v815, %v817
  %v819 = vrot.slane %v803, %v818
  %v821 = vunpack.c.l.s4 1966171168
  %v822 = vunpack.c.0.s8 %v821
  %v823 = vlaneseq
  %v824 = vshrl.u32 %v823, 7
  %v825 = vsub.s32 %v822, %v824
  %v826 = vrot.slane %v804, %v825
  %v828 = vunpack.c.l.s4 1966171168
  %v829 = vunpack.c.0.s8 %v828
  %v830 = vlaneseq
  %v831 = vshrl.u32 %v830, 7
  %v832 = vsub.s32 %v829, %v831
  %v833 = vrot.slane %v805, %v832
  %v834 = vcombine.high %v812, %v812
  %v835 = vcombine.high %v819, %v819
  %v836 = vcombine.high %v826, %v826
  %v837 = vcombine.high %v833, %v833
  %v838 = vcombine.high %v240, %v240
  %v840 = vunpack.c.l.s4 1966171168
  %v841 = vunpack.c.0.s8 %v840
  %v842 = vlaneseq
  %v843 = vshrl.u32 %v842, 7
  %v844 = vsub.s32 %v841, %v843
  %v845 = vrot.slane %v240, %v844
  %v847 = vunpack.c.l.s4 1966171168
  %v848 = vunpack.c.0.s8 %v847
  %v849 = vlaneseq
  %v850 = vshrl.u32 %v849, 7
  %v851 = vsub.s32 %v848, %v850
  %v852 = vrot.slane %v838, %v851
  %v853 = vcombine.high %v845, %v845
  %v854 = vcombine.high %v852, %v852
  %v856 = vunpack.c.l.s4 1966171168
  %v857 = vunpack.c.0.s8 %v856
  %v858 = vlaneseq
  %v859 = vshrl.u32 %v858, 7
  %v860 = vsub.s32 %v857, %v859
  %v861 = vrot.slane %v845, %v860
  %v863 = vunpack.c.l.s4 1966171168
  %v864 = vunpack.c.0.s8 %v863
  %v865 = vlaneseq
  %v866 = vshrl.u32 %v865, 7
  %v867 = vsub.s32 %v864, %v866
  %v868 = vrot.slane %v852, %v867
  %v870 = vunpack.c.l.s4 1966171168
  %v871 = vunpack.c.0.s8 %v870
  %v872 = vlaneseq
  %v873 = vshrl.u32 %v872, 7
  %v874 = vsub.s32 %v871, %v873
  %v875 = vrot.slane %v853, %v874
  %v877 = vunpack.c.l.s4 1966171168
  %v878 = vunpack.c.0.s8 %v877
  %v879 = vlaneseq
  %v880 = vshrl.u32 %v879, 7
  %v881 = vsub.s32 %v878, %v880
  %v882 = vrot.slane %v854, %v881
  %v883 = vcombine.high %v861, %v861
  %v884 = vcombine.high %v868, %v868
  %v885 = vcombine.high %v875, %v875
  %v886 = vcombine.high %v882, %v882
  %v887 = vcombine.high %v245, %v245
  %v889 = vunpack.c.l.s4 1966171168
  %v890 = vunpack.c.0.s8 %v889
  %v891 = vlaneseq
  %v892 = vshrl.u32 %v891, 7
  %v893 = vsub.s32 %v890, %v892
  %v894 = vrot.slane %v245, %v893
  %v896 = vunpack.c.l.s4 1966171168
  %v897 = vunpack.c.0.s8 %v896
  %v898 = vlaneseq
  %v899 = vshrl.u32 %v898, 7
  %v900 = vsub.s32 %v897, %v899
  %v901 = vrot.slane %v887, %v900
  %v902 = vcombine.high %v894, %v894
  %v903 = vcombine.high %v901, %v901
  %v905 = vunpack.c.l.s4 1966171168
  %v906 = vunpack.c.0.s8 %v905
  %v907 = vlaneseq
  %v908 = vshrl.u32 %v907, 7
  %v909 = vsub.s32 %v906, %v908
  %v910 = vrot.slane %v894, %v909
  %v912 = vunpack.c.l.s4 1966171168
  %v913 = vunpack.c.0.s8 %v912
  %v914 = vlaneseq
  %v915 = vshrl.u32 %v914, 7
  %v916 = vsub.s32 %v913, %v915
  %v917 = vrot.slane %v901, %v916
  %v919 = vunpack.c.l.s4 1966171168
  %v920 = vunpack.c.0.s8 %v919
  %v921 = vlaneseq
  %v922 = vshrl.u32 %v921, 7
  %v923 = vsub.s32 %v920, %v922
  %v924 = vrot.slane %v902, %v923
  %v926 = vunpack.c.l.s4 1966171168
  %v927 = vunpack.c.0.s8 %v926
  %v928 = vlaneseq
  %v929 = vshrl.u32 %v928, 7
  %v930 = vsub.s32 %v927, %v929
  %v931 = vrot.slane %v903, %v930
  %v932 = vcombine.high %v910, %v910
  %v933 = vcombine.high %v917, %v917
  %v934 = vcombine.high %v924, %v924
  %v935 = vcombine.high %v931, %v931
  %v936 = vlaneseq
  %v937 = vshrl.u32 %v936, 7
  %v938 = vsub.s32 0, %v937
  %v939 = vrot.slane %v763, %v938
  %v940 = vlaneseq
  %v941 = vshrl.u32 %v940, 7
  %v942 = vsub.s32 0, %v941
  %v943 = vrot.slane %v777, %v942
  %v944 = vlaneseq
  %v945 = vshrl.u32 %v944, 7
  %v946 = vsub.s32 0, %v945
  %v947 = vrot.slane %v785, %v946
  %v948 = vlaneseq
  %v949 = vshrl.u32 %v948, 7
  %v950 = vsub.s32 0, %v949
  %v951 = vrot.slane %v787, %v950
  %v952 = vlaneseq
  %v953 = vshrl.u32 %v952, 7
  %v954 = vsub.s32 0, %v953
  %v955 = vrot.slane %v770, %v954
  %v956 = vlaneseq
  %v957 = vshrl.u32 %v956, 7
  %v958 = vsub.s32 0, %v957
  %v959 = vrot.slane %v784, %v958
  %v960 = vlaneseq
  %v961 = vshrl.u32 %v960, 7
  %v962 = vsub.s32 0, %v961
  %v963 = vrot.slane %v786, %v962
  %v964 = vlaneseq
  %v965 = vshrl.u32 %v964, 7
  %v966 = vsub.s32 0, %v965
  %v967 = vrot.slane %v788, %v966
  %v968 = vlaneseq
  %v969 = vshrl.u32 %v968, 7
  %v970 = vsub.s32 0, %v969
  %v971 = vrot.slane %v812, %v970
  %v972 = vlaneseq
  %v973 = vshrl.u32 %v972, 7
  %v974 = vsub.s32 0, %v973
  %v975 = vrot.slane %v826, %v974
  %v976 = vlaneseq
  %v977 = vshrl.u32 %v976, 7
  %v978 = vsub.s32 0, %v977
  %v979 = vrot.slane %v834, %v978
  %v980 = vlaneseq
  %v981 = vshrl.u32 %v980, 7
  %v982 = vsub.s32 0, %v981
  %v983 = vrot.slane %v836, %v982
  %v984 = vlaneseq
  %v985 = vshrl.u32 %v984, 7
  %v986 = vsub.s32 0, %v985
  %v987 = vrot.slane %v819, %v986
  %v988 = vlaneseq
  %v989 = vshrl.u32 %v988, 7
  %v990 = vsub.s32 0, %v989
  %v991 = vrot.slane %v833, %v990
  %v992 = vlaneseq
  %v993 = vshrl.u32 %v992, 7
  %v994 = vsub.s32 0, %v993
  %v995 = vrot.slane %v835, %v994
  %v996 = vlaneseq
  %v997 = vshrl.u32 %v996, 7
  %v998 = vsub.s32 0, %v997
  %v999 = vrot.slane %v837, %v998
  %v1000 = vlaneseq
  %v1001 = vshrl.u32 %v1000, 7
  %v1002 = vsub.s32 0, %v1001
  %v1003 = vrot.slane %v861, %v1002
  %v1004 = vlaneseq
  %v1005 = vshrl.u32 %v1004, 7
  %v1006 = vsub.s32 0, %v1005
  %v1007 = vrot.slane %v875, %v1006
  %v1008 = vlaneseq
  %v1009 = vshrl.u32 %v1008, 7
  %v1010 = vsub.s32 0, %v1009
  %v1011 = vrot.slane %v883, %v1010
  %v1012 = vlaneseq
  %v1013 = vshrl.u32 %v1012, 7
  %v1014 = vsub.s32 0, %v1013
  %v1015 = vrot.slane %v885, %v1014
  %v1016 = vlaneseq
  %v1017 = vshrl.u32 %v1016, 7
  %v1018 = vsub.s32 0, %v1017
  %v1019 = vrot.slane %v868, %v1018
  %v1020 = vlaneseq
  %v1021 = vshrl.u32 %v1020, 7
  %v1022 = vsub.s32 0, %v1021
  %v1023 = vrot.slane %v882, %v1022
  %v1024 = vlaneseq
  %v1025 = vshrl.u32 %v1024, 7
  %v1026 = vsub.s32 0, %v1025
  %v1027 = vrot.slane %v884, %v1026
  %v1028 = vlaneseq
  %v1029 = vshrl.u32 %v1028, 7
  %v1030 = vsub.s32 0, %v1029
  %v1031 = vrot.slane %v886, %v1030
  %v1032 = vlaneseq
  %v1033 = vshrl.u32 %v1032, 7
  %v1034 = vsub.s32 0, %v1033
  %v1035 = vrot.slane %v910, %v1034
  %v1036 = vlaneseq
  %v1037 = vshrl.u32 %v1036, 7
  %v1038 = vsub.s32 0, %v1037
  %v1039 = vrot.slane %v924, %v1038
  %v1040 = vlaneseq
  %v1041 = vshrl.u32 %v1040, 7
  %v1042 = vsub.s32 0, %v1041
  %v1043 = vrot.slane %v932, %v1042
  %v1044 = vlaneseq
  %v1045 = vshrl.u32 %v1044, 7
  %v1046 = vsub.s32 0, %v1045
  %v1047 = vrot.slane %v934, %v1046
  %v1048 = vlaneseq
  %v1049 = vshrl.u32 %v1048, 7
  %v1050 = vsub.s32 0, %v1049
  %v1051 = vrot.slane %v917, %v1050
  %v1052 = vlaneseq
  %v1053 = vshrl.u32 %v1052, 7
  %v1054 = vsub.s32 0, %v1053
  %v1055 = vrot.slane %v931, %v1054
  %v1056 = vlaneseq
  %v1057 = vshrl.u32 %v1056, 7
  %v1058 = vsub.s32 0, %v1057
  %v1059 = vrot.slane %v933, %v1058
  %v1060 = vlaneseq
  %v1061 = vshrl.u32 %v1060, 7
  %v1062 = vsub.s32 0, %v1061
  %v1063 = vrot.slane %v935, %v1062
  %v1096 = vsub.f32 %v608, %v939
  %v1097 = vsub.f32 %v609, %v939
  %v1098 = vsub.f32 %v610, %v939
  %v1099 = vsub.f32 %v611, %v939
  %v1100 = vsub.f32 %v612, %v943
  %v1101 = vsub.f32 %v613, %v943
  %v1102 = vsub.f32 %v614, %v943
  %v1103 = vsub.f32 %v615, %v943
  %v1104 = vsub.f32 %v616, %v947
  %v1105 = vsub.f32 %v617, %v947
  %v1106 = vsub.f32 %v618, %v947
  %v1107 = vsub.f32 %v619, %v947
  %v1108 = vsub.f32 %v620, %v951
  %v1109 = vsub.f32 %v621, %v951
  %v1110 = vsub.f32 %v622, %v951
  %v1111 = vsub.f32 %v623, %v951
  %v1112 = vsub.f32 %v624, %v955
  %v1113 = vsub.f32 %v625, %v955
  %v1114 = vsub.f32 %v626, %v955
  %v1115 = vsub.f32 %v627, %v955
  %v1116 = vsub.f32 %v628, %v959
  %v1117 = vsub.f32 %v629, %v959
  %v1118 = vsub.f32 %v630, %v959
  %v1119 = vsub.f32 %v631, %v959
  %v1120 = vsub.f32 %v632, %v963
  %v1121 = vsub.f32 %v633, %v963
  %v1122 = vsub.f32 %v634, %v963
  %v1123 = vsub.f32 %v635, %v963
  %v1124 = vsub.f32 %v636, %v967
  %v1125 = vsub.f32 %v637, %v967
  %v1126 = vsub.f32 %v638, %v967
  %v1127 = vsub.f32 %v639, %v967
  %v1128 = vsub.f32 %v640, %v971
  %v1129 = vsub.f32 %v641, %v971
  %v1130 = vsub.f32 %v642, %v971
  %v1131 = vsub.f32 %v643, %v971
  %v1132 = vsub.f32 %v644, %v975
  %v1133 = vsub.f32 %v645, %v975
  %v1134 = vsub.f32 %v646, %v975
  %v1135 = vsub.f32 %v647, %v975
  %v1136 = vsub.f32 %v648, %v979
  %v1137 = vsub.f32 %v649, %v979
  %v1138 = vsub.f32 %v650, %v979
  %v1139 = vsub.f32 %v651, %v979
  %v1140 = vsub.f32 %v652, %v983
  %v1141 = vsub.f32 %v653, %v983
  %v1142 = vsub.f32 %v654, %v983
  %v1143 = vsub.f32 %v655, %v983
  %v1144 = vsub.f32 %v656, %v987
  %v1145 = vsub.f32 %v657, %v987
  %v1146 = vsub.f32 %v658, %v987
  %v1147 = vsub.f32 %v659, %v987
  %v1148 = vsub.f32 %v660, %v991
  %v1149 = vsub.f32 %v661, %v991
  %v1150 = vsub.f32 %v662, %v991
  %v1151 = vsub.f32 %v663, %v991
  %v1152 = vsub.f32 %v664, %v995
  %v1153 = vsub.f32 %v665, %v995
  %v1154 = vsub.f32 %v666, %v995
  %v1155 = vsub.f32 %v667, %v995
  %v1156 = vsub.f32 %v668, %v999
  %v1157 = vsub.f32 %v669, %v999
  %v1158 = vsub.f32 %v670, %v999
  %v1159 = vsub.f32 %v671, %v999
  %v1160 = vsub.f32 %v672, %v1003
  %v1161 = vsub.f32 %v673, %v1003
  %v1162 = vsub.f32 %v674, %v1003
  %v1163 = vsub.f32 %v675, %v1003
  %v1164 = vsub.f32 %v676, %v1007
  %v1165 = vsub.f32 %v677, %v1007
  %v1166 = vsub.f32 %v678, %v1007
  %v1167 = vsub.f32 %v679, %v1007
  %v1168 = vsub.f32 %v680, %v1011
  %v1169 = vsub.f32 %v681, %v1011
  %v1170 = vsub.f32 %v682, %v1011
  %v1171 = vsub.f32 %v683, %v1011
  %v1172 = vsub.f32 %v684, %v1015
  %v1173 = vsub.f32 %v685, %v1015
  %v1174 = vsub.f32 %v686, %v1015
  %v1175 = vsub.f32 %v687, %v1015
  %v1176 = vsub.f32 %v688, %v1019
  %v1177 = vsub.f32 %v689, %v1019
  %v1178 = vsub.f32 %v690, %v1019
  %v1179 = vsub.f32 %v691, %v1019
  %v1180 = vsub.f32 %v692, %v1023
  %v1181 = vsub.f32 %v693, %v1023
  %v1182 = vsub.f32 %v694, %v1023
  %v1183 = vsub.f32 %v695, %v1023
  %v1184 = vsub.f32 %v696, %v1027
  %v1185 = vsub.f32 %v697, %v1027
  %v1186 = vsub.f32 %v698, %v1027
  %v1187 = vsub.f32 %v699, %v1027
  %v1188 = vsub.f32 %v700, %v1031
  %v1189 = vsub.f32 %v701, %v1031
  %v1190 = vsub.f32 %v702, %v1031
  %v1191 = vsub.f32 %v703, %v1031
  %v1192 = vsub.f32 %v704, %v1035
  %v1193 = vsub.f32 %v705, %v1035
  %v1194 = vsub.f32 %v706, %v1035
  %v1195 = vsub.f32 %v707, %v1035
  %v1196 = vsub.f32 %v708, %v1039
  %v1197 = vsub.f32 %v709, %v1039
  %v1198 = vsub.f32 %v710, %v1039
  %v1199 = vsub.f32 %v711, %v1039
  %v1200 = vsub.f32 %v712, %v1043
  %v1201 = vsub.f32 %v713, %v1043
  %v1202 = vsub.f32 %v714, %v1043
  %v1203 = vsub.f32 %v715, %v1043
  %v1204 = vsub.f32 %v716, %v1047
  %v1205 = vsub.f32 %v717, %v1047
  %v1206 = vsub.f32 %v718, %v1047
  %v1207 = vsub.f32 %v719, %v1047
  %v1208 = vsub.f32 %v720, %v1051
  %v1209 = vsub.f32 %v721, %v1051
  %v1210 = vsub.f32 %v722, %v1051
  %v1211 = vsub.f32 %v723, %v1051
  %v1212 = vsub.f32 %v724, %v1055
  %v1213 = vsub.f32 %v725, %v1055
  %v1214 = vsub.f32 %v726, %v1055
  %v1215 = vsub.f32 %v727, %v1055
  %v1216 = vsub.f32 %v728, %v1059
  %v1217 = vsub.f32 %v729, %v1059
  %v1218 = vsub.f32 %v730, %v1059
  %v1219 = vsub.f32 %v731, %v1059
  %v1220 = vsub.f32 %v732, %v1063
  %v1221 = vsub.f32 %v733, %v1063
  %v1222 = vsub.f32 %v734, %v1063
  %v1223 = vsub.f32 %v735, %v1063
  %vm1224 = vcmp.gt.f32.partialorder %v1096, 0.0
  %vm1225 = vcmp.gt.f32.partialorder %v1097, 0.0
  %vm1226 = vcmp.gt.f32.partialorder %v1098, 0.0
  %vm1227 = vcmp.gt.f32.partialorder %v1099, 0.0
  %vm1228 = vcmp.gt.f32.partialorder %v1100, 0.0
  %vm1229 = vcmp.gt.f32.partialorder %v1101, 0.0
  %vm1230 = vcmp.gt.f32.partialorder %v1102, 0.0
  %vm1231 = vcmp.gt.f32.partialorder %v1103, 0.0
  %vm1232 = vcmp.gt.f32.partialorder %v1104, 0.0
  %vm1233 = vcmp.gt.f32.partialorder %v1105, 0.0
  %vm1234 = vcmp.gt.f32.partialorder %v1106, 0.0
  %vm1235 = vcmp.gt.f32.partialorder %v1107, 0.0
  %vm1236 = vcmp.gt.f32.partialorder %v1108, 0.0
  %vm1237 = vcmp.gt.f32.partialorder %v1109, 0.0
  %vm1238 = vcmp.gt.f32.partialorder %v1110, 0.0
  %vm1239 = vcmp.gt.f32.partialorder %v1111, 0.0
  %vm1240 = vcmp.gt.f32.partialorder %v1112, 0.0
  %vm1241 = vcmp.gt.f32.partialorder %v1113, 0.0
  %vm1242 = vcmp.gt.f32.partialorder %v1114, 0.0
  %vm1243 = vcmp.gt.f32.partialorder %v1115, 0.0
  %vm1244 = vcmp.gt.f32.partialorder %v1116, 0.0
  %vm1245 = vcmp.gt.f32.partialorder %v1117, 0.0
  %vm1246 = vcmp.gt.f32.partialorder %v1118, 0.0
  %vm1247 = vcmp.gt.f32.partialorder %v1119, 0.0
  %vm1248 = vcmp.gt.f32.partialorder %v1120, 0.0
  %vm1249 = vcmp.gt.f32.partialorder %v1121, 0.0
  %vm1250 = vcmp.gt.f32.partialorder %v1122, 0.0
  %vm1251 = vcmp.gt.f32.partialorder %v1123, 0.0
  %vm1252 = vcmp.gt.f32.partialorder %v1124, 0.0
  %vm1253 = vcmp.gt.f32.partialorder %v1125, 0.0
  %vm1254 = vcmp.gt.f32.partialorder %v1126, 0.0
  %vm1255 = vcmp.gt.f32.partialorder %v1127, 0.0
  %vm1256 = vcmp.gt.f32.partialorder %v1128, 0.0
  %vm1257 = vcmp.gt.f32.partialorder %v1129, 0.0
  %vm1258 = vcmp.gt.f32.partialorder %v1130, 0.0
  %vm1259 = vcmp.gt.f32.partialorder %v1131, 0.0
  %vm1260 = vcmp.gt.f32.partialorder %v1132, 0.0
  %vm1261 = vcmp.gt.f32.partialorder %v1133, 0.0
  %vm1262 = vcmp.gt.f32.partialorder %v1134, 0.0
  %vm1263 = vcmp.gt.f32.partialorder %v1135, 0.0
  %vm1264 = vcmp.gt.f32.partialorder %v1136, 0.0
  %vm1265 = vcmp.gt.f32.partialorder %v1137, 0.0
  %vm1266 = vcmp.gt.f32.partialorder %v1138, 0.0
  %vm1267 = vcmp.gt.f32.partialorder %v1139, 0.0
  %vm1268 = vcmp.gt.f32.partialorder %v1140, 0.0
  %vm1269 = vcmp.gt.f32.partialorder %v1141, 0.0
  %vm1270 = vcmp.gt.f32.partialorder %v1142, 0.0
  %vm1271 = vcmp.gt.f32.partialorder %v1143, 0.0
  %vm1272 = vcmp.gt.f32.partialorder %v1144, 0.0
  %vm1273 = vcmp.gt.f32.partialorder %v1145, 0.0
  %vm1274 = vcmp.gt.f32.partialorder %v1146, 0.0
  %vm1275 = vcmp.gt.f32.partialorder %v1147, 0.0
  %vm1276 = vcmp.gt.f32.partialorder %v1148, 0.0
  %vm1277 = vcmp.gt.f32.partialorder %v1149, 0.0
  %vm1278 = vcmp.gt.f32.partialorder %v1150, 0.0
  %vm1279 = vcmp.gt.f32.partialorder %v1151, 0.0
  %vm1280 = vcmp.gt.f32.partialorder %v1152, 0.0
  %vm1281 = vcmp.gt.f32.partialorder %v1153, 0.0
  %vm1282 = vcmp.gt.f32.partialorder %v1154, 0.0
  %vm1283 = vcmp.gt.f32.partialorder %v1155, 0.0
  %vm1284 = vcmp.gt.f32.partialorder %v1156, 0.0
  %vm1285 = vcmp.gt.f32.partialorder %v1157, 0.0
  %vm1286 = vcmp.gt.f32.partialorder %v1158, 0.0
  %vm1287 = vcmp.gt.f32.partialorder %v1159, 0.0
  %vm1288 = vcmp.gt.f32.partialorder %v1160, 0.0
  %vm1289 = vcmp.gt.f32.partialorder %v1161, 0.0
  %vm1290 = vcmp.gt.f32.partialorder %v1162, 0.0
  %vm1291 = vcmp.gt.f32.partialorder %v1163, 0.0
  %vm1292 = vcmp.gt.f32.partialorder %v1164, 0.0
  %vm1293 = vcmp.gt.f32.partialorder %v1165, 0.0
  %vm1294 = vcmp.gt.f32.partialorder %v1166, 0.0
  %vm1295 = vcmp.gt.f32.partialorder %v1167, 0.0
  %vm1296 = vcmp.gt.f32.partialorder %v1168, 0.0
  %vm1297 = vcmp.gt.f32.partialorder %v1169, 0.0
  %vm1298 = vcmp.gt.f32.partialorder %v1170, 0.0
  %vm1299 = vcmp.gt.f32.partialorder %v1171, 0.0
  %vm1300 = vcmp.gt.f32.partialorder %v1172, 0.0
  %vm1301 = vcmp.gt.f32.partialorder %v1173, 0.0
  %vm1302 = vcmp.gt.f32.partialorder %v1174, 0.0
  %vm1303 = vcmp.gt.f32.partialorder %v1175, 0.0
  %vm1304 = vcmp.gt.f32.partialorder %v1176, 0.0
  %vm1305 = vcmp.gt.f32.partialorder %v1177, 0.0
  %vm1306 = vcmp.gt.f32.partialorder %v1178, 0.0
  %vm1307 = vcmp.gt.f32.partialorder %v1179, 0.0
  %vm1308 = vcmp.gt.f32.partialorder %v1180, 0.0
  %vm1309 = vcmp.gt.f32.partialorder %v1181, 0.0
  %vm1310 = vcmp.gt.f32.partialorder %v1182, 0.0
  %vm1311 = vcmp.gt.f32.partialorder %v1183, 0.0
  %vm1312 = vcmp.gt.f32.partialorder %v1184, 0.0
  %vm1313 = vcmp.gt.f32.partialorder %v1185, 0.0
  %vm1314 = vcmp.gt.f32.partialorder %v1186, 0.0
  %vm1315 = vcmp.gt.f32.partialorder %v1187, 0.0
  %vm1316 = vcmp.gt.f32.partialorder %v1188, 0.0
  %vm1317 = vcmp.gt.f32.partialorder %v1189, 0.0
  %vm1318 = vcmp.gt.f32.partialorder %v1190, 0.0
  %vm1319 = vcmp.gt.f32.partialorder %v1191, 0.0
  %vm1320 = vcmp.gt.f32.partialorder %v1192, 0.0
  %vm1321 = vcmp.gt.f32.partialorder %v1193, 0.0
  %vm1322 = vcmp.gt.f32.partialorder %v1194, 0.0
  %vm1323 = vcmp.gt.f32.partialorder %v1195, 0.0
  %vm1324 = vcmp.gt.f32.partialorder %v1196, 0.0
  %vm1325 = vcmp.gt.f32.partialorder %v1197, 0.0
  %vm1326 = vcmp.gt.f32.partialorder %v1198, 0.0
  %vm1327 = vcmp.gt.f32.partialorder %v1199, 0.0
  %vm1328 = vcmp.gt.f32.partialorder %v1200, 0.0
  %vm1329 = vcmp.gt.f32.partialorder %v1201, 0.0
  %vm1330 = vcmp.gt.f32.partialorder %v1202, 0.0
  %vm1331 = vcmp.gt.f32.partialorder %v1203, 0.0
  %vm1332 = vcmp.gt.f32.partialorder %v1204, 0.0
  %vm1333 = vcmp.gt.f32.partialorder %v1205, 0.0
  %vm1334 = vcmp.gt.f32.partialorder %v1206, 0.0
  %vm1335 = vcmp.gt.f32.partialorder %v1207, 0.0
  %vm1336 = vcmp.gt.f32.partialorder %v1208, 0.0
  %vm1337 = vcmp.gt.f32.partialorder %v1209, 0.0
  %vm1338 = vcmp.gt.f32.partialorder %v1210, 0.0
  %vm1339 = vcmp.gt.f32.partialorder %v1211, 0.0
  %vm1340 = vcmp.gt.f32.partialorder %v1212, 0.0
  %vm1341 = vcmp.gt.f32.partialorder %v1213, 0.0
  %vm1342 = vcmp.gt.f32.partialorder %v1214, 0.0
  %vm1343 = vcmp.gt.f32.partialorder %v1215, 0.0
  %vm1344 = vcmp.gt.f32.partialorder %v1216, 0.0
  %vm1345 = vcmp.gt.f32.partialorder %v1217, 0.0
  %vm1346 = vcmp.gt.f32.partialorder %v1218, 0.0
  %vm1347 = vcmp.gt.f32.partialorder %v1219, 0.0
  %vm1348 = vcmp.gt.f32.partialorder %v1220, 0.0
  %vm1349 = vcmp.gt.f32.partialorder %v1221, 0.0
  %vm1350 = vcmp.gt.f32.partialorder %v1222, 0.0
  %vm1351 = vcmp.gt.f32.partialorder %v1223, 0.0
  %v1352 = vmin.f32 %v1096, 0.0
  %v1353 = vmin.f32 %v1097, 0.0
  %v1354 = vmin.f32 %v1098, 0.0
  %v1355 = vmin.f32 %v1099, 0.0
  %v1356 = vmin.f32 %v1100, 0.0
  %v1357 = vmin.f32 %v1101, 0.0
  %v1358 = vmin.f32 %v1102, 0.0
  %v1359 = vmin.f32 %v1103, 0.0
  %v1360 = vmin.f32 %v1104, 0.0
  %v1361 = vmin.f32 %v1105, 0.0
  %v1362 = vmin.f32 %v1106, 0.0
  %v1363 = vmin.f32 %v1107, 0.0
  %v1364 = vmin.f32 %v1108, 0.0
  %v1365 = vmin.f32 %v1109, 0.0
  %v1366 = vmin.f32 %v1110, 0.0
  %v1367 = vmin.f32 %v1111, 0.0
  %v1368 = vmin.f32 %v1112, 0.0
  %v1369 = vmin.f32 %v1113, 0.0
  %v1370 = vmin.f32 %v1114, 0.0
  %v1371 = vmin.f32 %v1115, 0.0
  %v1372 = vmin.f32 %v1116, 0.0
  %v1373 = vmin.f32 %v1117, 0.0
  %v1374 = vmin.f32 %v1118, 0.0
  %v1375 = vmin.f32 %v1119, 0.0
  %v1376 = vmin.f32 %v1120, 0.0
  %v1377 = vmin.f32 %v1121, 0.0
  %v1378 = vmin.f32 %v1122, 0.0
  %v1379 = vmin.f32 %v1123, 0.0
  %v1380 = vmin.f32 %v1124, 0.0
  %v1381 = vmin.f32 %v1125, 0.0
  %v1382 = vmin.f32 %v1126, 0.0
  %v1383 = vmin.f32 %v1127, 0.0
  %v1384 = vmin.f32 %v1128, 0.0
  %v1385 = vmin.f32 %v1129, 0.0
  %v1386 = vmin.f32 %v1130, 0.0
  %v1387 = vmin.f32 %v1131, 0.0
  %v1388 = vmin.f32 %v1132, 0.0
  %v1389 = vmin.f32 %v1133, 0.0
  %v1390 = vmin.f32 %v1134, 0.0
  %v1391 = vmin.f32 %v1135, 0.0
  %v1392 = vmin.f32 %v1136, 0.0
  %v1393 = vmin.f32 %v1137, 0.0
  %v1394 = vmin.f32 %v1138, 0.0
  %v1395 = vmin.f32 %v1139, 0.0
  %v1396 = vmin.f32 %v1140, 0.0
  %v1397 = vmin.f32 %v1141, 0.0
  %v1398 = vmin.f32 %v1142, 0.0
  %v1399 = vmin.f32 %v1143, 0.0
  %v1400 = vmin.f32 %v1144, 0.0
  %v1401 = vmin.f32 %v1145, 0.0
  %v1402 = vmin.f32 %v1146, 0.0
  %v1403 = vmin.f32 %v1147, 0.0
  %v1404 = vmin.f32 %v1148, 0.0
  %v1405 = vmin.f32 %v1149, 0.0
  %v1406 = vmin.f32 %v1150, 0.0
  %v1407 = vmin.f32 %v1151, 0.0
  %v1408 = vmin.f32 %v1152, 0.0
  %v1409 = vmin.f32 %v1153, 0.0
  %v1410 = vmin.f32 %v1154, 0.0
  %v1411 = vmin.f32 %v1155, 0.0
  %v1412 = vmin.f32 %v1156, 0.0
  %v1413 = vmin.f32 %v1157, 0.0
  %v1414 = vmin.f32 %v1158, 0.0
  %v1415 = vmin.f32 %v1159, 0.0
  %v1416 = vmin.f32 %v1160, 0.0
  %v1417 = vmin.f32 %v1161, 0.0
  %v1418 = vmin.f32 %v1162, 0.0
  %v1419 = vmin.f32 %v1163, 0.0
  %v1420 = vmin.f32 %v1164, 0.0
  %v1421 = vmin.f32 %v1165, 0.0
  %v1422 = vmin.f32 %v1166, 0.0
  %v1423 = vmin.f32 %v1167, 0.0
  %v1424 = vmin.f32 %v1168, 0.0
  %v1425 = vmin.f32 %v1169, 0.0
  %v1426 = vmin.f32 %v1170, 0.0
  %v1427 = vmin.f32 %v1171, 0.0
  %v1428 = vmin.f32 %v1172, 0.0
  %v1429 = vmin.f32 %v1173, 0.0
  %v1430 = vmin.f32 %v1174, 0.0
  %v1431 = vmin.f32 %v1175, 0.0
  %v1432 = vmin.f32 %v1176, 0.0
  %v1433 = vmin.f32 %v1177, 0.0
  %v1434 = vmin.f32 %v1178, 0.0
  %v1435 = vmin.f32 %v1179, 0.0
  %v1436 = vmin.f32 %v1180, 0.0
  %v1437 = vmin.f32 %v1181, 0.0
  %v1438 = vmin.f32 %v1182, 0.0
  %v1439 = vmin.f32 %v1183, 0.0
  %v1440 = vmin.f32 %v1184, 0.0
  %v1441 = vmin.f32 %v1185, 0.0
  %v1442 = vmin.f32 %v1186, 0.0
  %v1443 = vmin.f32 %v1187, 0.0
  %v1444 = vmin.f32 %v1188, 0.0
  %v1445 = vmin.f32 %v1189, 0.0
  %v1446 = vmin.f32 %v1190, 0.0
  %v1447 = vmin.f32 %v1191, 0.0
  %v1448 = vmin.f32 %v1192, 0.0
  %v1449 = vmin.f32 %v1193, 0.0
  %v1450 = vmin.f32 %v1194, 0.0
  %v1451 = vmin.f32 %v1195, 0.0
  %v1452 = vmin.f32 %v1196, 0.0
  %v1453 = vmin.f32 %v1197, 0.0
  %v1454 = vmin.f32 %v1198, 0.0
  %v1455 = vmin.f32 %v1199, 0.0
  %v1456 = vmin.f32 %v1200, 0.0
  %v1457 = vmin.f32 %v1201, 0.0
  %v1458 = vmin.f32 %v1202, 0.0
  %v1459 = vmin.f32 %v1203, 0.0
  %v1460 = vmin.f32 %v1204, 0.0
  %v1461 = vmin.f32 %v1205, 0.0
  %v1462 = vmin.f32 %v1206, 0.0
  %v1463 = vmin.f32 %v1207, 0.0
  %v1464 = vmin.f32 %v1208, 0.0
  %v1465 = vmin.f32 %v1209, 0.0
  %v1466 = vmin.f32 %v1210, 0.0
  %v1467 = vmin.f32 %v1211, 0.0
  %v1468 = vmin.f32 %v1212, 0.0
  %v1469 = vmin.f32 %v1213, 0.0
  %v1470 = vmin.f32 %v1214, 0.0
  %v1471 = vmin.f32 %v1215, 0.0
  %v1472 = vmin.f32 %v1216, 0.0
  %v1473 = vmin.f32 %v1217, 0.0
  %v1474 = vmin.f32 %v1218, 0.0
  %v1475 = vmin.f32 %v1219, 0.0
  %v1476 = vmin.f32 %v1220, 0.0
  %v1477 = vmin.f32 %v1221, 0.0
  %v1478 = vmin.f32 %v1222, 0.0
  %v1479 = vmin.f32 %v1223, 0.0
  %v1480 = vmul.f32 %v1352, 1.442695
  %v1481 = vpow.pop %v1480
  %v1482 = vmul.f32 %v1353, 1.442695
  %v1483 = vpow.pop %v1482
  %v1484 = vmul.f32 %v1354, 1.442695
  %v1485 = vpow.pop %v1484
  %v1486 = vmul.f32 %v1355, 1.442695
  %v1487 = vpow.pop %v1486
  %v1488 = vmul.f32 %v1356, 1.442695
  %v1489 = vpow.pop %v1488
  %v1490 = vmul.f32 %v1357, 1.442695
  %v1491 = vpow.pop %v1490
  %v1492 = vmul.f32 %v1358, 1.442695
  %v1493 = vpow.pop %v1492
  %v1494 = vmul.f32 %v1359, 1.442695
  %v1495 = vpow.pop %v1494
  %v1496 = vmul.f32 %v1360, 1.442695
  %v1497 = vpow.pop %v1496
  %v1498 = vmul.f32 %v1361, 1.442695
  %v1499 = vpow.pop %v1498
  %v1500 = vmul.f32 %v1362, 1.442695
  %v1501 = vpow.pop %v1500
  %v1502 = vmul.f32 %v1363, 1.442695
  %v1503 = vpow.pop %v1502
  %v1504 = vmul.f32 %v1364, 1.442695
  %v1505 = vpow.pop %v1504
  %v1506 = vmul.f32 %v1365, 1.442695
  %v1507 = vpow.pop %v1506
  %v1508 = vmul.f32 %v1366, 1.442695
  %v1509 = vpow.pop %v1508
  %v1510 = vmul.f32 %v1367, 1.442695
  %v1511 = vpow.pop %v1510
  %v1512 = vmul.f32 %v1368, 1.442695
  %v1513 = vpow.pop %v1512
  %v1514 = vmul.f32 %v1369, 1.442695
  %v1515 = vpow.pop %v1514
  %v1516 = vmul.f32 %v1370, 1.442695
  %v1517 = vpow.pop %v1516
  %v1518 = vmul.f32 %v1371, 1.442695
  %v1519 = vpow.pop %v1518
  %v1520 = vmul.f32 %v1372, 1.442695
  %v1521 = vpow.pop %v1520
  %v1522 = vmul.f32 %v1373, 1.442695
  %v1523 = vpow.pop %v1522
  %v1524 = vmul.f32 %v1374, 1.442695
  %v1525 = vpow.pop %v1524
  %v1526 = vmul.f32 %v1375, 1.442695
  %v1527 = vpow.pop %v1526
  %v1528 = vmul.f32 %v1376, 1.442695
  %v1529 = vpow.pop %v1528
  %v1530 = vmul.f32 %v1377, 1.442695
  %v1531 = vpow.pop %v1530
  %v1532 = vmul.f32 %v1378, 1.442695
  %v1533 = vpow.pop %v1532
  %v1534 = vmul.f32 %v1379, 1.442695
  %v1535 = vpow.pop %v1534
  %v1536 = vmul.f32 %v1380, 1.442695
  %v1537 = vpow.pop %v1536
  %v1538 = vmul.f32 %v1381, 1.442695
  %v1539 = vpow.pop %v1538
  %v1540 = vmul.f32 %v1382, 1.442695
  %v1541 = vpow.pop %v1540
  %v1542 = vmul.f32 %v1383, 1.442695
  %v1543 = vpow.pop %v1542
  %v1544 = vmul.f32 %v1384, 1.442695
  %v1545 = vpow.pop %v1544
  %v1546 = vmul.f32 %v1385, 1.442695
  %v1547 = vpow.pop %v1546
  %v1548 = vmul.f32 %v1386, 1.442695
  %v1549 = vpow.pop %v1548
  %v1550 = vmul.f32 %v1387, 1.442695
  %v1551 = vpow.pop %v1550
  %v1552 = vmul.f32 %v1388, 1.442695
  %v1553 = vpow.pop %v1552
  %v1554 = vmul.f32 %v1389, 1.442695
  %v1555 = vpow.pop %v1554
  %v1556 = vmul.f32 %v1390, 1.442695
  %v1557 = vpow.pop %v1556
  %v1558 = vmul.f32 %v1391, 1.442695
  %v1559 = vpow.pop %v1558
  %v1560 = vmul.f32 %v1392, 1.442695
  %v1561 = vpow.pop %v1560
  %v1562 = vmul.f32 %v1393, 1.442695
  %v1563 = vpow.pop %v1562
  %v1564 = vmul.f32 %v1394, 1.442695
  %v1565 = vpow.pop %v1564
  %v1566 = vmul.f32 %v1395, 1.442695
  %v1567 = vpow.pop %v1566
  %v1568 = vmul.f32 %v1396, 1.442695
  %v1569 = vpow.pop %v1568
  %v1570 = vmul.f32 %v1397, 1.442695
  %v1571 = vpow.pop %v1570
  %v1572 = vmul.f32 %v1398, 1.442695
  %v1573 = vpow.pop %v1572
  %v1574 = vmul.f32 %v1399, 1.442695
  %v1575 = vpow.pop %v1574
  %v1576 = vmul.f32 %v1400, 1.442695
  %v1577 = vpow.pop %v1576
  %v1578 = vmul.f32 %v1401, 1.442695
  %v1579 = vpow.pop %v1578
  %v1580 = vmul.f32 %v1402, 1.442695
  %v1581 = vpow.pop %v1580
  %v1582 = vmul.f32 %v1403, 1.442695
  %v1583 = vpow.pop %v1582
  %v1584 = vmul.f32 %v1404, 1.442695
  %v1585 = vpow.pop %v1584
  %v1586 = vmul.f32 %v1405, 1.442695
  %v1587 = vpow.pop %v1586
  %v1588 = vmul.f32 %v1406, 1.442695
  %v1589 = vpow.pop %v1588
  %v1590 = vmul.f32 %v1407, 1.442695
  %v1591 = vpow.pop %v1590
  %v1592 = vmul.f32 %v1408, 1.442695
  %v1593 = vpow.pop %v1592
  %v1594 = vmul.f32 %v1409, 1.442695
  %v1595 = vpow.pop %v1594
  %v1596 = vmul.f32 %v1410, 1.442695
  %v1597 = vpow.pop %v1596
  %v1598 = vmul.f32 %v1411, 1.442695
  %v1599 = vpow.pop %v1598
  %v1600 = vmul.f32 %v1412, 1.442695
  %v1601 = vpow.pop %v1600
  %v1602 = vmul.f32 %v1413, 1.442695
  %v1603 = vpow.pop %v1602
  %v1604 = vmul.f32 %v1414, 1.442695
  %v1605 = vpow.pop %v1604
  %v1606 = vmul.f32 %v1415, 1.442695
  %v1607 = vpow.pop %v1606
  %v1608 = vmul.f32 %v1416, 1.442695
  %v1609 = vpow.pop %v1608
  %v1610 = vmul.f32 %v1417, 1.442695
  %v1611 = vpow.pop %v1610
  %v1612 = vmul.f32 %v1418, 1.442695
  %v1613 = vpow.pop %v1612
  %v1614 = vmul.f32 %v1419, 1.442695
  %v1615 = vpow.pop %v1614
  %v1616 = vmul.f32 %v1420, 1.442695
  %v1617 = vpow.pop %v1616
  %v1618 = vmul.f32 %v1421, 1.442695
  %v1619 = vpow.pop %v1618
  %v1620 = vmul.f32 %v1422, 1.442695
  %v1621 = vpow.pop %v1620
  %v1622 = vmul.f32 %v1423, 1.442695
  %v1623 = vpow.pop %v1622
  %v1624 = vmul.f32 %v1424, 1.442695
  %v1625 = vpow.pop %v1624
  %v1626 = vmul.f32 %v1425, 1.442695
  %v1627 = vpow.pop %v1626
  %v1628 = vmul.f32 %v1426, 1.442695
  %v1629 = vpow.pop %v1628
  %v1630 = vmul.f32 %v1427, 1.442695
  %v1631 = vpow.pop %v1630
  %v1632 = vmul.f32 %v1428, 1.442695
  %v1633 = vpow.pop %v1632
  %v1634 = vmul.f32 %v1429, 1.442695
  %v1635 = vpow.pop %v1634
  %v1636 = vmul.f32 %v1430, 1.442695
  %v1637 = vpow.pop %v1636
  %v1638 = vmul.f32 %v1431, 1.442695
  %v1639 = vpow.pop %v1638
  %v1640 = vmul.f32 %v1432, 1.442695
  %v1641 = vpow.pop %v1640
  %v1642 = vmul.f32 %v1433, 1.442695
  %v1643 = vpow.pop %v1642
  %v1644 = vmul.f32 %v1434, 1.442695
  %v1645 = vpow.pop %v1644
  %v1646 = vmul.f32 %v1435, 1.442695
  %v1647 = vpow.pop %v1646
  %v1648 = vmul.f32 %v1436, 1.442695
  %v1649 = vpow.pop %v1648
  %v1650 = vmul.f32 %v1437, 1.442695
  %v1651 = vpow.pop %v1650
  %v1652 = vmul.f32 %v1438, 1.442695
  %v1653 = vpow.pop %v1652
  %v1654 = vmul.f32 %v1439, 1.442695
  %v1655 = vpow.pop %v1654
  %v1656 = vmul.f32 %v1440, 1.442695
  %v1657 = vpow.pop %v1656
  %v1658 = vmul.f32 %v1441, 1.442695
  %v1659 = vpow.pop %v1658
  %v1660 = vmul.f32 %v1442, 1.442695
  %v1661 = vpow.pop %v1660
  %v1662 = vmul.f32 %v1443, 1.442695
  %v1663 = vpow.pop %v1662
  %v1664 = vmul.f32 %v1444, 1.442695
  %v1665 = vpow.pop %v1664
  %v1666 = vmul.f32 %v1445, 1.442695
  %v1667 = vpow.pop %v1666
  %v1668 = vmul.f32 %v1446, 1.442695
  %v1669 = vpow.pop %v1668
  %v1670 = vmul.f32 %v1447, 1.442695
  %v1671 = vpow.pop %v1670
  %v1672 = vmul.f32 %v1448, 1.442695
  %v1673 = vpow.pop %v1672
  %v1674 = vmul.f32 %v1449, 1.442695
  %v1675 = vpow.pop %v1674
  %v1676 = vmul.f32 %v1450, 1.442695
  %v1677 = vpow.pop %v1676
  %v1678 = vmul.f32 %v1451, 1.442695
  %v1679 = vpow.pop %v1678
  %v1680 = vmul.f32 %v1452, 1.442695
  %v1681 = vpow.pop %v1680
  %v1682 = vmul.f32 %v1453, 1.442695
  %v1683 = vpow.pop %v1682
  %v1684 = vmul.f32 %v1454, 1.442695
  %v1685 = vpow.pop %v1684
  %v1686 = vmul.f32 %v1455, 1.442695
  %v1687 = vpow.pop %v1686
  %v1688 = vmul.f32 %v1456, 1.442695
  %v1689 = vpow.pop %v1688
  %v1690 = vmul.f32 %v1457, 1.442695
  %v1691 = vpow.pop %v1690
  %v1692 = vmul.f32 %v1458, 1.442695
  %v1693 = vpow.pop %v1692
  %v1694 = vmul.f32 %v1459, 1.442695
  %v1695 = vpow.pop %v1694
  %v1696 = vmul.f32 %v1460, 1.442695
  %v1697 = vpow.pop %v1696
  %v1698 = vmul.f32 %v1461, 1.442695
  %v1699 = vpow.pop %v1698
  %v1700 = vmul.f32 %v1462, 1.442695
  %v1701 = vpow.pop %v1700
  %v1702 = vmul.f32 %v1463, 1.442695
  %v1703 = vpow.pop %v1702
  %v1704 = vmul.f32 %v1464, 1.442695
  %v1705 = vpow.pop %v1704
  %v1706 = vmul.f32 %v1465, 1.442695
  %v1707 = vpow.pop %v1706
  %v1708 = vmul.f32 %v1466, 1.442695
  %v1709 = vpow.pop %v1708
  %v1710 = vmul.f32 %v1467, 1.442695
  %v1711 = vpow.pop %v1710
  %v1712 = vmul.f32 %v1468, 1.442695
  %v1713 = vpow.pop %v1712
  %v1714 = vmul.f32 %v1469, 1.442695
  %v1715 = vpow.pop %v1714
  %v1716 = vmul.f32 %v1470, 1.442695
  %v1717 = vpow.pop %v1716
  %v1718 = vmul.f32 %v1471, 1.442695
  %v1719 = vpow.pop %v1718
  %v1720 = vmul.f32 %v1472, 1.442695
  %v1721 = vpow.pop %v1720
  %v1722 = vmul.f32 %v1473, 1.442695
  %v1723 = vpow.pop %v1722
  %v1724 = vmul.f32 %v1474, 1.442695
  %v1725 = vpow.pop %v1724
  %v1726 = vmul.f32 %v1475, 1.442695
  %v1727 = vpow.pop %v1726
  %v1728 = vmul.f32 %v1476, 1.442695
  %v1729 = vpow.pop %v1728
  %v1730 = vmul.f32 %v1477, 1.442695
  %v1731 = vpow.pop %v1730
  %v1732 = vmul.f32 %v1478, 1.442695
  %v1733 = vpow.pop %v1732
  %v1734 = vmul.f32 %v1479, 1.442695
  %v1735 = vpow.pop %v1734
  %v1736 = vsub.f32 %v1481, 1.0
  %v1737 = vsub.f32 %v1483, 1.0
  %v1738 = vsub.f32 %v1485, 1.0
  %v1739 = vsub.f32 %v1487, 1.0
  %v1740 = vsub.f32 %v1489, 1.0
  %v1741 = vsub.f32 %v1491, 1.0
  %v1742 = vsub.f32 %v1493, 1.0
  %v1743 = vsub.f32 %v1495, 1.0
  %v1744 = vsub.f32 %v1497, 1.0
  %v1745 = vsub.f32 %v1499, 1.0
  %v1746 = vsub.f32 %v1501, 1.0
  %v1747 = vsub.f32 %v1503, 1.0
  %v1748 = vsub.f32 %v1505, 1.0
  %v1749 = vsub.f32 %v1507, 1.0
  %v1750 = vsub.f32 %v1509, 1.0
  %v1751 = vsub.f32 %v1511, 1.0
  %v1752 = vsub.f32 %v1513, 1.0
  %v1753 = vsub.f32 %v1515, 1.0
  %v1754 = vsub.f32 %v1517, 1.0
  %v1755 = vsub.f32 %v1519, 1.0
  %v1756 = vsub.f32 %v1521, 1.0
  %v1757 = vsub.f32 %v1523, 1.0
  %v1758 = vsub.f32 %v1525, 1.0
  %v1759 = vsub.f32 %v1527, 1.0
  %v1760 = vsub.f32 %v1529, 1.0
  %v1761 = vsub.f32 %v1531, 1.0
  %v1762 = vsub.f32 %v1533, 1.0
  %v1763 = vsub.f32 %v1535, 1.0
  %v1764 = vsub.f32 %v1537, 1.0
  %v1765 = vsub.f32 %v1539, 1.0
  %v1766 = vsub.f32 %v1541, 1.0
  %v1767 = vsub.f32 %v1543, 1.0
  %v1768 = vsub.f32 %v1545, 1.0
  %v1769 = vsub.f32 %v1547, 1.0
  %v1770 = vsub.f32 %v1549, 1.0
  %v1771 = vsub.f32 %v1551, 1.0
  %v1772 = vsub.f32 %v1553, 1.0
  %v1773 = vsub.f32 %v1555, 1.0
  %v1774 = vsub.f32 %v1557, 1.0
  %v1775 = vsub.f32 %v1559, 1.0
  %v1776 = vsub.f32 %v1561, 1.0
  %v1777 = vsub.f32 %v1563, 1.0
  %v1778 = vsub.f32 %v1565, 1.0
  %v1779 = vsub.f32 %v1567, 1.0
  %v1780 = vsub.f32 %v1569, 1.0
  %v1781 = vsub.f32 %v1571, 1.0
  %v1782 = vsub.f32 %v1573, 1.0
  %v1783 = vsub.f32 %v1575, 1.0
  %v1784 = vsub.f32 %v1577, 1.0
  %v1785 = vsub.f32 %v1579, 1.0
  %v1786 = vsub.f32 %v1581, 1.0
  %v1787 = vsub.f32 %v1583, 1.0
  %v1788 = vsub.f32 %v1585, 1.0
  %v1789 = vsub.f32 %v1587, 1.0
  %v1790 = vsub.f32 %v1589, 1.0
  %v1791 = vsub.f32 %v1591, 1.0
  %v1792 = vsub.f32 %v1593, 1.0
  %v1793 = vsub.f32 %v1595, 1.0
  %v1794 = vsub.f32 %v1597, 1.0
  %v1795 = vsub.f32 %v1599, 1.0
  %v1796 = vsub.f32 %v1601, 1.0
  %v1797 = vsub.f32 %v1603, 1.0
  %v1798 = vsub.f32 %v1605, 1.0
  %v1799 = vsub.f32 %v1607, 1.0
  %v1800 = vsub.f32 %v1609, 1.0
  %v1801 = vsub.f32 %v1611, 1.0
  %v1802 = vsub.f32 %v1613, 1.0
  %v1803 = vsub.f32 %v1615, 1.0
  %v1804 = vsub.f32 %v1617, 1.0
  %v1805 = vsub.f32 %v1619, 1.0
  %v1806 = vsub.f32 %v1621, 1.0
  %v1807 = vsub.f32 %v1623, 1.0
  %v1808 = vsub.f32 %v1625, 1.0
  %v1809 = vsub.f32 %v1627, 1.0
  %v1810 = vsub.f32 %v1629, 1.0
  %v1811 = vsub.f32 %v1631, 1.0
  %v1812 = vsub.f32 %v1633, 1.0
  %v1813 = vsub.f32 %v1635, 1.0
  %v1814 = vsub.f32 %v1637, 1.0
  %v1815 = vsub.f32 %v1639, 1.0
  %v1816 = vsub.f32 %v1641, 1.0
  %v1817 = vsub.f32 %v1643, 1.0
  %v1818 = vsub.f32 %v1645, 1.0
  %v1819 = vsub.f32 %v1647, 1.0
  %v1820 = vsub.f32 %v1649, 1.0
  %v1821 = vsub.f32 %v1651, 1.0
  %v1822 = vsub.f32 %v1653, 1.0
  %v1823 = vsub.f32 %v1655, 1.0
  %v1824 = vsub.f32 %v1657, 1.0
  %v1825 = vsub.f32 %v1659, 1.0
  %v1826 = vsub.f32 %v1661, 1.0
  %v1827 = vsub.f32 %v1663, 1.0
  %v1828 = vsub.f32 %v1665, 1.0
  %v1829 = vsub.f32 %v1667, 1.0
  %v1830 = vsub.f32 %v1669, 1.0
  %v1831 = vsub.f32 %v1671, 1.0
  %v1832 = vsub.f32 %v1673, 1.0
  %v1833 = vsub.f32 %v1675, 1.0
  %v1834 = vsub.f32 %v1677, 1.0
  %v1835 = vsub.f32 %v1679, 1.0
  %v1836 = vsub.f32 %v1681, 1.0
  %v1837 = vsub.f32 %v1683, 1.0
  %v1838 = vsub.f32 %v1685, 1.0
  %v1839 = vsub.f32 %v1687, 1.0
  %v1840 = vsub.f32 %v1689, 1.0
  %v1841 = vsub.f32 %v1691, 1.0
  %v1842 = vsub.f32 %v1693, 1.0
  %v1843 = vsub.f32 %v1695, 1.0
  %v1844 = vsub.f32 %v1697, 1.0
  %v1845 = vsub.f32 %v1699, 1.0
  %v1846 = vsub.f32 %v1701, 1.0
  %v1847 = vsub.f32 %v1703, 1.0
  %v1848 = vsub.f32 %v1705, 1.0
  %v1849 = vsub.f32 %v1707, 1.0
  %v1850 = vsub.f32 %v1709, 1.0
  %v1851 = vsub.f32 %v1711, 1.0
  %v1852 = vsub.f32 %v1713, 1.0
  %v1853 = vsub.f32 %v1715, 1.0
  %v1854 = vsub.f32 %v1717, 1.0
  %v1855 = vsub.f32 %v1719, 1.0
  %v1856 = vsub.f32 %v1721, 1.0
  %v1857 = vsub.f32 %v1723, 1.0
  %v1858 = vsub.f32 %v1725, 1.0
  %v1859 = vsub.f32 %v1727, 1.0
  %v1860 = vsub.f32 %v1729, 1.0
  %v1861 = vsub.f32 %v1731, 1.0
  %v1862 = vsub.f32 %v1733, 1.0
  %v1863 = vsub.f32 %v1735, 1.0
  %v1864 = vsel %vm1224, %v1096, %v1736
  %v1865 = vsel %vm1225, %v1097, %v1737
  %v1866 = vsel %vm1226, %v1098, %v1738
  %v1867 = vsel %vm1227, %v1099, %v1739
  %v1868 = vsel %vm1228, %v1100, %v1740
  %v1869 = vsel %vm1229, %v1101, %v1741
  %v1870 = vsel %vm1230, %v1102, %v1742
  %v1871 = vsel %vm1231, %v1103, %v1743
  %v1872 = vsel %vm1232, %v1104, %v1744
  %v1873 = vsel %vm1233, %v1105, %v1745
  %v1874 = vsel %vm1234, %v1106, %v1746
  %v1875 = vsel %vm1235, %v1107, %v1747
  %v1876 = vsel %vm1236, %v1108, %v1748
  %v1877 = vsel %vm1237, %v1109, %v1749
  %v1878 = vsel %vm1238, %v1110, %v1750
  %v1879 = vsel %vm1239, %v1111, %v1751
  %v1880 = vsel %vm1240, %v1112, %v1752
  %v1881 = vsel %vm1241, %v1113, %v1753
  %v1882 = vsel %vm1242, %v1114, %v1754
  %v1883 = vsel %vm1243, %v1115, %v1755
  %v1884 = vsel %vm1244, %v1116, %v1756
  %v1885 = vsel %vm1245, %v1117, %v1757
  %v1886 = vsel %vm1246, %v1118, %v1758
  %v1887 = vsel %vm1247, %v1119, %v1759
  %v1888 = vsel %vm1248, %v1120, %v1760
  %v1889 = vsel %vm1249, %v1121, %v1761
  %v1890 = vsel %vm1250, %v1122, %v1762
  %v1891 = vsel %vm1251, %v1123, %v1763
  %v1892 = vsel %vm1252, %v1124, %v1764
  %v1893 = vsel %vm1253, %v1125, %v1765
  %v1894 = vsel %vm1254, %v1126, %v1766
  %v1895 = vsel %vm1255, %v1127, %v1767
  %v1896 = vsel %vm1256, %v1128, %v1768
  %v1897 = vsel %vm1257, %v1129, %v1769
  %v1898 = vsel %vm1258, %v1130, %v1770
  %v1899 = vsel %vm1259, %v1131, %v1771
  %v1900 = vsel %vm1260, %v1132, %v1772
  %v1901 = vsel %vm1261, %v1133, %v1773
  %v1902 = vsel %vm1262, %v1134, %v1774
  %v1903 = vsel %vm1263, %v1135, %v1775
  %v1904 = vsel %vm1264, %v1136, %v1776
  %v1905 = vsel %vm1265, %v1137, %v1777
  %v1906 = vsel %vm1266, %v1138, %v1778
  %v1907 = vsel %vm1267, %v1139, %v1779
  %v1908 = vsel %vm1268, %v1140, %v1780
  %v1909 = vsel %vm1269, %v1141, %v1781
  %v1910 = vsel %vm1270, %v1142, %v1782
  %v1911 = vsel %vm1271, %v1143, %v1783
  %v1912 = vsel %vm1272, %v1144, %v1784
  %v1913 = vsel %vm1273, %v1145, %v1785
  %v1914 = vsel %vm1274, %v1146, %v1786
  %v1915 = vsel %vm1275, %v1147, %v1787
  %v1916 = vsel %vm1276, %v1148, %v1788
  %v1917 = vsel %vm1277, %v1149, %v1789
  %v1918 = vsel %vm1278, %v1150, %v1790
  %v1919 = vsel %vm1279, %v1151, %v1791
  %v1920 = vsel %vm1280, %v1152, %v1792
  %v1921 = vsel %vm1281, %v1153, %v1793
  %v1922 = vsel %vm1282, %v1154, %v1794
  %v1923 = vsel %vm1283, %v1155, %v1795
  %v1924 = vsel %vm1284, %v1156, %v1796
  %v1925 = vsel %vm1285, %v1157, %v1797
  %v1926 = vsel %vm1286, %v1158, %v1798
  %v1927 = vsel %vm1287, %v1159, %v1799
  %v1928 = vsel %vm1288, %v1160, %v1800
  %v1929 = vsel %vm1289, %v1161, %v1801
  %v1930 = vsel %vm1290, %v1162, %v1802
  %v1931 = vsel %vm1291, %v1163, %v1803
  %v1932 = vsel %vm1292, %v1164, %v1804
  %v1933 = vsel %vm1293, %v1165, %v1805
  %v1934 = vsel %vm1294, %v1166, %v1806
  %v1935 = vsel %vm1295, %v1167, %v1807
  %v1936 = vsel %vm1296, %v1168, %v1808
  %v1937 = vsel %vm1297, %v1169, %v1809
  %v1938 = vsel %vm1298, %v1170, %v1810
  %v1939 = vsel %vm1299, %v1171, %v1811
  %v1940 = vsel %vm1300, %v1172, %v1812
  %v1941 = vsel %vm1301, %v1173, %v1813
  %v1942 = vsel %vm1302, %v1174, %v1814
  %v1943 = vsel %vm1303, %v1175, %v1815
  %v1944 = vsel %vm1304, %v1176, %v1816
  %v1945 = vsel %vm1305, %v1177, %v1817
  %v1946 = vsel %vm1306, %v1178, %v1818
  %v1947 = vsel %vm1307, %v1179, %v1819
  %v1948 = vsel %vm1308, %v1180, %v1820
  %v1949 = vsel %vm1309, %v1181, %v1821
  %v1950 = vsel %vm1310, %v1182, %v1822
  %v1951 = vsel %vm1311, %v1183, %v1823
  %v1952 = vsel %vm1312, %v1184, %v1824
  %v1953 = vsel %vm1313, %v1185, %v1825
  %v1954 = vsel %vm1314, %v1186, %v1826
  %v1955 = vsel %vm1315, %v1187, %v1827
  %v1956 = vsel %vm1316, %v1188, %v1828
  %v1957 = vsel %vm1317, %v1189, %v1829
  %v1958 = vsel %vm1318, %v1190, %v1830
  %v1959 = vsel %vm1319, %v1191, %v1831
  %v1960 = vsel %vm1320, %v1192, %v1832
  %v1961 = vsel %vm1321, %v1193, %v1833
  %v1962 = vsel %vm1322, %v1194, %v1834
  %v1963 = vsel %vm1323, %v1195, %v1835
  %v1964 = vsel %vm1324, %v1196, %v1836
  %v1965 = vsel %vm1325, %v1197, %v1837
  %v1966 = vsel %vm1326, %v1198, %v1838
  %v1967 = vsel %vm1327, %v1199, %v1839
  %v1968 = vsel %vm1328, %v1200, %v1840
  %v1969 = vsel %vm1329, %v1201, %v1841
  %v1970 = vsel %vm1330, %v1202, %v1842
  %v1971 = vsel %vm1331, %v1203, %v1843
  %v1972 = vsel %vm1332, %v1204, %v1844
  %v1973 = vsel %vm1333, %v1205, %v1845
  %v1974 = vsel %vm1334, %v1206, %v1846
  %v1975 = vsel %vm1335, %v1207, %v1847
  %v1976 = vsel %vm1336, %v1208, %v1848
  %v1977 = vsel %vm1337, %v1209, %v1849
  %v1978 = vsel %vm1338, %v1210, %v1850
  %v1979 = vsel %vm1339, %v1211, %v1851
  %v1980 = vsel %vm1340, %v1212, %v1852
  %v1981 = vsel %vm1341, %v1213, %v1853
  %v1982 = vsel %vm1342, %v1214, %v1854
  %v1983 = vsel %vm1343, %v1215, %v1855
  %v1984 = vsel %vm1344, %v1216, %v1856
  %v1985 = vsel %vm1345, %v1217, %v1857
  %v1986 = vsel %vm1346, %v1218, %v1858
  %v1987 = vsel %vm1347, %v1219, %v1859
  %v1988 = vsel %vm1348, %v1220, %v1860
  %v1989 = vsel %vm1349, %v1221, %v1861
  %v1990 = vsel %vm1350, %v1222, %v1862
  %v1991 = vsel %vm1351, %v1223, %v1863
  %v1992 = vld [vmem:[%s6] sm:$0xff]
  %v1993 = vld [vmem:[%s6 + $0x8] sm:$0xff]
  %v1994 = vld [vmem:[%s6 + $0x10] sm:$0xff]
  %v1995 = vld [vmem:[%s6 + $0x18] sm:$0xff]
  %v1996 = vld [vmem:[%s6 + $0x20] sm:$0xff]
  %v1997 = vld [vmem:[%s6 + $0x28] sm:$0xff]
  %v1998 = vld [vmem:[%s6 + $0x30] sm:$0xff]
  %v1999 = vld [vmem:[%s6 + $0x38] sm:$0xff]
  %v2000 = vld [vmem:[%s6 + $0x40] sm:$0xff]
  %v2001 = vld [vmem:[%s6 + $0x48] sm:$0xff]
  %v2002 = vld [vmem:[%s6 + $0x50] sm:$0xff]
  %v2003 = vld [vmem:[%s6 + $0x58] sm:$0xff]
  %v2004 = vld [vmem:[%s6 + $0x60] sm:$0xff]
  %v2005 = vld [vmem:[%s6 + $0x68] sm:$0xff]
  %v2006 = vld [vmem:[%s6 + $0x70] sm:$0xff]
  %v2007 = vld [vmem:[%s6 + $0x78] sm:$0xff]
  %v2008 = vld [vmem:[%s7] sm:$0x1]
  %v2010 = vlaneseq
  %v2011 = vshrl.u32 %v2010, 7
  %v2012 = vsub.s32 0, %v2011
  %v2013 = vrot.slane %v2008, %v2012
  %2015 = vmatprep.subr.mxu0 0.0
  %2016 = vmatpush1.msra.mxu0 %v1992
  %2017 = vmatprep.subr.mxu0 0.0
  %2018 = vmatpush1.msra.mxu0 %v1993
  %2019 = vmatprep.subr.mxu0 0.0
  %2020 = vmatpush1.msra.mxu0 %v1994
  %2021 = vmatprep.subr.mxu0 0.0
  %2022 = vmatpush1.msra.mxu0 %v1995
  %2023 = vmatprep.subr.mxu0 0.0
  %2024 = vmatpush1.msra.mxu0 %v1996
  %2025 = vmatprep.subr.mxu0 0.0
  %2026 = vmatpush1.msra.mxu0 %v1997
  %2027 = vmatprep.subr.mxu0 0.0
  %2028 = vmatpush1.msra.mxu0 %v1998
  %2029 = vmatprep.subr.mxu0 0.0
  %2030 = vmatpush1.msra.mxu0 %v1999
  %2031 = vmatprep.subr.mxu0 0.0
  %2032 = vmatpush1.msra.mxu0 %v2000
  %2033 = vmatprep.subr.mxu0 0.0
  %2034 = vmatpush1.msra.mxu0 %v2001
  %2035 = vmatprep.subr.mxu0 0.0
  %2036 = vmatpush1.msra.mxu0 %v2002
  %2037 = vmatprep.subr.mxu0 0.0
  %2038 = vmatpush1.msra.mxu0 %v2003
  %2039 = vmatprep.subr.mxu0 0.0
  %2040 = vmatpush1.msra.mxu0 %v2004
  %2041 = vmatprep.subr.mxu0 0.0
  %2042 = vmatpush1.msra.mxu0 %v2005
  %2043 = vmatprep.subr.mxu0 0.0
  %2044 = vmatpush1.msra.mxu0 %v2006
  %2045 = vmatprep.subr.mxu0 0.0
  %2046 = vmatpush1.msra.mxu0 %v2007
  %2047 = vmatprep.subr.mxu0 0.0
  %2048 = vmatpush1.msra.mxu0 0.0
  %2049 = vmatprep.subr.mxu0 0.0
  %2050 = vmatpush1.msra.mxu0 0.0
  %2051 = vmatprep.subr.mxu0 0.0
  %2052 = vmatpush1.msra.mxu0 0.0
  %2053 = vmatprep.subr.mxu0 0.0
  %2054 = vmatpush1.msra.mxu0 0.0
  %2055 = vmatprep.subr.mxu0 0.0
  %2056 = vmatpush1.msra.mxu0 0.0
  %2057 = vmatprep.subr.mxu0 0.0
  %2058 = vmatpush1.msra.mxu0 0.0
  %2059 = vmatprep.subr.mxu0 0.0
  %2060 = vmatpush1.msra.mxu0 0.0
  %2061 = vmatprep.subr.mxu0 0.0
  %2062 = vmatpush1.msra.mxu0 0.0
  %2063 = vmatprep.subr.mxu0 0.0
  %2064 = vmatpush1.msra.mxu0 0.0
  %2065 = vmatprep.subr.mxu0 0.0
  %2066 = vmatpush1.msra.mxu0 0.0
  %2067 = vmatprep.subr.mxu0 0.0
  %2068 = vmatpush1.msra.mxu0 0.0
  %2069 = vmatprep.subr.mxu0 0.0
  %2070 = vmatpush1.msra.mxu0 0.0
  %2071 = vmatprep.subr.mxu0 0.0
  %2072 = vmatpush1.msra.mxu0 0.0
  %2073 = vmatprep.subr.mxu0 0.0
  %2074 = vmatpush1.msra.mxu0 0.0
  %2075 = vmatprep.subr.mxu0 0.0
  %2076 = vmatpush1.msra.mxu0 0.0
  %2077 = vmatprep.subr.mxu0 0.0
  %2078 = vmatpush1.msra.mxu0 0.0
  %2079 = vmatprep.mubr.f32.mxu0 0.0
  %2080 = vmatmul.mubr.f32.gmra.mrb[0].mxu0 %v1864
  %v2081 = vpop.f32.mrb[0].mxu0
  %v2082 = vadd.f32 %v2013, %v2081
  %v2083 = vpop.f32.mrb[0].mxu0
  %2084 = vmatprep.mubr.f32.mxu0 0.0
  %2085 = vmatmul.mubr.f32.gmra.mrb[0].mxu0 %v1865
  %v2086 = vpop.f32.mrb[0].mxu0
  %v2087 = vadd.f32 %v2013, %v2086
  %v2088 = vpop.f32.mrb[0].mxu0
  %2089 = vmatprep.mubr.f32.mxu0 0.0
  %2090 = vmatmul.mubr.f32.gmra.mrb[0].mxu0 %v1866
  %v2091 = vpop.f32.mrb[0].mxu0
  %v2092 = vadd.f32 %v2013, %v2091
  %v2093 = vpop.f32.mrb[0].mxu0
  %2094 = vmatprep.mubr.f32.mxu0 0.0
  %2095 = vmatmul.mubr.f32.gmra.mrb[0].mxu0 %v1867
  %v2096 = vpop.f32.mrb[0].mxu0
  %v2097 = vadd.f32 %v2013, %v2096
  %v2098 = vpop.f32.mrb[0].mxu0
  %2099 = vmatprep.mubr.f32.mxu0 0.0
  %2100 = vmatmul.mubr.f32.gmra.mrb[0].mxu0 %v1868
  %v2101 = vpop.f32.mrb[0].mxu0
  %v2102 = vadd.f32 %v2013, %v2101
  %v2103 = vpop.f32.mrb[0].mxu0
  %2104 = vmatprep.mubr.f32.mxu0 0.0
  %2105 = vmatmul.mubr.f32.gmra.mrb[0].mxu0 %v1869
  %v2106 = vpop.f32.mrb[0].mxu0
  %v2107 = vadd.f32 %v2013, %v2106
  %v2108 = vpop.f32.mrb[0].mxu0
  %2109 = vmatprep.mubr.f32.mxu0 0.0
  %2110 = vmatmul.mubr.f32.gmra.mrb[0].mxu0 %v1870
  %v2111 = vpop.f32.mrb[0].mxu0
  %v2112 = vadd.f32 %v2013, %v2111
  %v2113 = vpop.f32.mrb[0].mxu0
  %2114 = vmatprep.mubr.f32.mxu0 0.0
  %2115 = vmatmul.mubr.f32.gmra.mrb[0].mxu0 %v1871
  %v2116 = vpop.f32.mrb[0].mxu0
  %v2117 = vadd.f32 %v2013, %v2116
  %v2118 = vpop.f32.mrb[0].mxu0
  %2119 = vmatprep.mubr.f32.mxu0 0.0
  %2120 = vmatmul.mubr.f32.gmra.mrb[0].mxu0 %v1872
  %v2121 = vpop.f32.mrb[0].mxu0
  %v2122 = vadd.f32 %v2013, %v2121
  %v2123 = vpop.f32.mrb[0].mxu0
  %2124 = vmatprep.mubr.f32.mxu0 0.0
  %2125 = vmatmul.mubr.f32.gmra.mrb[0].mxu0 %v1873
  %v2126 = vpop.f32.mrb[0].mxu0
  %v2127 = vadd.f32 %v2013, %v2126
  %v2128 = vpop.f32.mrb[0].mxu0
  %2129 = vmatprep.mubr.f32.mxu0 0.0
  %2130 = vmatmul.mubr.f32.gmra.mrb[0].mxu0 %v1874
  %v2131 = vpop.f32.mrb[0].mxu0
  %v2132 = vadd.f32 %v2013, %v2131
  %v2133 = vpop.f32.mrb[0].mxu0
  %2134 = vmatprep.mubr.f32.mxu0 0.0
  %2135 = vmatmul.mubr.f32.gmra.mrb[0].mxu0 %v1875
  %v2136 = vpop.f32.mrb[0].mxu0
  %v2137 = vadd.f32 %v2013, %v2136
  %v2138 = vpop.f32.mrb[0].mxu0
  %2139 = vmatprep.mubr.f32.mxu0 0.0
  %2140 = vmatmul.mubr.f32.gmra.mrb[0].mxu0 %v1876
  %v2141 = vpop.f32.mrb[0].mxu0
  %v2142 = vadd.f32 %v2013, %v2141
  %v2143 = vpop.f32.mrb[0].mxu0
  %2144 = vmatprep.mubr.f32.mxu0 0.0
  %2145 = vmatmul.mubr.f32.gmra.mrb[0].mxu0 %v1877
  %v2146 = vpop.f32.mrb[0].mxu0
  %v2147 = vadd.f32 %v2013, %v2146
  %v2148 = vpop.f32.mrb[0].mxu0
  %2149 = vmatprep.mubr.f32.mxu0 0.0
  %2150 = vmatmul.mubr.f32.gmra.mrb[0].mxu0 %v1878
  %v2151 = vpop.f32.mrb[0].mxu0
  %v2152 = vadd.f32 %v2013, %v2151
  %v2153 = vpop.f32.mrb[0].mxu0
  %2154 = vmatprep.mubr.f32.mxu0 0.0
  %2155 = vmatmul.mubr.f32.gmra.mrb[0].mxu0 %v1879
  %v2156 = vpop.f32.mrb[0].mxu0
  %v2157 = vadd.f32 %v2013, %v2156
  %v2158 = vpop.f32.mrb[0].mxu0
  %2159 = vmatprep.mubr.f32.mxu0 0.0
  %2160 = vmatmul.mubr.f32.gmra.mrb[0].mxu0 %v1880
  %v2161 = vpop.f32.mrb[0].mxu0
  %v2162 = vadd.f32 %v2013, %v2161
  %v2163 = vpop.f32.mrb[0].mxu0
  %2164 = vmatprep.mubr.f32.mxu0 0.0
  %2165 = vmatmul.mubr.f32.gmra.mrb[0].mxu0 %v1881
  %v2166 = vpop.f32.mrb[0].mxu0
  %v2167 = vadd.f32 %v2013, %v2166
  %v2168 = vpop.f32.mrb[0].mxu0
  %2169 = vmatprep.mubr.f32.mxu0 0.0
  %2170 = vmatmul.mubr.f32.gmra.mrb[0].mxu0 %v1882
  %v2171 = vpop.f32.mrb[0].mxu0
  %v2172 = vadd.f32 %v2013, %v2171
  %v2173 = vpop.f32.mrb[0].mxu0
  %2174 = vmatprep.mubr.f32.mxu0 0.0
  %2175 = vmatmul.mubr.f32.gmra.mrb[0].mxu0 %v1883
  %v2176 = vpop.f32.mrb[0].mxu0
  %v2177 = vadd.f32 %v2013, %v2176
  %v2178 = vpop.f32.mrb[0].mxu0
  %2179 = vmatprep.mubr.f32.mxu0 0.0
  %2180 = vmatmul.mubr.f32.gmra.mrb[0].mxu0 %v1884
  %v2181 = vpop.f32.mrb[0].mxu0
  %v2182 = vadd.f32 %v2013, %v2181
  %v2183 = vpop.f32.mrb[0].mxu0
  %2184 = vmatprep.mubr.f32.mxu0 0.0
  %2185 = vmatmul.mubr.f32.gmra.mrb[0].mxu0 %v1885
  %v2186 = vpop.f32.mrb[0].mxu0
  %v2187 = vadd.f32 %v2013, %v2186
  %v2188 = vpop.f32.mrb[0].mxu0
  %2189 = vmatprep.mubr.f32.mxu0 0.0
  %2190 = vmatmul.mubr.f32.gmra.mrb[0].mxu0 %v1886
  %v2191 = vpop.f32.mrb[0].mxu0
  %v2192 = vadd.f32 %v2013, %v2191
  %v2193 = vpop.f32.mrb[0].mxu0
  %2194 = vmatprep.mubr.f32.mxu0 0.0
  %2195 = vmatmul.mubr.f32.gmra.mrb[0].mxu0 %v1887
  %v2196 = vpop.f32.mrb[0].mxu0
  %v2197 = vadd.f32 %v2013, %v2196
  %v2198 = vpop.f32.mrb[0].mxu0
  %2199 = vmatprep.mubr.f32.mxu0 0.0
  %2200 = vmatmul.mubr.f32.gmra.mrb[0].mxu0 %v1888
  %v2201 = vpop.f32.mrb[0].mxu0
  %v2202 = vadd.f32 %v2013, %v2201
  %v2203 = vpop.f32.mrb[0].mxu0
  %2204 = vmatprep.mubr.f32.mxu0 0.0
  %2205 = vmatmul.mubr.f32.gmra.mrb[0].mxu0 %v1889
  %v2206 = vpop.f32.mrb[0].mxu0
  %v2207 = vadd.f32 %v2013, %v2206
  %v2208 = vpop.f32.mrb[0].mxu0
  %2209 = vmatprep.mubr.f32.mxu0 0.0
  %2210 = vmatmul.mubr.f32.gmra.mrb[0].mxu0 %v1890
  %v2211 = vpop.f32.mrb[0].mxu0
  %v2212 = vadd.f32 %v2013, %v2211
  %v2213 = vpop.f32.mrb[0].mxu0
  %2214 = vmatprep.mubr.f32.mxu0 0.0
  %2215 = vmatmul.mubr.f32.gmra.mrb[0].mxu0 %v1891
  %v2216 = vpop.f32.mrb[0].mxu0
  %v2217 = vadd.f32 %v2013, %v2216
  %v2218 = vpop.f32.mrb[0].mxu0
  %2219 = vmatprep.mubr.f32.mxu0 0.0
  %2220 = vmatmul.mubr.f32.gmra.mrb[0].mxu0 %v1892
  %v2221 = vpop.f32.mrb[0].mxu0
  %v2222 = vadd.f32 %v2013, %v2221
  %v2223 = vpop.f32.mrb[0].mxu0
  %2224 = vmatprep.mubr.f32.mxu0 0.0
  %2225 = vmatmul.mubr.f32.gmra.mrb[0].mxu0 %v1893
  %v2226 = vpop.f32.mrb[0].mxu0
  %v2227 = vadd.f32 %v2013, %v2226
  %v2228 = vpop.f32.mrb[0].mxu0
  %2229 = vmatprep.mubr.f32.mxu0 0.0
  %2230 = vmatmul.mubr.f32.gmra.mrb[0].mxu0 %v1894
  %v2231 = vpop.f32.mrb[0].mxu0
  %v2232 = vadd.f32 %v2013, %v2231
  %v2233 = vpop.f32.mrb[0].mxu0
  %2234 = vmatprep.mubr.f32.mxu0 0.0
  %2235 = vmatmul.mubr.f32.gmra.mrb[0].mxu0 %v1895
  %v2236 = vpop.f32.mrb[0].mxu0
  %v2237 = vadd.f32 %v2013, %v2236
  %v2238 = vpop.f32.mrb[0].mxu0
  %2239 = vmatprep.mubr.f32.mxu0 0.0
  %2240 = vmatmul.mubr.f32.gmra.mrb[0].mxu0 %v1896
  %v2241 = vpop.f32.mrb[0].mxu0
  %v2242 = vadd.f32 %v2013, %v2241
  %v2243 = vpop.f32.mrb[0].mxu0
  %2244 = vmatprep.mubr.f32.mxu0 0.0
  %2245 = vmatmul.mubr.f32.gmra.mrb[0].mxu0 %v1897
  %v2246 = vpop.f32.mrb[0].mxu0
  %v2247 = vadd.f32 %v2013, %v2246
  %v2248 = vpop.f32.mrb[0].mxu0
  %2249 = vmatprep.mubr.f32.mxu0 0.0
  %2250 = vmatmul.mubr.f32.gmra.mrb[0].mxu0 %v1898
  %v2251 = vpop.f32.mrb[0].mxu0
  %v2252 = vadd.f32 %v2013, %v2251
  %v2253 = vpop.f32.mrb[0].mxu0
  %2254 = vmatprep.mubr.f32.mxu0 0.0
  %2255 = vmatmul.mubr.f32.gmra.mrb[0].mxu0 %v1899
  %v2256 = vpop.f32.mrb[0].mxu0
  %v2257 = vadd.f32 %v2013, %v2256
  %v2258 = vpop.f32.mrb[0].mxu0
  %2259 = vmatprep.mubr.f32.mxu0 0.0
  %2260 = vmatmul.mubr.f32.gmra.mrb[0].mxu0 %v1900
  %v2261 = vpop.f32.mrb[0].mxu0
  %v2262 = vadd.f32 %v2013, %v2261
  %v2263 = vpop.f32.mrb[0].mxu0
  %2264 = vmatprep.mubr.f32.mxu0 0.0
  %2265 = vmatmul.mubr.f32.gmra.mrb[0].mxu0 %v1901
  %v2266 = vpop.f32.mrb[0].mxu0
  %v2267 = vadd.f32 %v2013, %v2266
  %v2268 = vpop.f32.mrb[0].mxu0
  %2269 = vmatprep.mubr.f32.mxu0 0.0
  %2270 = vmatmul.mubr.f32.gmra.mrb[0].mxu0 %v1902
  %v2271 = vpop.f32.mrb[0].mxu0
  %v2272 = vadd.f32 %v2013, %v2271
  %v2273 = vpop.f32.mrb[0].mxu0
  %2274 = vmatprep.mubr.f32.mxu0 0.0
  %2275 = vmatmul.mubr.f32.gmra.mrb[0].mxu0 %v1903
  %v2276 = vpop.f32.mrb[0].mxu0
  %v2277 = vadd.f32 %v2013, %v2276
  %v2278 = vpop.f32.mrb[0].mxu0
  %2279 = vmatprep.mubr.f32.mxu0 0.0
  %2280 = vmatmul.mubr.f32.gmra.mrb[0].mxu0 %v1904
  %v2281 = vpop.f32.mrb[0].mxu0
  %v2282 = vadd.f32 %v2013, %v2281
  %v2283 = vpop.f32.mrb[0].mxu0
  %2284 = vmatprep.mubr.f32.mxu0 0.0
  %2285 = vmatmul.mubr.f32.gmra.mrb[0].mxu0 %v1905
  %v2286 = vpop.f32.mrb[0].mxu0
  %v2287 = vadd.f32 %v2013, %v2286
  %v2288 = vpop.f32.mrb[0].mxu0
  %2289 = vmatprep.mubr.f32.mxu0 0.0
  %2290 = vmatmul.mubr.f32.gmra.mrb[0].mxu0 %v1906
  %v2291 = vpop.f32.mrb[0].mxu0
  %v2292 = vadd.f32 %v2013, %v2291
  %v2293 = vpop.f32.mrb[0].mxu0
  %2294 = vmatprep.mubr.f32.mxu0 0.0
  %2295 = vmatmul.mubr.f32.gmra.mrb[0].mxu0 %v1907
  %v2296 = vpop.f32.mrb[0].mxu0
  %v2297 = vadd.f32 %v2013, %v2296
  %v2298 = vpop.f32.mrb[0].mxu0
  %2299 = vmatprep.mubr.f32.mxu0 0.0
  %2300 = vmatmul.mubr.f32.gmra.mrb[0].mxu0 %v1908
  %v2301 = vpop.f32.mrb[0].mxu0
  %v2302 = vadd.f32 %v2013, %v2301
  %v2303 = vpop.f32.mrb[0].mxu0
  %2304 = vmatprep.mubr.f32.mxu0 0.0
  %2305 = vmatmul.mubr.f32.gmra.mrb[0].mxu0 %v1909
  %v2306 = vpop.f32.mrb[0].mxu0
  %v2307 = vadd.f32 %v2013, %v2306
  %v2308 = vpop.f32.mrb[0].mxu0
  %2309 = vmatprep.mubr.f32.mxu0 0.0
  %2310 = vmatmul.mubr.f32.gmra.mrb[0].mxu0 %v1910
  %v2311 = vpop.f32.mrb[0].mxu0
  %v2312 = vadd.f32 %v2013, %v2311
  %v2313 = vpop.f32.mrb[0].mxu0
  %2314 = vmatprep.mubr.f32.mxu0 0.0
  %2315 = vmatmul.mubr.f32.gmra.mrb[0].mxu0 %v1911
  %v2316 = vpop.f32.mrb[0].mxu0
  %v2317 = vadd.f32 %v2013, %v2316
  %v2318 = vpop.f32.mrb[0].mxu0
  %2319 = vmatprep.mubr.f32.mxu0 0.0
  %2320 = vmatmul.mubr.f32.gmra.mrb[0].mxu0 %v1912
  %v2321 = vpop.f32.mrb[0].mxu0
  %v2322 = vadd.f32 %v2013, %v2321
  %v2323 = vpop.f32.mrb[0].mxu0
  %2324 = vmatprep.mubr.f32.mxu0 0.0
  %2325 = vmatmul.mubr.f32.gmra.mrb[0].mxu0 %v1913
  %v2326 = vpop.f32.mrb[0].mxu0
  %v2327 = vadd.f32 %v2013, %v2326
  %v2328 = vpop.f32.mrb[0].mxu0
  %2329 = vmatprep.mubr.f32.mxu0 0.0
  %2330 = vmatmul.mubr.f32.gmra.mrb[0].mxu0 %v1914
  %v2331 = vpop.f32.mrb[0].mxu0
  %v2332 = vadd.f32 %v2013, %v2331
  %v2333 = vpop.f32.mrb[0].mxu0
  %2334 = vmatprep.mubr.f32.mxu0 0.0
  %2335 = vmatmul.mubr.f32.gmra.mrb[0].mxu0 %v1915
  %v2336 = vpop.f32.mrb[0].mxu0
  %v2337 = vadd.f32 %v2013, %v2336
  %v2338 = vpop.f32.mrb[0].mxu0
  %2339 = vmatprep.mubr.f32.mxu0 0.0
  %2340 = vmatmul.mubr.f32.gmra.mrb[0].mxu0 %v1916
  %v2341 = vpop.f32.mrb[0].mxu0
  %v2342 = vadd.f32 %v2013, %v2341
  %v2343 = vpop.f32.mrb[0].mxu0
  %2344 = vmatprep.mubr.f32.mxu0 0.0
  %2345 = vmatmul.mubr.f32.gmra.mrb[0].mxu0 %v1917
  %v2346 = vpop.f32.mrb[0].mxu0
  %v2347 = vadd.f32 %v2013, %v2346
  %v2348 = vpop.f32.mrb[0].mxu0
  %2349 = vmatprep.mubr.f32.mxu0 0.0
  %2350 = vmatmul.mubr.f32.gmra.mrb[0].mxu0 %v1918
  %v2351 = vpop.f32.mrb[0].mxu0
  %v2352 = vadd.f32 %v2013, %v2351
  %v2353 = vpop.f32.mrb[0].mxu0
  %2354 = vmatprep.mubr.f32.mxu0 0.0
  %2355 = vmatmul.mubr.f32.gmra.mrb[0].mxu0 %v1919
  %v2356 = vpop.f32.mrb[0].mxu0
  %v2357 = vadd.f32 %v2013, %v2356
  %v2358 = vpop.f32.mrb[0].mxu0
  %2359 = vmatprep.mubr.f32.mxu0 0.0
  %2360 = vmatmul.mubr.f32.gmra.mrb[0].mxu0 %v1920
  %v2361 = vpop.f32.mrb[0].mxu0
  %v2362 = vadd.f32 %v2013, %v2361
  %v2363 = vpop.f32.mrb[0].mxu0
  %2364 = vmatprep.mubr.f32.mxu0 0.0
  %2365 = vmatmul.mubr.f32.gmra.mrb[0].mxu0 %v1921
  %v2366 = vpop.f32.mrb[0].mxu0
  %v2367 = vadd.f32 %v2013, %v2366
  %v2368 = vpop.f32.mrb[0].mxu0
  %2369 = vmatprep.mubr.f32.mxu0 0.0
  %2370 = vmatmul.mubr.f32.gmra.mrb[0].mxu0 %v1922
  %v2371 = vpop.f32.mrb[0].mxu0
  %v2372 = vadd.f32 %v2013, %v2371
  %v2373 = vpop.f32.mrb[0].mxu0
  %2374 = vmatprep.mubr.f32.mxu0 0.0
  %2375 = vmatmul.mubr.f32.gmra.mrb[0].mxu0 %v1923
  %v2376 = vpop.f32.mrb[0].mxu0
  %v2377 = vadd.f32 %v2013, %v2376
  %v2378 = vpop.f32.mrb[0].mxu0
  %2379 = vmatprep.mubr.f32.mxu0 0.0
  %2380 = vmatmul.mubr.f32.gmra.mrb[0].mxu0 %v1924
  %v2381 = vpop.f32.mrb[0].mxu0
  %v2382 = vadd.f32 %v2013, %v2381
  %v2383 = vpop.f32.mrb[0].mxu0
  %2384 = vmatprep.mubr.f32.mxu0 0.0
  %2385 = vmatmul.mubr.f32.gmra.mrb[0].mxu0 %v1925
  %v2386 = vpop.f32.mrb[0].mxu0
  %v2387 = vadd.f32 %v2013, %v2386
  %v2388 = vpop.f32.mrb[0].mxu0
  %2389 = vmatprep.mubr.f32.mxu0 0.0
  %2390 = vmatmul.mubr.f32.gmra.mrb[0].mxu0 %v1926
  %v2391 = vpop.f32.mrb[0].mxu0
  %v2392 = vadd.f32 %v2013, %v2391
  %v2393 = vpop.f32.mrb[0].mxu0
  %2394 = vmatprep.mubr.f32.mxu0 0.0
  %2395 = vmatmul.mubr.f32.gmra.mrb[0].mxu0 %v1927
  %v2396 = vpop.f32.mrb[0].mxu0
  %v2397 = vadd.f32 %v2013, %v2396
  %v2398 = vpop.f32.mrb[0].mxu0
  %2399 = vmatprep.mubr.f32.mxu0 0.0
  %2400 = vmatmul.mubr.f32.gmra.mrb[0].mxu0 %v1928
  %v2401 = vpop.f32.mrb[0].mxu0
  %v2402 = vadd.f32 %v2013, %v2401
  %v2403 = vpop.f32.mrb[0].mxu0
  %2404 = vmatprep.mubr.f32.mxu0 0.0
  %2405 = vmatmul.mubr.f32.gmra.mrb[0].mxu0 %v1929
  %v2406 = vpop.f32.mrb[0].mxu0
  %v2407 = vadd.f32 %v2013, %v2406
  %v2408 = vpop.f32.mrb[0].mxu0
  %2409 = vmatprep.mubr.f32.mxu0 0.0
  %2410 = vmatmul.mubr.f32.gmra.mrb[0].mxu0 %v1930
  %v2411 = vpop.f32.mrb[0].mxu0
  %v2412 = vadd.f32 %v2013, %v2411
  %v2413 = vpop.f32.mrb[0].mxu0
  %2414 = vmatprep.mubr.f32.mxu0 0.0
  %2415 = vmatmul.mubr.f32.gmra.mrb[0].mxu0 %v1931
  %v2416 = vpop.f32.mrb[0].mxu0
  %v2417 = vadd.f32 %v2013, %v2416
  %v2418 = vpop.f32.mrb[0].mxu0
  %2419 = vmatprep.mubr.f32.mxu0 0.0
  %2420 = vmatmul.mubr.f32.gmra.mrb[0].mxu0 %v1932
  %v2421 = vpop.f32.mrb[0].mxu0
  %v2422 = vadd.f32 %v2013, %v2421
  %v2423 = vpop.f32.mrb[0].mxu0
  %2424 = vmatprep.mubr.f32.mxu0 0.0
  %2425 = vmatmul.mubr.f32.gmra.mrb[0].mxu0 %v1933
  %v2426 = vpop.f32.mrb[0].mxu0
  %v2427 = vadd.f32 %v2013, %v2426
  %v2428 = vpop.f32.mrb[0].mxu0
  %2429 = vmatprep.mubr.f32.mxu0 0.0
  %2430 = vmatmul.mubr.f32.gmra.mrb[0].mxu0 %v1934
  %v2431 = vpop.f32.mrb[0].mxu0
  %v2432 = vadd.f32 %v2013, %v2431
  %v2433 = vpop.f32.mrb[0].mxu0
  %2434 = vmatprep.mubr.f32.mxu0 0.0
  %2435 = vmatmul.mubr.f32.gmra.mrb[0].mxu0 %v1935
  %v2436 = vpop.f32.mrb[0].mxu0
  %v2437 = vadd.f32 %v2013, %v2436
  %v2438 = vpop.f32.mrb[0].mxu0
  %2439 = vmatprep.mubr.f32.mxu0 0.0
  %2440 = vmatmul.mubr.f32.gmra.mrb[0].mxu0 %v1936
  %v2441 = vpop.f32.mrb[0].mxu0
  %v2442 = vadd.f32 %v2013, %v2441
  %v2443 = vpop.f32.mrb[0].mxu0
  %2444 = vmatprep.mubr.f32.mxu0 0.0
  %2445 = vmatmul.mubr.f32.gmra.mrb[0].mxu0 %v1937
  %v2446 = vpop.f32.mrb[0].mxu0
  %v2447 = vadd.f32 %v2013, %v2446
  %v2448 = vpop.f32.mrb[0].mxu0
  %2449 = vmatprep.mubr.f32.mxu0 0.0
  %2450 = vmatmul.mubr.f32.gmra.mrb[0].mxu0 %v1938
  %v2451 = vpop.f32.mrb[0].mxu0
  %v2452 = vadd.f32 %v2013, %v2451
  %v2453 = vpop.f32.mrb[0].mxu0
  %2454 = vmatprep.mubr.f32.mxu0 0.0
  %2455 = vmatmul.mubr.f32.gmra.mrb[0].mxu0 %v1939
  %v2456 = vpop.f32.mrb[0].mxu0
  %v2457 = vadd.f32 %v2013, %v2456
  %v2458 = vpop.f32.mrb[0].mxu0
  %2459 = vmatprep.mubr.f32.mxu0 0.0
  %2460 = vmatmul.mubr.f32.gmra.mrb[0].mxu0 %v1940
  %v2461 = vpop.f32.mrb[0].mxu0
  %v2462 = vadd.f32 %v2013, %v2461
  %v2463 = vpop.f32.mrb[0].mxu0
  %2464 = vmatprep.mubr.f32.mxu0 0.0
  %2465 = vmatmul.mubr.f32.gmra.mrb[0].mxu0 %v1941
  %v2466 = vpop.f32.mrb[0].mxu0
  %v2467 = vadd.f32 %v2013, %v2466
  %v2468 = vpop.f32.mrb[0].mxu0
  %2469 = vmatprep.mubr.f32.mxu0 0.0
  %2470 = vmatmul.mubr.f32.gmra.mrb[0].mxu0 %v1942
  %v2471 = vpop.f32.mrb[0].mxu0
  %v2472 = vadd.f32 %v2013, %v2471
  %v2473 = vpop.f32.mrb[0].mxu0
  %2474 = vmatprep.mubr.f32.mxu0 0.0
  %2475 = vmatmul.mubr.f32.gmra.mrb[0].mxu0 %v1943
  %v2476 = vpop.f32.mrb[0].mxu0
  %v2477 = vadd.f32 %v2013, %v2476
  %v2478 = vpop.f32.mrb[0].mxu0
  %2479 = vmatprep.mubr.f32.mxu0 0.0
  %2480 = vmatmul.mubr.f32.gmra.mrb[0].mxu0 %v1944
  %v2481 = vpop.f32.mrb[0].mxu0
  %v2482 = vadd.f32 %v2013, %v2481
  %v2483 = vpop.f32.mrb[0].mxu0
  %2484 = vmatprep.mubr.f32.mxu0 0.0
  %2485 = vmatmul.mubr.f32.gmra.mrb[0].mxu0 %v1945
  %v2486 = vpop.f32.mrb[0].mxu0
  %v2487 = vadd.f32 %v2013, %v2486
  %v2488 = vpop.f32.mrb[0].mxu0
  %2489 = vmatprep.mubr.f32.mxu0 0.0
  %2490 = vmatmul.mubr.f32.gmra.mrb[0].mxu0 %v1946
  %v2491 = vpop.f32.mrb[0].mxu0
  %v2492 = vadd.f32 %v2013, %v2491
  %v2493 = vpop.f32.mrb[0].mxu0
  %2494 = vmatprep.mubr.f32.mxu0 0.0
  %2495 = vmatmul.mubr.f32.gmra.mrb[0].mxu0 %v1947
  %v2496 = vpop.f32.mrb[0].mxu0
  %v2497 = vadd.f32 %v2013, %v2496
  %v2498 = vpop.f32.mrb[0].mxu0
  %2499 = vmatprep.mubr.f32.mxu0 0.0
  %2500 = vmatmul.mubr.f32.gmra.mrb[0].mxu0 %v1948
  %v2501 = vpop.f32.mrb[0].mxu0
  %v2502 = vadd.f32 %v2013, %v2501
  %v2503 = vpop.f32.mrb[0].mxu0
  %2504 = vmatprep.mubr.f32.mxu0 0.0
  %2505 = vmatmul.mubr.f32.gmra.mrb[0].mxu0 %v1949
  %v2506 = vpop.f32.mrb[0].mxu0
  %v2507 = vadd.f32 %v2013, %v2506
  %v2508 = vpop.f32.mrb[0].mxu0
  %2509 = vmatprep.mubr.f32.mxu0 0.0
  %2510 = vmatmul.mubr.f32.gmra.mrb[0].mxu0 %v1950
  %v2511 = vpop.f32.mrb[0].mxu0
  %v2512 = vadd.f32 %v2013, %v2511
  %v2513 = vpop.f32.mrb[0].mxu0
  %2514 = vmatprep.mubr.f32.mxu0 0.0
  %2515 = vmatmul.mubr.f32.gmra.mrb[0].mxu0 %v1951
  %v2516 = vpop.f32.mrb[0].mxu0
  %v2517 = vadd.f32 %v2013, %v2516
  %v2518 = vpop.f32.mrb[0].mxu0
  %2519 = vmatprep.mubr.f32.mxu0 0.0
  %2520 = vmatmul.mubr.f32.gmra.mrb[0].mxu0 %v1952
  %v2521 = vpop.f32.mrb[0].mxu0
  %v2522 = vadd.f32 %v2013, %v2521
  %v2523 = vpop.f32.mrb[0].mxu0
  %2524 = vmatprep.mubr.f32.mxu0 0.0
  %2525 = vmatmul.mubr.f32.gmra.mrb[0].mxu0 %v1953
  %v2526 = vpop.f32.mrb[0].mxu0
  %v2527 = vadd.f32 %v2013, %v2526
  %v2528 = vpop.f32.mrb[0].mxu0
  %2529 = vmatprep.mubr.f32.mxu0 0.0
  %2530 = vmatmul.mubr.f32.gmra.mrb[0].mxu0 %v1954
  %v2531 = vpop.f32.mrb[0].mxu0
  %v2532 = vadd.f32 %v2013, %v2531
  %v2533 = vpop.f32.mrb[0].mxu0
  %2534 = vmatprep.mubr.f32.mxu0 0.0
  %2535 = vmatmul.mubr.f32.gmra.mrb[0].mxu0 %v1955
  %v2536 = vpop.f32.mrb[0].mxu0
  %v2537 = vadd.f32 %v2013, %v2536
  %v2538 = vpop.f32.mrb[0].mxu0
  %2539 = vmatprep.mubr.f32.mxu0 0.0
  %2540 = vmatmul.mubr.f32.gmra.mrb[0].mxu0 %v1956
  %v2541 = vpop.f32.mrb[0].mxu0
  %v2542 = vadd.f32 %v2013, %v2541
  %v2543 = vpop.f32.mrb[0].mxu0
  %2544 = vmatprep.mubr.f32.mxu0 0.0
  %2545 = vmatmul.mubr.f32.gmra.mrb[0].mxu0 %v1957
  %v2546 = vpop.f32.mrb[0].mxu0
  %v2547 = vadd.f32 %v2013, %v2546
  %v2548 = vpop.f32.mrb[0].mxu0
  %2549 = vmatprep.mubr.f32.mxu0 0.0
  %2550 = vmatmul.mubr.f32.gmra.mrb[0].mxu0 %v1958
  %v2551 = vpop.f32.mrb[0].mxu0
  %v2552 = vadd.f32 %v2013, %v2551
  %v2553 = vpop.f32.mrb[0].mxu0
  %2554 = vmatprep.mubr.f32.mxu0 0.0
  %2555 = vmatmul.mubr.f32.gmra.mrb[0].mxu0 %v1959
  %v2556 = vpop.f32.mrb[0].mxu0
  %v2557 = vadd.f32 %v2013, %v2556
  %v2558 = vpop.f32.mrb[0].mxu0
  %2559 = vmatprep.mubr.f32.mxu0 0.0
  %2560 = vmatmul.mubr.f32.gmra.mrb[0].mxu0 %v1960
  %v2561 = vpop.f32.mrb[0].mxu0
  %v2562 = vadd.f32 %v2013, %v2561
  %v2563 = vpop.f32.mrb[0].mxu0
  %2564 = vmatprep.mubr.f32.mxu0 0.0
  %2565 = vmatmul.mubr.f32.gmra.mrb[0].mxu0 %v1961
  %v2566 = vpop.f32.mrb[0].mxu0
  %v2567 = vadd.f32 %v2013, %v2566
  %v2568 = vpop.f32.mrb[0].mxu0
  %2569 = vmatprep.mubr.f32.mxu0 0.0
  %2570 = vmatmul.mubr.f32.gmra.mrb[0].mxu0 %v1962
  %v2571 = vpop.f32.mrb[0].mxu0
  %v2572 = vadd.f32 %v2013, %v2571
  %v2573 = vpop.f32.mrb[0].mxu0
  %2574 = vmatprep.mubr.f32.mxu0 0.0
  %2575 = vmatmul.mubr.f32.gmra.mrb[0].mxu0 %v1963
  %v2576 = vpop.f32.mrb[0].mxu0
  %v2577 = vadd.f32 %v2013, %v2576
  %v2578 = vpop.f32.mrb[0].mxu0
  %2579 = vmatprep.mubr.f32.mxu0 0.0
  %2580 = vmatmul.mubr.f32.gmra.mrb[0].mxu0 %v1964
  %v2581 = vpop.f32.mrb[0].mxu0
  %v2582 = vadd.f32 %v2013, %v2581
  %v2583 = vpop.f32.mrb[0].mxu0
  %2584 = vmatprep.mubr.f32.mxu0 0.0
  %2585 = vmatmul.mubr.f32.gmra.mrb[0].mxu0 %v1965
  %v2586 = vpop.f32.mrb[0].mxu0
  %v2587 = vadd.f32 %v2013, %v2586
  %v2588 = vpop.f32.mrb[0].mxu0
  %2589 = vmatprep.mubr.f32.mxu0 0.0
  %2590 = vmatmul.mubr.f32.gmra.mrb[0].mxu0 %v1966
  %v2591 = vpop.f32.mrb[0].mxu0
  %v2592 = vadd.f32 %v2013, %v2591
  %v2593 = vpop.f32.mrb[0].mxu0
  %2594 = vmatprep.mubr.f32.mxu0 0.0
  %2595 = vmatmul.mubr.f32.gmra.mrb[0].mxu0 %v1967
  %v2596 = vpop.f32.mrb[0].mxu0
  %v2597 = vadd.f32 %v2013, %v2596
  %v2598 = vpop.f32.mrb[0].mxu0
  %2599 = vmatprep.mubr.f32.mxu0 0.0
  %2600 = vmatmul.mubr.f32.gmra.mrb[0].mxu0 %v1968
  %v2601 = vpop.f32.mrb[0].mxu0
  %v2602 = vadd.f32 %v2013, %v2601
  %v2603 = vpop.f32.mrb[0].mxu0
  %2604 = vmatprep.mubr.f32.mxu0 0.0
  %2605 = vmatmul.mubr.f32.gmra.mrb[0].mxu0 %v1969
  %v2606 = vpop.f32.mrb[0].mxu0
  %v2607 = vadd.f32 %v2013, %v2606
  %v2608 = vpop.f32.mrb[0].mxu0
  %2609 = vmatprep.mubr.f32.mxu0 0.0
  %2610 = vmatmul.mubr.f32.gmra.mrb[0].mxu0 %v1970
  %v2611 = vpop.f32.mrb[0].mxu0
  %v2612 = vadd.f32 %v2013, %v2611
  %v2613 = vpop.f32.mrb[0].mxu0
  %2614 = vmatprep.mubr.f32.mxu0 0.0
  %2615 = vmatmul.mubr.f32.gmra.mrb[0].mxu0 %v1971
  %v2616 = vpop.f32.mrb[0].mxu0
  %v2617 = vadd.f32 %v2013, %v2616
  %v2618 = vpop.f32.mrb[0].mxu0
  %2619 = vmatprep.mubr.f32.mxu0 0.0
  %2620 = vmatmul.mubr.f32.gmra.mrb[0].mxu0 %v1972
  %v2621 = vpop.f32.mrb[0].mxu0
  %v2622 = vadd.f32 %v2013, %v2621
  %v2623 = vpop.f32.mrb[0].mxu0
  %2624 = vmatprep.mubr.f32.mxu0 0.0
  %2625 = vmatmul.mubr.f32.gmra.mrb[0].mxu0 %v1973
  %v2626 = vpop.f32.mrb[0].mxu0
  %v2627 = vadd.f32 %v2013, %v2626
  %v2628 = vpop.f32.mrb[0].mxu0
  %2629 = vmatprep.mubr.f32.mxu0 0.0
  %2630 = vmatmul.mubr.f32.gmra.mrb[0].mxu0 %v1974
  %v2631 = vpop.f32.mrb[0].mxu0
  %v2632 = vadd.f32 %v2013, %v2631
  %v2633 = vpop.f32.mrb[0].mxu0
  %2634 = vmatprep.mubr.f32.mxu0 0.0
  %2635 = vmatmul.mubr.f32.gmra.mrb[0].mxu0 %v1975
  %v2636 = vpop.f32.mrb[0].mxu0
  %v2637 = vadd.f32 %v2013, %v2636
  %v2638 = vpop.f32.mrb[0].mxu0
  %2639 = vmatprep.mubr.f32.mxu0 0.0
  %2640 = vmatmul.mubr.f32.gmra.mrb[0].mxu0 %v1976
  %v2641 = vpop.f32.mrb[0].mxu0
  %v2642 = vadd.f32 %v2013, %v2641
  %v2643 = vpop.f32.mrb[0].mxu0
  %2644 = vmatprep.mubr.f32.mxu0 0.0
  %2645 = vmatmul.mubr.f32.gmra.mrb[0].mxu0 %v1977
  %v2646 = vpop.f32.mrb[0].mxu0
  %v2647 = vadd.f32 %v2013, %v2646
  %v2648 = vpop.f32.mrb[0].mxu0
  %2649 = vmatprep.mubr.f32.mxu0 0.0
  %2650 = vmatmul.mubr.f32.gmra.mrb[0].mxu0 %v1978
  %v2651 = vpop.f32.mrb[0].mxu0
  %v2652 = vadd.f32 %v2013, %v2651
  %v2653 = vpop.f32.mrb[0].mxu0
  %2654 = vmatprep.mubr.f32.mxu0 0.0
  %2655 = vmatmul.mubr.f32.gmra.mrb[0].mxu0 %v1979
  %v2656 = vpop.f32.mrb[0].mxu0
  %v2657 = vadd.f32 %v2013, %v2656
  %v2658 = vpop.f32.mrb[0].mxu0
  %2659 = vmatprep.mubr.f32.mxu0 0.0
  %2660 = vmatmul.mubr.f32.gmra.mrb[0].mxu0 %v1980
  %v2661 = vpop.f32.mrb[0].mxu0
  %v2662 = vadd.f32 %v2013, %v2661
  %v2663 = vpop.f32.mrb[0].mxu0
  %2664 = vmatprep.mubr.f32.mxu0 0.0
  %2665 = vmatmul.mubr.f32.gmra.mrb[0].mxu0 %v1981
  %v2666 = vpop.f32.mrb[0].mxu0
  %v2667 = vadd.f32 %v2013, %v2666
  %v2668 = vpop.f32.mrb[0].mxu0
  %2669 = vmatprep.mubr.f32.mxu0 0.0
  %2670 = vmatmul.mubr.f32.gmra.mrb[0].mxu0 %v1982
  %v2671 = vpop.f32.mrb[0].mxu0
  %v2672 = vadd.f32 %v2013, %v2671
  %v2673 = vpop.f32.mrb[0].mxu0
  %2674 = vmatprep.mubr.f32.mxu0 0.0
  %2675 = vmatmul.mubr.f32.gmra.mrb[0].mxu0 %v1983
  %v2676 = vpop.f32.mrb[0].mxu0
  %v2677 = vadd.f32 %v2013, %v2676
  %v2678 = vpop.f32.mrb[0].mxu0
  %2679 = vmatprep.mubr.f32.mxu0 0.0
  %2680 = vmatmul.mubr.f32.gmra.mrb[0].mxu0 %v1984
  %v2681 = vpop.f32.mrb[0].mxu0
  %v2682 = vadd.f32 %v2013, %v2681
  %v2683 = vpop.f32.mrb[0].mxu0
  %2684 = vmatprep.mubr.f32.mxu0 0.0
  %2685 = vmatmul.mubr.f32.gmra.mrb[0].mxu0 %v1985
  %v2686 = vpop.f32.mrb[0].mxu0
  %v2687 = vadd.f32 %v2013, %v2686
  %v2688 = vpop.f32.mrb[0].mxu0
  %2689 = vmatprep.mubr.f32.mxu0 0.0
  %2690 = vmatmul.mubr.f32.gmra.mrb[0].mxu0 %v1986
  %v2691 = vpop.f32.mrb[0].mxu0
  %v2692 = vadd.f32 %v2013, %v2691
  %v2693 = vpop.f32.mrb[0].mxu0
  %2694 = vmatprep.mubr.f32.mxu0 0.0
  %2695 = vmatmul.mubr.f32.gmra.mrb[0].mxu0 %v1987
  %v2696 = vpop.f32.mrb[0].mxu0
  %v2697 = vadd.f32 %v2013, %v2696
  %v2698 = vpop.f32.mrb[0].mxu0
  %2699 = vmatprep.mubr.f32.mxu0 0.0
  %2700 = vmatmul.mubr.f32.gmra.mrb[0].mxu0 %v1988
  %v2701 = vpop.f32.mrb[0].mxu0
  %v2702 = vadd.f32 %v2013, %v2701
  %v2703 = vpop.f32.mrb[0].mxu0
  %2704 = vmatprep.mubr.f32.mxu0 0.0
  %2705 = vmatmul.mubr.f32.gmra.mrb[0].mxu0 %v1989
  %v2706 = vpop.f32.mrb[0].mxu0
  %v2707 = vadd.f32 %v2013, %v2706
  %v2708 = vpop.f32.mrb[0].mxu0
  %2709 = vmatprep.mubr.f32.mxu0 0.0
  %2710 = vmatmul.mubr.f32.gmra.mrb[0].mxu0 %v1990
  %v2711 = vpop.f32.mrb[0].mxu0
  %v2712 = vadd.f32 %v2013, %v2711
  %v2713 = vpop.f32.mrb[0].mxu0
  %2714 = vmatprep.mubr.f32.mxu0 0.0
  %2715 = vmatmul.mubr.f32.gmra.mrb[0].mxu0 %v1991
  %v2716 = vpop.f32.mrb[0].mxu0
  %v2717 = vadd.f32 %v2013, %v2716
  %v2718 = vpop.f32.mrb[0].mxu0
  %2719 = vdwg.mxu0
  %vm2720 = vcmp.gt.f32.partialorder %v2082, 0.0
  %vm2721 = vcmp.gt.f32.partialorder %v2087, 0.0
  %vm2722 = vcmp.gt.f32.partialorder %v2092, 0.0
  %vm2723 = vcmp.gt.f32.partialorder %v2097, 0.0
  %vm2724 = vcmp.gt.f32.partialorder %v2102, 0.0
  %vm2725 = vcmp.gt.f32.partialorder %v2107, 0.0
  %vm2726 = vcmp.gt.f32.partialorder %v2112, 0.0
  %vm2727 = vcmp.gt.f32.partialorder %v2117, 0.0
  %vm2728 = vcmp.gt.f32.partialorder %v2122, 0.0
  %vm2729 = vcmp.gt.f32.partialorder %v2127, 0.0
  %vm2730 = vcmp.gt.f32.partialorder %v2132, 0.0
  %vm2731 = vcmp.gt.f32.partialorder %v2137, 0.0
  %vm2732 = vcmp.gt.f32.partialorder %v2142, 0.0
  %vm2733 = vcmp.gt.f32.partialorder %v2147, 0.0
  %vm2734 = vcmp.gt.f32.partialorder %v2152, 0.0
  %vm2735 = vcmp.gt.f32.partialorder %v2157, 0.0
  %vm2736 = vcmp.gt.f32.partialorder %v2162, 0.0
  %vm2737 = vcmp.gt.f32.partialorder %v2167, 0.0
  %vm2738 = vcmp.gt.f32.partialorder %v2172, 0.0
  %vm2739 = vcmp.gt.f32.partialorder %v2177, 0.0
  %vm2740 = vcmp.gt.f32.partialorder %v2182, 0.0
  %vm2741 = vcmp.gt.f32.partialorder %v2187, 0.0
  %vm2742 = vcmp.gt.f32.partialorder %v2192, 0.0
  %vm2743 = vcmp.gt.f32.partialorder %v2197, 0.0
  %vm2744 = vcmp.gt.f32.partialorder %v2202, 0.0
  %vm2745 = vcmp.gt.f32.partialorder %v2207, 0.0
  %vm2746 = vcmp.gt.f32.partialorder %v2212, 0.0
  %vm2747 = vcmp.gt.f32.partialorder %v2217, 0.0
  %vm2748 = vcmp.gt.f32.partialorder %v2222, 0.0
  %vm2749 = vcmp.gt.f32.partialorder %v2227, 0.0
  %vm2750 = vcmp.gt.f32.partialorder %v2232, 0.0
  %vm2751 = vcmp.gt.f32.partialorder %v2237, 0.0
  %vm2752 = vcmp.gt.f32.partialorder %v2242, 0.0
  %vm2753 = vcmp.gt.f32.partialorder %v2247, 0.0
  %vm2754 = vcmp.gt.f32.partialorder %v2252, 0.0
  %vm2755 = vcmp.gt.f32.partialorder %v2257, 0.0
  %vm2756 = vcmp.gt.f32.partialorder %v2262, 0.0
  %vm2757 = vcmp.gt.f32.partialorder %v2267, 0.0
  %vm2758 = vcmp.gt.f32.partialorder %v2272, 0.0
  %vm2759 = vcmp.gt.f32.partialorder %v2277, 0.0
  %vm2760 = vcmp.gt.f32.partialorder %v2282, 0.0
  %vm2761 = vcmp.gt.f32.partialorder %v2287, 0.0
  %vm2762 = vcmp.gt.f32.partialorder %v2292, 0.0
  %vm2763 = vcmp.gt.f32.partialorder %v2297, 0.0
  %vm2764 = vcmp.gt.f32.partialorder %v2302, 0.0
  %vm2765 = vcmp.gt.f32.partialorder %v2307, 0.0
  %vm2766 = vcmp.gt.f32.partialorder %v2312, 0.0
  %vm2767 = vcmp.gt.f32.partialorder %v2317, 0.0
  %vm2768 = vcmp.gt.f32.partialorder %v2322, 0.0
  %vm2769 = vcmp.gt.f32.partialorder %v2327, 0.0
  %vm2770 = vcmp.gt.f32.partialorder %v2332, 0.0
  %vm2771 = vcmp.gt.f32.partialorder %v2337, 0.0
  %vm2772 = vcmp.gt.f32.partialorder %v2342, 0.0
  %vm2773 = vcmp.gt.f32.partialorder %v2347, 0.0
  %vm2774 = vcmp.gt.f32.partialorder %v2352, 0.0
  %vm2775 = vcmp.gt.f32.partialorder %v2357, 0.0
  %vm2776 = vcmp.gt.f32.partialorder %v2362, 0.0
  %vm2777 = vcmp.gt.f32.partialorder %v2367, 0.0
  %vm2778 = vcmp.gt.f32.partialorder %v2372, 0.0
  %vm2779 = vcmp.gt.f32.partialorder %v2377, 0.0
  %vm2780 = vcmp.gt.f32.partialorder %v2382, 0.0
  %vm2781 = vcmp.gt.f32.partialorder %v2387, 0.0
  %vm2782 = vcmp.gt.f32.partialorder %v2392, 0.0
  %vm2783 = vcmp.gt.f32.partialorder %v2397, 0.0
  %vm2784 = vcmp.gt.f32.partialorder %v2402, 0.0
  %vm2785 = vcmp.gt.f32.partialorder %v2407, 0.0
  %vm2786 = vcmp.gt.f32.partialorder %v2412, 0.0
  %vm2787 = vcmp.gt.f32.partialorder %v2417, 0.0
  %vm2788 = vcmp.gt.f32.partialorder %v2422, 0.0
  %vm2789 = vcmp.gt.f32.partialorder %v2427, 0.0
  %vm2790 = vcmp.gt.f32.partialorder %v2432, 0.0
  %vm2791 = vcmp.gt.f32.partialorder %v2437, 0.0
  %vm2792 = vcmp.gt.f32.partialorder %v2442, 0.0
  %vm2793 = vcmp.gt.f32.partialorder %v2447, 0.0
  %vm2794 = vcmp.gt.f32.partialorder %v2452, 0.0
  %vm2795 = vcmp.gt.f32.partialorder %v2457, 0.0
  %vm2796 = vcmp.gt.f32.partialorder %v2462, 0.0
  %vm2797 = vcmp.gt.f32.partialorder %v2467, 0.0
  %vm2798 = vcmp.gt.f32.partialorder %v2472, 0.0
  %vm2799 = vcmp.gt.f32.partialorder %v2477, 0.0
  %vm2800 = vcmp.gt.f32.partialorder %v2482, 0.0
  %vm2801 = vcmp.gt.f32.partialorder %v2487, 0.0
  %vm2802 = vcmp.gt.f32.partialorder %v2492, 0.0
  %vm2803 = vcmp.gt.f32.partialorder %v2497, 0.0
  %vm2804 = vcmp.gt.f32.partialorder %v2502, 0.0
  %vm2805 = vcmp.gt.f32.partialorder %v2507, 0.0
  %vm2806 = vcmp.gt.f32.partialorder %v2512, 0.0
  %vm2807 = vcmp.gt.f32.partialorder %v2517, 0.0
  %vm2808 = vcmp.gt.f32.partialorder %v2522, 0.0
  %vm2809 = vcmp.gt.f32.partialorder %v2527, 0.0
  %vm2810 = vcmp.gt.f32.partialorder %v2532, 0.0
  %vm2811 = vcmp.gt.f32.partialorder %v2537, 0.0
  %vm2812 = vcmp.gt.f32.partialorder %v2542, 0.0
  %vm2813 = vcmp.gt.f32.partialorder %v2547, 0.0
  %vm2814 = vcmp.gt.f32.partialorder %v2552, 0.0
  %vm2815 = vcmp.gt.f32.partialorder %v2557, 0.0
  %vm2816 = vcmp.gt.f32.partialorder %v2562, 0.0
  %vm2817 = vcmp.gt.f32.partialorder %v2567, 0.0
  %vm2818 = vcmp.gt.f32.partialorder %v2572, 0.0
  %vm2819 = vcmp.gt.f32.partialorder %v2577, 0.0
  %vm2820 = vcmp.gt.f32.partialorder %v2582, 0.0
  %vm2821 = vcmp.gt.f32.partialorder %v2587, 0.0
  %vm2822 = vcmp.gt.f32.partialorder %v2592, 0.0
  %vm2823 = vcmp.gt.f32.partialorder %v2597, 0.0
  %vm2824 = vcmp.gt.f32.partialorder %v2602, 0.0
  %vm2825 = vcmp.gt.f32.partialorder %v2607, 0.0
  %vm2826 = vcmp.gt.f32.partialorder %v2612, 0.0
  %vm2827 = vcmp.gt.f32.partialorder %v2617, 0.0
  %vm2828 = vcmp.gt.f32.partialorder %v2622, 0.0
  %vm2829 = vcmp.gt.f32.partialorder %v2627, 0.0
  %vm2830 = vcmp.gt.f32.partialorder %v2632, 0.0
  %vm2831 = vcmp.gt.f32.partialorder %v2637, 0.0
  %vm2832 = vcmp.gt.f32.partialorder %v2642, 0.0
  %vm2833 = vcmp.gt.f32.partialorder %v2647, 0.0
  %vm2834 = vcmp.gt.f32.partialorder %v2652, 0.0
  %vm2835 = vcmp.gt.f32.partialorder %v2657, 0.0
  %vm2836 = vcmp.gt.f32.partialorder %v2662, 0.0
  %vm2837 = vcmp.gt.f32.partialorder %v2667, 0.0
  %vm2838 = vcmp.gt.f32.partialorder %v2672, 0.0
  %vm2839 = vcmp.gt.f32.partialorder %v2677, 0.0
  %vm2840 = vcmp.gt.f32.partialorder %v2682, 0.0
  %vm2841 = vcmp.gt.f32.partialorder %v2687, 0.0
  %vm2842 = vcmp.gt.f32.partialorder %v2692, 0.0
  %vm2843 = vcmp.gt.f32.partialorder %v2697, 0.0
  %vm2844 = vcmp.gt.f32.partialorder %v2702, 0.0
  %vm2845 = vcmp.gt.f32.partialorder %v2707, 0.0
  %vm2846 = vcmp.gt.f32.partialorder %v2712, 0.0
  %vm2847 = vcmp.gt.f32.partialorder %v2717, 0.0
  %v2848 = vmin.f32 %v2082, 0.0
  %v2849 = vmin.f32 %v2087, 0.0
  %v2850 = vmin.f32 %v2092, 0.0
  %v2851 = vmin.f32 %v2097, 0.0
  %v2852 = vmin.f32 %v2102, 0.0
  %v2853 = vmin.f32 %v2107, 0.0
  %v2854 = vmin.f32 %v2112, 0.0
  %v2855 = vmin.f32 %v2117, 0.0
  %v2856 = vmin.f32 %v2122, 0.0
  %v2857 = vmin.f32 %v2127, 0.0
  %v2858 = vmin.f32 %v2132, 0.0
  %v2859 = vmin.f32 %v2137, 0.0
  %v2860 = vmin.f32 %v2142, 0.0
  %v2861 = vmin.f32 %v2147, 0.0
  %v2862 = vmin.f32 %v2152, 0.0
  %v2863 = vmin.f32 %v2157, 0.0
  %v2864 = vmin.f32 %v2162, 0.0
  %v2865 = vmin.f32 %v2167, 0.0
  %v2866 = vmin.f32 %v2172, 0.0
  %v2867 = vmin.f32 %v2177, 0.0
  %v2868 = vmin.f32 %v2182, 0.0
  %v2869 = vmin.f32 %v2187, 0.0
  %v2870 = vmin.f32 %v2192, 0.0
  %v2871 = vmin.f32 %v2197, 0.0
  %v2872 = vmin.f32 %v2202, 0.0
  %v2873 = vmin.f32 %v2207, 0.0
  %v2874 = vmin.f32 %v2212, 0.0
  %v2875 = vmin.f32 %v2217, 0.0
  %v2876 = vmin.f32 %v2222, 0.0
  %v2877 = vmin.f32 %v2227, 0.0
  %v2878 = vmin.f32 %v2232, 0.0
  %v2879 = vmin.f32 %v2237, 0.0
  %v2880 = vmin.f32 %v2242, 0.0
  %v2881 = vmin.f32 %v2247, 0.0
  %v2882 = vmin.f32 %v2252, 0.0
  %v2883 = vmin.f32 %v2257, 0.0
  %v2884 = vmin.f32 %v2262, 0.0
  %v2885 = vmin.f32 %v2267, 0.0
  %v2886 = vmin.f32 %v2272, 0.0
  %v2887 = vmin.f32 %v2277, 0.0
  %v2888 = vmin.f32 %v2282, 0.0
  %v2889 = vmin.f32 %v2287, 0.0
  %v2890 = vmin.f32 %v2292, 0.0
  %v2891 = vmin.f32 %v2297, 0.0
  %v2892 = vmin.f32 %v2302, 0.0
  %v2893 = vmin.f32 %v2307, 0.0
  %v2894 = vmin.f32 %v2312, 0.0
  %v2895 = vmin.f32 %v2317, 0.0
  %v2896 = vmin.f32 %v2322, 0.0
  %v2897 = vmin.f32 %v2327, 0.0
  %v2898 = vmin.f32 %v2332, 0.0
  %v2899 = vmin.f32 %v2337, 0.0
  %v2900 = vmin.f32 %v2342, 0.0
  %v2901 = vmin.f32 %v2347, 0.0
  %v2902 = vmin.f32 %v2352, 0.0
  %v2903 = vmin.f32 %v2357, 0.0
  %v2904 = vmin.f32 %v2362, 0.0
  %v2905 = vmin.f32 %v2367, 0.0
  %v2906 = vmin.f32 %v2372, 0.0
  %v2907 = vmin.f32 %v2377, 0.0
  %v2908 = vmin.f32 %v2382, 0.0
  %v2909 = vmin.f32 %v2387, 0.0
  %v2910 = vmin.f32 %v2392, 0.0
  %v2911 = vmin.f32 %v2397, 0.0
  %v2912 = vmin.f32 %v2402, 0.0
  %v2913 = vmin.f32 %v2407, 0.0
  %v2914 = vmin.f32 %v2412, 0.0
  %v2915 = vmin.f32 %v2417, 0.0
  %v2916 = vmin.f32 %v2422, 0.0
  %v2917 = vmin.f32 %v2427, 0.0
  %v2918 = vmin.f32 %v2432, 0.0
  %v2919 = vmin.f32 %v2437, 0.0
  %v2920 = vmin.f32 %v2442, 0.0
  %v2921 = vmin.f32 %v2447, 0.0
  %v2922 = vmin.f32 %v2452, 0.0
  %v2923 = vmin.f32 %v2457, 0.0
  %v2924 = vmin.f32 %v2462, 0.0
  %v2925 = vmin.f32 %v2467, 0.0
  %v2926 = vmin.f32 %v2472, 0.0
  %v2927 = vmin.f32 %v2477, 0.0
  %v2928 = vmin.f32 %v2482, 0.0
  %v2929 = vmin.f32 %v2487, 0.0
  %v2930 = vmin.f32 %v2492, 0.0
  %v2931 = vmin.f32 %v2497, 0.0
  %v2932 = vmin.f32 %v2502, 0.0
  %v2933 = vmin.f32 %v2507, 0.0
  %v2934 = vmin.f32 %v2512, 0.0
  %v2935 = vmin.f32 %v2517, 0.0
  %v2936 = vmin.f32 %v2522, 0.0
  %v2937 = vmin.f32 %v2527, 0.0
  %v2938 = vmin.f32 %v2532, 0.0
  %v2939 = vmin.f32 %v2537, 0.0
  %v2940 = vmin.f32 %v2542, 0.0
  %v2941 = vmin.f32 %v2547, 0.0
  %v2942 = vmin.f32 %v2552, 0.0
  %v2943 = vmin.f32 %v2557, 0.0
  %v2944 = vmin.f32 %v2562, 0.0
  %v2945 = vmin.f32 %v2567, 0.0
  %v2946 = vmin.f32 %v2572, 0.0
  %v2947 = vmin.f32 %v2577, 0.0
  %v2948 = vmin.f32 %v2582, 0.0
  %v2949 = vmin.f32 %v2587, 0.0
  %v2950 = vmin.f32 %v2592, 0.0
  %v2951 = vmin.f32 %v2597, 0.0
  %v2952 = vmin.f32 %v2602, 0.0
  %v2953 = vmin.f32 %v2607, 0.0
  %v2954 = vmin.f32 %v2612, 0.0
  %v2955 = vmin.f32 %v2617, 0.0
  %v2956 = vmin.f32 %v2622, 0.0
  %v2957 = vmin.f32 %v2627, 0.0
  %v2958 = vmin.f32 %v2632, 0.0
  %v2959 = vmin.f32 %v2637, 0.0
  %v2960 = vmin.f32 %v2642, 0.0
  %v2961 = vmin.f32 %v2647, 0.0
  %v2962 = vmin.f32 %v2652, 0.0
  %v2963 = vmin.f32 %v2657, 0.0
  %v2964 = vmin.f32 %v2662, 0.0
  %v2965 = vmin.f32 %v2667, 0.0
  %v2966 = vmin.f32 %v2672, 0.0
  %v2967 = vmin.f32 %v2677, 0.0
  %v2968 = vmin.f32 %v2682, 0.0
  %v2969 = vmin.f32 %v2687, 0.0
  %v2970 = vmin.f32 %v2692, 0.0
  %v2971 = vmin.f32 %v2697, 0.0
  %v2972 = vmin.f32 %v2702, 0.0
  %v2973 = vmin.f32 %v2707, 0.0
  %v2974 = vmin.f32 %v2712, 0.0
  %v2975 = vmin.f32 %v2717, 0.0
  %v2976 = vmul.f32 %v2848, 1.442695
  %v2977 = vpow.pop %v2976
  %v2978 = vmul.f32 %v2849, 1.442695
  %v2979 = vpow.pop %v2978
  %v2980 = vmul.f32 %v2850, 1.442695
  %v2981 = vpow.pop %v2980
  %v2982 = vmul.f32 %v2851, 1.442695
  %v2983 = vpow.pop %v2982
  %v2984 = vmul.f32 %v2852, 1.442695
  %v2985 = vpow.pop %v2984
  %v2986 = vmul.f32 %v2853, 1.442695
  %v2987 = vpow.pop %v2986
  %v2988 = vmul.f32 %v2854, 1.442695
  %v2989 = vpow.pop %v2988
  %v2990 = vmul.f32 %v2855, 1.442695
  %v2991 = vpow.pop %v2990
  %v2992 = vmul.f32 %v2856, 1.442695
  %v2993 = vpow.pop %v2992
  %v2994 = vmul.f32 %v2857, 1.442695
  %v2995 = vpow.pop %v2994
  %v2996 = vmul.f32 %v2858, 1.442695
  %v2997 = vpow.pop %v2996
  %v2998 = vmul.f32 %v2859, 1.442695
  %v2999 = vpow.pop %v2998
  %v3000 = vmul.f32 %v2860, 1.442695
  %v3001 = vpow.pop %v3000
  %v3002 = vmul.f32 %v2861, 1.442695
  %v3003 = vpow.pop %v3002
  %v3004 = vmul.f32 %v2862, 1.442695
  %v3005 = vpow.pop %v3004
  %v3006 = vmul.f32 %v2863, 1.442695
  %v3007 = vpow.pop %v3006
  %v3008 = vmul.f32 %v2864, 1.442695
  %v3009 = vpow.pop %v3008
  %v3010 = vmul.f32 %v2865, 1.442695
  %v3011 = vpow.pop %v3010
  %v3012 = vmul.f32 %v2866, 1.442695
  %v3013 = vpow.pop %v3012
  %v3014 = vmul.f32 %v2867, 1.442695
  %v3015 = vpow.pop %v3014
  %v3016 = vmul.f32 %v2868, 1.442695
  %v3017 = vpow.pop %v3016
  %v3018 = vmul.f32 %v2869, 1.442695
  %v3019 = vpow.pop %v3018
  %v3020 = vmul.f32 %v2870, 1.442695
  %v3021 = vpow.pop %v3020
  %v3022 = vmul.f32 %v2871, 1.442695
  %v3023 = vpow.pop %v3022
  %v3024 = vmul.f32 %v2872, 1.442695
  %v3025 = vpow.pop %v3024
  %v3026 = vmul.f32 %v2873, 1.442695
  %v3027 = vpow.pop %v3026
  %v3028 = vmul.f32 %v2874, 1.442695
  %v3029 = vpow.pop %v3028
  %v3030 = vmul.f32 %v2875, 1.442695
  %v3031 = vpow.pop %v3030
  %v3032 = vmul.f32 %v2876, 1.442695
  %v3033 = vpow.pop %v3032
  %v3034 = vmul.f32 %v2877, 1.442695
  %v3035 = vpow.pop %v3034
  %v3036 = vmul.f32 %v2878, 1.442695
  %v3037 = vpow.pop %v3036
  %v3038 = vmul.f32 %v2879, 1.442695
  %v3039 = vpow.pop %v3038
  %v3040 = vmul.f32 %v2880, 1.442695
  %v3041 = vpow.pop %v3040
  %v3042 = vmul.f32 %v2881, 1.442695
  %v3043 = vpow.pop %v3042
  %v3044 = vmul.f32 %v2882, 1.442695
  %v3045 = vpow.pop %v3044
  %v3046 = vmul.f32 %v2883, 1.442695
  %v3047 = vpow.pop %v3046
  %v3048 = vmul.f32 %v2884, 1.442695
  %v3049 = vpow.pop %v3048
  %v3050 = vmul.f32 %v2885, 1.442695
  %v3051 = vpow.pop %v3050
  %v3052 = vmul.f32 %v2886, 1.442695
  %v3053 = vpow.pop %v3052
  %v3054 = vmul.f32 %v2887, 1.442695
  %v3055 = vpow.pop %v3054
  %v3056 = vmul.f32 %v2888, 1.442695
  %v3057 = vpow.pop %v3056
  %v3058 = vmul.f32 %v2889, 1.442695
  %v3059 = vpow.pop %v3058
  %v3060 = vmul.f32 %v2890, 1.442695
  %v3061 = vpow.pop %v3060
  %v3062 = vmul.f32 %v2891, 1.442695
  %v3063 = vpow.pop %v3062
  %v3064 = vmul.f32 %v2892, 1.442695
  %v3065 = vpow.pop %v3064
  %v3066 = vmul.f32 %v2893, 1.442695
  %v3067 = vpow.pop %v3066
  %v3068 = vmul.f32 %v2894, 1.442695
  %v3069 = vpow.pop %v3068
  %v3070 = vmul.f32 %v2895, 1.442695
  %v3071 = vpow.pop %v3070
  %v3072 = vmul.f32 %v2896, 1.442695
  %v3073 = vpow.pop %v3072
  %v3074 = vmul.f32 %v2897, 1.442695
  %v3075 = vpow.pop %v3074
  %v3076 = vmul.f32 %v2898, 1.442695
  %v3077 = vpow.pop %v3076
  %v3078 = vmul.f32 %v2899, 1.442695
  %v3079 = vpow.pop %v3078
  %v3080 = vmul.f32 %v2900, 1.442695
  %v3081 = vpow.pop %v3080
  %v3082 = vmul.f32 %v2901, 1.442695
  %v3083 = vpow.pop %v3082
  %v3084 = vmul.f32 %v2902, 1.442695
  %v3085 = vpow.pop %v3084
  %v3086 = vmul.f32 %v2903, 1.442695
  %v3087 = vpow.pop %v3086
  %v3088 = vmul.f32 %v2904, 1.442695
  %v3089 = vpow.pop %v3088
  %v3090 = vmul.f32 %v2905, 1.442695
  %v3091 = vpow.pop %v3090
  %v3092 = vmul.f32 %v2906, 1.442695
  %v3093 = vpow.pop %v3092
  %v3094 = vmul.f32 %v2907, 1.442695
  %v3095 = vpow.pop %v3094
  %v3096 = vmul.f32 %v2908, 1.442695
  %v3097 = vpow.pop %v3096
  %v3098 = vmul.f32 %v2909, 1.442695
  %v3099 = vpow.pop %v3098
  %v3100 = vmul.f32 %v2910, 1.442695
  %v3101 = vpow.pop %v3100
  %v3102 = vmul.f32 %v2911, 1.442695
  %v3103 = vpow.pop %v3102
  %v3104 = vmul.f32 %v2912, 1.442695
  %v3105 = vpow.pop %v3104
  %v3106 = vmul.f32 %v2913, 1.442695
  %v3107 = vpow.pop %v3106
  %v3108 = vmul.f32 %v2914, 1.442695
  %v3109 = vpow.pop %v3108
  %v3110 = vmul.f32 %v2915, 1.442695
  %v3111 = vpow.pop %v3110
  %v3112 = vmul.f32 %v2916, 1.442695
  %v3113 = vpow.pop %v3112
  %v3114 = vmul.f32 %v2917, 1.442695
  %v3115 = vpow.pop %v3114
  %v3116 = vmul.f32 %v2918, 1.442695
  %v3117 = vpow.pop %v3116
  %v3118 = vmul.f32 %v2919, 1.442695
  %v3119 = vpow.pop %v3118
  %v3120 = vmul.f32 %v2920, 1.442695
  %v3121 = vpow.pop %v3120
  %v3122 = vmul.f32 %v2921, 1.442695
  %v3123 = vpow.pop %v3122
  %v3124 = vmul.f32 %v2922, 1.442695
  %v3125 = vpow.pop %v3124
  %v3126 = vmul.f32 %v2923, 1.442695
  %v3127 = vpow.pop %v3126
  %v3128 = vmul.f32 %v2924, 1.442695
  %v3129 = vpow.pop %v3128
  %v3130 = vmul.f32 %v2925, 1.442695
  %v3131 = vpow.pop %v3130
  %v3132 = vmul.f32 %v2926, 1.442695
  %v3133 = vpow.pop %v3132
  %v3134 = vmul.f32 %v2927, 1.442695
  %v3135 = vpow.pop %v3134
  %v3136 = vmul.f32 %v2928, 1.442695
  %v3137 = vpow.pop %v3136
  %v3138 = vmul.f32 %v2929, 1.442695
  %v3139 = vpow.pop %v3138
  %v3140 = vmul.f32 %v2930, 1.442695
  %v3141 = vpow.pop %v3140
  %v3142 = vmul.f32 %v2931, 1.442695
  %v3143 = vpow.pop %v3142
  %v3144 = vmul.f32 %v2932, 1.442695
  %v3145 = vpow.pop %v3144
  %v3146 = vmul.f32 %v2933, 1.442695
  %v3147 = vpow.pop %v3146
  %v3148 = vmul.f32 %v2934, 1.442695
  %v3149 = vpow.pop %v3148
  %v3150 = vmul.f32 %v2935, 1.442695
  %v3151 = vpow.pop %v3150
  %v3152 = vmul.f32 %v2936, 1.442695
  %v3153 = vpow.pop %v3152
  %v3154 = vmul.f32 %v2937, 1.442695
  %v3155 = vpow.pop %v3154
  %v3156 = vmul.f32 %v2938, 1.442695
  %v3157 = vpow.pop %v3156
  %v3158 = vmul.f32 %v2939, 1.442695
  %v3159 = vpow.pop %v3158
  %v3160 = vmul.f32 %v2940, 1.442695
  %v3161 = vpow.pop %v3160
  %v3162 = vmul.f32 %v2941, 1.442695
  %v3163 = vpow.pop %v3162
  %v3164 = vmul.f32 %v2942, 1.442695
  %v3165 = vpow.pop %v3164
  %v3166 = vmul.f32 %v2943, 1.442695
  %v3167 = vpow.pop %v3166
  %v3168 = vmul.f32 %v2944, 1.442695
  %v3169 = vpow.pop %v3168
  %v3170 = vmul.f32 %v2945, 1.442695
  %v3171 = vpow.pop %v3170
  %v3172 = vmul.f32 %v2946, 1.442695
  %v3173 = vpow.pop %v3172
  %v3174 = vmul.f32 %v2947, 1.442695
  %v3175 = vpow.pop %v3174
  %v3176 = vmul.f32 %v2948, 1.442695
  %v3177 = vpow.pop %v3176
  %v3178 = vmul.f32 %v2949, 1.442695
  %v3179 = vpow.pop %v3178
  %v3180 = vmul.f32 %v2950, 1.442695
  %v3181 = vpow.pop %v3180
  %v3182 = vmul.f32 %v2951, 1.442695
  %v3183 = vpow.pop %v3182
  %v3184 = vmul.f32 %v2952, 1.442695
  %v3185 = vpow.pop %v3184
  %v3186 = vmul.f32 %v2953, 1.442695
  %v3187 = vpow.pop %v3186
  %v3188 = vmul.f32 %v2954, 1.442695
  %v3189 = vpow.pop %v3188
  %v3190 = vmul.f32 %v2955, 1.442695
  %v3191 = vpow.pop %v3190
  %v3192 = vmul.f32 %v2956, 1.442695
  %v3193 = vpow.pop %v3192
  %v3194 = vmul.f32 %v2957, 1.442695
  %v3195 = vpow.pop %v3194
  %v3196 = vmul.f32 %v2958, 1.442695
  %v3197 = vpow.pop %v3196
  %v3198 = vmul.f32 %v2959, 1.442695
  %v3199 = vpow.pop %v3198
  %v3200 = vmul.f32 %v2960, 1.442695
  %v3201 = vpow.pop %v3200
  %v3202 = vmul.f32 %v2961, 1.442695
  %v3203 = vpow.pop %v3202
  %v3204 = vmul.f32 %v2962, 1.442695
  %v3205 = vpow.pop %v3204
  %v3206 = vmul.f32 %v2963, 1.442695
  %v3207 = vpow.pop %v3206
  %v3208 = vmul.f32 %v2964, 1.442695
  %v3209 = vpow.pop %v3208
  %v3210 = vmul.f32 %v2965, 1.442695
  %v3211 = vpow.pop %v3210
  %v3212 = vmul.f32 %v2966, 1.442695
  %v3213 = vpow.pop %v3212
  %v3214 = vmul.f32 %v2967, 1.442695
  %v3215 = vpow.pop %v3214
  %v3216 = vmul.f32 %v2968, 1.442695
  %v3217 = vpow.pop %v3216
  %v3218 = vmul.f32 %v2969, 1.442695
  %v3219 = vpow.pop %v3218
  %v3220 = vmul.f32 %v2970, 1.442695
  %v3221 = vpow.pop %v3220
  %v3222 = vmul.f32 %v2971, 1.442695
  %v3223 = vpow.pop %v3222
  %v3224 = vmul.f32 %v2972, 1.442695
  %v3225 = vpow.pop %v3224
  %v3226 = vmul.f32 %v2973, 1.442695
  %v3227 = vpow.pop %v3226
  %v3228 = vmul.f32 %v2974, 1.442695
  %v3229 = vpow.pop %v3228
  %v3230 = vmul.f32 %v2975, 1.442695
  %v3231 = vpow.pop %v3230
  %v3232 = vsub.f32 %v2977, 1.0
  %v3233 = vsub.f32 %v2979, 1.0
  %v3234 = vsub.f32 %v2981, 1.0
  %v3235 = vsub.f32 %v2983, 1.0
  %v3236 = vsub.f32 %v2985, 1.0
  %v3237 = vsub.f32 %v2987, 1.0
  %v3238 = vsub.f32 %v2989, 1.0
  %v3239 = vsub.f32 %v2991, 1.0
  %v3240 = vsub.f32 %v2993, 1.0
  %v3241 = vsub.f32 %v2995, 1.0
  %v3242 = vsub.f32 %v2997, 1.0
  %v3243 = vsub.f32 %v2999, 1.0
  %v3244 = vsub.f32 %v3001, 1.0
  %v3245 = vsub.f32 %v3003, 1.0
  %v3246 = vsub.f32 %v3005, 1.0
  %v3247 = vsub.f32 %v3007, 1.0
  %v3248 = vsub.f32 %v3009, 1.0
  %v3249 = vsub.f32 %v3011, 1.0
  %v3250 = vsub.f32 %v3013, 1.0
  %v3251 = vsub.f32 %v3015, 1.0
  %v3252 = vsub.f32 %v3017, 1.0
  %v3253 = vsub.f32 %v3019, 1.0
  %v3254 = vsub.f32 %v3021, 1.0
  %v3255 = vsub.f32 %v3023, 1.0
  %v3256 = vsub.f32 %v3025, 1.0
  %v3257 = vsub.f32 %v3027, 1.0
  %v3258 = vsub.f32 %v3029, 1.0
  %v3259 = vsub.f32 %v3031, 1.0
  %v3260 = vsub.f32 %v3033, 1.0
  %v3261 = vsub.f32 %v3035, 1.0
  %v3262 = vsub.f32 %v3037, 1.0
  %v3263 = vsub.f32 %v3039, 1.0
  %v3264 = vsub.f32 %v3041, 1.0
  %v3265 = vsub.f32 %v3043, 1.0
  %v3266 = vsub.f32 %v3045, 1.0
  %v3267 = vsub.f32 %v3047, 1.0
  %v3268 = vsub.f32 %v3049, 1.0
  %v3269 = vsub.f32 %v3051, 1.0
  %v3270 = vsub.f32 %v3053, 1.0
  %v3271 = vsub.f32 %v3055, 1.0
  %v3272 = vsub.f32 %v3057, 1.0
  %v3273 = vsub.f32 %v3059, 1.0
  %v3274 = vsub.f32 %v3061, 1.0
  %v3275 = vsub.f32 %v3063, 1.0
  %v3276 = vsub.f32 %v3065, 1.0
  %v3277 = vsub.f32 %v3067, 1.0
  %v3278 = vsub.f32 %v3069, 1.0
  %v3279 = vsub.f32 %v3071, 1.0
  %v3280 = vsub.f32 %v3073, 1.0
  %v3281 = vsub.f32 %v3075, 1.0
  %v3282 = vsub.f32 %v3077, 1.0
  %v3283 = vsub.f32 %v3079, 1.0
  %v3284 = vsub.f32 %v3081, 1.0
  %v3285 = vsub.f32 %v3083, 1.0
  %v3286 = vsub.f32 %v3085, 1.0
  %v3287 = vsub.f32 %v3087, 1.0
  %v3288 = vsub.f32 %v3089, 1.0
  %v3289 = vsub.f32 %v3091, 1.0
  %v3290 = vsub.f32 %v3093, 1.0
  %v3291 = vsub.f32 %v3095, 1.0
  %v3292 = vsub.f32 %v3097, 1.0
  %v3293 = vsub.f32 %v3099, 1.0
  %v3294 = vsub.f32 %v3101, 1.0
  %v3295 = vsub.f32 %v3103, 1.0
  %v3296 = vsub.f32 %v3105, 1.0
  %v3297 = vsub.f32 %v3107, 1.0
  %v3298 = vsub.f32 %v3109, 1.0
  %v3299 = vsub.f32 %v3111, 1.0
  %v3300 = vsub.f32 %v3113, 1.0
  %v3301 = vsub.f32 %v3115, 1.0
  %v3302 = vsub.f32 %v3117, 1.0
  %v3303 = vsub.f32 %v3119, 1.0
  %v3304 = vsub.f32 %v3121, 1.0
  %v3305 = vsub.f32 %v3123, 1.0
  %v3306 = vsub.f32 %v3125, 1.0
  %v3307 = vsub.f32 %v3127, 1.0
  %v3308 = vsub.f32 %v3129, 1.0
  %v3309 = vsub.f32 %v3131, 1.0
  %v3310 = vsub.f32 %v3133, 1.0
  %v3311 = vsub.f32 %v3135, 1.0
  %v3312 = vsub.f32 %v3137, 1.0
  %v3313 = vsub.f32 %v3139, 1.0
  %v3314 = vsub.f32 %v3141, 1.0
  %v3315 = vsub.f32 %v3143, 1.0
  %v3316 = vsub.f32 %v3145, 1.0
  %v3317 = vsub.f32 %v3147, 1.0
  %v3318 = vsub.f32 %v3149, 1.0
  %v3319 = vsub.f32 %v3151, 1.0
  %v3320 = vsub.f32 %v3153, 1.0
  %v3321 = vsub.f32 %v3155, 1.0
  %v3322 = vsub.f32 %v3157, 1.0
  %v3323 = vsub.f32 %v3159, 1.0
  %v3324 = vsub.f32 %v3161, 1.0
  %v3325 = vsub.f32 %v3163, 1.0
  %v3326 = vsub.f32 %v3165, 1.0
  %v3327 = vsub.f32 %v3167, 1.0
  %v3328 = vsub.f32 %v3169, 1.0
  %v3329 = vsub.f32 %v3171, 1.0
  %v3330 = vsub.f32 %v3173, 1.0
  %v3331 = vsub.f32 %v3175, 1.0
  %v3332 = vsub.f32 %v3177, 1.0
  %v3333 = vsub.f32 %v3179, 1.0
  %v3334 = vsub.f32 %v3181, 1.0
  %v3335 = vsub.f32 %v3183, 1.0
  %v3336 = vsub.f32 %v3185, 1.0
  %v3337 = vsub.f32 %v3187, 1.0
  %v3338 = vsub.f32 %v3189, 1.0
  %v3339 = vsub.f32 %v3191, 1.0
  %v3340 = vsub.f32 %v3193, 1.0
  %v3341 = vsub.f32 %v3195, 1.0
  %v3342 = vsub.f32 %v3197, 1.0
  %v3343 = vsub.f32 %v3199, 1.0
  %v3344 = vsub.f32 %v3201, 1.0
  %v3345 = vsub.f32 %v3203, 1.0
  %v3346 = vsub.f32 %v3205, 1.0
  %v3347 = vsub.f32 %v3207, 1.0
  %v3348 = vsub.f32 %v3209, 1.0
  %v3349 = vsub.f32 %v3211, 1.0
  %v3350 = vsub.f32 %v3213, 1.0
  %v3351 = vsub.f32 %v3215, 1.0
  %v3352 = vsub.f32 %v3217, 1.0
  %v3353 = vsub.f32 %v3219, 1.0
  %v3354 = vsub.f32 %v3221, 1.0
  %v3355 = vsub.f32 %v3223, 1.0
  %v3356 = vsub.f32 %v3225, 1.0
  %v3357 = vsub.f32 %v3227, 1.0
  %v3358 = vsub.f32 %v3229, 1.0
  %v3359 = vsub.f32 %v3231, 1.0
  %v3360 = vsel %vm2720, %v2082, %v3232
  %v3361 = vsel %vm2721, %v2087, %v3233
  %v3362 = vsel %vm2722, %v2092, %v3234
  %v3363 = vsel %vm2723, %v2097, %v3235
  %v3364 = vsel %vm2724, %v2102, %v3236
  %v3365 = vsel %vm2725, %v2107, %v3237
  %v3366 = vsel %vm2726, %v2112, %v3238
  %v3367 = vsel %vm2727, %v2117, %v3239
  %v3368 = vsel %vm2728, %v2122, %v3240
  %v3369 = vsel %vm2729, %v2127, %v3241
  %v3370 = vsel %vm2730, %v2132, %v3242
  %v3371 = vsel %vm2731, %v2137, %v3243
  %v3372 = vsel %vm2732, %v2142, %v3244
  %v3373 = vsel %vm2733, %v2147, %v3245
  %v3374 = vsel %vm2734, %v2152, %v3246
  %v3375 = vsel %vm2735, %v2157, %v3247
  %v3376 = vsel %vm2736, %v2162, %v3248
  %v3377 = vsel %vm2737, %v2167, %v3249
  %v3378 = vsel %vm2738, %v2172, %v3250
  %v3379 = vsel %vm2739, %v2177, %v3251
  %v3380 = vsel %vm2740, %v2182, %v3252
  %v3381 = vsel %vm2741, %v2187, %v3253
  %v3382 = vsel %vm2742, %v2192, %v3254
  %v3383 = vsel %vm2743, %v2197, %v3255
  %v3384 = vsel %vm2744, %v2202, %v3256
  %v3385 = vsel %vm2745, %v2207, %v3257
  %v3386 = vsel %vm2746, %v2212, %v3258
  %v3387 = vsel %vm2747, %v2217, %v3259
  %v3388 = vsel %vm2748, %v2222, %v3260
  %v3389 = vsel %vm2749, %v2227, %v3261
  %v3390 = vsel %vm2750, %v2232, %v3262
  %v3391 = vsel %vm2751, %v2237, %v3263
  %v3392 = vsel %vm2752, %v2242, %v3264
  %v3393 = vsel %vm2753, %v2247, %v3265
  %v3394 = vsel %vm2754, %v2252, %v3266
  %v3395 = vsel %vm2755, %v2257, %v3267
  %v3396 = vsel %vm2756, %v2262, %v3268
  %v3397 = vsel %vm2757, %v2267, %v3269
  %v3398 = vsel %vm2758, %v2272, %v3270
  %v3399 = vsel %vm2759, %v2277, %v3271
  %v3400 = vsel %vm2760, %v2282, %v3272
  %v3401 = vsel %vm2761, %v2287, %v3273
  %v3402 = vsel %vm2762, %v2292, %v3274
  %v3403 = vsel %vm2763, %v2297, %v3275
  %v3404 = vsel %vm2764, %v2302, %v3276
  %v3405 = vsel %vm2765, %v2307, %v3277
  %v3406 = vsel %vm2766, %v2312, %v3278
  %v3407 = vsel %vm2767, %v2317, %v3279
  %v3408 = vsel %vm2768, %v2322, %v3280
  %v3409 = vsel %vm2769, %v2327, %v3281
  %v3410 = vsel %vm2770, %v2332, %v3282
  %v3411 = vsel %vm2771, %v2337, %v3283
  %v3412 = vsel %vm2772, %v2342, %v3284
  %v3413 = vsel %vm2773, %v2347, %v3285
  %v3414 = vsel %vm2774, %v2352, %v3286
  %v3415 = vsel %vm2775, %v2357, %v3287
  %v3416 = vsel %vm2776, %v2362, %v3288
  %v3417 = vsel %vm2777, %v2367, %v3289
  %v3418 = vsel %vm2778, %v2372, %v3290
  %v3419 = vsel %vm2779, %v2377, %v3291
  %v3420 = vsel %vm2780, %v2382, %v3292
  %v3421 = vsel %vm2781, %v2387, %v3293
  %v3422 = vsel %vm2782, %v2392, %v3294
  %v3423 = vsel %vm2783, %v2397, %v3295
  %v3424 = vsel %vm2784, %v2402, %v3296
  %v3425 = vsel %vm2785, %v2407, %v3297
  %v3426 = vsel %vm2786, %v2412, %v3298
  %v3427 = vsel %vm2787, %v2417, %v3299
  %v3428 = vsel %vm2788, %v2422, %v3300
  %v3429 = vsel %vm2789, %v2427, %v3301
  %v3430 = vsel %vm2790, %v2432, %v3302
  %v3431 = vsel %vm2791, %v2437, %v3303
  %v3432 = vsel %vm2792, %v2442, %v3304
  %v3433 = vsel %vm2793, %v2447, %v3305
  %v3434 = vsel %vm2794, %v2452, %v3306
  %v3435 = vsel %vm2795, %v2457, %v3307
  %v3436 = vsel %vm2796, %v2462, %v3308
  %v3437 = vsel %vm2797, %v2467, %v3309
  %v3438 = vsel %vm2798, %v2472, %v3310
  %v3439 = vsel %vm2799, %v2477, %v3311
  %v3440 = vsel %vm2800, %v2482, %v3312
  %v3441 = vsel %vm2801, %v2487, %v3313
  %v3442 = vsel %vm2802, %v2492, %v3314
  %v3443 = vsel %vm2803, %v2497, %v3315
  %v3444 = vsel %vm2804, %v2502, %v3316
  %v3445 = vsel %vm2805, %v2507, %v3317
  %v3446 = vsel %vm2806, %v2512, %v3318
  %v3447 = vsel %vm2807, %v2517, %v3319
  %v3448 = vsel %vm2808, %v2522, %v3320
  %v3449 = vsel %vm2809, %v2527, %v3321
  %v3450 = vsel %vm2810, %v2532, %v3322
  %v3451 = vsel %vm2811, %v2537, %v3323
  %v3452 = vsel %vm2812, %v2542, %v3324
  %v3453 = vsel %vm2813, %v2547, %v3325
  %v3454 = vsel %vm2814, %v2552, %v3326
  %v3455 = vsel %vm2815, %v2557, %v3327
  %v3456 = vsel %vm2816, %v2562, %v3328
  %v3457 = vsel %vm2817, %v2567, %v3329
  %v3458 = vsel %vm2818, %v2572, %v3330
  %v3459 = vsel %vm2819, %v2577, %v3331
  %v3460 = vsel %vm2820, %v2582, %v3332
  %v3461 = vsel %vm2821, %v2587, %v3333
  %v3462 = vsel %vm2822, %v2592, %v3334
  %v3463 = vsel %vm2823, %v2597, %v3335
  %v3464 = vsel %vm2824, %v2602, %v3336
  %v3465 = vsel %vm2825, %v2607, %v3337
  %v3466 = vsel %vm2826, %v2612, %v3338
  %v3467 = vsel %vm2827, %v2617, %v3339
  %v3468 = vsel %vm2828, %v2622, %v3340
  %v3469 = vsel %vm2829, %v2627, %v3341
  %v3470 = vsel %vm2830, %v2632, %v3342
  %v3471 = vsel %vm2831, %v2637, %v3343
  %v3472 = vsel %vm2832, %v2642, %v3344
  %v3473 = vsel %vm2833, %v2647, %v3345
  %v3474 = vsel %vm2834, %v2652, %v3346
  %v3475 = vsel %vm2835, %v2657, %v3347
  %v3476 = vsel %vm2836, %v2662, %v3348
  %v3477 = vsel %vm2837, %v2667, %v3349
  %v3478 = vsel %vm2838, %v2672, %v3350
  %v3479 = vsel %vm2839, %v2677, %v3351
  %v3480 = vsel %vm2840, %v2682, %v3352
  %v3481 = vsel %vm2841, %v2687, %v3353
  %v3482 = vsel %vm2842, %v2692, %v3354
  %v3483 = vsel %vm2843, %v2697, %v3355
  %v3484 = vsel %vm2844, %v2702, %v3356
  %v3485 = vsel %vm2845, %v2707, %v3357
  %v3486 = vsel %vm2846, %v2712, %v3358
  %v3487 = vsel %vm2847, %v2717, %v3359
  %v3492 = vcombine.high %v35, %v35
  %v3494 = vunpack.c.l.s4 1966171168
  %v3495 = vunpack.c.0.s8 %v3494
  %v3496 = vlaneseq
  %v3497 = vshrl.u32 %v3496, 7
  %v3498 = vsub.s32 %v3495, %v3497
  %v3499 = vrot.slane %v35, %v3498
  %v3501 = vunpack.c.l.s4 1966171168
  %v3502 = vunpack.c.0.s8 %v3501
  %v3503 = vlaneseq
  %v3504 = vshrl.u32 %v3503, 7
  %v3505 = vsub.s32 %v3502, %v3504
  %v3506 = vrot.slane %v3492, %v3505
  %v3507 = vcombine.high %v3499, %v3499
  %v3508 = vcombine.high %v3506, %v3506
  %v3510 = vunpack.c.l.s4 1966171168
  %v3511 = vunpack.c.0.s8 %v3510
  %v3512 = vlaneseq
  %v3513 = vshrl.u32 %v3512, 7
  %v3514 = vsub.s32 %v3511, %v3513
  %v3515 = vrot.slane %v3499, %v3514
  %v3517 = vunpack.c.l.s4 1966171168
  %v3518 = vunpack.c.0.s8 %v3517
  %v3519 = vlaneseq
  %v3520 = vshrl.u32 %v3519, 7
  %v3521 = vsub.s32 %v3518, %v3520
  %v3522 = vrot.slane %v3506, %v3521
  %v3524 = vunpack.c.l.s4 1966171168
  %v3525 = vunpack.c.0.s8 %v3524
  %v3526 = vlaneseq
  %v3527 = vshrl.u32 %v3526, 7
  %v3528 = vsub.s32 %v3525, %v3527
  %v3529 = vrot.slane %v3507, %v3528
  %v3531 = vunpack.c.l.s4 1966171168
  %v3532 = vunpack.c.0.s8 %v3531
  %v3533 = vlaneseq
  %v3534 = vshrl.u32 %v3533, 7
  %v3535 = vsub.s32 %v3532, %v3534
  %v3536 = vrot.slane %v3508, %v3535
  %v3537 = vcombine.high %v3515, %v3515
  %v3538 = vcombine.high %v3522, %v3522
  %v3539 = vcombine.high %v3529, %v3529
  %v3540 = vcombine.high %v3536, %v3536
  %v3541 = vcombine.high %v36, %v36
  %v3543 = vunpack.c.l.s4 1966171168
  %v3544 = vunpack.c.0.s8 %v3543
  %v3545 = vlaneseq
  %v3546 = vshrl.u32 %v3545, 7
  %v3547 = vsub.s32 %v3544, %v3546
  %v3548 = vrot.slane %v36, %v3547
  %v3550 = vunpack.c.l.s4 1966171168
  %v3551 = vunpack.c.0.s8 %v3550
  %v3552 = vlaneseq
  %v3553 = vshrl.u32 %v3552, 7
  %v3554 = vsub.s32 %v3551, %v3553
  %v3555 = vrot.slane %v3541, %v3554
  %v3556 = vcombine.high %v3548, %v3548
  %v3557 = vcombine.high %v3555, %v3555
  %v3559 = vunpack.c.l.s4 1966171168
  %v3560 = vunpack.c.0.s8 %v3559
  %v3561 = vlaneseq
  %v3562 = vshrl.u32 %v3561, 7
  %v3563 = vsub.s32 %v3560, %v3562
  %v3564 = vrot.slane %v3548, %v3563
  %v3566 = vunpack.c.l.s4 1966171168
  %v3567 = vunpack.c.0.s8 %v3566
  %v3568 = vlaneseq
  %v3569 = vshrl.u32 %v3568, 7
  %v3570 = vsub.s32 %v3567, %v3569
  %v3571 = vrot.slane %v3555, %v3570
  %v3573 = vunpack.c.l.s4 1966171168
  %v3574 = vunpack.c.0.s8 %v3573
  %v3575 = vlaneseq
  %v3576 = vshrl.u32 %v3575, 7
  %v3577 = vsub.s32 %v3574, %v3576
  %v3578 = vrot.slane %v3556, %v3577
  %v3580 = vunpack.c.l.s4 1966171168
  %v3581 = vunpack.c.0.s8 %v3580
  %v3582 = vlaneseq
  %v3583 = vshrl.u32 %v3582, 7
  %v3584 = vsub.s32 %v3581, %v3583
  %v3585 = vrot.slane %v3557, %v3584
  %v3586 = vcombine.high %v3564, %v3564
  %v3587 = vcombine.high %v3571, %v3571
  %v3588 = vcombine.high %v3578, %v3578
  %v3589 = vcombine.high %v3585, %v3585
  %v3590 = vcombine.high %v37, %v37
  %v3592 = vunpack.c.l.s4 1966171168
  %v3593 = vunpack.c.0.s8 %v3592
  %v3594 = vlaneseq
  %v3595 = vshrl.u32 %v3594, 7
  %v3596 = vsub.s32 %v3593, %v3595
  %v3597 = vrot.slane %v37, %v3596
  %v3599 = vunpack.c.l.s4 1966171168
  %v3600 = vunpack.c.0.s8 %v3599
  %v3601 = vlaneseq
  %v3602 = vshrl.u32 %v3601, 7
  %v3603 = vsub.s32 %v3600, %v3602
  %v3604 = vrot.slane %v3590, %v3603
  %v3605 = vcombine.high %v3597, %v3597
  %v3606 = vcombine.high %v3604, %v3604
  %v3608 = vunpack.c.l.s4 1966171168
  %v3609 = vunpack.c.0.s8 %v3608
  %v3610 = vlaneseq
  %v3611 = vshrl.u32 %v3610, 7
  %v3612 = vsub.s32 %v3609, %v3611
  %v3613 = vrot.slane %v3597, %v3612
  %v3615 = vunpack.c.l.s4 1966171168
  %v3616 = vunpack.c.0.s8 %v3615
  %v3617 = vlaneseq
  %v3618 = vshrl.u32 %v3617, 7
  %v3619 = vsub.s32 %v3616, %v3618
  %v3620 = vrot.slane %v3604, %v3619
  %v3622 = vunpack.c.l.s4 1966171168
  %v3623 = vunpack.c.0.s8 %v3622
  %v3624 = vlaneseq
  %v3625 = vshrl.u32 %v3624, 7
  %v3626 = vsub.s32 %v3623, %v3625
  %v3627 = vrot.slane %v3605, %v3626
  %v3629 = vunpack.c.l.s4 1966171168
  %v3630 = vunpack.c.0.s8 %v3629
  %v3631 = vlaneseq
  %v3632 = vshrl.u32 %v3631, 7
  %v3633 = vsub.s32 %v3630, %v3632
  %v3634 = vrot.slane %v3606, %v3633
  %v3635 = vcombine.high %v3613, %v3613
  %v3636 = vcombine.high %v3620, %v3620
  %v3637 = vcombine.high %v3627, %v3627
  %v3638 = vcombine.high %v3634, %v3634
  %v3639 = vcombine.high %v38, %v38
  %v3641 = vunpack.c.l.s4 1966171168
  %v3642 = vunpack.c.0.s8 %v3641
  %v3643 = vlaneseq
  %v3644 = vshrl.u32 %v3643, 7
  %v3645 = vsub.s32 %v3642, %v3644
  %v3646 = vrot.slane %v38, %v3645
  %v3648 = vunpack.c.l.s4 1966171168
  %v3649 = vunpack.c.0.s8 %v3648
  %v3650 = vlaneseq
  %v3651 = vshrl.u32 %v3650, 7
  %v3652 = vsub.s32 %v3649, %v3651
  %v3653 = vrot.slane %v3639, %v3652
  %v3654 = vcombine.high %v3646, %v3646
  %v3655 = vcombine.high %v3653, %v3653
  %v3657 = vunpack.c.l.s4 1966171168
  %v3658 = vunpack.c.0.s8 %v3657
  %v3659 = vlaneseq
  %v3660 = vshrl.u32 %v3659, 7
  %v3661 = vsub.s32 %v3658, %v3660
  %v3662 = vrot.slane %v3646, %v3661
  %v3664 = vunpack.c.l.s4 1966171168
  %v3665 = vunpack.c.0.s8 %v3664
  %v3666 = vlaneseq
  %v3667 = vshrl.u32 %v3666, 7
  %v3668 = vsub.s32 %v3665, %v3667
  %v3669 = vrot.slane %v3653, %v3668
  %v3671 = vunpack.c.l.s4 1966171168
  %v3672 = vunpack.c.0.s8 %v3671
  %v3673 = vlaneseq
  %v3674 = vshrl.u32 %v3673, 7
  %v3675 = vsub.s32 %v3672, %v3674
  %v3676 = vrot.slane %v3654, %v3675
  %v3678 = vunpack.c.l.s4 1966171168
  %v3679 = vunpack.c.0.s8 %v3678
  %v3680 = vlaneseq
  %v3681 = vshrl.u32 %v3680, 7
  %v3682 = vsub.s32 %v3679, %v3681
  %v3683 = vrot.slane %v3655, %v3682
  %v3684 = vcombine.high %v3662, %v3662
  %v3685 = vcombine.high %v3669, %v3669
  %v3686 = vcombine.high %v3676, %v3676
  %v3687 = vcombine.high %v3683, %v3683
  %vm3688 = vcmask 261120
  %v3689 = vsel %vm3688, %v3515, 0
  %3691 = vmatprep.subr.mxu0 0.0
  %3692 = vmatpush1.msra.mxu0 %v3360
  %3693 = vmatprep.subr.mxu0 0.0
  %3694 = vmatpush1.msra.mxu0 %v3361
  %3695 = vmatprep.subr.mxu0 0.0
  %3696 = vmatpush1.msra.mxu0 %v3362
  %3697 = vmatprep.subr.mxu0 0.0
  %3698 = vmatpush1.msra.mxu0 %v3363
  %3699 = vmatprep.subr.mxu0 0.0
  %3700 = vmatpush1.msra.mxu0 0.0
  %3701 = vmatprep.subr.mxu0 0.0
  %3702 = vmatpush1.msra.mxu0 0.0
  %3703 = vmatprep.subr.mxu0 0.0
  %3704 = vmatpush1.msra.mxu0 0.0
  %3705 = vmatprep.subr.mxu0 0.0
  %3706 = vmatpush1.msra.mxu0 0.0
  %3707 = vmatprep.subr.mxu0 0.0
  %3708 = vmatpush1.msra.mxu0 0.0
  %3709 = vmatprep.subr.mxu0 0.0
  %3710 = vmatpush1.msra.mxu0 0.0
  %3711 = vmatprep.subr.mxu0 0.0
  %3712 = vmatpush1.msra.mxu0 0.0
  %3713 = vmatprep.subr.mxu0 0.0
  %3714 = vmatpush1.msra.mxu0 0.0
  %3715 = vmatprep.subr.mxu0 0.0
  %3716 = vmatpush1.msra.mxu0 0.0
  %3717 = vmatprep.subr.mxu0 0.0
  %3718 = vmatpush1.msra.mxu0 0.0
  %3719 = vmatprep.subr.mxu0 0.0
  %3720 = vmatpush1.msra.mxu0 0.0
  %3721 = vmatprep.subr.mxu0 0.0
  %3722 = vmatpush1.msra.mxu0 0.0
  %3723 = vmatprep.subr.mxu0 0.0
  %3724 = vmatpush1.msra.mxu0 0.0
  %3725 = vmatprep.subr.mxu0 0.0
  %3726 = vmatpush1.msra.mxu0 0.0
  %3727 = vmatprep.subr.mxu0 0.0
  %3728 = vmatpush1.msra.mxu0 0.0
  %3729 = vmatprep.subr.mxu0 0.0
  %3730 = vmatpush1.msra.mxu0 0.0
  %3731 = vmatprep.subr.mxu0 0.0
  %3732 = vmatpush1.msra.mxu0 0.0
  %3733 = vmatprep.subr.mxu0 0.0
  %3734 = vmatpush1.msra.mxu0 0.0
  %3735 = vmatprep.subr.mxu0 0.0
  %3736 = vmatpush1.msra.mxu0 0.0
  %3737 = vmatprep.subr.mxu0 0.0
  %3738 = vmatpush1.msra.mxu0 0.0
  %3739 = vmatprep.subr.mxu0 0.0
  %3740 = vmatpush1.msra.mxu0 0.0
  %3741 = vmatprep.subr.mxu0 0.0
  %3742 = vmatpush1.msra.mxu0 0.0
  %3743 = vmatprep.subr.mxu0 0.0
  %3744 = vmatpush1.msra.mxu0 0.0
  %3745 = vmatprep.subr.mxu0 0.0
  %3746 = vmatpush1.msra.mxu0 0.0
  %3747 = vmatprep.subr.mxu0 0.0
  %3748 = vmatpush1.msra.mxu0 0.0
  %3749 = vmatprep.subr.mxu0 0.0
  %3750 = vmatpush1.msra.mxu0 0.0
  %3751 = vmatprep.subr.mxu0 0.0
  %3752 = vmatpush1.msra.mxu0 0.0
  %3753 = vmatprep.subr.mxu0 0.0
  %3754 = vmatpush1.msra.mxu0 0.0
  %3755 = vmatprep.mubr.f32.mxu0 0.0
  %3756 = vmatmul.mubr.f32.gmra.mrb[0].mxu0 %v3689
  %v3757 = vpop.f32.mrb[0].mxu0
  %v3758 = vadd.f32 0.0, %v3757
  %v3759 = vpop.f32.mrb[0].mxu0
  %3760 = vdwg.mxu0
  %v3761 = vsel %vm3688, %v3529, 0
  %3763 = vmatprep.subr.mxu0 0.0
  %3764 = vmatpush1.msra.mxu0 %v3364
  %3765 = vmatprep.subr.mxu0 0.0
  %3766 = vmatpush1.msra.mxu0 %v3365
  %3767 = vmatprep.subr.mxu0 0.0
  %3768 = vmatpush1.msra.mxu0 %v3366
  %3769 = vmatprep.subr.mxu0 0.0
  %3770 = vmatpush1.msra.mxu0 %v3367
  %3771 = vmatprep.subr.mxu0 0.0
  %3772 = vmatpush1.msra.mxu0 0.0
  %3773 = vmatprep.subr.mxu0 0.0
  %3774 = vmatpush1.msra.mxu0 0.0
  %3775 = vmatprep.subr.mxu0 0.0
  %3776 = vmatpush1.msra.mxu0 0.0
  %3777 = vmatprep.subr.mxu0 0.0
  %3778 = vmatpush1.msra.mxu0 0.0
  %3779 = vmatprep.subr.mxu0 0.0
  %3780 = vmatpush1.msra.mxu0 0.0
  %3781 = vmatprep.subr.mxu0 0.0
  %3782 = vmatpush1.msra.mxu0 0.0
  %3783 = vmatprep.subr.mxu0 0.0
  %3784 = vmatpush1.msra.mxu0 0.0
  %3785 = vmatprep.subr.mxu0 0.0
  %3786 = vmatpush1.msra.mxu0 0.0
  %3787 = vmatprep.subr.mxu0 0.0
  %3788 = vmatpush1.msra.mxu0 0.0
  %3789 = vmatprep.subr.mxu0 0.0
  %3790 = vmatpush1.msra.mxu0 0.0
  %3791 = vmatprep.subr.mxu0 0.0
  %3792 = vmatpush1.msra.mxu0 0.0
  %3793 = vmatprep.subr.mxu0 0.0
  %3794 = vmatpush1.msra.mxu0 0.0
  %3795 = vmatprep.subr.mxu0 0.0
  %3796 = vmatpush1.msra.mxu0 0.0
  %3797 = vmatprep.subr.mxu0 0.0
  %3798 = vmatpush1.msra.mxu0 0.0
  %3799 = vmatprep.subr.mxu0 0.0
  %3800 = vmatpush1.msra.mxu0 0.0
  %3801 = vmatprep.subr.mxu0 0.0
  %3802 = vmatpush1.msra.mxu0 0.0
  %3803 = vmatprep.subr.mxu0 0.0
  %3804 = vmatpush1.msra.mxu0 0.0
  %3805 = vmatprep.subr.mxu0 0.0
  %3806 = vmatpush1.msra.mxu0 0.0
  %3807 = vmatprep.subr.mxu0 0.0
  %3808 = vmatpush1.msra.mxu0 0.0
  %3809 = vmatprep.subr.mxu0 0.0
  %3810 = vmatpush1.msra.mxu0 0.0
  %3811 = vmatprep.subr.mxu0 0.0
  %3812 = vmatpush1.msra.mxu0 0.0
  %3813 = vmatprep.subr.mxu0 0.0
  %3814 = vmatpush1.msra.mxu0 0.0
  %3815 = vmatprep.subr.mxu0 0.0
  %3816 = vmatpush1.msra.mxu0 0.0
  %3817 = vmatprep.subr.mxu0 0.0
  %3818 = vmatpush1.msra.mxu0 0.0
  %3819 = vmatprep.subr.mxu0 0.0
  %3820 = vmatpush1.msra.mxu0 0.0
  %3821 = vmatprep.subr.mxu0 0.0
  %3822 = vmatpush1.msra.mxu0 0.0
  %3823 = vmatprep.subr.mxu0 0.0
  %3824 = vmatpush1.msra.mxu0 0.0
  %3825 = vmatprep.subr.mxu0 0.0
  %3826 = vmatpush1.msra.mxu0 0.0
  %3827 = vmatprep.mubr.f32.mxu0 0.0
  %3828 = vmatmul.mubr.f32.gmra.mrb[0].mxu0 %v3761
  %v3829 = vpop.f32.mrb[0].mxu0
  %v3830 = vadd.f32 0.0, %v3829
  %v3831 = vpop.f32.mrb[0].mxu0
  %3832 = vdwg.mxu0
  %v3833 = vsel %vm3688, %v3537, 0
  %3835 = vmatprep.subr.mxu0 0.0
  %3836 = vmatpush1.msra.mxu0 %v3368
  %3837 = vmatprep.subr.mxu0 0.0
  %3838 = vmatpush1.msra.mxu0 %v3369
  %3839 = vmatprep.subr.mxu0 0.0
  %3840 = vmatpush1.msra.mxu0 %v3370
  %3841 = vmatprep.subr.mxu0 0.0
  %3842 = vmatpush1.msra.mxu0 %v3371
  %3843 = vmatprep.subr.mxu0 0.0
  %3844 = vmatpush1.msra.mxu0 0.0
  %3845 = vmatprep.subr.mxu0 0.0
  %3846 = vmatpush1.msra.mxu0 0.0
  %3847 = vmatprep.subr.mxu0 0.0
  %3848 = vmatpush1.msra.mxu0 0.0
  %3849 = vmatprep.subr.mxu0 0.0
  %3850 = vmatpush1.msra.mxu0 0.0
  %3851 = vmatprep.subr.mxu0 0.0
  %3852 = vmatpush1.msra.mxu0 0.0
  %3853 = vmatprep.subr.mxu0 0.0
  %3854 = vmatpush1.msra.mxu0 0.0
  %3855 = vmatprep.subr.mxu0 0.0
  %3856 = vmatpush1.msra.mxu0 0.0
  %3857 = vmatprep.subr.mxu0 0.0
  %3858 = vmatpush1.msra.mxu0 0.0
  %3859 = vmatprep.subr.mxu0 0.0
  %3860 = vmatpush1.msra.mxu0 0.0
  %3861 = vmatprep.subr.mxu0 0.0
  %3862 = vmatpush1.msra.mxu0 0.0
  %3863 = vmatprep.subr.mxu0 0.0
  %3864 = vmatpush1.msra.mxu0 0.0
  %3865 = vmatprep.subr.mxu0 0.0
  %3866 = vmatpush1.msra.mxu0 0.0
  %3867 = vmatprep.subr.mxu0 0.0
  %3868 = vmatpush1.msra.mxu0 0.0
  %3869 = vmatprep.subr.mxu0 0.0
  %3870 = vmatpush1.msra.mxu0 0.0
  %3871 = vmatprep.subr.mxu0 0.0
  %3872 = vmatpush1.msra.mxu0 0.0
  %3873 = vmatprep.subr.mxu0 0.0
  %3874 = vmatpush1.msra.mxu0 0.0
  %3875 = vmatprep.subr.mxu0 0.0
  %3876 = vmatpush1.msra.mxu0 0.0
  %3877 = vmatprep.subr.mxu0 0.0
  %3878 = vmatpush1.msra.mxu0 0.0
  %3879 = vmatprep.subr.mxu0 0.0
  %3880 = vmatpush1.msra.mxu0 0.0
  %3881 = vmatprep.subr.mxu0 0.0
  %3882 = vmatpush1.msra.mxu0 0.0
  %3883 = vmatprep.subr.mxu0 0.0
  %3884 = vmatpush1.msra.mxu0 0.0
  %3885 = vmatprep.subr.mxu0 0.0
  %3886 = vmatpush1.msra.mxu0 0.0
  %3887 = vmatprep.subr.mxu0 0.0
  %3888 = vmatpush1.msra.mxu0 0.0
  %3889 = vmatprep.subr.mxu0 0.0
  %3890 = vmatpush1.msra.mxu0 0.0
  %3891 = vmatprep.subr.mxu0 0.0
  %3892 = vmatpush1.msra.mxu0 0.0
  %3893 = vmatprep.subr.mxu0 0.0
  %3894 = vmatpush1.msra.mxu0 0.0
  %3895 = vmatprep.subr.mxu0 0.0
  %3896 = vmatpush1.msra.mxu0 0.0
  %3897 = vmatprep.subr.mxu0 0.0
  %3898 = vmatpush1.msra.mxu0 0.0
  %3899 = vmatprep.mubr.f32.mxu0 0.0
  %3900 = vmatmul.mubr.f32.gmra.mrb[0].mxu0 %v3833
  %v3901 = vpop.f32.mrb[0].mxu0
  %v3902 = vadd.f32 0.0, %v3901
  %v3903 = vpop.f32.mrb[0].mxu0
  %3904 = vdwg.mxu0
  %v3905 = vsel %vm3688, %v3539, 0
  %3907 = vmatprep.subr.mxu0 0.0
  %3908 = vmatpush1.msra.mxu0 %v3372
  %3909 = vmatprep.subr.mxu0 0.0
  %3910 = vmatpush1.msra.mxu0 %v3373
  %3911 = vmatprep.subr.mxu0 0.0
  %3912 = vmatpush1.msra.mxu0 %v3374
  %3913 = vmatprep.subr.mxu0 0.0
  %3914 = vmatpush1.msra.mxu0 %v3375
  %3915 = vmatprep.subr.mxu0 0.0
  %3916 = vmatpush1.msra.mxu0 0.0
  %3917 = vmatprep.subr.mxu0 0.0
  %3918 = vmatpush1.msra.mxu0 0.0
  %3919 = vmatprep.subr.mxu0 0.0
  %3920 = vmatpush1.msra.mxu0 0.0
  %3921 = vmatprep.subr.mxu0 0.0
  %3922 = vmatpush1.msra.mxu0 0.0
  %3923 = vmatprep.subr.mxu0 0.0
  %3924 = vmatpush1.msra.mxu0 0.0
  %3925 = vmatprep.subr.mxu0 0.0
  %3926 = vmatpush1.msra.mxu0 0.0
  %3927 = vmatprep.subr.mxu0 0.0
  %3928 = vmatpush1.msra.mxu0 0.0
  %3929 = vmatprep.subr.mxu0 0.0
  %3930 = vmatpush1.msra.mxu0 0.0
  %3931 = vmatprep.subr.mxu0 0.0
  %3932 = vmatpush1.msra.mxu0 0.0
  %3933 = vmatprep.subr.mxu0 0.0
  %3934 = vmatpush1.msra.mxu0 0.0
  %3935 = vmatprep.subr.mxu0 0.0
  %3936 = vmatpush1.msra.mxu0 0.0
  %3937 = vmatprep.subr.mxu0 0.0
  %3938 = vmatpush1.msra.mxu0 0.0
  %3939 = vmatprep.subr.mxu0 0.0
  %3940 = vmatpush1.msra.mxu0 0.0
  %3941 = vmatprep.subr.mxu0 0.0
  %3942 = vmatpush1.msra.mxu0 0.0
  %3943 = vmatprep.subr.mxu0 0.0
  %3944 = vmatpush1.msra.mxu0 0.0
  %3945 = vmatprep.subr.mxu0 0.0
  %3946 = vmatpush1.msra.mxu0 0.0
  %3947 = vmatprep.subr.mxu0 0.0
  %3948 = vmatpush1.msra.mxu0 0.0
  %3949 = vmatprep.subr.mxu0 0.0
  %3950 = vmatpush1.msra.mxu0 0.0
  %3951 = vmatprep.subr.mxu0 0.0
  %3952 = vmatpush1.msra.mxu0 0.0
  %3953 = vmatprep.subr.mxu0 0.0
  %3954 = vmatpush1.msra.mxu0 0.0
  %3955 = vmatprep.subr.mxu0 0.0
  %3956 = vmatpush1.msra.mxu0 0.0
  %3957 = vmatprep.subr.mxu0 0.0
  %3958 = vmatpush1.msra.mxu0 0.0
  %3959 = vmatprep.subr.mxu0 0.0
  %3960 = vmatpush1.msra.mxu0 0.0
  %3961 = vmatprep.subr.mxu0 0.0
  %3962 = vmatpush1.msra.mxu0 0.0
  %3963 = vmatprep.subr.mxu0 0.0
  %3964 = vmatpush1.msra.mxu0 0.0
  %3965 = vmatprep.subr.mxu0 0.0
  %3966 = vmatpush1.msra.mxu0 0.0
  %3967 = vmatprep.subr.mxu0 0.0
  %3968 = vmatpush1.msra.mxu0 0.0
  %3969 = vmatprep.subr.mxu0 0.0
  %3970 = vmatpush1.msra.mxu0 0.0
  %3971 = vmatprep.mubr.f32.mxu0 0.0
  %3972 = vmatmul.mubr.f32.gmra.mrb[0].mxu0 %v3905
  %v3973 = vpop.f32.mrb[0].mxu0
  %v3974 = vadd.f32 0.0, %v3973
  %v3975 = vpop.f32.mrb[0].mxu0
  %3976 = vdwg.mxu0
  %v3977 = vsel %vm3688, %v3522, 0
  %3979 = vmatprep.subr.mxu0 0.0
  %3980 = vmatpush1.msra.mxu0 %v3376
  %3981 = vmatprep.subr.mxu0 0.0
  %3982 = vmatpush1.msra.mxu0 %v3377
  %3983 = vmatprep.subr.mxu0 0.0
  %3984 = vmatpush1.msra.mxu0 %v3378
  %3985 = vmatprep.subr.mxu0 0.0
  %3986 = vmatpush1.msra.mxu0 %v3379
  %3987 = vmatprep.subr.mxu0 0.0
  %3988 = vmatpush1.msra.mxu0 0.0
  %3989 = vmatprep.subr.mxu0 0.0
  %3990 = vmatpush1.msra.mxu0 0.0
  %3991 = vmatprep.subr.mxu0 0.0
  %3992 = vmatpush1.msra.mxu0 0.0
  %3993 = vmatprep.subr.mxu0 0.0
  %3994 = vmatpush1.msra.mxu0 0.0
  %3995 = vmatprep.subr.mxu0 0.0
  %3996 = vmatpush1.msra.mxu0 0.0
  %3997 = vmatprep.subr.mxu0 0.0
  %3998 = vmatpush1.msra.mxu0 0.0
  %3999 = vmatprep.subr.mxu0 0.0
  %4000 = vmatpush1.msra.mxu0 0.0
  %4001 = vmatprep.subr.mxu0 0.0
  %4002 = vmatpush1.msra.mxu0 0.0
  %4003 = vmatprep.subr.mxu0 0.0
  %4004 = vmatpush1.msra.mxu0 0.0
  %4005 = vmatprep.subr.mxu0 0.0
  %4006 = vmatpush1.msra.mxu0 0.0
  %4007 = vmatprep.subr.mxu0 0.0
  %4008 = vmatpush1.msra.mxu0 0.0
  %4009 = vmatprep.subr.mxu0 0.0
  %4010 = vmatpush1.msra.mxu0 0.0
  %4011 = vmatprep.subr.mxu0 0.0
  %4012 = vmatpush1.msra.mxu0 0.0
  %4013 = vmatprep.subr.mxu0 0.0
  %4014 = vmatpush1.msra.mxu0 0.0
  %4015 = vmatprep.subr.mxu0 0.0
  %4016 = vmatpush1.msra.mxu0 0.0
  %4017 = vmatprep.subr.mxu0 0.0
  %4018 = vmatpush1.msra.mxu0 0.0
  %4019 = vmatprep.subr.mxu0 0.0
  %4020 = vmatpush1.msra.mxu0 0.0
  %4021 = vmatprep.subr.mxu0 0.0
  %4022 = vmatpush1.msra.mxu0 0.0
  %4023 = vmatprep.subr.mxu0 0.0
  %4024 = vmatpush1.msra.mxu0 0.0
  %4025 = vmatprep.subr.mxu0 0.0
  %4026 = vmatpush1.msra.mxu0 0.0
  %4027 = vmatprep.subr.mxu0 0.0
  %4028 = vmatpush1.msra.mxu0 0.0
  %4029 = vmatprep.subr.mxu0 0.0
  %4030 = vmatpush1.msra.mxu0 0.0
  %4031 = vmatprep.subr.mxu0 0.0
  %4032 = vmatpush1.msra.mxu0 0.0
  %4033 = vmatprep.subr.mxu0 0.0
  %4034 = vmatpush1.msra.mxu0 0.0
  %4035 = vmatprep.subr.mxu0 0.0
  %4036 = vmatpush1.msra.mxu0 0.0
  %4037 = vmatprep.subr.mxu0 0.0
  %4038 = vmatpush1.msra.mxu0 0.0
  %4039 = vmatprep.subr.mxu0 0.0
  %4040 = vmatpush1.msra.mxu0 0.0
  %4041 = vmatprep.subr.mxu0 0.0
  %4042 = vmatpush1.msra.mxu0 0.0
  %4043 = vmatprep.mubr.f32.mxu0 0.0
  %4044 = vmatmul.mubr.f32.gmra.mrb[0].mxu0 %v3977
  %v4045 = vpop.f32.mrb[0].mxu0
  %v4046 = vadd.f32 0.0, %v4045
  %v4047 = vpop.f32.mrb[0].mxu0
  %4048 = vdwg.mxu0
  %v4049 = vsel %vm3688, %v3536, 0
  %4051 = vmatprep.subr.mxu0 0.0
  %4052 = vmatpush1.msra.mxu0 %v3380
  %4053 = vmatprep.subr.mxu0 0.0
  %4054 = vmatpush1.msra.mxu0 %v3381
  %4055 = vmatprep.subr.mxu0 0.0
  %4056 = vmatpush1.msra.mxu0 %v3382
  %4057 = vmatprep.subr.mxu0 0.0
  %4058 = vmatpush1.msra.mxu0 %v3383
  %4059 = vmatprep.subr.mxu0 0.0
  %4060 = vmatpush1.msra.mxu0 0.0
  %4061 = vmatprep.subr.mxu0 0.0
  %4062 = vmatpush1.msra.mxu0 0.0
  %4063 = vmatprep.subr.mxu0 0.0
  %4064 = vmatpush1.msra.mxu0 0.0
  %4065 = vmatprep.subr.mxu0 0.0
  %4066 = vmatpush1.msra.mxu0 0.0
  %4067 = vmatprep.subr.mxu0 0.0
  %4068 = vmatpush1.msra.mxu0 0.0
  %4069 = vmatprep.subr.mxu0 0.0
  %4070 = vmatpush1.msra.mxu0 0.0
  %4071 = vmatprep.subr.mxu0 0.0
  %4072 = vmatpush1.msra.mxu0 0.0
  %4073 = vmatprep.subr.mxu0 0.0
  %4074 = vmatpush1.msra.mxu0 0.0
  %4075 = vmatprep.subr.mxu0 0.0
  %4076 = vmatpush1.msra.mxu0 0.0
  %4077 = vmatprep.subr.mxu0 0.0
  %4078 = vmatpush1.msra.mxu0 0.0
  %4079 = vmatprep.subr.mxu0 0.0
  %4080 = vmatpush1.msra.mxu0 0.0
  %4081 = vmatprep.subr.mxu0 0.0
  %4082 = vmatpush1.msra.mxu0 0.0
  %4083 = vmatprep.subr.mxu0 0.0
  %4084 = vmatpush1.msra.mxu0 0.0
  %4085 = vmatprep.subr.mxu0 0.0
  %4086 = vmatpush1.msra.mxu0 0.0
  %4087 = vmatprep.subr.mxu0 0.0
  %4088 = vmatpush1.msra.mxu0 0.0
  %4089 = vmatprep.subr.mxu0 0.0
  %4090 = vmatpush1.msra.mxu0 0.0
  %4091 = vmatprep.subr.mxu0 0.0
  %4092 = vmatpush1.msra.mxu0 0.0
  %4093 = vmatprep.subr.mxu0 0.0
  %4094 = vmatpush1.msra.mxu0 0.0
  %4095 = vmatprep.subr.mxu0 0.0
  %4096 = vmatpush1.msra.mxu0 0.0
  %4097 = vmatprep.subr.mxu0 0.0
  %4098 = vmatpush1.msra.mxu0 0.0
  %4099 = vmatprep.subr.mxu0 0.0
  %4100 = vmatpush1.msra.mxu0 0.0
  %4101 = vmatprep.subr.mxu0 0.0
  %4102 = vmatpush1.msra.mxu0 0.0
  %4103 = vmatprep.subr.mxu0 0.0
  %4104 = vmatpush1.msra.mxu0 0.0
  %4105 = vmatprep.subr.mxu0 0.0
  %4106 = vmatpush1.msra.mxu0 0.0
  %4107 = vmatprep.subr.mxu0 0.0
  %4108 = vmatpush1.msra.mxu0 0.0
  %4109 = vmatprep.subr.mxu0 0.0
  %4110 = vmatpush1.msra.mxu0 0.0
  %4111 = vmatprep.subr.mxu0 0.0
  %4112 = vmatpush1.msra.mxu0 0.0
  %4113 = vmatprep.subr.mxu0 0.0
  %4114 = vmatpush1.msra.mxu0 0.0
  %4115 = vmatprep.mubr.f32.mxu0 0.0
  %4116 = vmatmul.mubr.f32.gmra.mrb[0].mxu0 %v4049
  %v4117 = vpop.f32.mrb[0].mxu0
  %v4118 = vadd.f32 0.0, %v4117
  %v4119 = vpop.f32.mrb[0].mxu0
  %4120 = vdwg.mxu0
  %v4121 = vsel %vm3688, %v3538, 0
  %4123 = vmatprep.subr.mxu0 0.0
  %4124 = vmatpush1.msra.mxu0 %v3384
  %4125 = vmatprep.subr.mxu0 0.0
  %4126 = vmatpush1.msra.mxu0 %v3385
  %4127 = vmatprep.subr.mxu0 0.0
  %4128 = vmatpush1.msra.mxu0 %v3386
  %4129 = vmatprep.subr.mxu0 0.0
  %4130 = vmatpush1.msra.mxu0 %v3387
  %4131 = vmatprep.subr.mxu0 0.0
  %4132 = vmatpush1.msra.mxu0 0.0
  %4133 = vmatprep.subr.mxu0 0.0
  %4134 = vmatpush1.msra.mxu0 0.0
  %4135 = vmatprep.subr.mxu0 0.0
  %4136 = vmatpush1.msra.mxu0 0.0
  %4137 = vmatprep.subr.mxu0 0.0
  %4138 = vmatpush1.msra.mxu0 0.0
  %4139 = vmatprep.subr.mxu0 0.0
  %4140 = vmatpush1.msra.mxu0 0.0
  %4141 = vmatprep.subr.mxu0 0.0
  %4142 = vmatpush1.msra.mxu0 0.0
  %4143 = vmatprep.subr.mxu0 0.0
  %4144 = vmatpush1.msra.mxu0 0.0
  %4145 = vmatprep.subr.mxu0 0.0
  %4146 = vmatpush1.msra.mxu0 0.0
  %4147 = vmatprep.subr.mxu0 0.0
  %4148 = vmatpush1.msra.mxu0 0.0
  %4149 = vmatprep.subr.mxu0 0.0
  %4150 = vmatpush1.msra.mxu0 0.0
  %4151 = vmatprep.subr.mxu0 0.0
  %4152 = vmatpush1.msra.mxu0 0.0
  %4153 = vmatprep.subr.mxu0 0.0
  %4154 = vmatpush1.msra.mxu0 0.0
  %4155 = vmatprep.subr.mxu0 0.0
  %4156 = vmatpush1.msra.mxu0 0.0
  %4157 = vmatprep.subr.mxu0 0.0
  %4158 = vmatpush1.msra.mxu0 0.0
  %4159 = vmatprep.subr.mxu0 0.0
  %4160 = vmatpush1.msra.mxu0 0.0
  %4161 = vmatprep.subr.mxu0 0.0
  %4162 = vmatpush1.msra.mxu0 0.0
  %4163 = vmatprep.subr.mxu0 0.0
  %4164 = vmatpush1.msra.mxu0 0.0
  %4165 = vmatprep.subr.mxu0 0.0
  %4166 = vmatpush1.msra.mxu0 0.0
  %4167 = vmatprep.subr.mxu0 0.0
  %4168 = vmatpush1.msra.mxu0 0.0
  %4169 = vmatprep.subr.mxu0 0.0
  %4170 = vmatpush1.msra.mxu0 0.0
  %4171 = vmatprep.subr.mxu0 0.0
  %4172 = vmatpush1.msra.mxu0 0.0
  %4173 = vmatprep.subr.mxu0 0.0
  %4174 = vmatpush1.msra.mxu0 0.0
  %4175 = vmatprep.subr.mxu0 0.0
  %4176 = vmatpush1.msra.mxu0 0.0
  %4177 = vmatprep.subr.mxu0 0.0
  %4178 = vmatpush1.msra.mxu0 0.0
  %4179 = vmatprep.subr.mxu0 0.0
  %4180 = vmatpush1.msra.mxu0 0.0
  %4181 = vmatprep.subr.mxu0 0.0
  %4182 = vmatpush1.msra.mxu0 0.0
  %4183 = vmatprep.subr.mxu0 0.0
  %4184 = vmatpush1.msra.mxu0 0.0
  %4185 = vmatprep.subr.mxu0 0.0
  %4186 = vmatpush1.msra.mxu0 0.0
  %4187 = vmatprep.mubr.f32.mxu0 0.0
  %4188 = vmatmul.mubr.f32.gmra.mrb[0].mxu0 %v4121
  %v4189 = vpop.f32.mrb[0].mxu0
  %v4190 = vadd.f32 0.0, %v4189
  %v4191 = vpop.f32.mrb[0].mxu0
  %4192 = vdwg.mxu0
  %v4193 = vsel %vm3688, %v3540, 0
  %4195 = vmatprep.subr.mxu0 0.0
  %4196 = vmatpush1.msra.mxu0 %v3388
  %4197 = vmatprep.subr.mxu0 0.0
  %4198 = vmatpush1.msra.mxu0 %v3389
  %4199 = vmatprep.subr.mxu0 0.0
  %4200 = vmatpush1.msra.mxu0 %v3390
  %4201 = vmatprep.subr.mxu0 0.0
  %4202 = vmatpush1.msra.mxu0 %v3391
  %4203 = vmatprep.subr.mxu0 0.0
  %4204 = vmatpush1.msra.mxu0 0.0
  %4205 = vmatprep.subr.mxu0 0.0
  %4206 = vmatpush1.msra.mxu0 0.0
  %4207 = vmatprep.subr.mxu0 0.0
  %4208 = vmatpush1.msra.mxu0 0.0
  %4209 = vmatprep.subr.mxu0 0.0
  %4210 = vmatpush1.msra.mxu0 0.0
  %4211 = vmatprep.subr.mxu0 0.0
  %4212 = vmatpush1.msra.mxu0 0.0
  %4213 = vmatprep.subr.mxu0 0.0
  %4214 = vmatpush1.msra.mxu0 0.0
  %4215 = vmatprep.subr.mxu0 0.0
  %4216 = vmatpush1.msra.mxu0 0.0
  %4217 = vmatprep.subr.mxu0 0.0
  %4218 = vmatpush1.msra.mxu0 0.0
  %4219 = vmatprep.subr.mxu0 0.0
  %4220 = vmatpush1.msra.mxu0 0.0
  %4221 = vmatprep.subr.mxu0 0.0
  %4222 = vmatpush1.msra.mxu0 0.0
  %4223 = vmatprep.subr.mxu0 0.0
  %4224 = vmatpush1.msra.mxu0 0.0
  %4225 = vmatprep.subr.mxu0 0.0
  %4226 = vmatpush1.msra.mxu0 0.0
  %4227 = vmatprep.subr.mxu0 0.0
  %4228 = vmatpush1.msra.mxu0 0.0
  %4229 = vmatprep.subr.mxu0 0.0
  %4230 = vmatpush1.msra.mxu0 0.0
  %4231 = vmatprep.subr.mxu0 0.0
  %4232 = vmatpush1.msra.mxu0 0.0
  %4233 = vmatprep.subr.mxu0 0.0
  %4234 = vmatpush1.msra.mxu0 0.0
  %4235 = vmatprep.subr.mxu0 0.0
  %4236 = vmatpush1.msra.mxu0 0.0
  %4237 = vmatprep.subr.mxu0 0.0
  %4238 = vmatpush1.msra.mxu0 0.0
  %4239 = vmatprep.subr.mxu0 0.0
  %4240 = vmatpush1.msra.mxu0 0.0
  %4241 = vmatprep.subr.mxu0 0.0
  %4242 = vmatpush1.msra.mxu0 0.0
  %4243 = vmatprep.subr.mxu0 0.0
  %4244 = vmatpush1.msra.mxu0 0.0
  %4245 = vmatprep.subr.mxu0 0.0
  %4246 = vmatpush1.msra.mxu0 0.0
  %4247 = vmatprep.subr.mxu0 0.0
  %4248 = vmatpush1.msra.mxu0 0.0
  %4249 = vmatprep.subr.mxu0 0.0
  %4250 = vmatpush1.msra.mxu0 0.0
  %4251 = vmatprep.subr.mxu0 0.0
  %4252 = vmatpush1.msra.mxu0 0.0
  %4253 = vmatprep.subr.mxu0 0.0
  %4254 = vmatpush1.msra.mxu0 0.0
  %4255 = vmatprep.subr.mxu0 0.0
  %4256 = vmatpush1.msra.mxu0 0.0
  %4257 = vmatprep.subr.mxu0 0.0
  %4258 = vmatpush1.msra.mxu0 0.0
  %4259 = vmatprep.mubr.f32.mxu0 0.0
  %4260 = vmatmul.mubr.f32.gmra.mrb[0].mxu0 %v4193
  %v4261 = vpop.f32.mrb[0].mxu0
  %v4262 = vadd.f32 0.0, %v4261
  %v4263 = vpop.f32.mrb[0].mxu0
  %4264 = vdwg.mxu0
  %v4265 = vsel %vm3688, %v3564, 0
  %4267 = vmatprep.subr.mxu0 0.0
  %4268 = vmatpush1.msra.mxu0 %v3392
  %4269 = vmatprep.subr.mxu0 0.0
  %4270 = vmatpush1.msra.mxu0 %v3393
  %4271 = vmatprep.subr.mxu0 0.0
  %4272 = vmatpush1.msra.mxu0 %v3394
  %4273 = vmatprep.subr.mxu0 0.0
  %4274 = vmatpush1.msra.mxu0 %v3395
  %4275 = vmatprep.subr.mxu0 0.0
  %4276 = vmatpush1.msra.mxu0 0.0
  %4277 = vmatprep.subr.mxu0 0.0
  %4278 = vmatpush1.msra.mxu0 0.0
  %4279 = vmatprep.subr.mxu0 0.0
  %4280 = vmatpush1.msra.mxu0 0.0
  %4281 = vmatprep.subr.mxu0 0.0
  %4282 = vmatpush1.msra.mxu0 0.0
  %4283 = vmatprep.subr.mxu0 0.0
  %4284 = vmatpush1.msra.mxu0 0.0
  %4285 = vmatprep.subr.mxu0 0.0
  %4286 = vmatpush1.msra.mxu0 0.0
  %4287 = vmatprep.subr.mxu0 0.0
  %4288 = vmatpush1.msra.mxu0 0.0
  %4289 = vmatprep.subr.mxu0 0.0
  %4290 = vmatpush1.msra.mxu0 0.0
  %4291 = vmatprep.subr.mxu0 0.0
  %4292 = vmatpush1.msra.mxu0 0.0
  %4293 = vmatprep.subr.mxu0 0.0
  %4294 = vmatpush1.msra.mxu0 0.0
  %4295 = vmatprep.subr.mxu0 0.0
  %4296 = vmatpush1.msra.mxu0 0.0
  %4297 = vmatprep.subr.mxu0 0.0
  %4298 = vmatpush1.msra.mxu0 0.0
  %4299 = vmatprep.subr.mxu0 0.0
  %4300 = vmatpush1.msra.mxu0 0.0
  %4301 = vmatprep.subr.mxu0 0.0
  %4302 = vmatpush1.msra.mxu0 0.0
  %4303 = vmatprep.subr.mxu0 0.0
  %4304 = vmatpush1.msra.mxu0 0.0
  %4305 = vmatprep.subr.mxu0 0.0
  %4306 = vmatpush1.msra.mxu0 0.0
  %4307 = vmatprep.subr.mxu0 0.0
  %4308 = vmatpush1.msra.mxu0 0.0
  %4309 = vmatprep.subr.mxu0 0.0
  %4310 = vmatpush1.msra.mxu0 0.0
  %4311 = vmatprep.subr.mxu0 0.0
  %4312 = vmatpush1.msra.mxu0 0.0
  %4313 = vmatprep.subr.mxu0 0.0
  %4314 = vmatpush1.msra.mxu0 0.0
  %4315 = vmatprep.subr.mxu0 0.0
  %4316 = vmatpush1.msra.mxu0 0.0
  %4317 = vmatprep.subr.mxu0 0.0
  %4318 = vmatpush1.msra.mxu0 0.0
  %4319 = vmatprep.subr.mxu0 0.0
  %4320 = vmatpush1.msra.mxu0 0.0
  %4321 = vmatprep.subr.mxu0 0.0
  %4322 = vmatpush1.msra.mxu0 0.0
  %4323 = vmatprep.subr.mxu0 0.0
  %4324 = vmatpush1.msra.mxu0 0.0
  %4325 = vmatprep.subr.mxu0 0.0
  %4326 = vmatpush1.msra.mxu0 0.0
  %4327 = vmatprep.subr.mxu0 0.0
  %4328 = vmatpush1.msra.mxu0 0.0
  %4329 = vmatprep.subr.mxu0 0.0
  %4330 = vmatpush1.msra.mxu0 0.0
  %4331 = vmatprep.mubr.f32.mxu0 0.0
  %4332 = vmatmul.mubr.f32.gmra.mrb[0].mxu0 %v4265
  %v4333 = vpop.f32.mrb[0].mxu0
  %v4334 = vadd.f32 0.0, %v4333
  %v4335 = vpop.f32.mrb[0].mxu0
  %4336 = vdwg.mxu0
  %v4337 = vsel %vm3688, %v3578, 0
  %4339 = vmatprep.subr.mxu0 0.0
  %4340 = vmatpush1.msra.mxu0 %v3396
  %4341 = vmatprep.subr.mxu0 0.0
  %4342 = vmatpush1.msra.mxu0 %v3397
  %4343 = vmatprep.subr.mxu0 0.0
  %4344 = vmatpush1.msra.mxu0 %v3398
  %4345 = vmatprep.subr.mxu0 0.0
  %4346 = vmatpush1.msra.mxu0 %v3399
  %4347 = vmatprep.subr.mxu0 0.0
  %4348 = vmatpush1.msra.mxu0 0.0
  %4349 = vmatprep.subr.mxu0 0.0
  %4350 = vmatpush1.msra.mxu0 0.0
  %4351 = vmatprep.subr.mxu0 0.0
  %4352 = vmatpush1.msra.mxu0 0.0
  %4353 = vmatprep.subr.mxu0 0.0
  %4354 = vmatpush1.msra.mxu0 0.0
  %4355 = vmatprep.subr.mxu0 0.0
  %4356 = vmatpush1.msra.mxu0 0.0
  %4357 = vmatprep.subr.mxu0 0.0
  %4358 = vmatpush1.msra.mxu0 0.0
  %4359 = vmatprep.subr.mxu0 0.0
  %4360 = vmatpush1.msra.mxu0 0.0
  %4361 = vmatprep.subr.mxu0 0.0
  %4362 = vmatpush1.msra.mxu0 0.0
  %4363 = vmatprep.subr.mxu0 0.0
  %4364 = vmatpush1.msra.mxu0 0.0
  %4365 = vmatprep.subr.mxu0 0.0
  %4366 = vmatpush1.msra.mxu0 0.0
  %4367 = vmatprep.subr.mxu0 0.0
  %4368 = vmatpush1.msra.mxu0 0.0
  %4369 = vmatprep.subr.mxu0 0.0
  %4370 = vmatpush1.msra.mxu0 0.0
  %4371 = vmatprep.subr.mxu0 0.0
  %4372 = vmatpush1.msra.mxu0 0.0
  %4373 = vmatprep.subr.mxu0 0.0
  %4374 = vmatpush1.msra.mxu0 0.0
  %4375 = vmatprep.subr.mxu0 0.0
  %4376 = vmatpush1.msra.mxu0 0.0
  %4377 = vmatprep.subr.mxu0 0.0
  %4378 = vmatpush1.msra.mxu0 0.0
  %4379 = vmatprep.subr.mxu0 0.0
  %4380 = vmatpush1.msra.mxu0 0.0
  %4381 = vmatprep.subr.mxu0 0.0
  %4382 = vmatpush1.msra.mxu0 0.0
  %4383 = vmatprep.subr.mxu0 0.0
  %4384 = vmatpush1.msra.mxu0 0.0
  %4385 = vmatprep.subr.mxu0 0.0
  %4386 = vmatpush1.msra.mxu0 0.0
  %4387 = vmatprep.subr.mxu0 0.0
  %4388 = vmatpush1.msra.mxu0 0.0
  %4389 = vmatprep.subr.mxu0 0.0
  %4390 = vmatpush1.msra.mxu0 0.0
  %4391 = vmatprep.subr.mxu0 0.0
  %4392 = vmatpush1.msra.mxu0 0.0
  %4393 = vmatprep.subr.mxu0 0.0
  %4394 = vmatpush1.msra.mxu0 0.0
  %4395 = vmatprep.subr.mxu0 0.0
  %4396 = vmatpush1.msra.mxu0 0.0
  %4397 = vmatprep.subr.mxu0 0.0
  %4398 = vmatpush1.msra.mxu0 0.0
  %4399 = vmatprep.subr.mxu0 0.0
  %4400 = vmatpush1.msra.mxu0 0.0
  %4401 = vmatprep.subr.mxu0 0.0
  %4402 = vmatpush1.msra.mxu0 0.0
  %4403 = vmatprep.mubr.f32.mxu0 0.0
  %4404 = vmatmul.mubr.f32.gmra.mrb[0].mxu0 %v4337
  %v4405 = vpop.f32.mrb[0].mxu0
  %v4406 = vadd.f32 0.0, %v4405
  %v4407 = vpop.f32.mrb[0].mxu0
  %4408 = vdwg.mxu0
  %v4409 = vsel %vm3688, %v3586, 0
  %4411 = vmatprep.subr.mxu0 0.0
  %4412 = vmatpush1.msra.mxu0 %v3400
  %4413 = vmatprep.subr.mxu0 0.0
  %4414 = vmatpush1.msra.mxu0 %v3401
  %4415 = vmatprep.subr.mxu0 0.0
  %4416 = vmatpush1.msra.mxu0 %v3402
  %4417 = vmatprep.subr.mxu0 0.0
  %4418 = vmatpush1.msra.mxu0 %v3403
  %4419 = vmatprep.subr.mxu0 0.0
  %4420 = vmatpush1.msra.mxu0 0.0
  %4421 = vmatprep.subr.mxu0 0.0
  %4422 = vmatpush1.msra.mxu0 0.0
  %4423 = vmatprep.subr.mxu0 0.0
  %4424 = vmatpush1.msra.mxu0 0.0
  %4425 = vmatprep.subr.mxu0 0.0
  %4426 = vmatpush1.msra.mxu0 0.0
  %4427 = vmatprep.subr.mxu0 0.0
  %4428 = vmatpush1.msra.mxu0 0.0
  %4429 = vmatprep.subr.mxu0 0.0
  %4430 = vmatpush1.msra.mxu0 0.0
  %4431 = vmatprep.subr.mxu0 0.0
  %4432 = vmatpush1.msra.mxu0 0.0
  %4433 = vmatprep.subr.mxu0 0.0
  %4434 = vmatpush1.msra.mxu0 0.0
  %4435 = vmatprep.subr.mxu0 0.0
  %4436 = vmatpush1.msra.mxu0 0.0
  %4437 = vmatprep.subr.mxu0 0.0
  %4438 = vmatpush1.msra.mxu0 0.0
  %4439 = vmatprep.subr.mxu0 0.0
  %4440 = vmatpush1.msra.mxu0 0.0
  %4441 = vmatprep.subr.mxu0 0.0
  %4442 = vmatpush1.msra.mxu0 0.0
  %4443 = vmatprep.subr.mxu0 0.0
  %4444 = vmatpush1.msra.mxu0 0.0
  %4445 = vmatprep.subr.mxu0 0.0
  %4446 = vmatpush1.msra.mxu0 0.0
  %4447 = vmatprep.subr.mxu0 0.0
  %4448 = vmatpush1.msra.mxu0 0.0
  %4449 = vmatprep.subr.mxu0 0.0
  %4450 = vmatpush1.msra.mxu0 0.0
  %4451 = vmatprep.subr.mxu0 0.0
  %4452 = vmatpush1.msra.mxu0 0.0
  %4453 = vmatprep.subr.mxu0 0.0
  %4454 = vmatpush1.msra.mxu0 0.0
  %4455 = vmatprep.subr.mxu0 0.0
  %4456 = vmatpush1.msra.mxu0 0.0
  %4457 = vmatprep.subr.mxu0 0.0
  %4458 = vmatpush1.msra.mxu0 0.0
  %4459 = vmatprep.subr.mxu0 0.0
  %4460 = vmatpush1.msra.mxu0 0.0
  %4461 = vmatprep.subr.mxu0 0.0
  %4462 = vmatpush1.msra.mxu0 0.0
  %4463 = vmatprep.subr.mxu0 0.0
  %4464 = vmatpush1.msra.mxu0 0.0
  %4465 = vmatprep.subr.mxu0 0.0
  %4466 = vmatpush1.msra.mxu0 0.0
  %4467 = vmatprep.subr.mxu0 0.0
  %4468 = vmatpush1.msra.mxu0 0.0
  %4469 = vmatprep.subr.mxu0 0.0
  %4470 = vmatpush1.msra.mxu0 0.0
  %4471 = vmatprep.subr.mxu0 0.0
  %4472 = vmatpush1.msra.mxu0 0.0
  %4473 = vmatprep.subr.mxu0 0.0
  %4474 = vmatpush1.msra.mxu0 0.0
  %4475 = vmatprep.mubr.f32.mxu0 0.0
  %4476 = vmatmul.mubr.f32.gmra.mrb[0].mxu0 %v4409
  %v4477 = vpop.f32.mrb[0].mxu0
  %v4478 = vadd.f32 0.0, %v4477
  %v4479 = vpop.f32.mrb[0].mxu0
  %4480 = vdwg.mxu0
  %v4481 = vsel %vm3688, %v3588, 0
  %4483 = vmatprep.subr.mxu0 0.0
  %4484 = vmatpush1.msra.mxu0 %v3404
  %4485 = vmatprep.subr.mxu0 0.0
  %4486 = vmatpush1.msra.mxu0 %v3405
  %4487 = vmatprep.subr.mxu0 0.0
  %4488 = vmatpush1.msra.mxu0 %v3406
  %4489 = vmatprep.subr.mxu0 0.0
  %4490 = vmatpush1.msra.mxu0 %v3407
  %4491 = vmatprep.subr.mxu0 0.0
  %4492 = vmatpush1.msra.mxu0 0.0
  %4493 = vmatprep.subr.mxu0 0.0
  %4494 = vmatpush1.msra.mxu0 0.0
  %4495 = vmatprep.subr.mxu0 0.0
  %4496 = vmatpush1.msra.mxu0 0.0
  %4497 = vmatprep.subr.mxu0 0.0
  %4498 = vmatpush1.msra.mxu0 0.0
  %4499 = vmatprep.subr.mxu0 0.0
  %4500 = vmatpush1.msra.mxu0 0.0
  %4501 = vmatprep.subr.mxu0 0.0
  %4502 = vmatpush1.msra.mxu0 0.0
  %4503 = vmatprep.subr.mxu0 0.0
  %4504 = vmatpush1.msra.mxu0 0.0
  %4505 = vmatprep.subr.mxu0 0.0
  %4506 = vmatpush1.msra.mxu0 0.0
  %4507 = vmatprep.subr.mxu0 0.0
  %4508 = vmatpush1.msra.mxu0 0.0
  %4509 = vmatprep.subr.mxu0 0.0
  %4510 = vmatpush1.msra.mxu0 0.0
  %4511 = vmatprep.subr.mxu0 0.0
  %4512 = vmatpush1.msra.mxu0 0.0
  %4513 = vmatprep.subr.mxu0 0.0
  %4514 = vmatpush1.msra.mxu0 0.0
  %4515 = vmatprep.subr.mxu0 0.0
  %4516 = vmatpush1.msra.mxu0 0.0
  %4517 = vmatprep.subr.mxu0 0.0
  %4518 = vmatpush1.msra.mxu0 0.0
  %4519 = vmatprep.subr.mxu0 0.0
  %4520 = vmatpush1.msra.mxu0 0.0
  %4521 = vmatprep.subr.mxu0 0.0
  %4522 = vmatpush1.msra.mxu0 0.0
  %4523 = vmatprep.subr.mxu0 0.0
  %4524 = vmatpush1.msra.mxu0 0.0
  %4525 = vmatprep.subr.mxu0 0.0
  %4526 = vmatpush1.msra.mxu0 0.0
  %4527 = vmatprep.subr.mxu0 0.0
  %4528 = vmatpush1.msra.mxu0 0.0
  %4529 = vmatprep.subr.mxu0 0.0
  %4530 = vmatpush1.msra.mxu0 0.0
  %4531 = vmatprep.subr.mxu0 0.0
  %4532 = vmatpush1.msra.mxu0 0.0
  %4533 = vmatprep.subr.mxu0 0.0
  %4534 = vmatpush1.msra.mxu0 0.0
  %4535 = vmatprep.subr.mxu0 0.0
  %4536 = vmatpush1.msra.mxu0 0.0
  %4537 = vmatprep.subr.mxu0 0.0
  %4538 = vmatpush1.msra.mxu0 0.0
  %4539 = vmatprep.subr.mxu0 0.0
  %4540 = vmatpush1.msra.mxu0 0.0
  %4541 = vmatprep.subr.mxu0 0.0
  %4542 = vmatpush1.msra.mxu0 0.0
  %4543 = vmatprep.subr.mxu0 0.0
  %4544 = vmatpush1.msra.mxu0 0.0
  %4545 = vmatprep.subr.mxu0 0.0
  %4546 = vmatpush1.msra.mxu0 0.0
  %4547 = vmatprep.mubr.f32.mxu0 0.0
  %4548 = vmatmul.mubr.f32.gmra.mrb[0].mxu0 %v4481
  %v4549 = vpop.f32.mrb[0].mxu0
  %v4550 = vadd.f32 0.0, %v4549
  %v4551 = vpop.f32.mrb[0].mxu0
  %4552 = vdwg.mxu0
  %v4553 = vsel %vm3688, %v3571, 0
  %4555 = vmatprep.subr.mxu0 0.0
  %4556 = vmatpush1.msra.mxu0 %v3408
  %4557 = vmatprep.subr.mxu0 0.0
  %4558 = vmatpush1.msra.mxu0 %v3409
  %4559 = vmatprep.subr.mxu0 0.0
  %4560 = vmatpush1.msra.mxu0 %v3410
  %4561 = vmatprep.subr.mxu0 0.0
  %4562 = vmatpush1.msra.mxu0 %v3411
  %4563 = vmatprep.subr.mxu0 0.0
  %4564 = vmatpush1.msra.mxu0 0.0
  %4565 = vmatprep.subr.mxu0 0.0
  %4566 = vmatpush1.msra.mxu0 0.0
  %4567 = vmatprep.subr.mxu0 0.0
  %4568 = vmatpush1.msra.mxu0 0.0
  %4569 = vmatprep.subr.mxu0 0.0
  %4570 = vmatpush1.msra.mxu0 0.0
  %4571 = vmatprep.subr.mxu0 0.0
  %4572 = vmatpush1.msra.mxu0 0.0
  %4573 = vmatprep.subr.mxu0 0.0
  %4574 = vmatpush1.msra.mxu0 0.0
  %4575 = vmatprep.subr.mxu0 0.0
  %4576 = vmatpush1.msra.mxu0 0.0
  %4577 = vmatprep.subr.mxu0 0.0
  %4578 = vmatpush1.msra.mxu0 0.0
  %4579 = vmatprep.subr.mxu0 0.0
  %4580 = vmatpush1.msra.mxu0 0.0
  %4581 = vmatprep.subr.mxu0 0.0
  %4582 = vmatpush1.msra.mxu0 0.0
  %4583 = vmatprep.subr.mxu0 0.0
  %4584 = vmatpush1.msra.mxu0 0.0
  %4585 = vmatprep.subr.mxu0 0.0
  %4586 = vmatpush1.msra.mxu0 0.0
  %4587 = vmatprep.subr.mxu0 0.0
  %4588 = vmatpush1.msra.mxu0 0.0
  %4589 = vmatprep.subr.mxu0 0.0
  %4590 = vmatpush1.msra.mxu0 0.0
  %4591 = vmatprep.subr.mxu0 0.0
  %4592 = vmatpush1.msra.mxu0 0.0
  %4593 = vmatprep.subr.mxu0 0.0
  %4594 = vmatpush1.msra.mxu0 0.0
  %4595 = vmatprep.subr.mxu0 0.0
  %4596 = vmatpush1.msra.mxu0 0.0
  %4597 = vmatprep.subr.mxu0 0.0
  %4598 = vmatpush1.msra.mxu0 0.0
  %4599 = vmatprep.subr.mxu0 0.0
  %4600 = vmatpush1.msra.mxu0 0.0
  %4601 = vmatprep.subr.mxu0 0.0
  %4602 = vmatpush1.msra.mxu0 0.0
  %4603 = vmatprep.subr.mxu0 0.0
  %4604 = vmatpush1.msra.mxu0 0.0
  %4605 = vmatprep.subr.mxu0 0.0
  %4606 = vmatpush1.msra.mxu0 0.0
  %4607 = vmatprep.subr.mxu0 0.0
  %4608 = vmatpush1.msra.mxu0 0.0
  %4609 = vmatprep.subr.mxu0 0.0
  %4610 = vmatpush1.msra.mxu0 0.0
  %4611 = vmatprep.subr.mxu0 0.0
  %4612 = vmatpush1.msra.mxu0 0.0
  %4613 = vmatprep.subr.mxu0 0.0
  %4614 = vmatpush1.msra.mxu0 0.0
  %4615 = vmatprep.subr.mxu0 0.0
  %4616 = vmatpush1.msra.mxu0 0.0
  %4617 = vmatprep.subr.mxu0 0.0
  %4618 = vmatpush1.msra.mxu0 0.0
  %4619 = vmatprep.mubr.f32.mxu0 0.0
  %4620 = vmatmul.mubr.f32.gmra.mrb[0].mxu0 %v4553
  %v4621 = vpop.f32.mrb[0].mxu0
  %v4622 = vadd.f32 0.0, %v4621
  %v4623 = vpop.f32.mrb[0].mxu0
  %4624 = vdwg.mxu0
  %v4625 = vsel %vm3688, %v3585, 0
  %4627 = vmatprep.subr.mxu0 0.0
  %4628 = vmatpush1.msra.mxu0 %v3412
  %4629 = vmatprep.subr.mxu0 0.0
  %4630 = vmatpush1.msra.mxu0 %v3413
  %4631 = vmatprep.subr.mxu0 0.0
  %4632 = vmatpush1.msra.mxu0 %v3414
  %4633 = vmatprep.subr.mxu0 0.0
  %4634 = vmatpush1.msra.mxu0 %v3415
  %4635 = vmatprep.subr.mxu0 0.0
  %4636 = vmatpush1.msra.mxu0 0.0
  %4637 = vmatprep.subr.mxu0 0.0
  %4638 = vmatpush1.msra.mxu0 0.0
  %4639 = vmatprep.subr.mxu0 0.0
  %4640 = vmatpush1.msra.mxu0 0.0
  %4641 = vmatprep.subr.mxu0 0.0
  %4642 = vmatpush1.msra.mxu0 0.0
  %4643 = vmatprep.subr.mxu0 0.0
  %4644 = vmatpush1.msra.mxu0 0.0
  %4645 = vmatprep.subr.mxu0 0.0
  %4646 = vmatpush1.msra.mxu0 0.0
  %4647 = vmatprep.subr.mxu0 0.0
  %4648 = vmatpush1.msra.mxu0 0.0
  %4649 = vmatprep.subr.mxu0 0.0
  %4650 = vmatpush1.msra.mxu0 0.0
  %4651 = vmatprep.subr.mxu0 0.0
  %4652 = vmatpush1.msra.mxu0 0.0
  %4653 = vmatprep.subr.mxu0 0.0
  %4654 = vmatpush1.msra.mxu0 0.0
  %4655 = vmatprep.subr.mxu0 0.0
  %4656 = vmatpush1.msra.mxu0 0.0
  %4657 = vmatprep.subr.mxu0 0.0
  %4658 = vmatpush1.msra.mxu0 0.0
  %4659 = vmatprep.subr.mxu0 0.0
  %4660 = vmatpush1.msra.mxu0 0.0
  %4661 = vmatprep.subr.mxu0 0.0
  %4662 = vmatpush1.msra.mxu0 0.0
  %4663 = vmatprep.subr.mxu0 0.0
  %4664 = vmatpush1.msra.mxu0 0.0
  %4665 = vmatprep.subr.mxu0 0.0
  %4666 = vmatpush1.msra.mxu0 0.0
  %4667 = vmatprep.subr.mxu0 0.0
  %4668 = vmatpush1.msra.mxu0 0.0
  %4669 = vmatprep.subr.mxu0 0.0
  %4670 = vmatpush1.msra.mxu0 0.0
  %4671 = vmatprep.subr.mxu0 0.0
  %4672 = vmatpush1.msra.mxu0 0.0
  %4673 = vmatprep.subr.mxu0 0.0
  %4674 = vmatpush1.msra.mxu0 0.0
  %4675 = vmatprep.subr.mxu0 0.0
  %4676 = vmatpush1.msra.mxu0 0.0
  %4677 = vmatprep.subr.mxu0 0.0
  %4678 = vmatpush1.msra.mxu0 0.0
  %4679 = vmatprep.subr.mxu0 0.0
  %4680 = vmatpush1.msra.mxu0 0.0
  %4681 = vmatprep.subr.mxu0 0.0
  %4682 = vmatpush1.msra.mxu0 0.0
  %4683 = vmatprep.subr.mxu0 0.0
  %4684 = vmatpush1.msra.mxu0 0.0
  %4685 = vmatprep.subr.mxu0 0.0
  %4686 = vmatpush1.msra.mxu0 0.0
  %4687 = vmatprep.subr.mxu0 0.0
  %4688 = vmatpush1.msra.mxu0 0.0
  %4689 = vmatprep.subr.mxu0 0.0
  %4690 = vmatpush1.msra.mxu0 0.0
  %4691 = vmatprep.mubr.f32.mxu0 0.0
  %4692 = vmatmul.mubr.f32.gmra.mrb[0].mxu0 %v4625
  %v4693 = vpop.f32.mrb[0].mxu0
  %v4694 = vadd.f32 0.0, %v4693
  %v4695 = vpop.f32.mrb[0].mxu0
  %4696 = vdwg.mxu0
  %v4697 = vsel %vm3688, %v3587, 0
  %4699 = vmatprep.subr.mxu0 0.0
  %4700 = vmatpush1.msra.mxu0 %v3416
  %4701 = vmatprep.subr.mxu0 0.0
  %4702 = vmatpush1.msra.mxu0 %v3417
  %4703 = vmatprep.subr.mxu0 0.0
  %4704 = vmatpush1.msra.mxu0 %v3418
  %4705 = vmatprep.subr.mxu0 0.0
  %4706 = vmatpush1.msra.mxu0 %v3419
  %4707 = vmatprep.subr.mxu0 0.0
  %4708 = vmatpush1.msra.mxu0 0.0
  %4709 = vmatprep.subr.mxu0 0.0
  %4710 = vmatpush1.msra.mxu0 0.0
  %4711 = vmatprep.subr.mxu0 0.0
  %4712 = vmatpush1.msra.mxu0 0.0
  %4713 = vmatprep.subr.mxu0 0.0
  %4714 = vmatpush1.msra.mxu0 0.0
  %4715 = vmatprep.subr.mxu0 0.0
  %4716 = vmatpush1.msra.mxu0 0.0
  %4717 = vmatprep.subr.mxu0 0.0
  %4718 = vmatpush1.msra.mxu0 0.0
  %4719 = vmatprep.subr.mxu0 0.0
  %4720 = vmatpush1.msra.mxu0 0.0
  %4721 = vmatprep.subr.mxu0 0.0
  %4722 = vmatpush1.msra.mxu0 0.0
  %4723 = vmatprep.subr.mxu0 0.0
  %4724 = vmatpush1.msra.mxu0 0.0
  %4725 = vmatprep.subr.mxu0 0.0
  %4726 = vmatpush1.msra.mxu0 0.0
  %4727 = vmatprep.subr.mxu0 0.0
  %4728 = vmatpush1.msra.mxu0 0.0
  %4729 = vmatprep.subr.mxu0 0.0
  %4730 = vmatpush1.msra.mxu0 0.0
  %4731 = vmatprep.subr.mxu0 0.0
  %4732 = vmatpush1.msra.mxu0 0.0
  %4733 = vmatprep.subr.mxu0 0.0
  %4734 = vmatpush1.msra.mxu0 0.0
  %4735 = vmatprep.subr.mxu0 0.0
  %4736 = vmatpush1.msra.mxu0 0.0
  %4737 = vmatprep.subr.mxu0 0.0
  %4738 = vmatpush1.msra.mxu0 0.0
  %4739 = vmatprep.subr.mxu0 0.0
  %4740 = vmatpush1.msra.mxu0 0.0
  %4741 = vmatprep.subr.mxu0 0.0
  %4742 = vmatpush1.msra.mxu0 0.0
  %4743 = vmatprep.subr.mxu0 0.0
  %4744 = vmatpush1.msra.mxu0 0.0
  %4745 = vmatprep.subr.mxu0 0.0
  %4746 = vmatpush1.msra.mxu0 0.0
  %4747 = vmatprep.subr.mxu0 0.0
  %4748 = vmatpush1.msra.mxu0 0.0
  %4749 = vmatprep.subr.mxu0 0.0
  %4750 = vmatpush1.msra.mxu0 0.0
  %4751 = vmatprep.subr.mxu0 0.0
  %4752 = vmatpush1.msra.mxu0 0.0
  %4753 = vmatprep.subr.mxu0 0.0
  %4754 = vmatpush1.msra.mxu0 0.0
  %4755 = vmatprep.subr.mxu0 0.0
  %4756 = vmatpush1.msra.mxu0 0.0
  %4757 = vmatprep.subr.mxu0 0.0
  %4758 = vmatpush1.msra.mxu0 0.0
  %4759 = vmatprep.subr.mxu0 0.0
  %4760 = vmatpush1.msra.mxu0 0.0
  %4761 = vmatprep.subr.mxu0 0.0
  %4762 = vmatpush1.msra.mxu0 0.0
  %4763 = vmatprep.mubr.f32.mxu0 0.0
  %4764 = vmatmul.mubr.f32.gmra.mrb[0].mxu0 %v4697
  %v4765 = vpop.f32.mrb[0].mxu0
  %v4766 = vadd.f32 0.0, %v4765
  %v4767 = vpop.f32.mrb[0].mxu0
  %4768 = vdwg.mxu0
  %v4769 = vsel %vm3688, %v3589, 0
  %4771 = vmatprep.subr.mxu0 0.0
  %4772 = vmatpush1.msra.mxu0 %v3420
  %4773 = vmatprep.subr.mxu0 0.0
  %4774 = vmatpush1.msra.mxu0 %v3421
  %4775 = vmatprep.subr.mxu0 0.0
  %4776 = vmatpush1.msra.mxu0 %v3422
  %4777 = vmatprep.subr.mxu0 0.0
  %4778 = vmatpush1.msra.mxu0 %v3423
  %4779 = vmatprep.subr.mxu0 0.0
  %4780 = vmatpush1.msra.mxu0 0.0
  %4781 = vmatprep.subr.mxu0 0.0
  %4782 = vmatpush1.msra.mxu0 0.0
  %4783 = vmatprep.subr.mxu0 0.0
  %4784 = vmatpush1.msra.mxu0 0.0
  %4785 = vmatprep.subr.mxu0 0.0
  %4786 = vmatpush1.msra.mxu0 0.0
  %4787 = vmatprep.subr.mxu0 0.0
  %4788 = vmatpush1.msra.mxu0 0.0
  %4789 = vmatprep.subr.mxu0 0.0
  %4790 = vmatpush1.msra.mxu0 0.0
  %4791 = vmatprep.subr.mxu0 0.0
  %4792 = vmatpush1.msra.mxu0 0.0
  %4793 = vmatprep.subr.mxu0 0.0
  %4794 = vmatpush1.msra.mxu0 0.0
  %4795 = vmatprep.subr.mxu0 0.0
  %4796 = vmatpush1.msra.mxu0 0.0
  %4797 = vmatprep.subr.mxu0 0.0
  %4798 = vmatpush1.msra.mxu0 0.0
  %4799 = vmatprep.subr.mxu0 0.0
  %4800 = vmatpush1.msra.mxu0 0.0
  %4801 = vmatprep.subr.mxu0 0.0
  %4802 = vmatpush1.msra.mxu0 0.0
  %4803 = vmatprep.subr.mxu0 0.0
  %4804 = vmatpush1.msra.mxu0 0.0
  %4805 = vmatprep.subr.mxu0 0.0
  %4806 = vmatpush1.msra.mxu0 0.0
  %4807 = vmatprep.subr.mxu0 0.0
  %4808 = vmatpush1.msra.mxu0 0.0
  %4809 = vmatprep.subr.mxu0 0.0
  %4810 = vmatpush1.msra.mxu0 0.0
  %4811 = vmatprep.subr.mxu0 0.0
  %4812 = vmatpush1.msra.mxu0 0.0
  %4813 = vmatprep.subr.mxu0 0.0
  %4814 = vmatpush1.msra.mxu0 0.0
  %4815 = vmatprep.subr.mxu0 0.0
  %4816 = vmatpush1.msra.mxu0 0.0
  %4817 = vmatprep.subr.mxu0 0.0
  %4818 = vmatpush1.msra.mxu0 0.0
  %4819 = vmatprep.subr.mxu0 0.0
  %4820 = vmatpush1.msra.mxu0 0.0
  %4821 = vmatprep.subr.mxu0 0.0
  %4822 = vmatpush1.msra.mxu0 0.0
  %4823 = vmatprep.subr.mxu0 0.0
  %4824 = vmatpush1.msra.mxu0 0.0
  %4825 = vmatprep.subr.mxu0 0.0
  %4826 = vmatpush1.msra.mxu0 0.0
  %4827 = vmatprep.subr.mxu0 0.0
  %4828 = vmatpush1.msra.mxu0 0.0
  %4829 = vmatprep.subr.mxu0 0.0
  %4830 = vmatpush1.msra.mxu0 0.0
  %4831 = vmatprep.subr.mxu0 0.0
  %4832 = vmatpush1.msra.mxu0 0.0
  %4833 = vmatprep.subr.mxu0 0.0
  %4834 = vmatpush1.msra.mxu0 0.0
  %4835 = vmatprep.mubr.f32.mxu0 0.0
  %4836 = vmatmul.mubr.f32.gmra.mrb[0].mxu0 %v4769
  %v4837 = vpop.f32.mrb[0].mxu0
  %v4838 = vadd.f32 0.0, %v4837
  %v4839 = vpop.f32.mrb[0].mxu0
  %4840 = vdwg.mxu0
  %v4841 = vsel %vm3688, %v3613, 0
  %4843 = vmatprep.subr.mxu0 0.0
  %4844 = vmatpush1.msra.mxu0 %v3424
  %4845 = vmatprep.subr.mxu0 0.0
  %4846 = vmatpush1.msra.mxu0 %v3425
  %4847 = vmatprep.subr.mxu0 0.0
  %4848 = vmatpush1.msra.mxu0 %v3426
  %4849 = vmatprep.subr.mxu0 0.0
  %4850 = vmatpush1.msra.mxu0 %v3427
  %4851 = vmatprep.subr.mxu0 0.0
  %4852 = vmatpush1.msra.mxu0 0.0
  %4853 = vmatprep.subr.mxu0 0.0
  %4854 = vmatpush1.msra.mxu0 0.0
  %4855 = vmatprep.subr.mxu0 0.0
  %4856 = vmatpush1.msra.mxu0 0.0
  %4857 = vmatprep.subr.mxu0 0.0
  %4858 = vmatpush1.msra.mxu0 0.0
  %4859 = vmatprep.subr.mxu0 0.0
  %4860 = vmatpush1.msra.mxu0 0.0
  %4861 = vmatprep.subr.mxu0 0.0
  %4862 = vmatpush1.msra.mxu0 0.0
  %4863 = vmatprep.subr.mxu0 0.0
  %4864 = vmatpush1.msra.mxu0 0.0
  %4865 = vmatprep.subr.mxu0 0.0
  %4866 = vmatpush1.msra.mxu0 0.0
  %4867 = vmatprep.subr.mxu0 0.0
  %4868 = vmatpush1.msra.mxu0 0.0
  %4869 = vmatprep.subr.mxu0 0.0
  %4870 = vmatpush1.msra.mxu0 0.0
  %4871 = vmatprep.subr.mxu0 0.0
  %4872 = vmatpush1.msra.mxu0 0.0
  %4873 = vmatprep.subr.mxu0 0.0
  %4874 = vmatpush1.msra.mxu0 0.0
  %4875 = vmatprep.subr.mxu0 0.0
  %4876 = vmatpush1.msra.mxu0 0.0
  %4877 = vmatprep.subr.mxu0 0.0
  %4878 = vmatpush1.msra.mxu0 0.0
  %4879 = vmatprep.subr.mxu0 0.0
  %4880 = vmatpush1.msra.mxu0 0.0
  %4881 = vmatprep.subr.mxu0 0.0
  %4882 = vmatpush1.msra.mxu0 0.0
  %4883 = vmatprep.subr.mxu0 0.0
  %4884 = vmatpush1.msra.mxu0 0.0
  %4885 = vmatprep.subr.mxu0 0.0
  %4886 = vmatpush1.msra.mxu0 0.0
  %4887 = vmatprep.subr.mxu0 0.0
  %4888 = vmatpush1.msra.mxu0 0.0
  %4889 = vmatprep.subr.mxu0 0.0
  %4890 = vmatpush1.msra.mxu0 0.0
  %4891 = vmatprep.subr.mxu0 0.0
  %4892 = vmatpush1.msra.mxu0 0.0
  %4893 = vmatprep.subr.mxu0 0.0
  %4894 = vmatpush1.msra.mxu0 0.0
  %4895 = vmatprep.subr.mxu0 0.0
  %4896 = vmatpush1.msra.mxu0 0.0
  %4897 = vmatprep.subr.mxu0 0.0
  %4898 = vmatpush1.msra.mxu0 0.0
  %4899 = vmatprep.subr.mxu0 0.0
  %4900 = vmatpush1.msra.mxu0 0.0
  %4901 = vmatprep.subr.mxu0 0.0
  %4902 = vmatpush1.msra.mxu0 0.0
  %4903 = vmatprep.subr.mxu0 0.0
  %4904 = vmatpush1.msra.mxu0 0.0
  %4905 = vmatprep.subr.mxu0 0.0
  %4906 = vmatpush1.msra.mxu0 0.0
  %4907 = vmatprep.mubr.f32.mxu0 0.0
  %4908 = vmatmul.mubr.f32.gmra.mrb[0].mxu0 %v4841
  %v4909 = vpop.f32.mrb[0].mxu0
  %v4910 = vadd.f32 0.0, %v4909
  %v4911 = vpop.f32.mrb[0].mxu0
  %4912 = vdwg.mxu0
  %v4913 = vsel %vm3688, %v3627, 0
  %4915 = vmatprep.subr.mxu0 0.0
  %4916 = vmatpush1.msra.mxu0 %v3428
  %4917 = vmatprep.subr.mxu0 0.0
  %4918 = vmatpush1.msra.mxu0 %v3429
  %4919 = vmatprep.subr.mxu0 0.0
  %4920 = vmatpush1.msra.mxu0 %v3430
  %4921 = vmatprep.subr.mxu0 0.0
  %4922 = vmatpush1.msra.mxu0 %v3431
  %4923 = vmatprep.subr.mxu0 0.0
  %4924 = vmatpush1.msra.mxu0 0.0
  %4925 = vmatprep.subr.mxu0 0.0
  %4926 = vmatpush1.msra.mxu0 0.0
  %4927 = vmatprep.subr.mxu0 0.0
  %4928 = vmatpush1.msra.mxu0 0.0
  %4929 = vmatprep.subr.mxu0 0.0
  %4930 = vmatpush1.msra.mxu0 0.0
  %4931 = vmatprep.subr.mxu0 0.0
  %4932 = vmatpush1.msra.mxu0 0.0
  %4933 = vmatprep.subr.mxu0 0.0
  %4934 = vmatpush1.msra.mxu0 0.0
  %4935 = vmatprep.subr.mxu0 0.0
  %4936 = vmatpush1.msra.mxu0 0.0
  %4937 = vmatprep.subr.mxu0 0.0
  %4938 = vmatpush1.msra.mxu0 0.0
  %4939 = vmatprep.subr.mxu0 0.0
  %4940 = vmatpush1.msra.mxu0 0.0
  %4941 = vmatprep.subr.mxu0 0.0
  %4942 = vmatpush1.msra.mxu0 0.0
  %4943 = vmatprep.subr.mxu0 0.0
  %4944 = vmatpush1.msra.mxu0 0.0
  %4945 = vmatprep.subr.mxu0 0.0
  %4946 = vmatpush1.msra.mxu0 0.0
  %4947 = vmatprep.subr.mxu0 0.0
  %4948 = vmatpush1.msra.mxu0 0.0
  %4949 = vmatprep.subr.mxu0 0.0
  %4950 = vmatpush1.msra.mxu0 0.0
  %4951 = vmatprep.subr.mxu0 0.0
  %4952 = vmatpush1.msra.mxu0 0.0
  %4953 = vmatprep.subr.mxu0 0.0
  %4954 = vmatpush1.msra.mxu0 0.0
  %4955 = vmatprep.subr.mxu0 0.0
  %4956 = vmatpush1.msra.mxu0 0.0
  %4957 = vmatprep.subr.mxu0 0.0
  %4958 = vmatpush1.msra.mxu0 0.0
  %4959 = vmatprep.subr.mxu0 0.0
  %4960 = vmatpush1.msra.mxu0 0.0
  %4961 = vmatprep.subr.mxu0 0.0
  %4962 = vmatpush1.msra.mxu0 0.0
  %4963 = vmatprep.subr.mxu0 0.0
  %4964 = vmatpush1.msra.mxu0 0.0
  %4965 = vmatprep.subr.mxu0 0.0
  %4966 = vmatpush1.msra.mxu0 0.0
  %4967 = vmatprep.subr.mxu0 0.0
  %4968 = vmatpush1.msra.mxu0 0.0
  %4969 = vmatprep.subr.mxu0 0.0
  %4970 = vmatpush1.msra.mxu0 0.0
  %4971 = vmatprep.subr.mxu0 0.0
  %4972 = vmatpush1.msra.mxu0 0.0
  %4973 = vmatprep.subr.mxu0 0.0
  %4974 = vmatpush1.msra.mxu0 0.0
  %4975 = vmatprep.subr.mxu0 0.0
  %4976 = vmatpush1.msra.mxu0 0.0
  %4977 = vmatprep.subr.mxu0 0.0
  %4978 = vmatpush1.msra.mxu0 0.0
  %4979 = vmatprep.mubr.f32.mxu0 0.0
  %4980 = vmatmul.mubr.f32.gmra.mrb[0].mxu0 %v4913
  %v4981 = vpop.f32.mrb[0].mxu0
  %v4982 = vadd.f32 0.0, %v4981
  %v4983 = vpop.f32.mrb[0].mxu0
  %4984 = vdwg.mxu0
  %v4985 = vsel %vm3688, %v3635, 0
  %4987 = vmatprep.subr.mxu0 0.0
  %4988 = vmatpush1.msra.mxu0 %v3432
  %4989 = vmatprep.subr.mxu0 0.0
  %4990 = vmatpush1.msra.mxu0 %v3433
  %4991 = vmatprep.subr.mxu0 0.0
  %4992 = vmatpush1.msra.mxu0 %v3434
  %4993 = vmatprep.subr.mxu0 0.0
  %4994 = vmatpush1.msra.mxu0 %v3435
  %4995 = vmatprep.subr.mxu0 0.0
  %4996 = vmatpush1.msra.mxu0 0.0
  %4997 = vmatprep.subr.mxu0 0.0
  %4998 = vmatpush1.msra.mxu0 0.0
  %4999 = vmatprep.subr.mxu0 0.0
  %5000 = vmatpush1.msra.mxu0 0.0
  %5001 = vmatprep.subr.mxu0 0.0
  %5002 = vmatpush1.msra.mxu0 0.0
  %5003 = vmatprep.subr.mxu0 0.0
  %5004 = vmatpush1.msra.mxu0 0.0
  %5005 = vmatprep.subr.mxu0 0.0
  %5006 = vmatpush1.msra.mxu0 0.0
  %5007 = vmatprep.subr.mxu0 0.0
  %5008 = vmatpush1.msra.mxu0 0.0
  %5009 = vmatprep.subr.mxu0 0.0
  %5010 = vmatpush1.msra.mxu0 0.0
  %5011 = vmatprep.subr.mxu0 0.0
  %5012 = vmatpush1.msra.mxu0 0.0
  %5013 = vmatprep.subr.mxu0 0.0
  %5014 = vmatpush1.msra.mxu0 0.0
  %5015 = vmatprep.subr.mxu0 0.0
  %5016 = vmatpush1.msra.mxu0 0.0
  %5017 = vmatprep.subr.mxu0 0.0
  %5018 = vmatpush1.msra.mxu0 0.0
  %5019 = vmatprep.subr.mxu0 0.0
  %5020 = vmatpush1.msra.mxu0 0.0
  %5021 = vmatprep.subr.mxu0 0.0
  %5022 = vmatpush1.msra.mxu0 0.0
  %5023 = vmatprep.subr.mxu0 0.0
  %5024 = vmatpush1.msra.mxu0 0.0
  %5025 = vmatprep.subr.mxu0 0.0
  %5026 = vmatpush1.msra.mxu0 0.0
  %5027 = vmatprep.subr.mxu0 0.0
  %5028 = vmatpush1.msra.mxu0 0.0
  %5029 = vmatprep.subr.mxu0 0.0
  %5030 = vmatpush1.msra.mxu0 0.0
  %5031 = vmatprep.subr.mxu0 0.0
  %5032 = vmatpush1.msra.mxu0 0.0
  %5033 = vmatprep.subr.mxu0 0.0
  %5034 = vmatpush1.msra.mxu0 0.0
  %5035 = vmatprep.subr.mxu0 0.0
  %5036 = vmatpush1.msra.mxu0 0.0
  %5037 = vmatprep.subr.mxu0 0.0
  %5038 = vmatpush1.msra.mxu0 0.0
  %5039 = vmatprep.subr.mxu0 0.0
  %5040 = vmatpush1.msra.mxu0 0.0
  %5041 = vmatprep.subr.mxu0 0.0
  %5042 = vmatpush1.msra.mxu0 0.0
  %5043 = vmatprep.subr.mxu0 0.0
  %5044 = vmatpush1.msra.mxu0 0.0
  %5045 = vmatprep.subr.mxu0 0.0
  %5046 = vmatpush1.msra.mxu0 0.0
  %5047 = vmatprep.subr.mxu0 0.0
  %5048 = vmatpush1.msra.mxu0 0.0
  %5049 = vmatprep.subr.mxu0 0.0
  %5050 = vmatpush1.msra.mxu0 0.0
  %5051 = vmatprep.mubr.f32.mxu0 0.0
  %5052 = vmatmul.mubr.f32.gmra.mrb[0].mxu0 %v4985
  %v5053 = vpop.f32.mrb[0].mxu0
  %v5054 = vadd.f32 0.0, %v5053
  %v5055 = vpop.f32.mrb[0].mxu0
  %5056 = vdwg.mxu0
  %v5057 = vsel %vm3688, %v3637, 0
  %5059 = vmatprep.subr.mxu0 0.0
  %5060 = vmatpush1.msra.mxu0 %v3436
  %5061 = vmatprep.subr.mxu0 0.0
  %5062 = vmatpush1.msra.mxu0 %v3437
  %5063 = vmatprep.subr.mxu0 0.0
  %5064 = vmatpush1.msra.mxu0 %v3438
  %5065 = vmatprep.subr.mxu0 0.0
  %5066 = vmatpush1.msra.mxu0 %v3439
  %5067 = vmatprep.subr.mxu0 0.0
  %5068 = vmatpush1.msra.mxu0 0.0
  %5069 = vmatprep.subr.mxu0 0.0
  %5070 = vmatpush1.msra.mxu0 0.0
  %5071 = vmatprep.subr.mxu0 0.0
  %5072 = vmatpush1.msra.mxu0 0.0
  %5073 = vmatprep.subr.mxu0 0.0
  %5074 = vmatpush1.msra.mxu0 0.0
  %5075 = vmatprep.subr.mxu0 0.0
  %5076 = vmatpush1.msra.mxu0 0.0
  %5077 = vmatprep.subr.mxu0 0.0
  %5078 = vmatpush1.msra.mxu0 0.0
  %5079 = vmatprep.subr.mxu0 0.0
  %5080 = vmatpush1.msra.mxu0 0.0
  %5081 = vmatprep.subr.mxu0 0.0
  %5082 = vmatpush1.msra.mxu0 0.0
  %5083 = vmatprep.subr.mxu0 0.0
  %5084 = vmatpush1.msra.mxu0 0.0
  %5085 = vmatprep.subr.mxu0 0.0
  %5086 = vmatpush1.msra.mxu0 0.0
  %5087 = vmatprep.subr.mxu0 0.0
  %5088 = vmatpush1.msra.mxu0 0.0
  %5089 = vmatprep.subr.mxu0 0.0
  %5090 = vmatpush1.msra.mxu0 0.0
  %5091 = vmatprep.subr.mxu0 0.0
  %5092 = vmatpush1.msra.mxu0 0.0
  %5093 = vmatprep.subr.mxu0 0.0
  %5094 = vmatpush1.msra.mxu0 0.0
  %5095 = vmatprep.subr.mxu0 0.0
  %5096 = vmatpush1.msra.mxu0 0.0
  %5097 = vmatprep.subr.mxu0 0.0
  %5098 = vmatpush1.msra.mxu0 0.0
  %5099 = vmatprep.subr.mxu0 0.0
  %5100 = vmatpush1.msra.mxu0 0.0
  %5101 = vmatprep.subr.mxu0 0.0
  %5102 = vmatpush1.msra.mxu0 0.0
  %5103 = vmatprep.subr.mxu0 0.0
  %5104 = vmatpush1.msra.mxu0 0.0
  %5105 = vmatprep.subr.mxu0 0.0
  %5106 = vmatpush1.msra.mxu0 0.0
  %5107 = vmatprep.subr.mxu0 0.0
  %5108 = vmatpush1.msra.mxu0 0.0
  %5109 = vmatprep.subr.mxu0 0.0
  %5110 = vmatpush1.msra.mxu0 0.0
  %5111 = vmatprep.subr.mxu0 0.0
  %5112 = vmatpush1.msra.mxu0 0.0
  %5113 = vmatprep.subr.mxu0 0.0
  %5114 = vmatpush1.msra.mxu0 0.0
  %5115 = vmatprep.subr.mxu0 0.0
  %5116 = vmatpush1.msra.mxu0 0.0
  %5117 = vmatprep.subr.mxu0 0.0
  %5118 = vmatpush1.msra.mxu0 0.0
  %5119 = vmatprep.subr.mxu0 0.0
  %5120 = vmatpush1.msra.mxu0 0.0
  %5121 = vmatprep.subr.mxu0 0.0
  %5122 = vmatpush1.msra.mxu0 0.0
  %5123 = vmatprep.mubr.f32.mxu0 0.0
  %5124 = vmatmul.mubr.f32.gmra.mrb[0].mxu0 %v5057
  %v5125 = vpop.f32.mrb[0].mxu0
  %v5126 = vadd.f32 0.0, %v5125
  %v5127 = vpop.f32.mrb[0].mxu0
  %5128 = vdwg.mxu0
  %v5129 = vsel %vm3688, %v3620, 0
  %5131 = vmatprep.subr.mxu0 0.0
  %5132 = vmatpush1.msra.mxu0 %v3440
  %5133 = vmatprep.subr.mxu0 0.0
  %5134 = vmatpush1.msra.mxu0 %v3441
  %5135 = vmatprep.subr.mxu0 0.0
  %5136 = vmatpush1.msra.mxu0 %v3442
  %5137 = vmatprep.subr.mxu0 0.0
  %5138 = vmatpush1.msra.mxu0 %v3443
  %5139 = vmatprep.subr.mxu0 0.0
  %5140 = vmatpush1.msra.mxu0 0.0
  %5141 = vmatprep.subr.mxu0 0.0
  %5142 = vmatpush1.msra.mxu0 0.0
  %5143 = vmatprep.subr.mxu0 0.0
  %5144 = vmatpush1.msra.mxu0 0.0
  %5145 = vmatprep.subr.mxu0 0.0
  %5146 = vmatpush1.msra.mxu0 0.0
  %5147 = vmatprep.subr.mxu0 0.0
  %5148 = vmatpush1.msra.mxu0 0.0
  %5149 = vmatprep.subr.mxu0 0.0
  %5150 = vmatpush1.msra.mxu0 0.0
  %5151 = vmatprep.subr.mxu0 0.0
  %5152 = vmatpush1.msra.mxu0 0.0
  %5153 = vmatprep.subr.mxu0 0.0
  %5154 = vmatpush1.msra.mxu0 0.0
  %5155 = vmatprep.subr.mxu0 0.0
  %5156 = vmatpush1.msra.mxu0 0.0
  %5157 = vmatprep.subr.mxu0 0.0
  %5158 = vmatpush1.msra.mxu0 0.0
  %5159 = vmatprep.subr.mxu0 0.0
  %5160 = vmatpush1.msra.mxu0 0.0
  %5161 = vmatprep.subr.mxu0 0.0
  %5162 = vmatpush1.msra.mxu0 0.0
  %5163 = vmatprep.subr.mxu0 0.0
  %5164 = vmatpush1.msra.mxu0 0.0
  %5165 = vmatprep.subr.mxu0 0.0
  %5166 = vmatpush1.msra.mxu0 0.0
  %5167 = vmatprep.subr.mxu0 0.0
  %5168 = vmatpush1.msra.mxu0 0.0
  %5169 = vmatprep.subr.mxu0 0.0
  %5170 = vmatpush1.msra.mxu0 0.0
  %5171 = vmatprep.subr.mxu0 0.0
  %5172 = vmatpush1.msra.mxu0 0.0
  %5173 = vmatprep.subr.mxu0 0.0
  %5174 = vmatpush1.msra.mxu0 0.0
  %5175 = vmatprep.subr.mxu0 0.0
  %5176 = vmatpush1.msra.mxu0 0.0
  %5177 = vmatprep.subr.mxu0 0.0
  %5178 = vmatpush1.msra.mxu0 0.0
  %5179 = vmatprep.subr.mxu0 0.0
  %5180 = vmatpush1.msra.mxu0 0.0
  %5181 = vmatprep.subr.mxu0 0.0
  %5182 = vmatpush1.msra.mxu0 0.0
  %5183 = vmatprep.subr.mxu0 0.0
  %5184 = vmatpush1.msra.mxu0 0.0
  %5185 = vmatprep.subr.mxu0 0.0
  %5186 = vmatpush1.msra.mxu0 0.0
  %5187 = vmatprep.subr.mxu0 0.0
  %5188 = vmatpush1.msra.mxu0 0.0
  %5189 = vmatprep.subr.mxu0 0.0
  %5190 = vmatpush1.msra.mxu0 0.0
  %5191 = vmatprep.subr.mxu0 0.0
  %5192 = vmatpush1.msra.mxu0 0.0
  %5193 = vmatprep.subr.mxu0 0.0
  %5194 = vmatpush1.msra.mxu0 0.0
  %5195 = vmatprep.mubr.f32.mxu0 0.0
  %5196 = vmatmul.mubr.f32.gmra.mrb[0].mxu0 %v5129
  %v5197 = vpop.f32.mrb[0].mxu0
  %v5198 = vadd.f32 0.0, %v5197
  %v5199 = vpop.f32.mrb[0].mxu0
  %5200 = vdwg.mxu0
  %v5201 = vsel %vm3688, %v3634, 0
  %5203 = vmatprep.subr.mxu0 0.0
  %5204 = vmatpush1.msra.mxu0 %v3444
  %5205 = vmatprep.subr.mxu0 0.0
  %5206 = vmatpush1.msra.mxu0 %v3445
  %5207 = vmatprep.subr.mxu0 0.0
  %5208 = vmatpush1.msra.mxu0 %v3446
  %5209 = vmatprep.subr.mxu0 0.0
  %5210 = vmatpush1.msra.mxu0 %v3447
  %5211 = vmatprep.subr.mxu0 0.0
  %5212 = vmatpush1.msra.mxu0 0.0
  %5213 = vmatprep.subr.mxu0 0.0
  %5214 = vmatpush1.msra.mxu0 0.0
  %5215 = vmatprep.subr.mxu0 0.0
  %5216 = vmatpush1.msra.mxu0 0.0
  %5217 = vmatprep.subr.mxu0 0.0
  %5218 = vmatpush1.msra.mxu0 0.0
  %5219 = vmatprep.subr.mxu0 0.0
  %5220 = vmatpush1.msra.mxu0 0.0
  %5221 = vmatprep.subr.mxu0 0.0
  %5222 = vmatpush1.msra.mxu0 0.0
  %5223 = vmatprep.subr.mxu0 0.0
  %5224 = vmatpush1.msra.mxu0 0.0
  %5225 = vmatprep.subr.mxu0 0.0
  %5226 = vmatpush1.msra.mxu0 0.0
  %5227 = vmatprep.subr.mxu0 0.0
  %5228 = vmatpush1.msra.mxu0 0.0
  %5229 = vmatprep.subr.mxu0 0.0
  %5230 = vmatpush1.msra.mxu0 0.0
  %5231 = vmatprep.subr.mxu0 0.0
  %5232 = vmatpush1.msra.mxu0 0.0
  %5233 = vmatprep.subr.mxu0 0.0
  %5234 = vmatpush1.msra.mxu0 0.0
  %5235 = vmatprep.subr.mxu0 0.0
  %5236 = vmatpush1.msra.mxu0 0.0
  %5237 = vmatprep.subr.mxu0 0.0
  %5238 = vmatpush1.msra.mxu0 0.0
  %5239 = vmatprep.subr.mxu0 0.0
  %5240 = vmatpush1.msra.mxu0 0.0
  %5241 = vmatprep.subr.mxu0 0.0
  %5242 = vmatpush1.msra.mxu0 0.0
  %5243 = vmatprep.subr.mxu0 0.0
  %5244 = vmatpush1.msra.mxu0 0.0
  %5245 = vmatprep.subr.mxu0 0.0
  %5246 = vmatpush1.msra.mxu0 0.0
  %5247 = vmatprep.subr.mxu0 0.0
  %5248 = vmatpush1.msra.mxu0 0.0
  %5249 = vmatprep.subr.mxu0 0.0
  %5250 = vmatpush1.msra.mxu0 0.0
  %5251 = vmatprep.subr.mxu0 0.0
  %5252 = vmatpush1.msra.mxu0 0.0
  %5253 = vmatprep.subr.mxu0 0.0
  %5254 = vmatpush1.msra.mxu0 0.0
  %5255 = vmatprep.subr.mxu0 0.0
  %5256 = vmatpush1.msra.mxu0 0.0
  %5257 = vmatprep.subr.mxu0 0.0
  %5258 = vmatpush1.msra.mxu0 0.0
  %5259 = vmatprep.subr.mxu0 0.0
  %5260 = vmatpush1.msra.mxu0 0.0
  %5261 = vmatprep.subr.mxu0 0.0
  %5262 = vmatpush1.msra.mxu0 0.0
  %5263 = vmatprep.subr.mxu0 0.0
  %5264 = vmatpush1.msra.mxu0 0.0
  %5265 = vmatprep.subr.mxu0 0.0
  %5266 = vmatpush1.msra.mxu0 0.0
  %5267 = vmatprep.mubr.f32.mxu0 0.0
  %5268 = vmatmul.mubr.f32.gmra.mrb[0].mxu0 %v5201
  %v5269 = vpop.f32.mrb[0].mxu0
  %v5270 = vadd.f32 0.0, %v5269
  %v5271 = vpop.f32.mrb[0].mxu0
  %5272 = vdwg.mxu0
  %v5273 = vsel %vm3688, %v3636, 0
  %5275 = vmatprep.subr.mxu0 0.0
  %5276 = vmatpush1.msra.mxu0 %v3448
  %5277 = vmatprep.subr.mxu0 0.0
  %5278 = vmatpush1.msra.mxu0 %v3449
  %5279 = vmatprep.subr.mxu0 0.0
  %5280 = vmatpush1.msra.mxu0 %v3450
  %5281 = vmatprep.subr.mxu0 0.0
  %5282 = vmatpush1.msra.mxu0 %v3451
  %5283 = vmatprep.subr.mxu0 0.0
  %5284 = vmatpush1.msra.mxu0 0.0
  %5285 = vmatprep.subr.mxu0 0.0
  %5286 = vmatpush1.msra.mxu0 0.0
  %5287 = vmatprep.subr.mxu0 0.0
  %5288 = vmatpush1.msra.mxu0 0.0
  %5289 = vmatprep.subr.mxu0 0.0
  %5290 = vmatpush1.msra.mxu0 0.0
  %5291 = vmatprep.subr.mxu0 0.0
  %5292 = vmatpush1.msra.mxu0 0.0
  %5293 = vmatprep.subr.mxu0 0.0
  %5294 = vmatpush1.msra.mxu0 0.0
  %5295 = vmatprep.subr.mxu0 0.0
  %5296 = vmatpush1.msra.mxu0 0.0
  %5297 = vmatprep.subr.mxu0 0.0
  %5298 = vmatpush1.msra.mxu0 0.0
  %5299 = vmatprep.subr.mxu0 0.0
  %5300 = vmatpush1.msra.mxu0 0.0
  %5301 = vmatprep.subr.mxu0 0.0
  %5302 = vmatpush1.msra.mxu0 0.0
  %5303 = vmatprep.subr.mxu0 0.0
  %5304 = vmatpush1.msra.mxu0 0.0
  %5305 = vmatprep.subr.mxu0 0.0
  %5306 = vmatpush1.msra.mxu0 0.0
  %5307 = vmatprep.subr.mxu0 0.0
  %5308 = vmatpush1.msra.mxu0 0.0
  %5309 = vmatprep.subr.mxu0 0.0
  %5310 = vmatpush1.msra.mxu0 0.0
  %5311 = vmatprep.subr.mxu0 0.0
  %5312 = vmatpush1.msra.mxu0 0.0
  %5313 = vmatprep.subr.mxu0 0.0
  %5314 = vmatpush1.msra.mxu0 0.0
  %5315 = vmatprep.subr.mxu0 0.0
  %5316 = vmatpush1.msra.mxu0 0.0
  %5317 = vmatprep.subr.mxu0 0.0
  %5318 = vmatpush1.msra.mxu0 0.0
  %5319 = vmatprep.subr.mxu0 0.0
  %5320 = vmatpush1.msra.mxu0 0.0
  %5321 = vmatprep.subr.mxu0 0.0
  %5322 = vmatpush1.msra.mxu0 0.0
  %5323 = vmatprep.subr.mxu0 0.0
  %5324 = vmatpush1.msra.mxu0 0.0
  %5325 = vmatprep.subr.mxu0 0.0
  %5326 = vmatpush1.msra.mxu0 0.0
  %5327 = vmatprep.subr.mxu0 0.0
  %5328 = vmatpush1.msra.mxu0 0.0
  %5329 = vmatprep.subr.mxu0 0.0
  %5330 = vmatpush1.msra.mxu0 0.0
  %5331 = vmatprep.subr.mxu0 0.0
  %5332 = vmatpush1.msra.mxu0 0.0
  %5333 = vmatprep.subr.mxu0 0.0
  %5334 = vmatpush1.msra.mxu0 0.0
  %5335 = vmatprep.subr.mxu0 0.0
  %5336 = vmatpush1.msra.mxu0 0.0
  %5337 = vmatprep.subr.mxu0 0.0
  %5338 = vmatpush1.msra.mxu0 0.0
  %5339 = vmatprep.mubr.f32.mxu0 0.0
  %5340 = vmatmul.mubr.f32.gmra.mrb[0].mxu0 %v5273
  %v5341 = vpop.f32.mrb[0].mxu0
  %v5342 = vadd.f32 0.0, %v5341
  %v5343 = vpop.f32.mrb[0].mxu0
  %5344 = vdwg.mxu0
  %v5345 = vsel %vm3688, %v3638, 0
  %5347 = vmatprep.subr.mxu0 0.0
  %5348 = vmatpush1.msra.mxu0 %v3452
  %5349 = vmatprep.subr.mxu0 0.0
  %5350 = vmatpush1.msra.mxu0 %v3453
  %5351 = vmatprep.subr.mxu0 0.0
  %5352 = vmatpush1.msra.mxu0 %v3454
  %5353 = vmatprep.subr.mxu0 0.0
  %5354 = vmatpush1.msra.mxu0 %v3455
  %5355 = vmatprep.subr.mxu0 0.0
  %5356 = vmatpush1.msra.mxu0 0.0
  %5357 = vmatprep.subr.mxu0 0.0
  %5358 = vmatpush1.msra.mxu0 0.0
  %5359 = vmatprep.subr.mxu0 0.0
  %5360 = vmatpush1.msra.mxu0 0.0
  %5361 = vmatprep.subr.mxu0 0.0
  %5362 = vmatpush1.msra.mxu0 0.0
  %5363 = vmatprep.subr.mxu0 0.0
  %5364 = vmatpush1.msra.mxu0 0.0
  %5365 = vmatprep.subr.mxu0 0.0
  %5366 = vmatpush1.msra.mxu0 0.0
  %5367 = vmatprep.subr.mxu0 0.0
  %5368 = vmatpush1.msra.mxu0 0.0
  %5369 = vmatprep.subr.mxu0 0.0
  %5370 = vmatpush1.msra.mxu0 0.0
  %5371 = vmatprep.subr.mxu0 0.0
  %5372 = vmatpush1.msra.mxu0 0.0
  %5373 = vmatprep.subr.mxu0 0.0
  %5374 = vmatpush1.msra.mxu0 0.0
  %5375 = vmatprep.subr.mxu0 0.0
  %5376 = vmatpush1.msra.mxu0 0.0
  %5377 = vmatprep.subr.mxu0 0.0
  %5378 = vmatpush1.msra.mxu0 0.0
  %5379 = vmatprep.subr.mxu0 0.0
  %5380 = vmatpush1.msra.mxu0 0.0
  %5381 = vmatprep.subr.mxu0 0.0
  %5382 = vmatpush1.msra.mxu0 0.0
  %5383 = vmatprep.subr.mxu0 0.0
  %5384 = vmatpush1.msra.mxu0 0.0
  %5385 = vmatprep.subr.mxu0 0.0
  %5386 = vmatpush1.msra.mxu0 0.0
  %5387 = vmatprep.subr.mxu0 0.0
  %5388 = vmatpush1.msra.mxu0 0.0
  %5389 = vmatprep.subr.mxu0 0.0
  %5390 = vmatpush1.msra.mxu0 0.0
  %5391 = vmatprep.subr.mxu0 0.0
  %5392 = vmatpush1.msra.mxu0 0.0
  %5393 = vmatprep.subr.mxu0 0.0
  %5394 = vmatpush1.msra.mxu0 0.0
  %5395 = vmatprep.subr.mxu0 0.0
  %5396 = vmatpush1.msra.mxu0 0.0
  %5397 = vmatprep.subr.mxu0 0.0
  %5398 = vmatpush1.msra.mxu0 0.0
  %5399 = vmatprep.subr.mxu0 0.0
  %5400 = vmatpush1.msra.mxu0 0.0
  %5401 = vmatprep.subr.mxu0 0.0
  %5402 = vmatpush1.msra.mxu0 0.0
  %5403 = vmatprep.subr.mxu0 0.0
  %5404 = vmatpush1.msra.mxu0 0.0
  %5405 = vmatprep.subr.mxu0 0.0
  %5406 = vmatpush1.msra.mxu0 0.0
  %5407 = vmatprep.subr.mxu0 0.0
  %5408 = vmatpush1.msra.mxu0 0.0
  %5409 = vmatprep.subr.mxu0 0.0
  %5410 = vmatpush1.msra.mxu0 0.0
  %5411 = vmatprep.mubr.f32.mxu0 0.0
  %5412 = vmatmul.mubr.f32.gmra.mrb[0].mxu0 %v5345
  %v5413 = vpop.f32.mrb[0].mxu0
  %v5414 = vadd.f32 0.0, %v5413
  %v5415 = vpop.f32.mrb[0].mxu0
  %5416 = vdwg.mxu0
  %v5417 = vsel %vm3688, %v3662, 0
  %5419 = vmatprep.subr.mxu0 0.0
  %5420 = vmatpush1.msra.mxu0 %v3456
  %5421 = vmatprep.subr.mxu0 0.0
  %5422 = vmatpush1.msra.mxu0 %v3457
  %5423 = vmatprep.subr.mxu0 0.0
  %5424 = vmatpush1.msra.mxu0 %v3458
  %5425 = vmatprep.subr.mxu0 0.0
  %5426 = vmatpush1.msra.mxu0 %v3459
  %5427 = vmatprep.subr.mxu0 0.0
  %5428 = vmatpush1.msra.mxu0 0.0
  %5429 = vmatprep.subr.mxu0 0.0
  %5430 = vmatpush1.msra.mxu0 0.0
  %5431 = vmatprep.subr.mxu0 0.0
  %5432 = vmatpush1.msra.mxu0 0.0
  %5433 = vmatprep.subr.mxu0 0.0
  %5434 = vmatpush1.msra.mxu0 0.0
  %5435 = vmatprep.subr.mxu0 0.0
  %5436 = vmatpush1.msra.mxu0 0.0
  %5437 = vmatprep.subr.mxu0 0.0
  %5438 = vmatpush1.msra.mxu0 0.0
  %5439 = vmatprep.subr.mxu0 0.0
  %5440 = vmatpush1.msra.mxu0 0.0
  %5441 = vmatprep.subr.mxu0 0.0
  %5442 = vmatpush1.msra.mxu0 0.0
  %5443 = vmatprep.subr.mxu0 0.0
  %5444 = vmatpush1.msra.mxu0 0.0
  %5445 = vmatprep.subr.mxu0 0.0
  %5446 = vmatpush1.msra.mxu0 0.0
  %5447 = vmatprep.subr.mxu0 0.0
  %5448 = vmatpush1.msra.mxu0 0.0
  %5449 = vmatprep.subr.mxu0 0.0
  %5450 = vmatpush1.msra.mxu0 0.0
  %5451 = vmatprep.subr.mxu0 0.0
  %5452 = vmatpush1.msra.mxu0 0.0
  %5453 = vmatprep.subr.mxu0 0.0
  %5454 = vmatpush1.msra.mxu0 0.0
  %5455 = vmatprep.subr.mxu0 0.0
  %5456 = vmatpush1.msra.mxu0 0.0
  %5457 = vmatprep.subr.mxu0 0.0
  %5458 = vmatpush1.msra.mxu0 0.0
  %5459 = vmatprep.subr.mxu0 0.0
  %5460 = vmatpush1.msra.mxu0 0.0
  %5461 = vmatprep.subr.mxu0 0.0
  %5462 = vmatpush1.msra.mxu0 0.0
  %5463 = vmatprep.subr.mxu0 0.0
  %5464 = vmatpush1.msra.mxu0 0.0
  %5465 = vmatprep.subr.mxu0 0.0
  %5466 = vmatpush1.msra.mxu0 0.0
  %5467 = vmatprep.subr.mxu0 0.0
  %5468 = vmatpush1.msra.mxu0 0.0
  %5469 = vmatprep.subr.mxu0 0.0
  %5470 = vmatpush1.msra.mxu0 0.0
  %5471 = vmatprep.subr.mxu0 0.0
  %5472 = vmatpush1.msra.mxu0 0.0
  %5473 = vmatprep.subr.mxu0 0.0
  %5474 = vmatpush1.msra.mxu0 0.0
  %5475 = vmatprep.subr.mxu0 0.0
  %5476 = vmatpush1.msra.mxu0 0.0
  %5477 = vmatprep.subr.mxu0 0.0
  %5478 = vmatpush1.msra.mxu0 0.0
  %5479 = vmatprep.subr.mxu0 0.0
  %5480 = vmatpush1.msra.mxu0 0.0
  %5481 = vmatprep.subr.mxu0 0.0
  %5482 = vmatpush1.msra.mxu0 0.0
  %5483 = vmatprep.mubr.f32.mxu0 0.0
  %5484 = vmatmul.mubr.f32.gmra.mrb[0].mxu0 %v5417
  %v5485 = vpop.f32.mrb[0].mxu0
  %v5486 = vadd.f32 0.0, %v5485
  %v5487 = vpop.f32.mrb[0].mxu0
  %5488 = vdwg.mxu0
  %v5489 = vsel %vm3688, %v3676, 0
  %5491 = vmatprep.subr.mxu0 0.0
  %5492 = vmatpush1.msra.mxu0 %v3460
  %5493 = vmatprep.subr.mxu0 0.0
  %5494 = vmatpush1.msra.mxu0 %v3461
  %5495 = vmatprep.subr.mxu0 0.0
  %5496 = vmatpush1.msra.mxu0 %v3462
  %5497 = vmatprep.subr.mxu0 0.0
  %5498 = vmatpush1.msra.mxu0 %v3463
  %5499 = vmatprep.subr.mxu0 0.0
  %5500 = vmatpush1.msra.mxu0 0.0
  %5501 = vmatprep.subr.mxu0 0.0
  %5502 = vmatpush1.msra.mxu0 0.0
  %5503 = vmatprep.subr.mxu0 0.0
  %5504 = vmatpush1.msra.mxu0 0.0
  %5505 = vmatprep.subr.mxu0 0.0
  %5506 = vmatpush1.msra.mxu0 0.0
  %5507 = vmatprep.subr.mxu0 0.0
  %5508 = vmatpush1.msra.mxu0 0.0
  %5509 = vmatprep.subr.mxu0 0.0
  %5510 = vmatpush1.msra.mxu0 0.0
  %5511 = vmatprep.subr.mxu0 0.0
  %5512 = vmatpush1.msra.mxu0 0.0
  %5513 = vmatprep.subr.mxu0 0.0
  %5514 = vmatpush1.msra.mxu0 0.0
  %5515 = vmatprep.subr.mxu0 0.0
  %5516 = vmatpush1.msra.mxu0 0.0
  %5517 = vmatprep.subr.mxu0 0.0
  %5518 = vmatpush1.msra.mxu0 0.0
  %5519 = vmatprep.subr.mxu0 0.0
  %5520 = vmatpush1.msra.mxu0 0.0
  %5521 = vmatprep.subr.mxu0 0.0
  %5522 = vmatpush1.msra.mxu0 0.0
  %5523 = vmatprep.subr.mxu0 0.0
  %5524 = vmatpush1.msra.mxu0 0.0
  %5525 = vmatprep.subr.mxu0 0.0
  %5526 = vmatpush1.msra.mxu0 0.0
  %5527 = vmatprep.subr.mxu0 0.0
  %5528 = vmatpush1.msra.mxu0 0.0
  %5529 = vmatprep.subr.mxu0 0.0
  %5530 = vmatpush1.msra.mxu0 0.0
  %5531 = vmatprep.subr.mxu0 0.0
  %5532 = vmatpush1.msra.mxu0 0.0
  %5533 = vmatprep.subr.mxu0 0.0
  %5534 = vmatpush1.msra.mxu0 0.0
  %5535 = vmatprep.subr.mxu0 0.0
  %5536 = vmatpush1.msra.mxu0 0.0
  %5537 = vmatprep.subr.mxu0 0.0
  %5538 = vmatpush1.msra.mxu0 0.0
  %5539 = vmatprep.subr.mxu0 0.0
  %5540 = vmatpush1.msra.mxu0 0.0
  %5541 = vmatprep.subr.mxu0 0.0
  %5542 = vmatpush1.msra.mxu0 0.0
  %5543 = vmatprep.subr.mxu0 0.0
  %5544 = vmatpush1.msra.mxu0 0.0
  %5545 = vmatprep.subr.mxu0 0.0
  %5546 = vmatpush1.msra.mxu0 0.0
  %5547 = vmatprep.subr.mxu0 0.0
  %5548 = vmatpush1.msra.mxu0 0.0
  %5549 = vmatprep.subr.mxu0 0.0
  %5550 = vmatpush1.msra.mxu0 0.0
  %5551 = vmatprep.subr.mxu0 0.0
  %5552 = vmatpush1.msra.mxu0 0.0
  %5553 = vmatprep.subr.mxu0 0.0
  %5554 = vmatpush1.msra.mxu0 0.0
  %5555 = vmatprep.mubr.f32.mxu0 0.0
  %5556 = vmatmul.mubr.f32.gmra.mrb[0].mxu0 %v5489
  %v5557 = vpop.f32.mrb[0].mxu0
  %v5558 = vadd.f32 0.0, %v5557
  %v5559 = vpop.f32.mrb[0].mxu0
  %5560 = vdwg.mxu0
  %v5561 = vsel %vm3688, %v3684, 0
  %5563 = vmatprep.subr.mxu0 0.0
  %5564 = vmatpush1.msra.mxu0 %v3464
  %5565 = vmatprep.subr.mxu0 0.0
  %5566 = vmatpush1.msra.mxu0 %v3465
  %5567 = vmatprep.subr.mxu0 0.0
  %5568 = vmatpush1.msra.mxu0 %v3466
  %5569 = vmatprep.subr.mxu0 0.0
  %5570 = vmatpush1.msra.mxu0 %v3467
  %5571 = vmatprep.subr.mxu0 0.0
  %5572 = vmatpush1.msra.mxu0 0.0
  %5573 = vmatprep.subr.mxu0 0.0
  %5574 = vmatpush1.msra.mxu0 0.0
  %5575 = vmatprep.subr.mxu0 0.0
  %5576 = vmatpush1.msra.mxu0 0.0
  %5577 = vmatprep.subr.mxu0 0.0
  %5578 = vmatpush1.msra.mxu0 0.0
  %5579 = vmatprep.subr.mxu0 0.0
  %5580 = vmatpush1.msra.mxu0 0.0
  %5581 = vmatprep.subr.mxu0 0.0
  %5582 = vmatpush1.msra.mxu0 0.0
  %5583 = vmatprep.subr.mxu0 0.0
  %5584 = vmatpush1.msra.mxu0 0.0
  %5585 = vmatprep.subr.mxu0 0.0
  %5586 = vmatpush1.msra.mxu0 0.0
  %5587 = vmatprep.subr.mxu0 0.0
  %5588 = vmatpush1.msra.mxu0 0.0
  %5589 = vmatprep.subr.mxu0 0.0
  %5590 = vmatpush1.msra.mxu0 0.0
  %5591 = vmatprep.subr.mxu0 0.0
  %5592 = vmatpush1.msra.mxu0 0.0
  %5593 = vmatprep.subr.mxu0 0.0
  %5594 = vmatpush1.msra.mxu0 0.0
  %5595 = vmatprep.subr.mxu0 0.0
  %5596 = vmatpush1.msra.mxu0 0.0
  %5597 = vmatprep.subr.mxu0 0.0
  %5598 = vmatpush1.msra.mxu0 0.0
  %5599 = vmatprep.subr.mxu0 0.0
  %5600 = vmatpush1.msra.mxu0 0.0
  %5601 = vmatprep.subr.mxu0 0.0
  %5602 = vmatpush1.msra.mxu0 0.0
  %5603 = vmatprep.subr.mxu0 0.0
  %5604 = vmatpush1.msra.mxu0 0.0
  %5605 = vmatprep.subr.mxu0 0.0
  %5606 = vmatpush1.msra.mxu0 0.0
  %5607 = vmatprep.subr.mxu0 0.0
  %5608 = vmatpush1.msra.mxu0 0.0
  %5609 = vmatprep.subr.mxu0 0.0
  %5610 = vmatpush1.msra.mxu0 0.0
  %5611 = vmatprep.subr.mxu0 0.0
  %5612 = vmatpush1.msra.mxu0 0.0
  %5613 = vmatprep.subr.mxu0 0.0
  %5614 = vmatpush1.msra.mxu0 0.0
  %5615 = vmatprep.subr.mxu0 0.0
  %5616 = vmatpush1.msra.mxu0 0.0
  %5617 = vmatprep.subr.mxu0 0.0
  %5618 = vmatpush1.msra.mxu0 0.0
  %5619 = vmatprep.subr.mxu0 0.0
  %5620 = vmatpush1.msra.mxu0 0.0
  %5621 = vmatprep.subr.mxu0 0.0
  %5622 = vmatpush1.msra.mxu0 0.0
  %5623 = vmatprep.subr.mxu0 0.0
  %5624 = vmatpush1.msra.mxu0 0.0
  %5625 = vmatprep.subr.mxu0 0.0
  %5626 = vmatpush1.msra.mxu0 0.0
  %5627 = vmatprep.mubr.f32.mxu0 0.0
  %5628 = vmatmul.mubr.f32.gmra.mrb[0].mxu0 %v5561
  %v5629 = vpop.f32.mrb[0].mxu0
  %v5630 = vadd.f32 0.0, %v5629
  %v5631 = vpop.f32.mrb[0].mxu0
  %5632 = vdwg.mxu0
  %v5633 = vsel %vm3688, %v3686, 0
  %5635 = vmatprep.subr.mxu0 0.0
  %5636 = vmatpush1.msra.mxu0 %v3468
  %5637 = vmatprep.subr.mxu0 0.0
  %5638 = vmatpush1.msra.mxu0 %v3469
  %5639 = vmatprep.subr.mxu0 0.0
  %5640 = vmatpush1.msra.mxu0 %v3470
  %5641 = vmatprep.subr.mxu0 0.0
  %5642 = vmatpush1.msra.mxu0 %v3471
  %5643 = vmatprep.subr.mxu0 0.0
  %5644 = vmatpush1.msra.mxu0 0.0
  %5645 = vmatprep.subr.mxu0 0.0
  %5646 = vmatpush1.msra.mxu0 0.0
  %5647 = vmatprep.subr.mxu0 0.0
  %5648 = vmatpush1.msra.mxu0 0.0
  %5649 = vmatprep.subr.mxu0 0.0
  %5650 = vmatpush1.msra.mxu0 0.0
  %5651 = vmatprep.subr.mxu0 0.0
  %5652 = vmatpush1.msra.mxu0 0.0
  %5653 = vmatprep.subr.mxu0 0.0
  %5654 = vmatpush1.msra.mxu0 0.0
  %5655 = vmatprep.subr.mxu0 0.0
  %5656 = vmatpush1.msra.mxu0 0.0
  %5657 = vmatprep.subr.mxu0 0.0
  %5658 = vmatpush1.msra.mxu0 0.0
  %5659 = vmatprep.subr.mxu0 0.0
  %5660 = vmatpush1.msra.mxu0 0.0
  %5661 = vmatprep.subr.mxu0 0.0
  %5662 = vmatpush1.msra.mxu0 0.0
  %5663 = vmatprep.subr.mxu0 0.0
  %5664 = vmatpush1.msra.mxu0 0.0
  %5665 = vmatprep.subr.mxu0 0.0
  %5666 = vmatpush1.msra.mxu0 0.0
  %5667 = vmatprep.subr.mxu0 0.0
  %5668 = vmatpush1.msra.mxu0 0.0
  %5669 = vmatprep.subr.mxu0 0.0
  %5670 = vmatpush1.msra.mxu0 0.0
  %5671 = vmatprep.subr.mxu0 0.0
  %5672 = vmatpush1.msra.mxu0 0.0
  %5673 = vmatprep.subr.mxu0 0.0
  %5674 = vmatpush1.msra.mxu0 0.0
  %5675 = vmatprep.subr.mxu0 0.0
  %5676 = vmatpush1.msra.mxu0 0.0
  %5677 = vmatprep.subr.mxu0 0.0
  %5678 = vmatpush1.msra.mxu0 0.0
  %5679 = vmatprep.subr.mxu0 0.0
  %5680 = vmatpush1.msra.mxu0 0.0
  %5681 = vmatprep.subr.mxu0 0.0
  %5682 = vmatpush1.msra.mxu0 0.0
  %5683 = vmatprep.subr.mxu0 0.0
  %5684 = vmatpush1.msra.mxu0 0.0
  %5685 = vmatprep.subr.mxu0 0.0
  %5686 = vmatpush1.msra.mxu0 0.0
  %5687 = vmatprep.subr.mxu0 0.0
  %5688 = vmatpush1.msra.mxu0 0.0
  %5689 = vmatprep.subr.mxu0 0.0
  %5690 = vmatpush1.msra.mxu0 0.0
  %5691 = vmatprep.subr.mxu0 0.0
  %5692 = vmatpush1.msra.mxu0 0.0
  %5693 = vmatprep.subr.mxu0 0.0
  %5694 = vmatpush1.msra.mxu0 0.0
  %5695 = vmatprep.subr.mxu0 0.0
  %5696 = vmatpush1.msra.mxu0 0.0
  %5697 = vmatprep.subr.mxu0 0.0
  %5698 = vmatpush1.msra.mxu0 0.0
  %5699 = vmatprep.mubr.f32.mxu0 0.0
  %5700 = vmatmul.mubr.f32.gmra.mrb[0].mxu0 %v5633
  %v5701 = vpop.f32.mrb[0].mxu0
  %v5702 = vadd.f32 0.0, %v5701
  %v5703 = vpop.f32.mrb[0].mxu0
  %5704 = vdwg.mxu0
  %v5705 = vsel %vm3688, %v3669, 0
  %5707 = vmatprep.subr.mxu0 0.0
  %5708 = vmatpush1.msra.mxu0 %v3472
  %5709 = vmatprep.subr.mxu0 0.0
  %5710 = vmatpush1.msra.mxu0 %v3473
  %5711 = vmatprep.subr.mxu0 0.0
  %5712 = vmatpush1.msra.mxu0 %v3474
  %5713 = vmatprep.subr.mxu0 0.0
  %5714 = vmatpush1.msra.mxu0 %v3475
  %5715 = vmatprep.subr.mxu0 0.0
  %5716 = vmatpush1.msra.mxu0 0.0
  %5717 = vmatprep.subr.mxu0 0.0
  %5718 = vmatpush1.msra.mxu0 0.0
  %5719 = vmatprep.subr.mxu0 0.0
  %5720 = vmatpush1.msra.mxu0 0.0
  %5721 = vmatprep.subr.mxu0 0.0
  %5722 = vmatpush1.msra.mxu0 0.0
  %5723 = vmatprep.subr.mxu0 0.0
  %5724 = vmatpush1.msra.mxu0 0.0
  %5725 = vmatprep.subr.mxu0 0.0
  %5726 = vmatpush1.msra.mxu0 0.0
  %5727 = vmatprep.subr.mxu0 0.0
  %5728 = vmatpush1.msra.mxu0 0.0
  %5729 = vmatprep.subr.mxu0 0.0
  %5730 = vmatpush1.msra.mxu0 0.0
  %5731 = vmatprep.subr.mxu0 0.0
  %5732 = vmatpush1.msra.mxu0 0.0
  %5733 = vmatprep.subr.mxu0 0.0
  %5734 = vmatpush1.msra.mxu0 0.0
  %5735 = vmatprep.subr.mxu0 0.0
  %5736 = vmatpush1.msra.mxu0 0.0
  %5737 = vmatprep.subr.mxu0 0.0
  %5738 = vmatpush1.msra.mxu0 0.0
  %5739 = vmatprep.subr.mxu0 0.0
  %5740 = vmatpush1.msra.mxu0 0.0
  %5741 = vmatprep.subr.mxu0 0.0
  %5742 = vmatpush1.msra.mxu0 0.0
  %5743 = vmatprep.subr.mxu0 0.0
  %5744 = vmatpush1.msra.mxu0 0.0
  %5745 = vmatprep.subr.mxu0 0.0
  %5746 = vmatpush1.msra.mxu0 0.0
  %5747 = vmatprep.subr.mxu0 0.0
  %5748 = vmatpush1.msra.mxu0 0.0
  %5749 = vmatprep.subr.mxu0 0.0
  %5750 = vmatpush1.msra.mxu0 0.0
  %5751 = vmatprep.subr.mxu0 0.0
  %5752 = vmatpush1.msra.mxu0 0.0
  %5753 = vmatprep.subr.mxu0 0.0
  %5754 = vmatpush1.msra.mxu0 0.0
  %5755 = vmatprep.subr.mxu0 0.0
  %5756 = vmatpush1.msra.mxu0 0.0
  %5757 = vmatprep.subr.mxu0 0.0
  %5758 = vmatpush1.msra.mxu0 0.0
  %5759 = vmatprep.subr.mxu0 0.0
  %5760 = vmatpush1.msra.mxu0 0.0
  %5761 = vmatprep.subr.mxu0 0.0
  %5762 = vmatpush1.msra.mxu0 0.0
  %5763 = vmatprep.subr.mxu0 0.0
  %5764 = vmatpush1.msra.mxu0 0.0
  %5765 = vmatprep.subr.mxu0 0.0
  %5766 = vmatpush1.msra.mxu0 0.0
  %5767 = vmatprep.subr.mxu0 0.0
  %5768 = vmatpush1.msra.mxu0 0.0
  %5769 = vmatprep.subr.mxu0 0.0
  %5770 = vmatpush1.msra.mxu0 0.0
  %5771 = vmatprep.mubr.f32.mxu0 0.0
  %5772 = vmatmul.mubr.f32.gmra.mrb[0].mxu0 %v5705
  %v5773 = vpop.f32.mrb[0].mxu0
  %v5774 = vadd.f32 0.0, %v5773
  %v5775 = vpop.f32.mrb[0].mxu0
  %5776 = vdwg.mxu0
  %v5777 = vsel %vm3688, %v3683, 0
  %5779 = vmatprep.subr.mxu0 0.0
  %5780 = vmatpush1.msra.mxu0 %v3476
  %5781 = vmatprep.subr.mxu0 0.0
  %5782 = vmatpush1.msra.mxu0 %v3477
  %5783 = vmatprep.subr.mxu0 0.0
  %5784 = vmatpush1.msra.mxu0 %v3478
  %5785 = vmatprep.subr.mxu0 0.0
  %5786 = vmatpush1.msra.mxu0 %v3479
  %5787 = vmatprep.subr.mxu0 0.0
  %5788 = vmatpush1.msra.mxu0 0.0
  %5789 = vmatprep.subr.mxu0 0.0
  %5790 = vmatpush1.msra.mxu0 0.0
  %5791 = vmatprep.subr.mxu0 0.0
  %5792 = vmatpush1.msra.mxu0 0.0
  %5793 = vmatprep.subr.mxu0 0.0
  %5794 = vmatpush1.msra.mxu0 0.0
  %5795 = vmatprep.subr.mxu0 0.0
  %5796 = vmatpush1.msra.mxu0 0.0
  %5797 = vmatprep.subr.mxu0 0.0
  %5798 = vmatpush1.msra.mxu0 0.0
  %5799 = vmatprep.subr.mxu0 0.0
  %5800 = vmatpush1.msra.mxu0 0.0
  %5801 = vmatprep.subr.mxu0 0.0
  %5802 = vmatpush1.msra.mxu0 0.0
  %5803 = vmatprep.subr.mxu0 0.0
  %5804 = vmatpush1.msra.mxu0 0.0
  %5805 = vmatprep.subr.mxu0 0.0
  %5806 = vmatpush1.msra.mxu0 0.0
  %5807 = vmatprep.subr.mxu0 0.0
  %5808 = vmatpush1.msra.mxu0 0.0
  %5809 = vmatprep.subr.mxu0 0.0
  %5810 = vmatpush1.msra.mxu0 0.0
  %5811 = vmatprep.subr.mxu0 0.0
  %5812 = vmatpush1.msra.mxu0 0.0
  %5813 = vmatprep.subr.mxu0 0.0
  %5814 = vmatpush1.msra.mxu0 0.0
  %5815 = vmatprep.subr.mxu0 0.0
  %5816 = vmatpush1.msra.mxu0 0.0
  %5817 = vmatprep.subr.mxu0 0.0
  %5818 = vmatpush1.msra.mxu0 0.0
  %5819 = vmatprep.subr.mxu0 0.0
  %5820 = vmatpush1.msra.mxu0 0.0
  %5821 = vmatprep.subr.mxu0 0.0
  %5822 = vmatpush1.msra.mxu0 0.0
  %5823 = vmatprep.subr.mxu0 0.0
  %5824 = vmatpush1.msra.mxu0 0.0
  %5825 = vmatprep.subr.mxu0 0.0
  %5826 = vmatpush1.msra.mxu0 0.0
  %5827 = vmatprep.subr.mxu0 0.0
  %5828 = vmatpush1.msra.mxu0 0.0
  %5829 = vmatprep.subr.mxu0 0.0
  %5830 = vmatpush1.msra.mxu0 0.0
  %5831 = vmatprep.subr.mxu0 0.0
  %5832 = vmatpush1.msra.mxu0 0.0
  %5833 = vmatprep.subr.mxu0 0.0
  %5834 = vmatpush1.msra.mxu0 0.0
  %5835 = vmatprep.subr.mxu0 0.0
  %5836 = vmatpush1.msra.mxu0 0.0
  %5837 = vmatprep.subr.mxu0 0.0
  %5838 = vmatpush1.msra.mxu0 0.0
  %5839 = vmatprep.subr.mxu0 0.0
  %5840 = vmatpush1.msra.mxu0 0.0
  %5841 = vmatprep.subr.mxu0 0.0
  %5842 = vmatpush1.msra.mxu0 0.0
  %5843 = vmatprep.mubr.f32.mxu0 0.0
  %5844 = vmatmul.mubr.f32.gmra.mrb[0].mxu0 %v5777
  %v5845 = vpop.f32.mrb[0].mxu0
  %v5846 = vadd.f32 0.0, %v5845
  %v5847 = vpop.f32.mrb[0].mxu0
  %5848 = vdwg.mxu0
  %v5849 = vsel %vm3688, %v3685, 0
  %5851 = vmatprep.subr.mxu0 0.0
  %5852 = vmatpush1.msra.mxu0 %v3480
  %5853 = vmatprep.subr.mxu0 0.0
  %5854 = vmatpush1.msra.mxu0 %v3481
  %5855 = vmatprep.subr.mxu0 0.0
  %5856 = vmatpush1.msra.mxu0 %v3482
  %5857 = vmatprep.subr.mxu0 0.0
  %5858 = vmatpush1.msra.mxu0 %v3483
  %5859 = vmatprep.subr.mxu0 0.0
  %5860 = vmatpush1.msra.mxu0 0.0
  %5861 = vmatprep.subr.mxu0 0.0
  %5862 = vmatpush1.msra.mxu0 0.0
  %5863 = vmatprep.subr.mxu0 0.0
  %5864 = vmatpush1.msra.mxu0 0.0
  %5865 = vmatprep.subr.mxu0 0.0
  %5866 = vmatpush1.msra.mxu0 0.0
  %5867 = vmatprep.subr.mxu0 0.0
  %5868 = vmatpush1.msra.mxu0 0.0
  %5869 = vmatprep.subr.mxu0 0.0
  %5870 = vmatpush1.msra.mxu0 0.0
  %5871 = vmatprep.subr.mxu0 0.0
  %5872 = vmatpush1.msra.mxu0 0.0
  %5873 = vmatprep.subr.mxu0 0.0
  %5874 = vmatpush1.msra.mxu0 0.0
  %5875 = vmatprep.subr.mxu0 0.0
  %5876 = vmatpush1.msra.mxu0 0.0
  %5877 = vmatprep.subr.mxu0 0.0
  %5878 = vmatpush1.msra.mxu0 0.0
  %5879 = vmatprep.subr.mxu0 0.0
  %5880 = vmatpush1.msra.mxu0 0.0
  %5881 = vmatprep.subr.mxu0 0.0
  %5882 = vmatpush1.msra.mxu0 0.0
  %5883 = vmatprep.subr.mxu0 0.0
  %5884 = vmatpush1.msra.mxu0 0.0
  %5885 = vmatprep.subr.mxu0 0.0
  %5886 = vmatpush1.msra.mxu0 0.0
  %5887 = vmatprep.subr.mxu0 0.0
  %5888 = vmatpush1.msra.mxu0 0.0
  %5889 = vmatprep.subr.mxu0 0.0
  %5890 = vmatpush1.msra.mxu0 0.0
  %5891 = vmatprep.subr.mxu0 0.0
  %5892 = vmatpush1.msra.mxu0 0.0
  %5893 = vmatprep.subr.mxu0 0.0
  %5894 = vmatpush1.msra.mxu0 0.0
  %5895 = vmatprep.subr.mxu0 0.0
  %5896 = vmatpush1.msra.mxu0 0.0
  %5897 = vmatprep.subr.mxu0 0.0
  %5898 = vmatpush1.msra.mxu0 0.0
  %5899 = vmatprep.subr.mxu0 0.0
  %5900 = vmatpush1.msra.mxu0 0.0
  %5901 = vmatprep.subr.mxu0 0.0
  %5902 = vmatpush1.msra.mxu0 0.0
  %5903 = vmatprep.subr.mxu0 0.0
  %5904 = vmatpush1.msra.mxu0 0.0
  %5905 = vmatprep.subr.mxu0 0.0
  %5906 = vmatpush1.msra.mxu0 0.0
  %5907 = vmatprep.subr.mxu0 0.0
  %5908 = vmatpush1.msra.mxu0 0.0
  %5909 = vmatprep.subr.mxu0 0.0
  %5910 = vmatpush1.msra.mxu0 0.0
  %5911 = vmatprep.subr.mxu0 0.0
  %5912 = vmatpush1.msra.mxu0 0.0
  %5913 = vmatprep.subr.mxu0 0.0
  %5914 = vmatpush1.msra.mxu0 0.0
  %5915 = vmatprep.mubr.f32.mxu0 0.0
  %5916 = vmatmul.mubr.f32.gmra.mrb[0].mxu0 %v5849
  %v5917 = vpop.f32.mrb[0].mxu0
  %v5918 = vadd.f32 0.0, %v5917
  %v5919 = vpop.f32.mrb[0].mxu0
  %5920 = vdwg.mxu0
  %v5921 = vsel %vm3688, %v3687, 0
  %5923 = vmatprep.subr.mxu0 0.0
  %5924 = vmatpush1.msra.mxu0 %v3484
  %5925 = vmatprep.subr.mxu0 0.0
  %5926 = vmatpush1.msra.mxu0 %v3485
  %5927 = vmatprep.subr.mxu0 0.0
  %5928 = vmatpush1.msra.mxu0 %v3486
  %5929 = vmatprep.subr.mxu0 0.0
  %5930 = vmatpush1.msra.mxu0 %v3487
  %5931 = vmatprep.subr.mxu0 0.0
  %5932 = vmatpush1.msra.mxu0 0.0
  %5933 = vmatprep.subr.mxu0 0.0
  %5934 = vmatpush1.msra.mxu0 0.0
  %5935 = vmatprep.subr.mxu0 0.0
  %5936 = vmatpush1.msra.mxu0 0.0
  %5937 = vmatprep.subr.mxu0 0.0
  %5938 = vmatpush1.msra.mxu0 0.0
  %5939 = vmatprep.subr.mxu0 0.0
  %5940 = vmatpush1.msra.mxu0 0.0
  %5941 = vmatprep.subr.mxu0 0.0
  %5942 = vmatpush1.msra.mxu0 0.0
  %5943 = vmatprep.subr.mxu0 0.0
  %5944 = vmatpush1.msra.mxu0 0.0
  %5945 = vmatprep.subr.mxu0 0.0
  %5946 = vmatpush1.msra.mxu0 0.0
  %5947 = vmatprep.subr.mxu0 0.0
  %5948 = vmatpush1.msra.mxu0 0.0
  %5949 = vmatprep.subr.mxu0 0.0
  %5950 = vmatpush1.msra.mxu0 0.0
  %5951 = vmatprep.subr.mxu0 0.0
  %5952 = vmatpush1.msra.mxu0 0.0
  %5953 = vmatprep.subr.mxu0 0.0
  %5954 = vmatpush1.msra.mxu0 0.0
  %5955 = vmatprep.subr.mxu0 0.0
  %5956 = vmatpush1.msra.mxu0 0.0
  %5957 = vmatprep.subr.mxu0 0.0
  %5958 = vmatpush1.msra.mxu0 0.0
  %5959 = vmatprep.subr.mxu0 0.0
  %5960 = vmatpush1.msra.mxu0 0.0
  %5961 = vmatprep.subr.mxu0 0.0
  %5962 = vmatpush1.msra.mxu0 0.0
  %5963 = vmatprep.subr.mxu0 0.0
  %5964 = vmatpush1.msra.mxu0 0.0
  %5965 = vmatprep.subr.mxu0 0.0
  %5966 = vmatpush1.msra.mxu0 0.0
  %5967 = vmatprep.subr.mxu0 0.0
  %5968 = vmatpush1.msra.mxu0 0.0
  %5969 = vmatprep.subr.mxu0 0.0
  %5970 = vmatpush1.msra.mxu0 0.0
  %5971 = vmatprep.subr.mxu0 0.0
  %5972 = vmatpush1.msra.mxu0 0.0
  %5973 = vmatprep.subr.mxu0 0.0
  %5974 = vmatpush1.msra.mxu0 0.0
  %5975 = vmatprep.subr.mxu0 0.0
  %5976 = vmatpush1.msra.mxu0 0.0
  %5977 = vmatprep.subr.mxu0 0.0
  %5978 = vmatpush1.msra.mxu0 0.0
  %5979 = vmatprep.subr.mxu0 0.0
  %5980 = vmatpush1.msra.mxu0 0.0
  %5981 = vmatprep.subr.mxu0 0.0
  %5982 = vmatpush1.msra.mxu0 0.0
  %5983 = vmatprep.subr.mxu0 0.0
  %5984 = vmatpush1.msra.mxu0 0.0
  %5985 = vmatprep.subr.mxu0 0.0
  %5986 = vmatpush1.msra.mxu0 0.0
  %5987 = vmatprep.mubr.f32.mxu0 0.0
  %5988 = vmatmul.mubr.f32.gmra.mrb[0].mxu0 %v5921
  %v5989 = vpop.f32.mrb[0].mxu0
  %v5990 = vadd.f32 0.0, %v5989
  %v5991 = vpop.f32.mrb[0].mxu0
  %5992 = vdwg.mxu0
  %v6025 = vrot.slane %v3830, 7
  %vm6026 = vcmask 1041409
  %v6027 = vsel %vm6026, %v6025, %v3758
  %v6028 = vrot.slane %v3902, 6
  %vm6029 = vcmask 1042434
  %v6030 = vsel %vm6029, %v6028, %v6027
  %v6031 = vrot.slane %v3974, 5
  %vm6032 = vcmask 1043459
  %v6033 = vsel %vm6032, %v6031, %v6030
  %v6034 = vrot.slane %v4046, 4
  %vm6035 = vcmask 1044484
  %v6036 = vsel %vm6035, %v6034, %v6033
  %v6037 = vrot.slane %v4118, 3
  %vm6038 = vcmask 1045509
  %v6039 = vsel %vm6038, %v6037, %v6036
  %v6040 = vrot.slane %v4190, 2
  %vm6041 = vcmask 1046534
  %v6042 = vsel %vm6041, %v6040, %v6039
  %v6043 = vrot.slane %v4262, 1
  %vm6044 = vcmask 1047559
  %v6045 = vsel %vm6044, %v6043, %v6042
  %v6046 = vrot.slane %v4406, 7
  %v6047 = vsel %vm6026, %v6046, %v4334
  %v6048 = vrot.slane %v4478, 6
  %v6049 = vsel %vm6029, %v6048, %v6047
  %v6050 = vrot.slane %v4550, 5
  %v6051 = vsel %vm6032, %v6050, %v6049
  %v6052 = vrot.slane %v4622, 4
  %v6053 = vsel %vm6035, %v6052, %v6051
  %v6054 = vrot.slane %v4694, 3
  %v6055 = vsel %vm6038, %v6054, %v6053
  %v6056 = vrot.slane %v4766, 2
  %v6057 = vsel %vm6041, %v6056, %v6055
  %v6058 = vrot.slane %v4838, 1
  %v6059 = vsel %vm6044, %v6058, %v6057
  %v6060 = vrot.slane %v4982, 7
  %v6061 = vsel %vm6026, %v6060, %v4910
  %v6062 = vrot.slane %v5054, 6
  %v6063 = vsel %vm6029, %v6062, %v6061
  %v6064 = vrot.slane %v5126, 5
  %v6065 = vsel %vm6032, %v6064, %v6063
  %v6066 = vrot.slane %v5198, 4
  %v6067 = vsel %vm6035, %v6066, %v6065
  %v6068 = vrot.slane %v5270, 3
  %v6069 = vsel %vm6038, %v6068, %v6067
  %v6070 = vrot.slane %v5342, 2
  %v6071 = vsel %vm6041, %v6070, %v6069
  %v6072 = vrot.slane %v5414, 1
  %v6073 = vsel %vm6044, %v6072, %v6071
  %v6074 = vrot.slane %v5558, 7
  %v6075 = vsel %vm6026, %v6074, %v5486
  %v6076 = vrot.slane %v5630, 6
  %v6077 = vsel %vm6029, %v6076, %v6075
  %v6078 = vrot.slane %v5702, 5
  %v6079 = vsel %vm6032, %v6078, %v6077
  %v6080 = vrot.slane %v5774, 4
  %v6081 = vsel %vm6035, %v6080, %v6079
  %v6082 = vrot.slane %v5846, 3
  %v6083 = vsel %vm6038, %v6082, %v6081
  %v6084 = vrot.slane %v5918, 2
  %v6085 = vsel %vm6041, %v6084, %v6083
  %v6086 = vrot.slane %v5990, 1
  %v6087 = vsel %vm6044, %v6086, %v6085
  %6092 = vst [vmem:[%s8] sm:$0xff] %v6045
  %6093 = vst [vmem:[%s8 + $0x8] sm:$0xff] %v6059
  %6094 = vst [vmem:[%s8 + $0x10] sm:$0xff] %v6073
  %6095 = vst [vmem:[%s8 + $0x18] sm:$0xff] %v6087
  %v6096 = vmul.f32 %v3758, %v3758
  %v6097 = vmul.f32 %v3830, %v3830
  %v6098 = vmul.f32 %v3902, %v3902
  %v6099 = vmul.f32 %v3974, %v3974
  %v6100 = vmul.f32 %v4046, %v4046
  %v6101 = vmul.f32 %v4118, %v4118
  %v6102 = vmul.f32 %v4190, %v4190
  %v6103 = vmul.f32 %v4262, %v4262
  %v6104 = vmul.f32 %v4334, %v4334
  %v6105 = vmul.f32 %v4406, %v4406
  %v6106 = vmul.f32 %v4478, %v4478
  %v6107 = vmul.f32 %v4550, %v4550
  %v6108 = vmul.f32 %v4622, %v4622
  %v6109 = vmul.f32 %v4694, %v4694
  %v6110 = vmul.f32 %v4766, %v4766
  %v6111 = vmul.f32 %v4838, %v4838
  %v6112 = vmul.f32 %v4910, %v4910
  %v6113 = vmul.f32 %v4982, %v4982
  %v6114 = vmul.f32 %v5054, %v5054
  %v6115 = vmul.f32 %v5126, %v5126
  %v6116 = vmul.f32 %v5198, %v5198
  %v6117 = vmul.f32 %v5270, %v5270
  %v6118 = vmul.f32 %v5342, %v5342
  %v6119 = vmul.f32 %v5414, %v5414
  %v6120 = vmul.f32 %v5486, %v5486
  %v6121 = vmul.f32 %v5558, %v5558
  %v6122 = vmul.f32 %v5630, %v5630
  %v6123 = vmul.f32 %v5702, %v5702
  %v6124 = vmul.f32 %v5774, %v5774
  %v6125 = vmul.f32 %v5846, %v5846
  %v6126 = vmul.f32 %v5918, %v5918
  %v6127 = vmul.f32 %v5990, %v5990
  %v6160 = vrot.slane %v6097, 7
  %v6161 = vsel %vm6026, %v6160, %v6096
  %v6162 = vrot.slane %v6098, 6
  %v6163 = vsel %vm6029, %v6162, %v6161
  %v6164 = vrot.slane %v6099, 5
  %v6165 = vsel %vm6032, %v6164, %v6163
  %v6166 = vrot.slane %v6100, 4
  %v6167 = vsel %vm6035, %v6166, %v6165
  %v6168 = vrot.slane %v6101, 3
  %v6169 = vsel %vm6038, %v6168, %v6167
  %v6170 = vrot.slane %v6102, 2
  %v6171 = vsel %vm6041, %v6170, %v6169
  %v6172 = vrot.slane %v6103, 1
  %v6173 = vsel %vm6044, %v6172, %v6171
  %v6174 = vrot.slane %v6105, 7
  %v6175 = vsel %vm6026, %v6174, %v6104
  %v6176 = vrot.slane %v6106, 6
  %v6177 = vsel %vm6029, %v6176, %v6175
  %v6178 = vrot.slane %v6107, 5
  %v6179 = vsel %vm6032, %v6178, %v6177
  %v6180 = vrot.slane %v6108, 4
  %v6181 = vsel %vm6035, %v6180, %v6179
  %v6182 = vrot.slane %v6109, 3
  %v6183 = vsel %vm6038, %v6182, %v6181
  %v6184 = vrot.slane %v6110, 2
  %v6185 = vsel %vm6041, %v6184, %v6183
  %v6186 = vrot.slane %v6111, 1
  %v6187 = vsel %vm6044, %v6186, %v6185
  %v6188 = vrot.slane %v6113, 7
  %v6189 = vsel %vm6026, %v6188, %v6112
  %v6190 = vrot.slane %v6114, 6
  %v6191 = vsel %vm6029, %v6190, %v6189
  %v6192 = vrot.slane %v6115, 5
  %v6193 = vsel %vm6032, %v6192, %v6191
  %v6194 = vrot.slane %v6116, 4
  %v6195 = vsel %vm6035, %v6194, %v6193
  %v6196 = vrot.slane %v6117, 3
  %v6197 = vsel %vm6038, %v6196, %v6195
  %v6198 = vrot.slane %v6118, 2
  %v6199 = vsel %vm6041, %v6198, %v6197
  %v6200 = vrot.slane %v6119, 1
  %v6201 = vsel %vm6044, %v6200, %v6199
  %v6202 = vrot.slane %v6121, 7
  %v6203 = vsel %vm6026, %v6202, %v6120
  %v6204 = vrot.slane %v6122, 6
  %v6205 = vsel %vm6029, %v6204, %v6203
  %v6206 = vrot.slane %v6123, 5
  %v6207 = vsel %vm6032, %v6206, %v6205
  %v6208 = vrot.slane %v6124, 4
  %v6209 = vsel %vm6035, %v6208, %v6207
  %v6210 = vrot.slane %v6125, 3
  %v6211 = vsel %vm6038, %v6210, %v6209
  %v6212 = vrot.slane %v6126, 2
  %v6213 = vsel %vm6041, %v6212, %v6211
  %v6214 = vrot.slane %v6127, 1
  %v6215 = vsel %vm6044, %v6214, %v6213
  %6220 = vadd.xlane.f32.xlu0 %v6173
  %v6221 = vpop.xlane.xlu0 %6220
  %6222 = vadd.xlane.f32.xlu0 %v6187
  %v6223 = vpop.xlane.xlu0 %6222
  %6224 = vadd.xlane.f32.xlu0 %v6201
  %v6225 = vpop.xlane.xlu0 %6224
  %6226 = vadd.xlane.f32.xlu0 %v6215
  %v6227 = vpop.xlane.xlu0 %6226
  %6228 = vmatprep.subr.mxu0 0.0
  %6229 = vmatpush1.xpose.msra.mxu0 %v6045
  %6230 = vmatprep.subr.mxu0 0.0
  %6231 = vmatpush1.xpose.msra.mxu0 %v6059
  %6232 = vmatprep.subr.mxu0 0.0
  %6233 = vmatpush1.xpose.msra.mxu0 %v6073
  %6234 = vmatprep.subr.mxu0 0.0
  %6235 = vmatpush1.xpose.msra.mxu0 %v6087
  %6236 = vmatprep.subr.mxu0 0.0
  %6237 = vmatpush1.xpose.msra.mxu0 0.0
  %6238 = vmatprep.subr.mxu0 0.0
  %6239 = vmatpush1.xpose.msra.mxu0 0.0
  %6240 = vmatprep.subr.mxu0 0.0
  %6241 = vmatpush1.xpose.msra.mxu0 0.0
  %6242 = vmatprep.subr.mxu0 0.0
  %6243 = vmatpush1.xpose.msra.mxu0 0.0
  %6244 = vmatprep.subr.mxu0 0.0
  %6245 = vmatpush1.xpose.msra.mxu0 0.0
  %6246 = vmatprep.subr.mxu0 0.0
  %6247 = vmatpush1.xpose.msra.mxu0 0.0
  %6248 = vmatprep.subr.mxu0 0.0
  %6249 = vmatpush1.xpose.msra.mxu0 0.0
  %6250 = vmatprep.subr.mxu0 0.0
  %6251 = vmatpush1.xpose.msra.mxu0 0.0
  %6252 = vmatprep.subr.mxu0 0.0
  %6253 = vmatpush1.xpose.msra.mxu0 0.0
  %6254 = vmatprep.subr.mxu0 0.0
  %6255 = vmatpush1.xpose.msra.mxu0 0.0
  %6256 = vmatprep.subr.mxu0 0.0
  %6257 = vmatpush1.xpose.msra.mxu0 0.0
  %6258 = vmatprep.subr.mxu0 0.0
  %6259 = vmatpush1.xpose.msra.mxu0 0.0
  %6260 = vmatprep.subr.mxu0 0.0
  %6261 = vmatpush1.xpose.msra.mxu0 0.0
  %6262 = vmatprep.subr.mxu0 0.0
  %6263 = vmatpush1.xpose.msra.mxu0 0.0
  %6264 = vmatprep.subr.mxu0 0.0
  %6265 = vmatpush1.xpose.msra.mxu0 0.0
  %6266 = vmatprep.subr.mxu0 0.0
  %6267 = vmatpush1.xpose.msra.mxu0 0.0
  %6268 = vmatprep.subr.mxu0 0.0
  %6269 = vmatpush1.xpose.msra.mxu0 0.0
  %6270 = vmatprep.subr.mxu0 0.0
  %6271 = vmatpush1.xpose.msra.mxu0 0.0
  %6272 = vmatprep.subr.mxu0 0.0
  %6273 = vmatpush1.xpose.msra.mxu0 0.0
  %6274 = vmatprep.subr.mxu0 0.0
  %6275 = vmatpush1.xpose.msra.mxu0 0.0
  %6276 = vmatprep.subr.mxu0 0.0
  %6277 = vmatpush1.xpose.msra.mxu0 0.0
  %6278 = vmatprep.subr.mxu0 0.0
  %6279 = vmatpush1.xpose.msra.mxu0 0.0
  %6280 = vmatprep.subr.mxu0 0.0
  %6281 = vmatpush1.xpose.msra.mxu0 0.0
  %6282 = vmatprep.subr.mxu0 0.0
  %6283 = vmatpush1.xpose.msra.mxu0 0.0
  %6284 = vmatprep.subr.mxu0 0.0
  %6285 = vmatpush1.xpose.msra.mxu0 0.0
  %6286 = vmatprep.subr.mxu0 0.0
  %6287 = vmatpush1.xpose.msra.mxu0 0.0
  %6288 = vmatprep.subr.mxu0 0.0
  %6289 = vmatpush1.xpose.msra.mxu0 0.0
  %6290 = vmatprep.subr.mxu0 0.0
  %6291 = vmatpush1.xpose.msra.mxu0 0.0
  %6292 = vmatprep.mubr.f32.mxu0 0.0
  %6293 = vmatmul.mubr.f32.gmra.mrb[0].mxu0 %v6045
  %v6294 = vpop.f32.mrb[0].mxu0
  %v6295 = vadd.f32 0.0, %v6294
  %v6296 = vpop.f32.mrb[0].mxu0
  %6297 = vmatprep.mubr.f32.mxu0 0.0
  %6298 = vmatmul.mubr.f32.gmra.mrb[0].mxu0 %v6059
  %v6299 = vpop.f32.mrb[0].mxu0
  %v6300 = vadd.f32 0.0, %v6299
  %v6301 = vpop.f32.mrb[0].mxu0
  %6302 = vmatprep.mubr.f32.mxu0 0.0
  %6303 = vmatmul.mubr.f32.gmra.mrb[0].mxu0 %v6073
  %v6304 = vpop.f32.mrb[0].mxu0
  %v6305 = vadd.f32 0.0, %v6304
  %v6306 = vpop.f32.mrb[0].mxu0
  %6307 = vmatprep.mubr.f32.mxu0 0.0
  %6308 = vmatmul.mubr.f32.gmra.mrb[0].mxu0 %v6087
  %v6309 = vpop.f32.mrb[0].mxu0
  %v6310 = vadd.f32 0.0, %v6309
  %v6311 = vpop.f32.mrb[0].mxu0
  %6312 = vdwg.mxu0
  %6313 = vxpose.xlu0.b32.start [1/16] %v6221, 128
  %6314 = vxpose.xlu0.b32.cont [2/16] %v6223, 128
  %6315 = vxpose.xlu0.b32.cont [3/16] %v6225, 128
  %6316 = vxpose.xlu0.b32.cont [4/16] %v6227, 128
  %6317 = vxpose.xlu0.b32.cont [5/16] 0.0, 128
  %6318 = vxpose.xlu0.b32.cont [6/16] 0.0, 128
  %6319 = vxpose.xlu0.b32.cont [7/16] 0.0, 128
  %6320 = vxpose.xlu0.b32.cont [8/16] 0.0, 128
  %6321 = vxpose.xlu0.b32.cont [9/16] 0.0, 128
  %6322 = vxpose.xlu0.b32.cont [10/16] 0.0, 128
  %6323 = vxpose.xlu0.b32.cont [11/16] 0.0, 128
  %6324 = vxpose.xlu0.b32.cont [12/16] 0.0, 128
  %6325 = vxpose.xlu0.b32.cont [13/16] 0.0, 128
  %6326 = vxpose.xlu0.b32.cont [14/16] 0.0, 128
  %6327 = vxpose.xlu0.b32.cont [15/16] 0.0, 128
  %6328 = vxpose.xlu0.b32.end [16/16] 0.0, 128
  %v6329 = vpop.trf.xlu0
  %v6330 = vpop.trf.xlu0
  %v6331 = vpop.trf.xlu0
  %v6332 = vpop.trf.xlu0
  %v6333 = vpop.trf.xlu0
  %v6334 = vpop.trf.xlu0
  %v6335 = vpop.trf.xlu0
  %v6336 = vpop.trf.xlu0
  %v6337 = vpop.trf.xlu0
  %v6338 = vpop.trf.xlu0
  %v6339 = vpop.trf.xlu0
  %v6340 = vpop.trf.xlu0
  %v6341 = vpop.trf.xlu0
  %v6342 = vpop.trf.xlu0
  %v6343 = vpop.trf.xlu0
  %v6344 = vpop.trf.xlu0
  %v6345 = vlaneseq
  %v6346 = vshrl.u32 %v6345, 7
  %v6347 = vsub.s32 0, %v6346
  %v6348 = vrot.slane %v6329, %v6347
  %v6349 = vadd.f32 %v6221, %v6348
  %v6350 = vadd.f32 %v6223, %v6348
  %v6351 = vadd.f32 %v6225, %v6348
  %v6352 = vadd.f32 %v6227, %v6348
  %v6353 = vmul.f32 %v6295, 2.0
  %v6354 = vmul.f32 %v6300, 2.0
  %v6355 = vmul.f32 %v6305, 2.0
  %v6356 = vmul.f32 %v6310, 2.0
  %v6357 = vsub.f32 %v6349, %v6353
  %v6358 = vsub.f32 %v6350, %v6354
  %v6359 = vsub.f32 %v6351, %v6355
  %v6360 = vsub.f32 %v6352, %v6356
  %v6361 = vmax.f32 %v6357, 0.0
  %v6362 = vmax.f32 %v6358, 0.0
  %v6363 = vmax.f32 %v6359, 0.0
  %v6364 = vmax.f32 %v6360, 0.0
  %v6365 = vsel %vm3688, %v35, 0.0
  %6366 = vadd.xlane.f32.xlu0 %v6365
  %v6367 = vpop.xlane.xlu0 %6366
  %v6368 = vsel %vm3688, %v36, 0.0
  %6369 = vadd.xlane.f32.xlu0 %v6368
  %v6370 = vpop.xlane.xlu0 %6369
  %v6371 = vsel %vm3688, %v37, 0.0
  %6372 = vadd.xlane.f32.xlu0 %v6371
  %v6373 = vpop.xlane.xlu0 %6372
  %v6374 = vsel %vm3688, %v38, 0.0
  %6375 = vadd.xlane.f32.xlu0 %v6374
  %v6376 = vpop.xlane.xlu0 %6375
  %vm6377 = vcmp.gt.f32.partialorder %v6367, 0.0
  %vm6378 = vcmp.gt.f32.partialorder %v6370, 0.0
  %vm6379 = vcmp.gt.f32.partialorder %v6373, 0.0
  %vm6380 = vcmp.gt.f32.partialorder %v6376, 0.0
  %v6381 = vrcp.pop %v6367
  %v6382 = vmul.f32 1.0, %v6381
  %v6383 = vrcp.pop %v6370
  %v6384 = vmul.f32 1.0, %v6383
  %v6385 = vrcp.pop %v6373
  %v6386 = vmul.f32 1.0, %v6385
  %v6387 = vrcp.pop %v6376
  %v6388 = vmul.f32 1.0, %v6387
  %v6389 = vsel %vm6377, %v6382, 0.0
  %v6390 = vsel %vm6378, %v6384, 0.0
  %v6391 = vsel %vm6379, %v6386, 0.0
  %v6392 = vsel %vm6380, %v6388, 0.0
  %v6393 = vrsqrt.pop %v6361
  %v6394 = vmul.f32 %v6361, %v6393
  %vm6395 = vcmp.eq.f32.partialorder %v6361, inf
  %v6396 = vsel %vm6395, %v6361, %v6394
  %vm6397 = vcmp.eq.f32.partialorder %v6361, 0.0
  %v6398 = vand.u32 %v6361, 2147483648
  %v6399 = vsel %vm6397, %v6398, %v6396
  %v6400 = vrsqrt.pop %v6362
  %v6401 = vmul.f32 %v6362, %v6400
  %vm6402 = vcmp.eq.f32.partialorder %v6362, inf
  %v6403 = vsel %vm6402, %v6362, %v6401
  %vm6404 = vcmp.eq.f32.partialorder %v6362, 0.0
  %v6405 = vand.u32 %v6362, 2147483648
  %v6406 = vsel %vm6404, %v6405, %v6403
  %v6407 = vrsqrt.pop %v6363
  %v6408 = vmul.f32 %v6363, %v6407
  %vm6409 = vcmp.eq.f32.partialorder %v6363, inf
  %v6410 = vsel %vm6409, %v6363, %v6408
  %vm6411 = vcmp.eq.f32.partialorder %v6363, 0.0
  %v6412 = vand.u32 %v6363, 2147483648
  %v6413 = vsel %vm6411, %v6412, %v6410
  %v6414 = vrsqrt.pop %v6364
  %v6415 = vmul.f32 %v6364, %v6414
  %vm6416 = vcmp.eq.f32.partialorder %v6364, inf
  %v6417 = vsel %vm6416, %v6364, %v6415
  %vm6418 = vcmp.eq.f32.partialorder %v6364, 0.0
  %v6419 = vand.u32 %v6364, 2147483648
  %v6420 = vsel %vm6418, %v6419, %v6417
  %6421 = vxpose.xlu0.b32.start [1/16] %v6389, 128
  %6422 = vxpose.xlu0.b32.cont [2/16] %v6390, 128
  %6423 = vxpose.xlu0.b32.cont [3/16] %v6391, 128
  %6424 = vxpose.xlu0.b32.cont [4/16] %v6392, 128
  %6425 = vxpose.xlu0.b32.cont [5/16] 0.0, 128
  %6426 = vxpose.xlu0.b32.cont [6/16] 0.0, 128
  %6427 = vxpose.xlu0.b32.cont [7/16] 0.0, 128
  %6428 = vxpose.xlu0.b32.cont [8/16] 0.0, 128
  %6429 = vxpose.xlu0.b32.cont [9/16] 0.0, 128
  %6430 = vxpose.xlu0.b32.cont [10/16] 0.0, 128
  %6431 = vxpose.xlu0.b32.cont [11/16] 0.0, 128
  %6432 = vxpose.xlu0.b32.cont [12/16] 0.0, 128
  %6433 = vxpose.xlu0.b32.cont [13/16] 0.0, 128
  %6434 = vxpose.xlu0.b32.cont [14/16] 0.0, 128
  %6435 = vxpose.xlu0.b32.cont [15/16] 0.0, 128
  %6436 = vxpose.xlu0.b32.end [16/16] 0.0, 128
  %v6437 = vpop.trf.xlu0
  %v6438 = vpop.trf.xlu0
  %v6439 = vpop.trf.xlu0
  %v6440 = vpop.trf.xlu0
  %v6441 = vpop.trf.xlu0
  %v6442 = vpop.trf.xlu0
  %v6443 = vpop.trf.xlu0
  %v6444 = vpop.trf.xlu0
  %v6445 = vpop.trf.xlu0
  %v6446 = vpop.trf.xlu0
  %v6447 = vpop.trf.xlu0
  %v6448 = vpop.trf.xlu0
  %v6449 = vpop.trf.xlu0
  %v6450 = vpop.trf.xlu0
  %v6451 = vpop.trf.xlu0
  %v6452 = vpop.trf.xlu0
  %v6453 = vlaneseq
  %v6454 = vshrl.u32 %v6453, 7
  %v6455 = vsub.s32 0, %v6454
  %v6456 = vrot.slane %v6437, %v6455
  %v6457 = vadd.f32 %v6389, %v6456
  %v6458 = vadd.f32 %v6390, %v6456
  %v6459 = vadd.f32 %v6391, %v6456
  %v6460 = vadd.f32 %v6392, %v6456
  %v6461 = vmul.f32 %v6399, %v6457
  %v6462 = vmul.f32 %v6406, %v6458
  %v6463 = vmul.f32 %v6413, %v6459
  %v6464 = vmul.f32 %v6420, %v6460
  %6465 = vst.msk [vmem:[#allocation2] sm:$0xff] %vm3688, %v6461
  %6466 = vst.msk [vmem:[#allocation2 + $0x8] sm:$0xff] %vm3688, %v6462
  %6467 = vst.msk [vmem:[#allocation2 + $0x10] sm:$0xff] %vm3688, %v6463
  %6468 = vst.msk [vmem:[#allocation2 + $0x18] sm:$0xff] %vm3688, %v6464
  %v6469 = vld [vmem:[%s2] sm:$0x1]
  %v6470 = vlaneseq
  %v6471 = vand.u32 %v6470, 127
  loop: start=0, step=1, limit=32
  $region34: #{forward.6} parent=0 // loop_pre_header
    _
  $region35: #{forward.6} parent=0 // loop_header
    %s6473 = sphi 0, %s6477
    %p6474 = scmp.ge.s32.totalorder %s6473, 32
    %v6478 = vphi 0.0, %v6541
    %v6479 = vphi %v6471, %v6539
  $region36: #{forward.6} parent=0 // loop_header_branch
    %6476 = sbr.rel (%p6474) target = $region40
  $region37: #{forward.6} parent=0 // loop_body
    %v6480 = vstv %s6473
    %vm6481 = vcmp.eq.s32.totalorder %v6471, %v6480
    %v6482 = vsel %vm6481, %v6478, 0.0
    %vm6483 = vcmask 253952
    %v6484 = vsel %vm6483, %v6482, 0.0
    %6485 = vadd.xlane.f32.xlu0 %v6484
    %v6486 = vpop.xlane.xlu0 %6485
    %v6487 = vsel %vm6481, %v6469, 0.0
    %v6488 = vsel %vm6483, %v6487, 0.0
    %6489 = vadd.xlane.f32.xlu0 %v6488
    %v6490 = vpop.xlane.xlu0 %6489
    %vm6491 = vcmp.gt.f32.partialorder %v6490, 0.0
    %vm6492 = vcmp.eq.f32.partialorder %v6486, 0.0
    %vm6493 = vmand %vm6491, %vm6492
    %s6494 = scalar_lea.vmem %s1, %s6473
    %v6495 = vld [vmem:[%s6494] sm:$0x1]
    %s6496 = scalar_lea.vmem [#allocation2], %s6473
    %v6497 = vld [vmem:[%s6496] sm:$0x1]
    %vm6498 = vcmp.gt.f32.partialorder %v6495, 0.0
    %vm6499 = vcmp.eq.f32.partialorder %v6478, 0.0
    %vm6500 = vmand %vm6498, %vm6499
    %vm6501 = vcmp.gt.f32.partialorder %v6469, 0.0
    %vm6502 = vmand %vm6500, %vm6501
    %v6503 = vsel %vm6502, %v6497, -inf
    %v6504 = vsel %vm6483, %v6503, -inf
    %6505 = vmax.xlane.f32.xlu0 %v6504
    %v6506 = vpop.xlane.xlu0 %6505
    %vm6507 = vcmp.eq.f32.partialorder %v6503, %v6506
    %v6508 = vsel %vm6507, %v6471, 32
    %v6509 = vsel %vm6483, %v6508, 2147483647
    %v6510 = vand.u32 %v6509, 65535
    %v6511 = vshra.s32 %v6509, 16
    %v6512 = vcvt.s32.f32 %v6510
    %v6513 = vcvt.s32.f32 %v6511
    %6514 = vmin.xlane.f32.xlu0 %v6513
    %v6515 = vpop.xlane.xlu0 %6514
    %vm6516 = vcmp.eq.f32.partialorder %v6513, %v6515
    %v6517 = vsel %vm6516, %v6512, inf
    %6518 = vmin.xlane.f32.xlu0 %v6517
    %v6519 = vpop.xlane.xlu0 %6518
    %v6520 = vcvt.f32.s32 %v6519
    %v6521 = vcvt.f32.s32 %v6515
    %v6522 = vshll.u32 %v6521, 16
    %v6523 = vadd.s32 %v6522, %v6520
    %v6524 = vsel %vm6502, 1, 0
    %v6525 = vcvt.s32.f32 %v6524
    %v6526 = vsel %vm6483, %v6525, -inf
    %6527 = vmax.xlane.f32.xlu0 %v6526
    %v6528 = vpop.xlane.xlu0 %6527
    %vm6529 = vcmp.gt.f32.partialorder %v6528, 0.0
    %vm6530 = vmand %vm6493, %vm6529
    %vm6531 = vcmp.eq.s32.totalorder %v6471, %v6523
    %v6532 = vsel %vm6493, 1, 0
    %vm6533 = vcmp.eq.s32.totalorder %v6532, 1
    %vm6534 = vmand %vm6481, %vm6533
    %v6535 = vsel %vm6534, %v6480, %v6479
    %v6536 = vsel %vm6530, 1, 0
    %vm6537 = vcmp.eq.s32.totalorder %v6536, 1
    %vm6538 = vmand %vm6531, %vm6537
    %v6539 = vsel %vm6538, %v6480, %v6535
    %v6540 = vsel %vm6534, 1.0, %v6478
    %v6541 = vsel %vm6538, 1.0, %v6540
  $region38: #{forward.6} parent=0 // loop_footer
    %s6477 = sadd.s32 1, %s6473
  $region39: #{forward.6} parent=0 // loop_footer_branch
    %6472 = sbr.rel target = $region35
  $region40: #{forward.6} parent=0 // loop_exit
    _
  %vm6542 = vcmask 253952
  %6543 = vst.msk [vmem:[%s9] sm:$0x1] %vm6542, %v6479
  // Predicated region
  $region41: #{forward.6} parent=0 // pred_check
    _
  $region42: #{forward.6} parent=0 // pred_check_branch
    %6545 = sbr.rel (0) target = $region44
  $region43: #{forward.6} parent=0 // pred_region
    _
  $region44: #{forward.6} parent=0 // pred_fallthru
    _
  // Predicated region
  $region45: #{forward.6} parent=0 // pred_check
    _
  $region46: #{forward.6} parent=0 // pred_check_branch
    %6547 = sbr.rel (0) target = $region48
  $region47: #{forward.6} parent=0 // pred_region
    _
  $region48: #{forward.6} parent=0 // pred_fallthru
    _
  // Predicated region
  $region49: #{forward.6} parent=0 // pred_check
    _
  $region50: #{forward.6} parent=0 // pred_check_branch
    %6549 = sbr.rel (0) target = $region52
  $region51: #{forward.6} parent=0 // pred_region
    _
  $region52: #{forward.6} parent=0 // pred_fallthru
    _
  // Predicated region
  $region53: #{forward.6} parent=0 // pred_check
    _
  $region54: #{forward.6} parent=0 // pred_check_branch
    %6551 = sbr.rel (0) target = $region56
  $region55: #{forward.6} parent=0 // pred_region
    _
  $region56: #{forward.6} parent=0 // pred_fallthru
    _

</llo_original>
